<compile_context>
chip_gen: v7x
topology: tpu7x:2x2x1
jax: 0.10.0
libtpu: 0.0.40
codegen_flags: <defaults>
</compile_context>

<pallas_src>
import math
import functools
from types import SimpleNamespace

import numpy as np
import jax
import jax.numpy as jnp
from jax import lax
from jax.experimental import pallas as pl
from jax.experimental.pallas import tpu as pltpu


GEN_VOCAB, GEN_DIM = 40, 300     # gen + domain embedding dims must sum to 400 (LSTM input)
DOM_DIM = 100
POS_VOCAB = 24
DEP_VOCAB = 12


def make_args():
    return SimpleNamespace(
        lstm_dim=32,
        dependency_embed_dim=64,   # must equal dynamic_layer_dim: the torch module feeds
        dynamic_layer_dim=64,      # DynamicLayer's output into edge_k / edge_v Linears
        num_attention_heads=4,
        position_embed_dim=32,
        class_num=4,
        num_syntransformer_layers=2,
        weight_edge=0.5,
        alpha_adjacent=0.3,
        nhops=2,
    )


# ---------------------------------------------------------------------------
# BlockSpec helpers
# ---------------------------------------------------------------------------
def _batch_spec(shape):
    """Per-batch block: leading dim indexed by the grid, rest full extent."""
    n = len(shape)
    return pl.BlockSpec(shape, lambda b, _n=n: (b,) + (0,) * (_n - 1))


def _full_spec(shape):
    """Whole-array block (weights / constant matrices), independent of the grid."""
    n = len(shape)
    return pl.BlockSpec(shape, lambda b, _n=n: (0,) * _n)


_PARALLEL = pltpu.CompilerParams(dimension_semantics=("parallel",))


# ---------------------------------------------------------------------------
# Constant matrices (built on host with numpy; tiny)
# ---------------------------------------------------------------------------
def _head_select(dim, heads):
    """(dim, heads) 0/1 matrix: hsel[d, h] = 1 iff d belongs to head h."""
    hd = dim // heads
    m = (np.arange(dim)[:, None] // hd == np.arange(heads)[None, :]).astype(np.float32)
    return jnp.asarray(m)


def _transpose_perm(S):
    """(S^2, S^2) permutation: (P @ x)[i*S+j] = x[j*S+i]  (the (i,j) transpose)."""
    n = S * S
    P = np.zeros((n, n), np.float32)
    a = np.arange(n)
    P[a, (a % S) * S + a // S] = 1.0
    return jnp.asarray(P)


def _shift_mats(S):
    """Shift matrices for left/up/dia adjacency (zero fill at the boundary)."""
    n = S * S
    a = np.arange(n)
    i, j = a // S, a % S
    SI = np.zeros((n, n), np.float32)   # out[i,j] = in[i-1, j]
    SJ = np.zeros((n, n), np.float32)   # out[i,j] = in[i, j-1]
    SD = np.zeros((n, n), np.float32)   # out[i,j] = in[i-1, j-1]
    SI[a[i >= 1], (a - S)[i >= 1]] = 1.0
    SJ[a[j >= 1], (a - 1)[j >= 1]] = 1.0
    sel = (i >= 1) & (j >= 1)
    SD[a[sel], (a - S - 1)[sel]] = 1.0
    return jnp.asarray(SI), jnp.asarray(SJ), jnp.asarray(SD)


# ---------------------------------------------------------------------------
# Fused encoder: SelfAttention residual + DynamicLayer + all Syntax_Transformer
# layers in ONE per-batch kernel (no HBM intermediates between the stages).
# ---------------------------------------------------------------------------
def _encoder_kernel(x_ref, smask_ref, edge_ref, dmask_ref,
                    hseld_ref, hseldT_ref, hselh_ref, hselhT_ref, perm_ref,
                    dwqkv_ref, dbqkv_ref, dwa1_ref, dwa2_ref, dba_ref,
                    swqkv_ref, sbqkv_ref, swekv_ref, sbekv_ref, gamma_ref, beta_ref,
                    o_ref, *, S, E, Dd, hidden, H, hd_d, hd_h, L, weight_edge):
    # ---------------- SelfAttention over LSTM features (+ residual) ----------
    # TODO(synk): the repo's `SelfAttention` class source is not included in the
    # provided module; implemented as standard masked dot-product self-attention.
    x = x_ref[0]                                          # (S, hidden)
    sm = smask_ref[0]                                     # (1, S)
    sc = lax.dot_general(x, x, (((1,), (1,)), ((), ())),
                         preferred_element_type=jnp.float32)       # (S, S)
    sc = jnp.where(sm == 0.0, -1e9, sc)
    probs0 = jax.nn.softmax(sc, axis=-1)
    tok = x + jnp.dot(probs0, x, preferred_element_type=jnp.float32)

    # ---------------- DynamicLayer (edge attention + alpha-gate) -------------
    dmask = dmask_ref[0]                                  # (S, S) dep mask per query (i, j)
    dmask4 = dmask[:, :, None, None]
    dmask3 = dmask[:, :, None]
    edge0 = edge_ref[0].reshape(S * S, E)                 # (S*S, E)
    qkv = jnp.dot(edge0, dwqkv_ref[...], preferred_element_type=jnp.float32) + dbqkv_ref[...]
    q = qkv[:, :Dd].reshape(S, S, Dd)
    k = qkv[:, Dd:2 * Dd].reshape(S, S, Dd)
    v = qkv[:, 2 * Dd:].reshape(S, S, Dd)

    # scores[i, j, kk, h] = sum_{d in head h} q[i, j, d] * k[i, kk, d]
    prod = q[:, :, None, :] * k[:, None, :, :]            # (S, S, S, Dd)
    scores = jnp.dot(prod.reshape(S * S * S, Dd), hseld_ref[...],
                     preferred_element_type=jnp.float32).reshape(S, S, S, H)
    scores = jnp.where(dmask4 == 0.0, -10000.0, scores)
    smax = jnp.max(scores, axis=2, keepdims=True)
    e = jnp.exp(scores - smax)
    attn = e / jnp.sum(e, axis=2, keepdims=True) * (1.0 / math.sqrt(hd_d))  # softmax THEN /sqrt

    # merged[i, j, d] = sum_kk attn[i, j, kk, head(d)] * v[i, kk, d]
    pexp = jnp.dot(attn.reshape(S * S * S, H), hseldT_ref[...],
                   preferred_element_type=jnp.float32).reshape(S, S, S, Dd)
    merged = jnp.sum(pexp * v[:, None, :, :], axis=2)     # (S, S, Dd)
    mflat = merged.reshape(S * S, Dd)
    mTflat = jnp.dot(perm_ref[...], mflat, preferred_element_type=jnp.float32)  # (i,j) transpose
    a = (jnp.dot(mflat, dwa1_ref[...], preferred_element_type=jnp.float32)
         + jnp.dot(mTflat, dwa2_ref[...], preferred_element_type=jnp.float32) + dba_ref[...])
    alph = jax.nn.sigmoid(a)                              # (S*S, 1)
    edge_feat = (1.0 - alph) * mflat + alph * mTflat      # (S*S, Dd)

    # ---------------- Syntax_Transformer layers (stacked weights) ------------
    inv_sqrt_h = 1.0 / math.sqrt(hd_h)
    hsel = hselh_ref[...]
    hselT = hselhT_ref[...]
    for l in range(L):
        tqkv = jnp.dot(tok, swqkv_ref[l], preferred_element_type=jnp.float32) + sbqkv_ref[l]
        tq = tqkv[:, :hidden]
        tk = tqkv[:, hidden:2 * hidden]
        tv = tqkv[:, 2 * hidden:]
        ekv = jnp.dot(edge_feat, swekv_ref[l], preferred_element_type=jnp.float32) + sbekv_ref[l]
        ek = ekv[:, :hidden].reshape(S, S, hidden)
        ev = ekv[:, hidden:].reshape(S, S, hidden)
        keff = tk[None, :, :] + weight_edge * ek          # (S, S, hidden)
        veff = tv[None, :, :] + weight_edge * ev
        # scores[i, j, h] = (1/sqrt(hd)) * sum_{d in head h} q[i, d] * keff[i, j, d]
        prod2 = tq[:, None, :] * keff                     # (S, S, hidden)
        sc2 = jnp.dot(prod2.reshape(S * S, hidden), hsel,
                      preferred_element_type=jnp.float32).reshape(S, S, H) * inv_sqrt_h
        sc2 = jnp.where(dmask3 == 0.0, -10000.0, sc2)
        smax2 = jnp.max(sc2, axis=1, keepdims=True)
        e2 = jnp.exp(sc2 - smax2)
        p2 = e2 / jnp.sum(e2, axis=1, keepdims=True)      # softmax over keys j
        # ctx[i, d] = sum_j p2[i, j, head(d)] * veff[i, j, d]
        pexp2 = jnp.dot(p2.reshape(S * S, H), hselT,
                        preferred_element_type=jnp.float32).reshape(S, S, hidden)
        ctx = jnp.sum(pexp2 * veff, axis=1)               # (S, hidden)
        y = tok + ctx
        mu = jnp.mean(y, axis=-1, keepdims=True)
        var = jnp.mean((y - mu) ** 2, axis=-1, keepdims=True)
        tok = (y - mu) * lax.rsqrt(var + 1e-5) * gamma_ref[l] + beta_ref[l]
    o_ref[0] = tok


def encoder(lstm_feature, seq_mask, edge_embedding, dep_masks, dyn_p, layer_params, args):
    B, S, hidden = lstm_feature.shape
    E = edge_embedding.shape[-1]
    Dd = args.dynamic_layer_dim
    H = args.num_attention_heads
    L = len(layer_params)

    # DynamicLayer fused weights
    dwqkv = jnp.concatenate([dyn_p['wq'], dyn_p['wk'], dyn_p['wv']], axis=1)   # (E, 3Dd)
    dbqkv = jnp.concatenate([dyn_p['bq'], dyn_p['bk'], dyn_p['bv']], axis=1)   # (1, 3Dd)
    # Syntax layers stacked/fused weights
    swqkv = jnp.stack([jnp.concatenate([lp['wq'], lp['wk'], lp['wv']], axis=1)
                       for lp in layer_params])            # (L, hidden, 3*hidden)
    sbqkv = jnp.stack([jnp.concatenate([lp['bq'], lp['bk'], lp['bv']], axis=1)
                       for lp in layer_params])            # (L, 1, 3*hidden)
    swekv = jnp.stack([jnp.concatenate([lp['wek'], lp['wev']], axis=1)
                       for lp in layer_params])            # (L, Dd, 2*hidden)
    sbekv = jnp.stack([jnp.concatenate([lp['bek'], lp['bev']], axis=1)
                       for lp in layer_params])            # (L, 1, 2*hidden)
    gamma = jnp.stack([lp['gamma'] for lp in layer_params])
    beta = jnp.stack([lp['beta'] for lp in layer_params])

    hseld = _head_select(Dd, H)
    hselh = _head_select(hidden, H)
    perm = _transpose_perm(S)
    mask_row = seq_mask.reshape(B, 1, S).astype(jnp.float32)

    return pl.pallas_call(
        functools.partial(_encoder_kernel, S=S, E=E, Dd=Dd, hidden=hidden, H=H,
                          hd_d=Dd // H, hd_h=hidden // H, L=L,
                          weight_edge=float(args.weight_edge)),
        out_shape=jax.ShapeDtypeStruct((B, S, hidden), jnp.float32),
        grid=(B,),
        in_specs=[_batch_spec((1, S, hidden)), _batch_spec((1, 1, S)),
                  _batch_spec((1, S, S, E)), _batch_spec((1, S, S)),
                  _full_spec((Dd, H)), _full_spec((H, Dd)),
                  _full_spec((hidden, H)), _full_spec((H, hidden)),
                  _full_spec((S * S, S * S)),
                  _full_spec((E, 3 * Dd)), _full_spec((1, 3 * Dd)),
                  _full_spec((Dd, 1)), _full_spec((Dd, 1)), _full_spec((1, 1)),
                  _full_spec((L, hidden, 3 * hidden)), _full_spec((L, 1, 3 * hidden)),
                  _full_spec((L, Dd, 2 * hidden)), _full_spec((L, 1, 2 * hidden)),
                  _full_spec((L, 1, hidden)), _full_spec((L, 1, hidden))],
        out_specs=_batch_spec((1, S, hidden)),
        compiler_params=_PARALLEL,
    )(lstm_feature, mask_row, edge_embedding, dep_masks,
      hseld, hseld.T, hselh, hselh.T, perm,
      dwqkv, dbqkv, dyn_p['wa'][:Dd], dyn_p['wa'][Dd:], dyn_p['ba'],
      swqkv, sbqkv, swekv, sbekv, gamma, beta)


# ---------------------------------------------------------------------------
# multi_hops: initial cls + all hops fused into one kernel per batch element
# ---------------------------------------------------------------------------
def _multihops_kernel(feat_ref, mask_ref, perm_ref, si_ref, sj_ref, sd_ref,
                      wcls_ref, bcls_ref,
                      wfx_ref, wfL_ref, wfLT_ref, wfp_ref, wfpt_ref, bf_ref,
                      wt1_ref, wt2_ref, wt3_ref, bt_ref,
                      o_ref, *, S, F, C, nhops, alpha):
    feat = feat_ref[0].reshape(S * S, F)                  # (S*S, F)
    mask3 = mask_ref[0][:, :, None]                       # (S, S, 1) pairwise seq mask (hoisted)
    perm = perm_ref[...]
    si, sj, sd = si_ref[...], sj_ref[...], sd_ref[...]
    wcls, bcls = wcls_ref[...], bcls_ref[...]
    wfx, wfL, wfLT = wfx_ref[...], wfL_ref[...], wfLT_ref[...]
    wfp, wfpt, bf = wfp_ref[...], wfpt_ref[...], bf_ref[...]
    wt1, wt2, wt3, bt = wt1_ref[...], wt2_ref[...], wt3_ref[...], bt_ref[...]

    # initial class logits (dropout p=0.0 -> identity)
    logits = jnp.dot(feat, wcls, preferred_element_type=jnp.float32) + bcls   # (S*S, C)

    for _ in range(nhops):
        probs = logits                                    # (S*S, C), pre-mask
        probs3 = probs.reshape(S, S, C)
        probsT = jnp.dot(perm, probs, preferred_element_type=jnp.float32)     # transpose(i,j)

        # trans_linear(cat([left, up, dia])) = shift_i(probs@wt1)+shift_j(probs@wt2)+shift_d(probs@wt3)+bt
        t1 = jnp.dot(probs, wt1, preferred_element_type=jnp.float32)
        t2 = jnp.dot(probs, wt2, preferred_element_type=jnp.float32)
        t3 = jnp.dot(probs, wt3, preferred_element_type=jnp.float32)
        other = (jnp.dot(si, t1, preferred_element_type=jnp.float32)
                 + jnp.dot(sj, t2, preferred_element_type=jnp.float32)
                 + jnp.dot(sd, t3, preferred_element_type=jnp.float32)
                 + bt)                                    # (S*S, C)

        # m[x, c] = max( max_i masked[i, x, c], max_j masked[x, j, c] )
        masked = probs3 * mask3
        m = jnp.maximum(jnp.max(masked, axis=0), jnp.max(masked, axis=1))     # (S, C)

        # feature_linear on cat([feat, L, L_T, probs, probs_T]) via split-weight partial matmuls;
        # L[i,j]=m[i] and L_T[i,j]=m[j] contribute as per-row / per-column broadcasts.
        mw1 = jnp.dot(m, wfL, preferred_element_type=jnp.float32)             # (S, F)
        mw2 = jnp.dot(m, wfLT, preferred_element_type=jnp.float32)            # (S, F)
        feat2 = (jnp.dot(feat, wfx, preferred_element_type=jnp.float32)
                 + jnp.dot(probs, wfp, preferred_element_type=jnp.float32)
                 + jnp.dot(probsT, wfpt, preferred_element_type=jnp.float32)
                 + bf)
        feat2 = feat2.reshape(S, S, F) + mw1[:, None, :] + mw2[None, :, :]
        feat = feat2.reshape(S * S, F)

        new_logits = jnp.dot(feat, wcls, preferred_element_type=jnp.float32) + bcls
        logits = (1.0 - alpha) * new_logits + alpha * other

    o_ref[0] = logits.reshape(S, S, C)


def multi_hops(features, seq_mask, p, args):
    B, S, _, F = features.shape
    C = args.class_num
    perm = _transpose_perm(S)
    si, sj, sd = _shift_mats(S)
    wf = p['w_feat']
    wfx, wfL = wf[:F], wf[F:F + C]
    wfLT, wfp, wfpt = wf[F + C:F + 2 * C], wf[F + 2 * C:F + 3 * C], wf[F + 3 * C:]
    wt = p['w_trans']
    wt1, wt2, wt3 = wt[:C], wt[C:2 * C], wt[2 * C:]
    pair_mask = seq_mask[:, :, None] * seq_mask[:, None, :]                   # (B, S, S)

    return pl.pallas_call(
        functools.partial(_multihops_kernel, S=S, F=F, C=C,
                          nhops=int(args.nhops), alpha=float(args.alpha_adjacent)),
        out_shape=jax.ShapeDtypeStruct((B, S, S, C), jnp.float32),
        grid=(B,),
        in_specs=[_batch_spec((1, S, S, F)), _batch_spec((1, S, S)),
                  _full_spec((S * S, S * S)), _full_spec((S * S, S * S)),
                  _full_spec((S * S, S * S)), _full_spec((S * S, S * S)),
                  _full_spec((F, C)), _full_spec((1, C)),
                  _full_spec((F, F)), _full_spec((C, F)), _full_spec((C, F)),
                  _full_spec((C, F)), _full_spec((C, F)), _full_spec((1, F)),
                  _full_spec((C, C)), _full_spec((C, C)), _full_spec((C, C)),
                  _full_spec((1, C))],
        out_specs=_batch_spec((1, S, S, C)),
        compiler_params=_PARALLEL,
    )(features, pair_mask, perm, si, sj, sd,
      p['w_cls'], p['b_cls'], wfx, wfL, wfLT, wfp, wfpt, p['b_feat'],
      wt1, wt2, wt3, p['b_trans'])


# ---------------------------------------------------------------------------
# BiLSTM (plain JAX; input projection hoisted out of the recurrence)
# ---------------------------------------------------------------------------
def bilstm(x, p, lstm_dim):
    # TODO(synk): sequential LSTM recurrence kept in lax.scan (no clean Pallas tiling win);
    # pack_padded_sequence is not reproduced (inputs are zero-masked instead).
    B, S, Din = x.shape
    xf = x.reshape(B * S, Din)
    gx_f = (xf @ p['w_ih_f'].T + p['b_ih_f']).reshape(B, S, 4 * lstm_dim)
    gx_b = (xf @ p['w_ih_b'].T + p['b_ih_b']).reshape(B, S, 4 * lstm_dim)

    def run(gx, w_hh, b_hh, reverse):
        def step(carry, g_in):
            h, c = carry
            gates = g_in + h @ w_hh.T + b_hh
            i, f, g, o = jnp.split(gates, 4, axis=-1)
            i = jax.nn.sigmoid(i)
            f = jax.nn.sigmoid(f)
            g = jnp.tanh(g)
            o = jax.nn.sigmoid(o)
            c = f * c + i * g
            h = o * jnp.tanh(c)
            return (h, c), h

        init = (jnp.zeros((B, lstm_dim), jnp.float32), jnp.zeros((B, lstm_dim), jnp.float32))
        _, hs = lax.scan(step, init, jnp.swapaxes(gx, 0, 1), reverse=reverse)
        return jnp.swapaxes(hs, 0, 1)

    fwd = run(gx_f, p['w_hh_f'], p['b_hh_f'], False)
    bwd = run(gx_b, p['w_hh_b'], p['b_hh_b'], True)
    return jnp.concatenate([fwd, bwd], axis=-1)


# ---------------------------------------------------------------------------
# Full forward pass
# ---------------------------------------------------------------------------
def forward(params, args, sentence_tokens, lengths, mask, dependency_masks,
            syntactic_position_datas, edge_datas):
    S = int(jnp.max(lengths))
    B = sentence_tokens.shape[0]
    tokens = sentence_tokens[:, :S]
    maskf = mask[:, :S].astype(jnp.float32)

    # embeddings (gathers kept as JAX glue; all dropouts are eval-mode identity)
    gen = params['gen_emb'][tokens]
    dom = params['domain_emb'][tokens]
    token_embedding = jnp.concatenate([gen, dom], axis=-1) * maskf[:, :, None]

    position_embedding = params['pos_emb'][syntactic_position_datas[:, :S, :S]]
    edge_embedding = params['dep_emb'][edge_datas[:, :S, :S]]
    mask_matrix = (maskf[:, :, None] * maskf[:, None, :])[..., None]
    position_embedding = position_embedding * mask_matrix
    edge_embedding = edge_embedding * mask_matrix
    dep_masks = dependency_masks[:, :S, :S].astype(jnp.float32)

    lstm_feature = bilstm(token_embedding, params['lstm'], args.lstm_dim)

    # Fused: self-attention residual + DynamicLayer + syntax transformer layers
    syn_feature = encoder(lstm_feature, maskf, edge_embedding, dep_masks,
                          params['dynamic'], params['syntax_layers'], args)

    hidden = syn_feature.shape[-1]
    f_row = jnp.broadcast_to(syn_feature[:, :, None, :], (B, S, S, hidden))
    f_col = jnp.broadcast_to(syn_feature[:, None, :, :], (B, S, S, hidden))
    concat_features = jnp.concatenate([f_row, f_col, position_embedding], axis=-1)

    logits = multi_hops(concat_features, maskf, params['hops'], args)
    return [logits]


# ---------------------------------------------------------------------------
# Deterministic synthetic parameters
# ---------------------------------------------------------------------------
def init_params(key, args):
    keys = iter(jax.random.split(key, 64))

    def nrm(shape, scale=0.05):
        return jax.random.normal(next(keys), shape, jnp.float32) * scale

    hidden = 2 * args.lstm_dim
    De = args.dependency_embed_dim
    Dd = args.dynamic_layer_dim
    C = args.class_num
    F = 4 * args.lstm_dim + args.position_embed_dim

    return {
        'gen_emb': nrm((GEN_VOCAB, GEN_DIM), 0.1),
        'domain_emb': nrm((GEN_VOCAB, DOM_DIM), 0.1),
        'pos_emb': nrm((POS_VOCAB, args.position_embed_dim), 0.1),
        'dep_emb': nrm((DEP_VOCAB, De), 0.1),
        'lstm': {
            'w_ih_f': nrm((4 * args.lstm_dim, GEN_DIM + DOM_DIM)),
            'w_hh_f': nrm((4 * args.lstm_dim, args.lstm_dim)),
            'b_ih_f': nrm((4 * args.lstm_dim,)),
            'b_hh_f': nrm((4 * args.lstm_dim,)),
            'w_ih_b': nrm((4 * args.lstm_dim, GEN_DIM + DOM_DIM)),
            'w_hh_b': nrm((4 * args.lstm_dim, args.lstm_dim)),
            'b_ih_b': nrm((4 * args.lstm_dim,)),
            'b_hh_b': nrm((4 * args.lstm_dim,)),
        },
        'dynamic': {
            'wq': nrm((De, Dd)), 'bq': nrm((1, Dd)),
            'wk': nrm((De, Dd)), 'bk': nrm((1, Dd)),
            'wv': nrm((De, Dd)), 'bv': nrm((1, Dd)),
            'wa': nrm((2 * Dd, 1)), 'ba': nrm((1, 1)),
        },
        'syntax_layers': [
            {
                'wq': nrm((hidden, hidden)), 'bq': nrm((1, hidden)),
                'wk': nrm((hidden, hidden)), 'bk': nrm((1, hidden)),
                'wv': nrm((hidden, hidden)), 'bv': nrm((1, hidden)),
                'wek': nrm((Dd, hidden)), 'bek': nrm((1, hidden)),
                'wev': nrm((Dd, hidden)), 'bev': nrm((1, hidden)),
                'gamma': jnp.ones((1, hidden), jnp.float32),
                'beta': jnp.zeros((1, hidden), jnp.float32),
            }
            for _ in range(args.num_syntransformer_layers)
        ],
        'hops': {
            'w_cls': nrm((F, C)), 'b_cls': nrm((1, C)),
            'w_feat': nrm((F + 4 * C, F)), 'b_feat': nrm((1, F)),
            'w_trans': nrm((3 * C, C)), 'b_trans': nrm((1, C)),
        },
    }


if __name__ == "__main__":
    args = make_args()
    key = jax.random.PRNGKey(0)
    kp, kd = jax.random.split(key)
    params = init_params(kp, args)

    B, S, PAD = 2, 8, 12
    kk = jax.random.split(kd, 4)
    sentence_tokens = jax.random.randint(kk[0], (B, S), 1, GEN_VOCAB, dtype=jnp.int32)
    lengths = jnp.full((B,), S, jnp.int32)
    mask = jnp.ones((B, S), jnp.float32)
    dependency_masks = (jax.random.uniform(kk[1], (B, PAD, PAD)) > 0.3).astype(jnp.float32)
    syntactic_position_datas = jax.random.randint(kk[2], (B, PAD, PAD), 0, POS_VOCAB, dtype=jnp.int32)
    edge_datas = jax.random.randint(kk[3], (B, PAD, PAD), 0, DEP_VOCAB, dtype=jnp.int32)

    out = forward(params, args, sentence_tokens, lengths, mask, dependency_masks,
                  syntactic_position_datas, edge_datas)
    logits = out[0]
    jax.block_until_ready(logits)
    assert logits.shape == (B, S, S, args.class_num), logits.shape
    assert bool(jnp.all(jnp.isfinite(logits)))
    print("KERNEL_OK")
</pallas_src>

<mosaic_0001>
module attributes {stable_mosaic.version = 11 : i64} {
  func.func @_encoder_kernel(%arg0: i32, %arg1: memref<1x8x64xf32, #tpu.memory_space<vmem>>, %arg2: memref<1x1x8xf32, #tpu.memory_space<vmem>>, %arg3: memref<1x8x8x64xf32, #tpu.memory_space<vmem>>, %arg4: memref<1x8x8xf32, #tpu.memory_space<vmem>>, %arg5: memref<64x4xf32, #tpu.memory_space<vmem>>, %arg6: memref<4x64xf32, #tpu.memory_space<vmem>>, %arg7: memref<64x4xf32, #tpu.memory_space<vmem>>, %arg8: memref<4x64xf32, #tpu.memory_space<vmem>>, %arg9: memref<64x64xf32, #tpu.memory_space<vmem>>, %arg10: memref<64x192xf32, #tpu.memory_space<vmem>>, %arg11: memref<1x192xf32, #tpu.memory_space<vmem>>, %arg12: memref<64x1xf32, #tpu.memory_space<vmem>>, %arg13: memref<64x1xf32, #tpu.memory_space<vmem>>, %arg14: memref<1x1xf32, #tpu.memory_space<vmem>>, %arg15: memref<2x64x192xf32, #tpu.memory_space<vmem>>, %arg16: memref<2x1x192xf32, #tpu.memory_space<vmem>>, %arg17: memref<2x64x128xf32, #tpu.memory_space<vmem>>, %arg18: memref<2x1x128xf32, #tpu.memory_space<vmem>>, %arg19: memref<2x1x64xf32, #tpu.memory_space<vmem>>, %arg20: memref<2x1x64xf32, #tpu.memory_space<vmem>>, %arg21: memref<1x8x64xf32, #tpu.memory_space<vmem>>) attributes {dimension_semantics = [#tpu.dimension_semantics<parallel>], iteration_bounds = array<i64: 2>, scalar_prefetch = 0 : i64, scratch_operands = 0 : i64, tpu.core_type = #tpu.core_type<tc>, window_params = [{transform_indices = @transform_0, window_bounds = array<i64: 1, 8, 64>}, {transform_indices = @transform_1, window_bounds = array<i64: 1, 1, 8>}, {transform_indices = @transform_2, window_bounds = array<i64: 1, 8, 8, 64>}, {transform_indices = @transform_3, window_bounds = array<i64: 1, 8, 8>}, {pipeline_mode = #tpu.pipeline_mode<synchronous>, transform_indices = @transform_4, window_bounds = array<i64: 64, 4>}, {pipeline_mode = #tpu.pipeline_mode<synchronous>, transform_indices = @transform_5, window_bounds = array<i64: 4, 64>}, {pipeline_mode = #tpu.pipeline_mode<synchronous>, transform_indices = @transform_6, window_bounds = array<i64: 64, 4>}, {pipeline_mode = #tpu.pipeline_mode<synchronous>, transform_indices = @transform_7, window_bounds = array<i64: 4, 64>}, {pipeline_mode = #tpu.pipeline_mode<synchronous>, transform_indices = @transform_8, window_bounds = array<i64: 64, 64>}, {pipeline_mode = #tpu.pipeline_mode<synchronous>, transform_indices = @transform_9, window_bounds = array<i64: 64, 192>}, {pipeline_mode = #tpu.pipeline_mode<synchronous>, transform_indices = @transform_10, window_bounds = array<i64: 1, 192>}, {pipeline_mode = #tpu.pipeline_mode<synchronous>, transform_indices = @transform_11, window_bounds = array<i64: 64, 1>}, {pipeline_mode = #tpu.pipeline_mode<synchronous>, transform_indices = @transform_12, window_bounds = array<i64: 64, 1>}, {pipeline_mode = #tpu.pipeline_mode<synchronous>, transform_indices = @transform_13, window_bounds = array<i64: 1, 1>}, {pipeline_mode = #tpu.pipeline_mode<synchronous>, transform_indices = @transform_14, window_bounds = array<i64: 2, 64, 192>}, {pipeline_mode = #tpu.pipeline_mode<synchronous>, transform_indices = @transform_15, window_bounds = array<i64: 2, 1, 192>}, {pipeline_mode = #tpu.pipeline_mode<synchronous>, transform_indices = @transform_16, window_bounds = array<i64: 2, 64, 128>}, {pipeline_mode = #tpu.pipeline_mode<synchronous>, transform_indices = @transform_17, window_bounds = array<i64: 2, 1, 128>}, {pipeline_mode = #tpu.pipeline_mode<synchronous>, transform_indices = @transform_18, window_bounds = array<i64: 2, 1, 64>}, {pipeline_mode = #tpu.pipeline_mode<synchronous>, transform_indices = @transform_19, window_bounds = array<i64: 2, 1, 64>}, {transform_indices = @transform_20, window_bounds = array<i64: 1, 8, 64>}]} {
    %c0 = arith.constant 0 : index
    %c0_0 = arith.constant 0 : index
    %c0_1 = arith.constant 0 : index
    %0 = vector.load %arg1[%c0, %c0_0, %c0_1] : memref<1x8x64xf32, #tpu.memory_space<vmem>>, vector<1x8x64xf32>
    %1 = vector.shape_cast %0 : vector<1x8x64xf32> to vector<8x64xf32>
    %c0_2 = arith.constant 0 : index
    %c0_3 = arith.constant 0 : index
    %c0_4 = arith.constant 0 : index
    %2 = vector.load %arg2[%c0_2, %c0_3, %c0_4] : memref<1x1x8xf32, #tpu.memory_space<vmem>>, vector<1x1x8xf32>
    %3 = vector.shape_cast %2 : vector<1x1x8xf32> to vector<1x8xf32>
    %cst = arith.constant dense<0.000000e+00> : vector<8x8xf32>
    %4 = tpu.matmul %1, %1, %cst {dimension_numbers = #tpu.dot_dimension_numbers<[1], [1], [0], [0], [0, 0, 1, 0], [], []>} : vector<8x64xf32>, vector<8x64xf32>, vector<8x8xf32> -> vector<8x8xf32>
    %cst_5 = arith.constant 0.000000e+00 : f32
    %5 = vector.broadcast %cst_5 : f32 to vector<1x8xf32>
    %6 = arith.cmpf oeq, %3, %5 : vector<1x8xf32>
    %cst_6 = arith.constant -1.000000e+09 : f32
    %7 = vector.shape_cast %6 : vector<1x8xi1> to vector<1x8xi1>
    %8 = vector.broadcast %7 : vector<1x8xi1> to vector<8x8xi1>
    %9 = vector.broadcast %cst_6 : f32 to vector<8x8xf32>
    %10 = arith.select %8, %9, %4 : vector<8x8xi1>, vector<8x8xf32>
    %cst_7 = arith.constant dense<0xFF800000> : vector<8xf32>
    %11 = vector.multi_reduction <maximumf>, %10, %cst_7 [1] : vector<8x8xf32> to vector<8xf32>
    %cst_8 = arith.constant 0xFF800000 : f32
    %12 = vector.broadcast %cst_8 : f32 to vector<8xf32>
    %13 = arith.maximumf %12, %11 : vector<8xf32>
    %14 = vector.shape_cast %13 : vector<8xf32> to vector<8x1xf32>
    %15 = vector.broadcast %14 : vector<8x1xf32> to vector<8x8xf32>
    %16 = arith.subf %10, %15 : vector<8x8xf32>
    %17 = math.exp %16 : vector<8x8xf32>
    %cst_9 = arith.constant dense<0.000000e+00> : vector<8xf32>
    %18 = vector.multi_reduction <add>, %17, %cst_9 [1] : vector<8x8xf32> to vector<8xf32>
    %19 = vector.shape_cast %18 : vector<8xf32> to vector<8x1xf32>
    %20 = vector.broadcast %19 : vector<8x1xf32> to vector<8x8xf32>
    %21 = arith.divf %17, %20 : vector<8x8xf32>
    %cst_10 = arith.constant dense<0.000000e+00> : vector<8x64xf32>
    %22 = tpu.matmul %21, %1, %cst_10 {dimension_numbers = #tpu.dot_dimension_numbers<[1], [0], [0], [1], [0, 0, 1, 1], [], []>} : vector<8x8xf32>, vector<8x64xf32>, vector<8x64xf32> -> vector<8x64xf32>
    %23 = arith.addf %1, %22 : vector<8x64xf32>
    %c0_11 = arith.constant 0 : index
    %c0_12 = arith.constant 0 : index
    %c0_13 = arith.constant 0 : index
    %24 = vector.load %arg4[%c0_11, %c0_12, %c0_13] : memref<1x8x8xf32, #tpu.memory_space<vmem>>, vector<1x8x8xf32>
    %25 = vector.shape_cast %24 : vector<1x8x8xf32> to vector<8x8xf32>
    %26 = vector.shape_cast %25 : vector<8x8xf32> to vector<8x8x1x1xf32>
    %27 = vector.shape_cast %25 : vector<8x8xf32> to vector<8x8x1xf32>
    %c0_14 = arith.constant 0 : index
    %c0_15 = arith.constant 0 : index
    %c0_16 = arith.constant 0 : index
    %c0_17 = arith.constant 0 : index
    %28 = vector.load %arg3[%c0_14, %c0_15, %c0_16, %c0_17] : memref<1x8x8x64xf32, #tpu.memory_space<vmem>>, vector<1x8x8x64xf32>
    %29 = vector.shape_cast %28 : vector<1x8x8x64xf32> to vector<8x8x64xf32>
    %30 = vector.shape_cast %29 : vector<8x8x64xf32> to vector<64x64xf32>
    %c0_18 = arith.constant 0 : index
    %c0_19 = arith.constant 0 : index
    %31 = vector.load %arg10[%c0_18, %c0_19] : memref<64x192xf32, #tpu.memory_space<vmem>>, vector<64x192xf32>
    %cst_20 = arith.constant dense<0.000000e+00> : vector<64x192xf32>
    %32 = tpu.matmul %30, %31, %cst_20 {dimension_numbers = #tpu.dot_dimension_numbers<[1], [0], [0], [1], [0, 0, 1, 1], [], []>} : vector<64x64xf32>, vector<64x192xf32>, vector<64x192xf32> -> vector<64x192xf32>
    %c0_21 = arith.constant 0 : index
    %c0_22 = arith.constant 0 : index
    %33 = vector.load %arg11[%c0_21, %c0_22] : memref<1x192xf32, #tpu.memory_space<vmem>>, vector<1x192xf32>
    %34 = vector.broadcast %33 : vector<1x192xf32> to vector<64x192xf32>
    %35 = arith.addf %32, %34 : vector<64x192xf32>
    %36 = vector.extract_strided_slice %35 {offsets = [0, 0], sizes = [64, 64], strides = [1, 1]} : vector<64x192xf32> to vector<64x64xf32>
    %37 = vector.shape_cast %36 : vector<64x64xf32> to vector<8x8x64xf32>
    %38 = vector.extract_strided_slice %35 {offsets = [0, 64], sizes = [64, 64], strides = [1, 1]} : vector<64x192xf32> to vector<64x64xf32>
    %39 = vector.shape_cast %38 : vector<64x64xf32> to vector<8x8x64xf32>
    %40 = vector.extract_strided_slice %35 {offsets = [0, 128], sizes = [64, 64], strides = [1, 1]} : vector<64x192xf32> to vector<64x64xf32>
    %41 = vector.shape_cast %40 : vector<64x64xf32> to vector<8x8x64xf32>
    %42 = vector.shape_cast %37 : vector<8x8x64xf32> to vector<8x8x1x64xf32>
    %43 = vector.shape_cast %39 : vector<8x8x64xf32> to vector<8x1x8x64xf32>
    %44 = vector.broadcast %42 : vector<8x8x1x64xf32> to vector<8x8x8x64xf32>
    %45 = vector.broadcast %43 : vector<8x1x8x64xf32> to vector<8x8x8x64xf32>
    %46 = arith.mulf %44, %45 : vector<8x8x8x64xf32>
    %47 = vector.shape_cast %46 : vector<8x8x8x64xf32> to vector<512x64xf32>
    %c0_23 = arith.constant 0 : index
    %c0_24 = arith.constant 0 : index
    %48 = vector.load %arg5[%c0_23, %c0_24] : memref<64x4xf32, #tpu.memory_space<vmem>>, vector<64x4xf32>
    %cst_25 = arith.constant dense<0.000000e+00> : vector<512x4xf32>
    %49 = tpu.matmul %47, %48, %cst_25 {dimension_numbers = #tpu.dot_dimension_numbers<[1], [0], [0], [1], [0, 0, 1, 1], [], []>} : vector<512x64xf32>, vector<64x4xf32>, vector<512x4xf32> -> vector<512x4xf32>
    %50 = vector.shape_cast %49 : vector<512x4xf32> to vector<8x8x8x4xf32>
    %cst_26 = arith.constant 0.000000e+00 : f32
    %51 = vector.broadcast %cst_26 : f32 to vector<8x8x1x1xf32>
    %52 = arith.cmpf oeq, %26, %51 : vector<8x8x1x1xf32>
    %cst_27 = arith.constant -1.000000e+04 : f32
    %53 = vector.shape_cast %52 : vector<8x8x1x1xi1> to vector<8x8x1x1xi1>
    %54 = vector.broadcast %53 : vector<8x8x1x1xi1> to vector<8x8x8x4xi1>
    %55 = vector.broadcast %cst_27 : f32 to vector<8x8x8x4xf32>
    %56 = arith.select %54, %55, %50 : vector<8x8x8x4xi1>, vector<8x8x8x4xf32>
    %cst_28 = arith.constant dense<0xFF800000> : vector<8x8x4xf32>
    %57 = vector.multi_reduction <maximumf>, %56, %cst_28 [2] : vector<8x8x8x4xf32> to vector<8x8x4xf32>
    %58 = vector.shape_cast %57 : vector<8x8x4xf32> to vector<8x8x1x4xf32>
    %59 = vector.broadcast %58 : vector<8x8x1x4xf32> to vector<8x8x8x4xf32>
    %60 = arith.subf %56, %59 : vector<8x8x8x4xf32>
    %61 = math.exp %60 : vector<8x8x8x4xf32>
    %cst_29 = arith.constant dense<0.000000e+00> : vector<8x8x4xf32>
    %62 = vector.multi_reduction <add>, %61, %cst_29 [2] : vector<8x8x8x4xf32> to vector<8x8x4xf32>
    %63 = vector.shape_cast %62 : vector<8x8x4xf32> to vector<8x8x1x4xf32>
    %64 = vector.broadcast %63 : vector<8x8x1x4xf32> to vector<8x8x8x4xf32>
    %65 = arith.divf %61, %64 : vector<8x8x8x4xf32>
    %cst_30 = arith.constant 2.500000e-01 : f32
    %66 = vector.broadcast %cst_30 : f32 to vector<8x8x8x4xf32>
    %67 = arith.mulf %65, %66 : vector<8x8x8x4xf32>
    %68 = vector.shape_cast %67 : vector<8x8x8x4xf32> to vector<512x4xf32>
    %c0_31 = arith.constant 0 : index
    %c0_32 = arith.constant 0 : index
    %69 = vector.load %arg6[%c0_31, %c0_32] : memref<4x64xf32, #tpu.memory_space<vmem>>, vector<4x64xf32>
    %cst_33 = arith.constant dense<0.000000e+00> : vector<512x64xf32>
    %70 = tpu.matmul %68, %69, %cst_33 {dimension_numbers = #tpu.dot_dimension_numbers<[1], [0], [0], [1], [0, 0, 1, 1], [], []>} : vector<512x4xf32>, vector<4x64xf32>, vector<512x64xf32> -> vector<512x64xf32>
    %71 = vector.shape_cast %70 : vector<512x64xf32> to vector<8x8x8x64xf32>
    %72 = vector.shape_cast %41 : vector<8x8x64xf32> to vector<8x1x8x64xf32>
    %73 = vector.broadcast %72 : vector<8x1x8x64xf32> to vector<8x8x8x64xf32>
    %74 = arith.mulf %71, %73 : vector<8x8x8x64xf32>
    %cst_34 = arith.constant dense<0.000000e+00> : vector<8x8x64xf32>
    %75 = vector.multi_reduction <add>, %74, %cst_34 [2] : vector<8x8x8x64xf32> to vector<8x8x64xf32>
    %76 = vector.shape_cast %75 : vector<8x8x64xf32> to vector<64x64xf32>
    %c0_35 = arith.constant 0 : index
    %c0_36 = arith.constant 0 : index
    %77 = vector.load %arg9[%c0_35, %c0_36] : memref<64x64xf32, #tpu.memory_space<vmem>>, vector<64x64xf32>
    %cst_37 = arith.constant dense<0.000000e+00> : vector<64x64xf32>
    %78 = tpu.matmul %77, %76, %cst_37 {dimension_numbers = #tpu.dot_dimension_numbers<[1], [0], [0], [1], [0, 0, 1, 1], [], []>} : vector<64x64xf32>, vector<64x64xf32>, vector<64x64xf32> -> vector<64x64xf32>
    %c0_38 = arith.constant 0 : index
    %c0_39 = arith.constant 0 : index
    %79 = vector.load %arg12[%c0_38, %c0_39] : memref<64x1xf32, #tpu.memory_space<vmem>>, vector<64x1xf32>
    %cst_40 = arith.constant dense<0.000000e+00> : vector<64x1xf32>
    %80 = tpu.matmul %76, %79, %cst_40 {dimension_numbers = #tpu.dot_dimension_numbers<[1], [0], [0], [1], [0, 0, 1, 1], [], []>} : vector<64x64xf32>, vector<64x1xf32>, vector<64x1xf32> -> vector<64x1xf32>
    %c0_41 = arith.constant 0 : index
    %c0_42 = arith.constant 0 : index
    %81 = vector.load %arg13[%c0_41, %c0_42] : memref<64x1xf32, #tpu.memory_space<vmem>>, vector<64x1xf32>
    %cst_43 = arith.constant dense<0.000000e+00> : vector<64x1xf32>
    %82 = tpu.matmul %78, %81, %cst_43 {dimension_numbers = #tpu.dot_dimension_numbers<[1], [0], [0], [1], [0, 0, 1, 1], [], []>} : vector<64x64xf32>, vector<64x1xf32>, vector<64x1xf32> -> vector<64x1xf32>
    %83 = arith.addf %80, %82 : vector<64x1xf32>
    %c0_44 = arith.constant 0 : index
    %c0_45 = arith.constant 0 : index
    %84 = vector.load %arg14[%c0_44, %c0_45] : memref<1x1xf32, #tpu.memory_space<vmem>>, vector<1x1xf32>
    %85 = vector.broadcast %84 : vector<1x1xf32> to vector<64x1xf32>
    %86 = arith.addf %83, %85 : vector<64x1xf32>
    %87 = arith.negf %86 : vector<64x1xf32>
    %88 = math.exp %87 : vector<64x1xf32>
    %cst_46 = arith.constant 1.000000e+00 : f32
    %89 = vector.broadcast %cst_46 : f32 to vector<64x1xf32>
    %90 = arith.addf %89, %88 : vector<64x1xf32>
    %91 = arith.divf %89, %90 : vector<64x1xf32>
    %cst_47 = arith.constant 1.000000e+00 : f32
    %92 = vector.broadcast %cst_47 : f32 to vector<64x1xf32>
    %93 = arith.subf %92, %91 : vector<64x1xf32>
    %94 = vector.broadcast %93 : vector<64x1xf32> to vector<64x64xf32>
    %95 = arith.mulf %94, %76 : vector<64x64xf32>
    %96 = vector.broadcast %91 : vector<64x1xf32> to vector<64x64xf32>
    %97 = arith.mulf %96, %78 : vector<64x64xf32>
    %98 = arith.addf %95, %97 : vector<64x64xf32>
    %c0_48 = arith.constant 0 : index
    %c0_49 = arith.constant 0 : index
    %99 = vector.load %arg7[%c0_48, %c0_49] : memref<64x4xf32, #tpu.memory_space<vmem>>, vector<64x4xf32>
    %c0_50 = arith.constant 0 : index
    %c0_51 = arith.constant 0 : index
    %100 = vector.load %arg8[%c0_50, %c0_51] : memref<4x64xf32, #tpu.memory_space<vmem>>, vector<4x64xf32>
    %c0_52 = arith.constant 0 : index
    %c0_53 = arith.constant 0 : index
    %c0_54 = arith.constant 0 : index
    %101 = vector.load %arg15[%c0_52, %c0_53, %c0_54] : memref<2x64x192xf32, #tpu.memory_space<vmem>>, vector<1x64x192xf32>
    %102 = vector.shape_cast %101 : vector<1x64x192xf32> to vector<64x192xf32>
    %cst_55 = arith.constant dense<0.000000e+00> : vector<8x192xf32>
    %103 = tpu.matmul %23, %102, %cst_55 {dimension_numbers = #tpu.dot_dimension_numbers<[1], [0], [0], [1], [0, 0, 1, 1], [], []>} : vector<8x64xf32>, vector<64x192xf32>, vector<8x192xf32> -> vector<8x192xf32>
    %c0_56 = arith.constant 0 : index
    %c0_57 = arith.constant 0 : index
    %c0_58 = arith.constant 0 : index
    %104 = vector.load %arg16[%c0_56, %c0_57, %c0_58] : memref<2x1x192xf32, #tpu.memory_space<vmem>>, vector<1x1x192xf32>
    %105 = vector.shape_cast %104 : vector<1x1x192xf32> to vector<1x192xf32>
    %106 = vector.broadcast %105 : vector<1x192xf32> to vector<8x192xf32>
    %107 = arith.addf %103, %106 : vector<8x192xf32>
    %108 = vector.extract_strided_slice %107 {offsets = [0, 0], sizes = [8, 64], strides = [1, 1]} : vector<8x192xf32> to vector<8x64xf32>
    %109 = vector.extract_strided_slice %107 {offsets = [0, 64], sizes = [8, 64], strides = [1, 1]} : vector<8x192xf32> to vector<8x64xf32>
    %110 = vector.extract_strided_slice %107 {offsets = [0, 128], sizes = [8, 64], strides = [1, 1]} : vector<8x192xf32> to vector<8x64xf32>
    %c0_59 = arith.constant 0 : index
    %c0_60 = arith.constant 0 : index
    %c0_61 = arith.constant 0 : index
    %111 = vector.load %arg17[%c0_59, %c0_60, %c0_61] : memref<2x64x128xf32, #tpu.memory_space<vmem>>, vector<1x64x128xf32>
    %112 = vector.shape_cast %111 : vector<1x64x128xf32> to vector<64x128xf32>
    %cst_62 = arith.constant dense<0.000000e+00> : vector<64x128xf32>
    %113 = tpu.matmul %98, %112, %cst_62 {dimension_numbers = #tpu.dot_dimension_numbers<[1], [0], [0], [1], [0, 0, 1, 1], [], []>} : vector<64x64xf32>, vector<64x128xf32>, vector<64x128xf32> -> vector<64x128xf32>
    %c0_63 = arith.constant 0 : index
    %c0_64 = arith.constant 0 : index
    %c0_65 = arith.constant 0 : index
    %114 = vector.load %arg18[%c0_63, %c0_64, %c0_65] : memref<2x1x128xf32, #tpu.memory_space<vmem>>, vector<1x1x128xf32>
    %115 = vector.shape_cast %114 : vector<1x1x128xf32> to vector<1x128xf32>
    %116 = vector.broadcast %115 : vector<1x128xf32> to vector<64x128xf32>
    %117 = arith.addf %113, %116 : vector<64x128xf32>
    %118 = vector.extract_strided_slice %117 {offsets = [0, 0], sizes = [64, 64], strides = [1, 1]} : vector<64x128xf32> to vector<64x64xf32>
    %119 = vector.shape_cast %118 : vector<64x64xf32> to vector<8x8x64xf32>
    %120 = vector.extract_strided_slice %117 {offsets = [0, 64], sizes = [64, 64], strides = [1, 1]} : vector<64x128xf32> to vector<64x64xf32>
    %121 = vector.shape_cast %120 : vector<64x64xf32> to vector<8x8x64xf32>
    %122 = vector.shape_cast %109 : vector<8x64xf32> to vector<1x8x64xf32>
    %cst_66 = arith.constant 5.000000e-01 : f32
    %123 = vector.broadcast %cst_66 : f32 to vector<8x8x64xf32>
    %124 = arith.mulf %123, %119 : vector<8x8x64xf32>
    %125 = vector.broadcast %122 : vector<1x8x64xf32> to vector<8x8x64xf32>
    %126 = arith.addf %125, %124 : vector<8x8x64xf32>
    %127 = vector.shape_cast %110 : vector<8x64xf32> to vector<1x8x64xf32>
    %cst_67 = arith.constant 5.000000e-01 : f32
    %128 = vector.broadcast %cst_67 : f32 to vector<8x8x64xf32>
    %129 = arith.mulf %128, %121 : vector<8x8x64xf32>
    %130 = vector.broadcast %127 : vector<1x8x64xf32> to vector<8x8x64xf32>
    %131 = arith.addf %130, %129 : vector<8x8x64xf32>
    %132 = vector.shape_cast %108 : vector<8x64xf32> to vector<8x1x64xf32>
    %133 = vector.broadcast %132 : vector<8x1x64xf32> to vector<8x8x64xf32>
    %134 = arith.mulf %133, %126 : vector<8x8x64xf32>
    %135 = vector.shape_cast %134 : vector<8x8x64xf32> to vector<64x64xf32>
    %cst_68 = arith.constant dense<0.000000e+00> : vector<64x4xf32>
    %136 = tpu.matmul %135, %99, %cst_68 {dimension_numbers = #tpu.dot_dimension_numbers<[1], [0], [0], [1], [0, 0, 1, 1], [], []>} : vector<64x64xf32>, vector<64x4xf32>, vector<64x4xf32> -> vector<64x4xf32>
    %137 = vector.shape_cast %136 : vector<64x4xf32> to vector<8x8x4xf32>
    %cst_69 = arith.constant 2.500000e-01 : f32
    %138 = vector.broadcast %cst_69 : f32 to vector<8x8x4xf32>
    %139 = arith.mulf %137, %138 : vector<8x8x4xf32>
    %cst_70 = arith.constant 0.000000e+00 : f32
    %140 = vector.broadcast %cst_70 : f32 to vector<8x8x1xf32>
    %141 = arith.cmpf oeq, %27, %140 : vector<8x8x1xf32>
    %cst_71 = arith.constant -1.000000e+04 : f32
    %142 = vector.shape_cast %141 : vector<8x8x1xi1> to vector<8x8x1xi1>
    %143 = vector.broadcast %142 : vector<8x8x1xi1> to vector<8x8x4xi1>
    %144 = vector.broadcast %cst_71 : f32 to vector<8x8x4xf32>
    %145 = arith.select %143, %144, %139 : vector<8x8x4xi1>, vector<8x8x4xf32>
    %cst_72 = arith.constant dense<0xFF800000> : vector<8x4xf32>
    %146 = vector.multi_reduction <maximumf>, %145, %cst_72 [1] : vector<8x8x4xf32> to vector<8x4xf32>
    %147 = vector.shape_cast %146 : vector<8x4xf32> to vector<8x1x4xf32>
    %148 = vector.broadcast %147 : vector<8x1x4xf32> to vector<8x8x4xf32>
    %149 = arith.subf %145, %148 : vector<8x8x4xf32>
    %150 = math.exp %149 : vector<8x8x4xf32>
    %cst_73 = arith.constant dense<0.000000e+00> : vector<8x4xf32>
    %151 = vector.multi_reduction <add>, %150, %cst_73 [1] : vector<8x8x4xf32> to vector<8x4xf32>
    %152 = vector.shape_cast %151 : vector<8x4xf32> to vector<8x1x4xf32>
    %153 = vector.broadcast %152 : vector<8x1x4xf32> to vector<8x8x4xf32>
    %154 = arith.divf %150, %153 : vector<8x8x4xf32>
    %155 = vector.shape_cast %154 : vector<8x8x4xf32> to vector<64x4xf32>
    %cst_74 = arith.constant dense<0.000000e+00> : vector<64x64xf32>
    %156 = tpu.matmul %155, %100, %cst_74 {dimension_numbers = #tpu.dot_dimension_numbers<[1], [0], [0], [1], [0, 0, 1, 1], [], []>} : vector<64x4xf32>, vector<4x64xf32>, vector<64x64xf32> -> vector<64x64xf32>
    %157 = vector.shape_cast %156 : vector<64x64xf32> to vector<8x8x64xf32>
    %158 = arith.mulf %157, %131 : vector<8x8x64xf32>
    %cst_75 = arith.constant dense<0.000000e+00> : vector<8x64xf32>
    %159 = vector.multi_reduction <add>, %158, %cst_75 [1] : vector<8x8x64xf32> to vector<8x64xf32>
    %160 = arith.addf %23, %159 : vector<8x64xf32>
    %cst_76 = arith.constant dense<0.000000e+00> : vector<8xf32>
    %161 = vector.multi_reduction <add>, %160, %cst_76 [1] : vector<8x64xf32> to vector<8xf32>
    %162 = vector.shape_cast %161 : vector<8xf32> to vector<8x1xf32>
    %cst_77 = arith.constant 6.400000e+01 : f32
    %163 = vector.broadcast %cst_77 : f32 to vector<8x1xf32>
    %164 = arith.divf %162, %163 : vector<8x1xf32>
    %165 = vector.broadcast %164 : vector<8x1xf32> to vector<8x64xf32>
    %166 = arith.subf %160, %165 : vector<8x64xf32>
    %167 = arith.mulf %166, %166 : vector<8x64xf32>
    %cst_78 = arith.constant dense<0.000000e+00> : vector<8xf32>
    %168 = vector.multi_reduction <add>, %167, %cst_78 [1] : vector<8x64xf32> to vector<8xf32>
    %169 = vector.shape_cast %168 : vector<8xf32> to vector<8x1xf32>
    %cst_79 = arith.constant 6.400000e+01 : f32
    %170 = vector.broadcast %cst_79 : f32 to vector<8x1xf32>
    %171 = arith.divf %169, %170 : vector<8x1xf32>
    %172 = vector.broadcast %164 : vector<8x1xf32> to vector<8x64xf32>
    %173 = arith.subf %160, %172 : vector<8x64xf32>
    %cst_80 = arith.constant 9.99999974E-6 : f32
    %174 = vector.broadcast %cst_80 : f32 to vector<8x1xf32>
    %175 = arith.addf %171, %174 : vector<8x1xf32>
    %176 = math.rsqrt %175 : vector<8x1xf32>
    %177 = vector.broadcast %176 : vector<8x1xf32> to vector<8x64xf32>
    %178 = arith.mulf %173, %177 : vector<8x64xf32>
    %c0_81 = arith.constant 0 : index
    %c0_82 = arith.constant 0 : index
    %c0_83 = arith.constant 0 : index
    %179 = vector.load %arg19[%c0_81, %c0_82, %c0_83] : memref<2x1x64xf32, #tpu.memory_space<vmem>>, vector<1x1x64xf32>
    %180 = vector.shape_cast %179 : vector<1x1x64xf32> to vector<1x64xf32>
    %181 = vector.broadcast %180 : vector<1x64xf32> to vector<8x64xf32>
    %182 = arith.mulf %178, %181 : vector<8x64xf32>
    %c0_84 = arith.constant 0 : index
    %c0_85 = arith.constant 0 : index
    %c0_86 = arith.constant 0 : index
    %183 = vector.load %arg20[%c0_84, %c0_85, %c0_86] : memref<2x1x64xf32, #tpu.memory_space<vmem>>, vector<1x1x64xf32>
    %184 = vector.shape_cast %183 : vector<1x1x64xf32> to vector<1x64xf32>
    %185 = vector.broadcast %184 : vector<1x64xf32> to vector<8x64xf32>
    %186 = arith.addf %182, %185 : vector<8x64xf32>
    %c1 = arith.constant 1 : index
    %c0_87 = arith.constant 0 : index
    %c0_88 = arith.constant 0 : index
    %187 = vector.load %arg15[%c1, %c0_87, %c0_88] : memref<2x64x192xf32, #tpu.memory_space<vmem>>, vector<1x64x192xf32>
    %188 = vector.shape_cast %187 : vector<1x64x192xf32> to vector<64x192xf32>
    %cst_89 = arith.constant dense<0.000000e+00> : vector<8x192xf32>
    %189 = tpu.matmul %186, %188, %cst_89 {dimension_numbers = #tpu.dot_dimension_numbers<[1], [0], [0], [1], [0, 0, 1, 1], [], []>} : vector<8x64xf32>, vector<64x192xf32>, vector<8x192xf32> -> vector<8x192xf32>
    %c1_90 = arith.constant 1 : index
    %c0_91 = arith.constant 0 : index
    %c0_92 = arith.constant 0 : index
    %190 = vector.load %arg16[%c1_90, %c0_91, %c0_92] : memref<2x1x192xf32, #tpu.memory_space<vmem>>, vector<1x1x192xf32>
    %191 = vector.shape_cast %190 : vector<1x1x192xf32> to vector<1x192xf32>
    %192 = vector.broadcast %191 : vector<1x192xf32> to vector<8x192xf32>
    %193 = arith.addf %189, %192 : vector<8x192xf32>
    %194 = vector.extract_strided_slice %193 {offsets = [0, 0], sizes = [8, 64], strides = [1, 1]} : vector<8x192xf32> to vector<8x64xf32>
    %195 = vector.extract_strided_slice %193 {offsets = [0, 64], sizes = [8, 64], strides = [1, 1]} : vector<8x192xf32> to vector<8x64xf32>
    %196 = vector.extract_strided_slice %193 {offsets = [0, 128], sizes = [8, 64], strides = [1, 1]} : vector<8x192xf32> to vector<8x64xf32>
    %c1_93 = arith.constant 1 : index
    %c0_94 = arith.constant 0 : index
    %c0_95 = arith.constant 0 : index
    %197 = vector.load %arg17[%c1_93, %c0_94, %c0_95] : memref<2x64x128xf32, #tpu.memory_space<vmem>>, vector<1x64x128xf32>
    %198 = vector.shape_cast %197 : vector<1x64x128xf32> to vector<64x128xf32>
    %cst_96 = arith.constant dense<0.000000e+00> : vector<64x128xf32>
    %199 = tpu.matmul %98, %198, %cst_96 {dimension_numbers = #tpu.dot_dimension_numbers<[1], [0], [0], [1], [0, 0, 1, 1], [], []>} : vector<64x64xf32>, vector<64x128xf32>, vector<64x128xf32> -> vector<64x128xf32>
    %c1_97 = arith.constant 1 : index
    %c0_98 = arith.constant 0 : index
    %c0_99 = arith.constant 0 : index
    %200 = vector.load %arg18[%c1_97, %c0_98, %c0_99] : memref<2x1x128xf32, #tpu.memory_space<vmem>>, vector<1x1x128xf32>
    %201 = vector.shape_cast %200 : vector<1x1x128xf32> to vector<1x128xf32>
    %202 = vector.broadcast %201 : vector<1x128xf32> to vector<64x128xf32>
    %203 = arith.addf %199, %202 : vector<64x128xf32>
    %204 = vector.extract_strided_slice %203 {offsets = [0, 0], sizes = [64, 64], strides = [1, 1]} : vector<64x128xf32> to vector<64x64xf32>
    %205 = vector.shape_cast %204 : vector<64x64xf32> to vector<8x8x64xf32>
    %206 = vector.extract_strided_slice %203 {offsets = [0, 64], sizes = [64, 64], strides = [1, 1]} : vector<64x128xf32> to vector<64x64xf32>
    %207 = vector.shape_cast %206 : vector<64x64xf32> to vector<8x8x64xf32>
    %208 = vector.shape_cast %195 : vector<8x64xf32> to vector<1x8x64xf32>
    %cst_100 = arith.constant 5.000000e-01 : f32
    %209 = vector.broadcast %cst_100 : f32 to vector<8x8x64xf32>
    %210 = arith.mulf %209, %205 : vector<8x8x64xf32>
    %211 = vector.broadcast %208 : vector<1x8x64xf32> to vector<8x8x64xf32>
    %212 = arith.addf %211, %210 : vector<8x8x64xf32>
    %213 = vector.shape_cast %196 : vector<8x64xf32> to vector<1x8x64xf32>
    %cst_101 = arith.constant 5.000000e-01 : f32
    %214 = vector.broadcast %cst_101 : f32 to vector<8x8x64xf32>
    %215 = arith.mulf %214, %207 : vector<8x8x64xf32>
    %216 = vector.broadcast %213 : vector<1x8x64xf32> to vector<8x8x64xf32>
    %217 = arith.addf %216, %215 : vector<8x8x64xf32>
    %218 = vector.shape_cast %194 : vector<8x64xf32> to vector<8x1x64xf32>
    %219 = vector.broadcast %218 : vector<8x1x64xf32> to vector<8x8x64xf32>
    %220 = arith.mulf %219, %212 : vector<8x8x64xf32>
    %221 = vector.shape_cast %220 : vector<8x8x64xf32> to vector<64x64xf32>
    %cst_102 = arith.constant dense<0.000000e+00> : vector<64x4xf32>
    %222 = tpu.matmul %221, %99, %cst_102 {dimension_numbers = #tpu.dot_dimension_numbers<[1], [0], [0], [1], [0, 0, 1, 1], [], []>} : vector<64x64xf32>, vector<64x4xf32>, vector<64x4xf32> -> vector<64x4xf32>
    %223 = vector.shape_cast %222 : vector<64x4xf32> to vector<8x8x4xf32>
    %cst_103 = arith.constant 2.500000e-01 : f32
    %224 = vector.broadcast %cst_103 : f32 to vector<8x8x4xf32>
    %225 = arith.mulf %223, %224 : vector<8x8x4xf32>
    %cst_104 = arith.constant 0.000000e+00 : f32
    %226 = vector.broadcast %cst_104 : f32 to vector<8x8x1xf32>
    %227 = arith.cmpf oeq, %27, %226 : vector<8x8x1xf32>
    %cst_105 = arith.constant -1.000000e+04 : f32
    %228 = vector.shape_cast %227 : vector<8x8x1xi1> to vector<8x8x1xi1>
    %229 = vector.broadcast %228 : vector<8x8x1xi1> to vector<8x8x4xi1>
    %230 = vector.broadcast %cst_105 : f32 to vector<8x8x4xf32>
    %231 = arith.select %229, %230, %225 : vector<8x8x4xi1>, vector<8x8x4xf32>
    %cst_106 = arith.constant dense<0xFF800000> : vector<8x4xf32>
    %232 = vector.multi_reduction <maximumf>, %231, %cst_106 [1] : vector<8x8x4xf32> to vector<8x4xf32>
    %233 = vector.shape_cast %232 : vector<8x4xf32> to vector<8x1x4xf32>
    %234 = vector.broadcast %233 : vector<8x1x4xf32> to vector<8x8x4xf32>
    %235 = arith.subf %231, %234 : vector<8x8x4xf32>
    %236 = math.exp %235 : vector<8x8x4xf32>
    %cst_107 = arith.constant dense<0.000000e+00> : vector<8x4xf32>
    %237 = vector.multi_reduction <add>, %236, %cst_107 [1] : vector<8x8x4xf32> to vector<8x4xf32>
    %238 = vector.shape_cast %237 : vector<8x4xf32> to vector<8x1x4xf32>
    %239 = vector.broadcast %238 : vector<8x1x4xf32> to vector<8x8x4xf32>
    %240 = arith.divf %236, %239 : vector<8x8x4xf32>
    %241 = vector.shape_cast %240 : vector<8x8x4xf32> to vector<64x4xf32>
    %cst_108 = arith.constant dense<0.000000e+00> : vector<64x64xf32>
    %242 = tpu.matmul %241, %100, %cst_108 {dimension_numbers = #tpu.dot_dimension_numbers<[1], [0], [0], [1], [0, 0, 1, 1], [], []>} : vector<64x4xf32>, vector<4x64xf32>, vector<64x64xf32> -> vector<64x64xf32>
    %243 = vector.shape_cast %242 : vector<64x64xf32> to vector<8x8x64xf32>
    %244 = arith.mulf %243, %217 : vector<8x8x64xf32>
    %cst_109 = arith.constant dense<0.000000e+00> : vector<8x64xf32>
    %245 = vector.multi_reduction <add>, %244, %cst_109 [1] : vector<8x8x64xf32> to vector<8x64xf32>
    %246 = arith.addf %186, %245 : vector<8x64xf32>
    %cst_110 = arith.constant dense<0.000000e+00> : vector<8xf32>
    %247 = vector.multi_reduction <add>, %246, %cst_110 [1] : vector<8x64xf32> to vector<8xf32>
    %248 = vector.shape_cast %247 : vector<8xf32> to vector<8x1xf32>
    %cst_111 = arith.constant 6.400000e+01 : f32
    %249 = vector.broadcast %cst_111 : f32 to vector<8x1xf32>
    %250 = arith.divf %248, %249 : vector<8x1xf32>
    %251 = vector.broadcast %250 : vector<8x1xf32> to vector<8x64xf32>
    %252 = arith.subf %246, %251 : vector<8x64xf32>
    %253 = arith.mulf %252, %252 : vector<8x64xf32>
    %cst_112 = arith.constant dense<0.000000e+00> : vector<8xf32>
    %254 = vector.multi_reduction <add>, %253, %cst_112 [1] : vector<8x64xf32> to vector<8xf32>
    %255 = vector.shape_cast %254 : vector<8xf32> to vector<8x1xf32>
    %cst_113 = arith.constant 6.400000e+01 : f32
    %256 = vector.broadcast %cst_113 : f32 to vector<8x1xf32>
    %257 = arith.divf %255, %256 : vector<8x1xf32>
    %258 = vector.broadcast %250 : vector<8x1xf32> to vector<8x64xf32>
    %259 = arith.subf %246, %258 : vector<8x64xf32>
    %cst_114 = arith.constant 9.99999974E-6 : f32
    %260 = vector.broadcast %cst_114 : f32 to vector<8x1xf32>
    %261 = arith.addf %257, %260 : vector<8x1xf32>
    %262 = math.rsqrt %261 : vector<8x1xf32>
    %263 = vector.broadcast %262 : vector<8x1xf32> to vector<8x64xf32>
    %264 = arith.mulf %259, %263 : vector<8x64xf32>
    %c1_115 = arith.constant 1 : index
    %c0_116 = arith.constant 0 : index
    %c0_117 = arith.constant 0 : index
    %265 = vector.load %arg19[%c1_115, %c0_116, %c0_117] : memref<2x1x64xf32, #tpu.memory_space<vmem>>, vector<1x1x64xf32>
    %266 = vector.shape_cast %265 : vector<1x1x64xf32> to vector<1x64xf32>
    %267 = vector.broadcast %266 : vector<1x64xf32> to vector<8x64xf32>
    %268 = arith.mulf %264, %267 : vector<8x64xf32>
    %c1_118 = arith.constant 1 : index
    %c0_119 = arith.constant 0 : index
    %c0_120 = arith.constant 0 : index
    %269 = vector.load %arg20[%c1_118, %c0_119, %c0_120] : memref<2x1x64xf32, #tpu.memory_space<vmem>>, vector<1x1x64xf32>
    %270 = vector.shape_cast %269 : vector<1x1x64xf32> to vector<1x64xf32>
    %271 = vector.broadcast %270 : vector<1x64xf32> to vector<8x64xf32>
    %272 = arith.addf %268, %271 : vector<8x64xf32>
    %c0_121 = arith.constant 0 : index
    %c0_122 = arith.constant 0 : index
    %c0_123 = arith.constant 0 : index
    %273 = vector.load %arg21[%c0_121, %c0_122, %c0_123] : memref<1x8x64xf32, #tpu.memory_space<vmem>>, vector<1x8x64xf32>
    %274 = vector.shape_cast %273 : vector<1x8x64xf32> to vector<8x64xf32>
    %275 = vector.shape_cast %272 : vector<8x64xf32> to vector<1x8x64xf32>
    tpu.vector_store %arg21[%c0_121, %c0_122, %c0_123], %275 {strides = array<i32>} : memref<1x8x64xf32, #tpu.memory_space<vmem>>, vector<1x8x64xf32>,
    return
  }
  func.func @transform_0(%arg0: i32) -> (i32, i32, i32) {
    %c0_i32 = arith.constant 0 : i32
    %c0_i32_0 = arith.constant 0 : i32
    %c0_i32_1 = arith.constant 0 : i32
    return %arg0, %c0_i32, %c0_i32_0 : i32, i32, i32
  }
  func.func @transform_1(%arg0: i32) -> (i32, i32, i32) {
    %c0_i32 = arith.constant 0 : i32
    %c0_i32_0 = arith.constant 0 : i32
    %c0_i32_1 = arith.constant 0 : i32
    return %arg0, %c0_i32, %c0_i32_0 : i32, i32, i32
  }
  func.func @transform_2(%arg0: i32) -> (i32, i32, i32, i32) {
    %c0_i32 = arith.constant 0 : i32
    %c0_i32_0 = arith.constant 0 : i32
    %c0_i32_1 = arith.constant 0 : i32
    %c0_i32_2 = arith.constant 0 : i32
    return %arg0, %c0_i32, %c0_i32_0, %c0_i32_1 : i32, i32, i32, i32
  }
  func.func @transform_3(%arg0: i32) -> (i32, i32, i32) {
    %c0_i32 = arith.constant 0 : i32
    %c0_i32_0 = arith.constant 0 : i32
    %c0_i32_1 = arith.constant 0 : i32
    return %arg0, %c0_i32, %c0_i32_0 : i32, i32, i32
  }
  func.func @transform_4(%arg0: i32) -> (i32, i32) {
    %c0_i32 = arith.constant 0 : i32
    %c0_i32_0 = arith.constant 0 : i32
    %c0_i32_1 = arith.constant 0 : i32
    return %c0_i32, %c0_i32_0 : i32, i32
  }
  func.func @transform_5(%arg0: i32) -> (i32, i32) {
    %c0_i32 = arith.constant 0 : i32
    %c0_i32_0 = arith.constant 0 : i32
    %c0_i32_1 = arith.constant 0 : i32
    return %c0_i32, %c0_i32_0 : i32, i32
  }
  func.func @transform_6(%arg0: i32) -> (i32, i32) {
    %c0_i32 = arith.constant 0 : i32
    %c0_i32_0 = arith.constant 0 : i32
    %c0_i32_1 = arith.constant 0 : i32
    return %c0_i32, %c0_i32_0 : i32, i32
  }
  func.func @transform_7(%arg0: i32) -> (i32, i32) {
    %c0_i32 = arith.constant 0 : i32
    %c0_i32_0 = arith.constant 0 : i32
    %c0_i32_1 = arith.constant 0 : i32
    return %c0_i32, %c0_i32_0 : i32, i32
  }
  func.func @transform_8(%arg0: i32) -> (i32, i32) {
    %c0_i32 = arith.constant 0 : i32
    %c0_i32_0 = arith.constant 0 : i32
    %c0_i32_1 = arith.constant 0 : i32
    return %c0_i32, %c0_i32_0 : i32, i32
  }
  func.func @transform_9(%arg0: i32) -> (i32, i32) {
    %c0_i32 = arith.constant 0 : i32
    %c0_i32_0 = arith.constant 0 : i32
    %c0_i32_1 = arith.constant 0 : i32
    return %c0_i32, %c0_i32_0 : i32, i32
  }
  func.func @transform_10(%arg0: i32) -> (i32, i32) {
    %c0_i32 = arith.constant 0 : i32
    %c0_i32_0 = arith.constant 0 : i32
    %c0_i32_1 = arith.constant 0 : i32
    return %c0_i32, %c0_i32_0 : i32, i32
  }
  func.func @transform_11(%arg0: i32) -> (i32, i32) {
    %c0_i32 = arith.constant 0 : i32
    %c0_i32_0 = arith.constant 0 : i32
    %c0_i32_1 = arith.constant 0 : i32
    return %c0_i32, %c0_i32_0 : i32, i32
  }
  func.func @transform_12(%arg0: i32) -> (i32, i32) {
    %c0_i32 = arith.constant 0 : i32
    %c0_i32_0 = arith.constant 0 : i32
    %c0_i32_1 = arith.constant 0 : i32
    return %c0_i32, %c0_i32_0 : i32, i32
  }
  func.func @transform_13(%arg0: i32) -> (i32, i32) {
    %c0_i32 = arith.constant 0 : i32
    %c0_i32_0 = arith.constant 0 : i32
    %c0_i32_1 = arith.constant 0 : i32
    return %c0_i32, %c0_i32_0 : i32, i32
  }
  func.func @transform_14(%arg0: i32) -> (i32, i32, i32) {
    %c0_i32 = arith.constant 0 : i32
    %c0_i32_0 = arith.constant 0 : i32
    %c0_i32_1 = arith.constant 0 : i32
    %c0_i32_2 = arith.constant 0 : i32
    return %c0_i32, %c0_i32_0, %c0_i32_1 : i32, i32, i32
  }
  func.func @transform_15(%arg0: i32) -> (i32, i32, i32) {
    %c0_i32 = arith.constant 0 : i32
    %c0_i32_0 = arith.constant 0 : i32
    %c0_i32_1 = arith.constant 0 : i32
    %c0_i32_2 = arith.constant 0 : i32
    return %c0_i32, %c0_i32_0, %c0_i32_1 : i32, i32, i32
  }
  func.func @transform_16(%arg0: i32) -> (i32, i32, i32) {
    %c0_i32 = arith.constant 0 : i32
    %c0_i32_0 = arith.constant 0 : i32
    %c0_i32_1 = arith.constant 0 : i32
    %c0_i32_2 = arith.constant 0 : i32
    return %c0_i32, %c0_i32_0, %c0_i32_1 : i32, i32, i32
  }
  func.func @transform_17(%arg0: i32) -> (i32, i32, i32) {
    %c0_i32 = arith.constant 0 : i32
    %c0_i32_0 = arith.constant 0 : i32
    %c0_i32_1 = arith.constant 0 : i32
    %c0_i32_2 = arith.constant 0 : i32
    return %c0_i32, %c0_i32_0, %c0_i32_1 : i32, i32, i32
  }
  func.func @transform_18(%arg0: i32) -> (i32, i32, i32) {
    %c0_i32 = arith.constant 0 : i32
    %c0_i32_0 = arith.constant 0 : i32
    %c0_i32_1 = arith.constant 0 : i32
    %c0_i32_2 = arith.constant 0 : i32
    return %c0_i32, %c0_i32_0, %c0_i32_1 : i32, i32, i32
  }
  func.func @transform_19(%arg0: i32) -> (i32, i32, i32) {
    %c0_i32 = arith.constant 0 : i32
    %c0_i32_0 = arith.constant 0 : i32
    %c0_i32_1 = arith.constant 0 : i32
    %c0_i32_2 = arith.constant 0 : i32
    return %c0_i32, %c0_i32_0, %c0_i32_1 : i32, i32, i32
  }
  func.func @transform_20(%arg0: i32) -> (i32, i32, i32) {
    %c0_i32 = arith.constant 0 : i32
    %c0_i32_0 = arith.constant 0 : i32
    %c0_i32_1 = arith.constant 0 : i32
    return %arg0, %c0_i32, %c0_i32_0 : i32, i32, i32
  }
}

</mosaic_0001>

<llo_original>
// kernel: tpu_custom_call.1
$region0: #{tpu_custom_call.1}
  #allocation0 [shape = 'u32[]', space=smem, size = 0x4, offset = 0x4, fixed_abs, tag = 'smem constant byte address 0x4 - core index']
  #allocation1 [shape = 'u32[144,128]{1,0:T(1,128)}', space=vmem, size = 0x12000, scoped, tag = 'internal scratch']
  #allocation2 [shape = 'f32[1,1]{1,0:T(1,128)S(1)}', space=vmem, size = 0x200, scoped, tag = 'scoped memory for tpu_custom_call.1']
  %s0 = inlined_call_operand.vmem [shape: f32[2,8,64], index: 0, kind: input, shape index: {}]
  %s1 = inlined_call_operand.vmem [shape: f32[2,1,8], index: 1, kind: input, shape index: {}]
  %s2 = inlined_call_operand.hbm [shape: f32[2,8,8,64], index: 2, kind: input, shape index: {}]
  %s3 = inlined_call_operand.vmem [shape: f32[2,8,8], index: 3, kind: input, shape index: {}]
  %s4 = inlined_call_operand.vmem [shape: f32[64,4], index: 4, kind: input, shape index: {}]
  %s5 = inlined_call_operand.vmem [shape: f32[4,64], index: 5, kind: input, shape index: {}]
  %s6 = inlined_call_operand.vmem [shape: f32[64,4], index: 6, kind: input, shape index: {}]
  %s7 = inlined_call_operand.vmem [shape: f32[4,64], index: 7, kind: input, shape index: {}]
  %s8 = inlined_call_operand.hbm [shape: f32[64,64], index: 8, kind: input, shape index: {}]
  %s9 = inlined_call_operand.hbm [shape: f32[64,192], index: 9, kind: input, shape index: {}]
  %s10 = inlined_call_operand.vmem [shape: f32[1,192], index: 10, kind: input, shape index: {}]
  %s11 = inlined_call_operand.vmem [shape: f32[64,1], index: 11, kind: input, shape index: {}]
  %s12 = inlined_call_operand.vmem [shape: f32[64,1], index: 12, kind: input, shape index: {}]
  %s13 = inlined_call_operand.<no memory space> [shape: f32[1,1], index: 13, kind: input, shape index: {}]
  %s14 = inlined_call_operand.vmem [shape: f32[2,64,192], index: 14, kind: input, shape index: {}]
  %s15 = inlined_call_operand.vmem [shape: f32[2,1,192], index: 15, kind: input, shape index: {}]
  %s16 = inlined_call_operand.hbm [shape: f32[2,64,128], index: 16, kind: input, shape index: {}]
  %s17 = inlined_call_operand.vmem [shape: f32[2,1,128], index: 17, kind: input, shape index: {}]
  %s18 = inlined_call_operand.vmem [shape: f32[2,1,64], index: 18, kind: input, shape index: {}]
  %s19 = inlined_call_operand.vmem [shape: f32[2,1,64], index: 19, kind: input, shape index: {}]
  %s20 = inlined_call_operand.hbm [shape: f32[2,8,64], index: 20, kind: output, shape index: {}]
  %s21 = sld [smem:[#allocation0]]
  $region129: #{tpu_custom_call.1} parent=0
    _
  %s23 = ssub.s32 1, %s21
  %s24 = scalar_select 0, %s23, %s21
  %v25 = vstv %s13
  %26 = vst [vmem:[#allocation2] sm:$0x1] %v25
  $region1: #{tpu_custom_call.1} parent=0
    #allocation3 [shape = 'u8[65536]{0}', space=vmem, size = 0x10000, scoped, tag = 'input window, operand 2']
    #allocation4 [shape = 's32[2]{0}', space=sflag, size = 0x8, scoped, tag = 'scoped memory for tpu_custom_call.1']
    #allocation5 [shape = 's32[2]{0}', space=sflag, size = 0x8, scoped, tag = 'scoped memory for tpu_custom_call.1']
    #allocation6 [shape = 'u8[32768]{0}', space=vmem, size = 0x8000, scoped, tag = 'input window, operand 8, single buffered']
    #allocation7 [shape = 's32[1]{0}', space=sflag, size = 0x4, scoped, tag = 'scoped memory for tpu_custom_call.1']
    #allocation8 [shape = 'u8[65536]{0}', space=vmem, size = 0x10000, scoped, tag = 'input window, operand 9, single buffered']
    #allocation9 [shape = 'u8[65536]{0}', space=vmem, size = 0x10000, scoped, tag = 'input window, operand 16, single buffered']
    #allocation10 [shape = 's32[1]{0}', space=sflag, size = 0x4, scoped, tag = 'scoped memory for tpu_custom_call.1']
    #allocation11 [shape = 'u8[8192]{0}', space=vmem, size = 0x2000, scoped, tag = 'output window, operand 0']
    %27 = vsyncpa [#allocation4], 0
    %s28 = scalar_lea.sflag [#allocation4], 1
    %29 = vsyncpa %s28, 0
    %30 = vsyncpa [#allocation7], 0
    %31 = vsyncpa [#allocation10], 0
    %32 = vsyncpa [#allocation5], 0
    %s33 = scalar_lea.sflag [#allocation5], 1
    %34 = vsyncpa %s33, 0
    loop: start=0, step=1, limit=4
    $region2: #{tpu_custom_call.1} parent=1 // loop_pre_header
      _
    $region3: #{tpu_custom_call.1} parent=1 // loop_header
      %s36 = sphi 0, %s40
      %p37 = scmp.ge.s32.totalorder %s36, 4
      %s46 = sphi 0, %s48
      %s49 = sphi 0, %s46
      %s50 = sphi 0, %s49
      %s66 = sphi 0, %s50
      %s72 = sphi 0, %s74
      %s75 = sphi 0, %s72
      %s76 = sphi 0, %s75
      %s92 = sphi 0, %s76
      %s98 = sphi 0, %s100
      %s101 = sphi 0, %s98
      %s102 = sphi 0, %s101
      %s118 = sphi 0, %s102
      %s124 = sphi 0, %s126
      %s127 = sphi 0, %s124
      %s128 = sphi 0, %s127
      %s144 = sphi 0, %s128
      %s148 = sphi 0, %s148
      %s150 = sphi 0, %s148
      %s151 = sphi 0, %s150
      %s165 = sphi 0, %s151
      %s169 = sphi 0, %s169
      %s171 = sphi 0, %s169
      %s172 = sphi 0, %s171
      %s186 = sphi 0, %s172
      %s190 = sphi 0, %s190
      %s192 = sphi 0, %s190
      %s193 = sphi 0, %s192
      %s207 = sphi 0, %s193
      %s211 = sphi 0, %s211
      %s213 = sphi 0, %s211
      %s214 = sphi 0, %s213
      %s228 = sphi 0, %s214
      %s232 = sphi 0, %s232
      %s234 = sphi 0, %s232
      %s235 = sphi 0, %s234
      %s249 = sphi 0, %s235
      %s253 = sphi 0, %s253
      %s255 = sphi 0, %s253
      %s256 = sphi 0, %s255
      %s270 = sphi 0, %s256
      %s274 = sphi 0, %s274
      %s276 = sphi 0, %s274
      %s277 = sphi 0, %s276
      %s291 = sphi 0, %s277
      %s295 = sphi 0, %s295
      %s297 = sphi 0, %s295
      %s298 = sphi 0, %s297
      %s312 = sphi 0, %s298
      %s316 = sphi 0, %s316
      %s318 = sphi 0, %s316
      %s319 = sphi 0, %s318
      %s333 = sphi 0, %s319
      %s337 = sphi 0, %s337
      %s339 = sphi 0, %s337
      %s340 = sphi 0, %s339
      %s354 = sphi 0, %s340
      %s358 = sphi 0, %s358
      %s360 = sphi 0, %s358
      %s361 = sphi 0, %s360
      %s375 = sphi 0, %s361
      %s379 = sphi 0, %s379
      %s381 = sphi 0, %s379
      %s382 = sphi 0, %s381
      %s396 = sphi 0, %s382
      %s400 = sphi 0, %s400
      %s402 = sphi 0, %s400
      %s403 = sphi 0, %s402
      %s417 = sphi 0, %s403
      %s421 = sphi 0, %s421
      %s423 = sphi 0, %s421
      %s424 = sphi 0, %s423
      %s438 = sphi 0, %s424
      %s442 = sphi 0, %s442
      %s444 = sphi 0, %s442
      %s445 = sphi 0, %s444
      %s459 = sphi 0, %s445
      %s463 = sphi 0, %s463
      %s465 = sphi 0, %s463
      %s466 = sphi 0, %s465
      %s480 = sphi 0, %s466
      %s486 = sphi 0, %s488
      %s489 = sphi 0, %s486
      %s490 = sphi 0, %s489
      %s506 = sphi 0, %s490
    $region4: #{tpu_custom_call.1} parent=1 // loop_header_branch
      %39 = sbr.rel (%p37) target = $region8
    $region5: #{tpu_custom_call.1} parent=1 // loop_body
      %s41 = ssub.s32 %s36, 1
      %s42 = ssub.s32 %s36, 2
      %s43 = sadd.s32 %s36, 1
      %s44 = ssub.s32 %s36, %s43
      %p45 = scmp.eq.s32.totalorder %s44, 0
      %s47 = sadd.s32 %s46, 1
      %s48 = scalar_select %p45, %s46, %s47
      %p51 = pneg %p45
      %p52 = scmp.eq.s32.totalorder %s36, 1
      %p53 = por %p51, %p52
      %p54 = scmp.ne.s32.totalorder %s46, %s49
      %p55 = scmp.eq.s32.totalorder %s36, 0
      %p56 = por %p54, %p55
      %p57 = scmp.ne.s32.totalorder %s46, %s49
      %p58 = scmp.eq.s32.totalorder %s41, 1
      %p59 = por %p57, %p58
      %p60 = scmp.ne.s32.totalorder %s49, %s50
      %p61 = scmp.eq.s32.totalorder %s41, 0
      %p62 = por %p60, %p61
      %p63 = scmp.ne.s32.totalorder %s49, %s50
      %p64 = scmp.eq.s32.totalorder %s42, 1
      %p65 = por %p63, %p64
      %p67 = scmp.ne.s32.totalorder %s50, %s66
      %p68 = scmp.eq.s32.totalorder %s42, 0
      %p69 = por %p67, %p68
      %s70 = ssub.s32 %s36, %s43
      %p71 = scmp.eq.s32.totalorder %s70, 0
      %s73 = sadd.s32 %s72, 1
      %s74 = scalar_select %p71, %s72, %s73
      %p77 = pneg %p71
      %p78 = scmp.eq.s32.totalorder %s36, 1
      %p79 = por %p77, %p78
      %p80 = scmp.ne.s32.totalorder %s72, %s75
      %p81 = scmp.eq.s32.totalorder %s36, 0
      %p82 = por %p80, %p81
      %p83 = scmp.ne.s32.totalorder %s72, %s75
      %p84 = scmp.eq.s32.totalorder %s41, 1
      %p85 = por %p83, %p84
      %p86 = scmp.ne.s32.totalorder %s75, %s76
      %p87 = scmp.eq.s32.totalorder %s41, 0
      %p88 = por %p86, %p87
      %p89 = scmp.ne.s32.totalorder %s75, %s76
      %p90 = scmp.eq.s32.totalorder %s42, 1
      %p91 = por %p89, %p90
      %p93 = scmp.ne.s32.totalorder %s76, %s92
      %p94 = scmp.eq.s32.totalorder %s42, 0
      %p95 = por %p93, %p94
      %s96 = ssub.s32 %s36, %s43
      %p97 = scmp.eq.s32.totalorder %s96, 0
      %s99 = sadd.s32 %s98, 1
      %s100 = scalar_select %p97, %s98, %s99
      %p103 = pneg %p97
      %p104 = scmp.eq.s32.totalorder %s36, 1
      %p105 = por %p103, %p104
      %p106 = scmp.ne.s32.totalorder %s98, %s101
      %p107 = scmp.eq.s32.totalorder %s36, 0
      %p108 = por %p106, %p107
      %p109 = scmp.ne.s32.totalorder %s98, %s101
      %p110 = scmp.eq.s32.totalorder %s41, 1
      %p111 = por %p109, %p110
      %p112 = scmp.ne.s32.totalorder %s101, %s102
      %p113 = scmp.eq.s32.totalorder %s41, 0
      %p114 = por %p112, %p113
      %p115 = scmp.ne.s32.totalorder %s101, %s102
      %p116 = scmp.eq.s32.totalorder %s42, 1
      %p117 = por %p115, %p116
      %p119 = scmp.ne.s32.totalorder %s102, %s118
      %p120 = scmp.eq.s32.totalorder %s42, 0
      %p121 = por %p119, %p120
      %s122 = ssub.s32 %s36, %s43
      %p123 = scmp.eq.s32.totalorder %s122, 0
      %s125 = sadd.s32 %s124, 1
      %s126 = scalar_select %p123, %s124, %s125
      %p129 = pneg %p123
      %p130 = scmp.eq.s32.totalorder %s36, 1
      %p131 = por %p129, %p130
      %p132 = scmp.ne.s32.totalorder %s124, %s127
      %p133 = scmp.eq.s32.totalorder %s36, 0
      %p134 = por %p132, %p133
      %p135 = scmp.ne.s32.totalorder %s124, %s127
      %p136 = scmp.eq.s32.totalorder %s41, 1
      %p137 = por %p135, %p136
      %p138 = scmp.ne.s32.totalorder %s127, %s128
      %p139 = scmp.eq.s32.totalorder %s41, 0
      %p140 = por %p138, %p139
      %p141 = scmp.ne.s32.totalorder %s127, %s128
      %p142 = scmp.eq.s32.totalorder %s42, 1
      %p143 = por %p141, %p142
      %p145 = scmp.ne.s32.totalorder %s128, %s144
      %p146 = scmp.eq.s32.totalorder %s42, 0
      %p147 = por %p145, %p146
      %s149 = sadd.s32 %s148, 1
      %p152 = scmp.eq.s32.totalorder %s36, 1
      %p153 = scmp.ne.s32.totalorder %s148, %s150
      %p154 = scmp.eq.s32.totalorder %s36, 0
      %p155 = por %p153, %p154
      %p156 = scmp.ne.s32.totalorder %s148, %s150
      %p157 = scmp.eq.s32.totalorder %s41, 1
      %p158 = por %p156, %p157
      %p159 = scmp.ne.s32.totalorder %s150, %s151
      %p160 = scmp.eq.s32.totalorder %s41, 0
      %p161 = por %p159, %p160
      %p162 = scmp.ne.s32.totalorder %s150, %s151
      %p163 = scmp.eq.s32.totalorder %s42, 1
      %p164 = por %p162, %p163
      %p166 = scmp.ne.s32.totalorder %s151, %s165
      %p167 = scmp.eq.s32.totalorder %s42, 0
      %p168 = por %p166, %p167
      %s170 = sadd.s32 %s169, 1
      %p173 = scmp.eq.s32.totalorder %s36, 1
      %p174 = scmp.ne.s32.totalorder %s169, %s171
      %p175 = scmp.eq.s32.totalorder %s36, 0
      %p176 = por %p174, %p175
      %p177 = scmp.ne.s32.totalorder %s169, %s171
      %p178 = scmp.eq.s32.totalorder %s41, 1
      %p179 = por %p177, %p178
      %p180 = scmp.ne.s32.totalorder %s171, %s172
      %p181 = scmp.eq.s32.totalorder %s41, 0
      %p182 = por %p180, %p181
      %p183 = scmp.ne.s32.totalorder %s171, %s172
      %p184 = scmp.eq.s32.totalorder %s42, 1
      %p185 = por %p183, %p184
      %p187 = scmp.ne.s32.totalorder %s172, %s186
      %p188 = scmp.eq.s32.totalorder %s42, 0
      %p189 = por %p187, %p188
      %s191 = sadd.s32 %s190, 1
      %p194 = scmp.eq.s32.totalorder %s36, 1
      %p195 = scmp.ne.s32.totalorder %s190, %s192
      %p196 = scmp.eq.s32.totalorder %s36, 0
      %p197 = por %p195, %p196
      %p198 = scmp.ne.s32.totalorder %s190, %s192
      %p199 = scmp.eq.s32.totalorder %s41, 1
      %p200 = por %p198, %p199
      %p201 = scmp.ne.s32.totalorder %s192, %s193
      %p202 = scmp.eq.s32.totalorder %s41, 0
      %p203 = por %p201, %p202
      %p204 = scmp.ne.s32.totalorder %s192, %s193
      %p205 = scmp.eq.s32.totalorder %s42, 1
      %p206 = por %p204, %p205
      %p208 = scmp.ne.s32.totalorder %s193, %s207
      %p209 = scmp.eq.s32.totalorder %s42, 0
      %p210 = por %p208, %p209
      %s212 = sadd.s32 %s211, 1
      %p215 = scmp.eq.s32.totalorder %s36, 1
      %p216 = scmp.ne.s32.totalorder %s211, %s213
      %p217 = scmp.eq.s32.totalorder %s36, 0
      %p218 = por %p216, %p217
      %p219 = scmp.ne.s32.totalorder %s211, %s213
      %p220 = scmp.eq.s32.totalorder %s41, 1
      %p221 = por %p219, %p220
      %p222 = scmp.ne.s32.totalorder %s213, %s214
      %p223 = scmp.eq.s32.totalorder %s41, 0
      %p224 = por %p222, %p223
      %p225 = scmp.ne.s32.totalorder %s213, %s214
      %p226 = scmp.eq.s32.totalorder %s42, 1
      %p227 = por %p225, %p226
      %p229 = scmp.ne.s32.totalorder %s214, %s228
      %p230 = scmp.eq.s32.totalorder %s42, 0
      %p231 = por %p229, %p230
      %s233 = sadd.s32 %s232, 1
      %p236 = scmp.eq.s32.totalorder %s36, 1
      %p237 = scmp.ne.s32.totalorder %s232, %s234
      %p238 = scmp.eq.s32.totalorder %s36, 0
      %p239 = por %p237, %p238
      %p240 = scmp.ne.s32.totalorder %s232, %s234
      %p241 = scmp.eq.s32.totalorder %s41, 1
      %p242 = por %p240, %p241
      %p243 = scmp.ne.s32.totalorder %s234, %s235
      %p244 = scmp.eq.s32.totalorder %s41, 0
      %p245 = por %p243, %p244
      %p246 = scmp.ne.s32.totalorder %s234, %s235
      %p247 = scmp.eq.s32.totalorder %s42, 1
      %p248 = por %p246, %p247
      %p250 = scmp.ne.s32.totalorder %s235, %s249
      %p251 = scmp.eq.s32.totalorder %s42, 0
      %p252 = por %p250, %p251
      %s254 = sadd.s32 %s253, 1
      %p257 = scmp.eq.s32.totalorder %s36, 1
      %p258 = scmp.ne.s32.totalorder %s253, %s255
      %p259 = scmp.eq.s32.totalorder %s36, 0
      %p260 = por %p258, %p259
      %p261 = scmp.ne.s32.totalorder %s253, %s255
      %p262 = scmp.eq.s32.totalorder %s41, 1
      %p263 = por %p261, %p262
      %p264 = scmp.ne.s32.totalorder %s255, %s256
      %p265 = scmp.eq.s32.totalorder %s41, 0
      %p266 = por %p264, %p265
      %p267 = scmp.ne.s32.totalorder %s255, %s256
      %p268 = scmp.eq.s32.totalorder %s42, 1
      %p269 = por %p267, %p268
      %p271 = scmp.ne.s32.totalorder %s256, %s270
      %p272 = scmp.eq.s32.totalorder %s42, 0
      %p273 = por %p271, %p272
      %s275 = sadd.s32 %s274, 1
      %p278 = scmp.eq.s32.totalorder %s36, 1
      %p279 = scmp.ne.s32.totalorder %s274, %s276
      %p280 = scmp.eq.s32.totalorder %s36, 0
      %p281 = por %p279, %p280
      %p282 = scmp.ne.s32.totalorder %s274, %s276
      %p283 = scmp.eq.s32.totalorder %s41, 1
      %p284 = por %p282, %p283
      %p285 = scmp.ne.s32.totalorder %s276, %s277
      %p286 = scmp.eq.s32.totalorder %s41, 0
      %p287 = por %p285, %p286
      %p288 = scmp.ne.s32.totalorder %s276, %s277
      %p289 = scmp.eq.s32.totalorder %s42, 1
      %p290 = por %p288, %p289
      %p292 = scmp.ne.s32.totalorder %s277, %s291
      %p293 = scmp.eq.s32.totalorder %s42, 0
      %p294 = por %p292, %p293
      %s296 = sadd.s32 %s295, 1
      %p299 = scmp.eq.s32.totalorder %s36, 1
      %p300 = scmp.ne.s32.totalorder %s295, %s297
      %p301 = scmp.eq.s32.totalorder %s36, 0
      %p302 = por %p300, %p301
      %p303 = scmp.ne.s32.totalorder %s295, %s297
      %p304 = scmp.eq.s32.totalorder %s41, 1
      %p305 = por %p303, %p304
      %p306 = scmp.ne.s32.totalorder %s297, %s298
      %p307 = scmp.eq.s32.totalorder %s41, 0
      %p308 = por %p306, %p307
      %p309 = scmp.ne.s32.totalorder %s297, %s298
      %p310 = scmp.eq.s32.totalorder %s42, 1
      %p311 = por %p309, %p310
      %p313 = scmp.ne.s32.totalorder %s298, %s312
      %p314 = scmp.eq.s32.totalorder %s42, 0
      %p315 = por %p313, %p314
      %s317 = sadd.s32 %s316, 1
      %p320 = scmp.eq.s32.totalorder %s36, 1
      %p321 = scmp.ne.s32.totalorder %s316, %s318
      %p322 = scmp.eq.s32.totalorder %s36, 0
      %p323 = por %p321, %p322
      %p324 = scmp.ne.s32.totalorder %s316, %s318
      %p325 = scmp.eq.s32.totalorder %s41, 1
      %p326 = por %p324, %p325
      %p327 = scmp.ne.s32.totalorder %s318, %s319
      %p328 = scmp.eq.s32.totalorder %s41, 0
      %p329 = por %p327, %p328
      %p330 = scmp.ne.s32.totalorder %s318, %s319
      %p331 = scmp.eq.s32.totalorder %s42, 1
      %p332 = por %p330, %p331
      %p334 = scmp.ne.s32.totalorder %s319, %s333
      %p335 = scmp.eq.s32.totalorder %s42, 0
      %p336 = por %p334, %p335
      %s338 = sadd.s32 %s337, 1
      %p341 = scmp.eq.s32.totalorder %s36, 1
      %p342 = scmp.ne.s32.totalorder %s337, %s339
      %p343 = scmp.eq.s32.totalorder %s36, 0
      %p344 = por %p342, %p343
      %p345 = scmp.ne.s32.totalorder %s337, %s339
      %p346 = scmp.eq.s32.totalorder %s41, 1
      %p347 = por %p345, %p346
      %p348 = scmp.ne.s32.totalorder %s339, %s340
      %p349 = scmp.eq.s32.totalorder %s41, 0
      %p350 = por %p348, %p349
      %p351 = scmp.ne.s32.totalorder %s339, %s340
      %p352 = scmp.eq.s32.totalorder %s42, 1
      %p353 = por %p351, %p352
      %p355 = scmp.ne.s32.totalorder %s340, %s354
      %p356 = scmp.eq.s32.totalorder %s42, 0
      %p357 = por %p355, %p356
      %s359 = sadd.s32 %s358, 1
      %p362 = scmp.eq.s32.totalorder %s36, 1
      %p363 = scmp.ne.s32.totalorder %s358, %s360
      %p364 = scmp.eq.s32.totalorder %s36, 0
      %p365 = por %p363, %p364
      %p366 = scmp.ne.s32.totalorder %s358, %s360
      %p367 = scmp.eq.s32.totalorder %s41, 1
      %p368 = por %p366, %p367
      %p369 = scmp.ne.s32.totalorder %s360, %s361
      %p370 = scmp.eq.s32.totalorder %s41, 0
      %p371 = por %p369, %p370
      %p372 = scmp.ne.s32.totalorder %s360, %s361
      %p373 = scmp.eq.s32.totalorder %s42, 1
      %p374 = por %p372, %p373
      %p376 = scmp.ne.s32.totalorder %s361, %s375
      %p377 = scmp.eq.s32.totalorder %s42, 0
      %p378 = por %p376, %p377
      %s380 = sadd.s32 %s379, 1
      %p383 = scmp.eq.s32.totalorder %s36, 1
      %p384 = scmp.ne.s32.totalorder %s379, %s381
      %p385 = scmp.eq.s32.totalorder %s36, 0
      %p386 = por %p384, %p385
      %p387 = scmp.ne.s32.totalorder %s379, %s381
      %p388 = scmp.eq.s32.totalorder %s41, 1
      %p389 = por %p387, %p388
      %p390 = scmp.ne.s32.totalorder %s381, %s382
      %p391 = scmp.eq.s32.totalorder %s41, 0
      %p392 = por %p390, %p391
      %p393 = scmp.ne.s32.totalorder %s381, %s382
      %p394 = scmp.eq.s32.totalorder %s42, 1
      %p395 = por %p393, %p394
      %p397 = scmp.ne.s32.totalorder %s382, %s396
      %p398 = scmp.eq.s32.totalorder %s42, 0
      %p399 = por %p397, %p398
      %s401 = sadd.s32 %s400, 1
      %p404 = scmp.eq.s32.totalorder %s36, 1
      %p405 = scmp.ne.s32.totalorder %s400, %s402
      %p406 = scmp.eq.s32.totalorder %s36, 0
      %p407 = por %p405, %p406
      %p408 = scmp.ne.s32.totalorder %s400, %s402
      %p409 = scmp.eq.s32.totalorder %s41, 1
      %p410 = por %p408, %p409
      %p411 = scmp.ne.s32.totalorder %s402, %s403
      %p412 = scmp.eq.s32.totalorder %s41, 0
      %p413 = por %p411, %p412
      %p414 = scmp.ne.s32.totalorder %s402, %s403
      %p415 = scmp.eq.s32.totalorder %s42, 1
      %p416 = por %p414, %p415
      %p418 = scmp.ne.s32.totalorder %s403, %s417
      %p419 = scmp.eq.s32.totalorder %s42, 0
      %p420 = por %p418, %p419
      %s422 = sadd.s32 %s421, 1
      %p425 = scmp.eq.s32.totalorder %s36, 1
      %p426 = scmp.ne.s32.totalorder %s421, %s423
      %p427 = scmp.eq.s32.totalorder %s36, 0
      %p428 = por %p426, %p427
      %p429 = scmp.ne.s32.totalorder %s421, %s423
      %p430 = scmp.eq.s32.totalorder %s41, 1
      %p431 = por %p429, %p430
      %p432 = scmp.ne.s32.totalorder %s423, %s424
      %p433 = scmp.eq.s32.totalorder %s41, 0
      %p434 = por %p432, %p433
      %p435 = scmp.ne.s32.totalorder %s423, %s424
      %p436 = scmp.eq.s32.totalorder %s42, 1
      %p437 = por %p435, %p436
      %p439 = scmp.ne.s32.totalorder %s424, %s438
      %p440 = scmp.eq.s32.totalorder %s42, 0
      %p441 = por %p439, %p440
      %s443 = sadd.s32 %s442, 1
      %p446 = scmp.eq.s32.totalorder %s36, 1
      %p447 = scmp.ne.s32.totalorder %s442, %s444
      %p448 = scmp.eq.s32.totalorder %s36, 0
      %p449 = por %p447, %p448
      %p450 = scmp.ne.s32.totalorder %s442, %s444
      %p451 = scmp.eq.s32.totalorder %s41, 1
      %p452 = por %p450, %p451
      %p453 = scmp.ne.s32.totalorder %s444, %s445
      %p454 = scmp.eq.s32.totalorder %s41, 0
      %p455 = por %p453, %p454
      %p456 = scmp.ne.s32.totalorder %s444, %s445
      %p457 = scmp.eq.s32.totalorder %s42, 1
      %p458 = por %p456, %p457
      %p460 = scmp.ne.s32.totalorder %s445, %s459
      %p461 = scmp.eq.s32.totalorder %s42, 0
      %p462 = por %p460, %p461
      %s464 = sadd.s32 %s463, 1
      %p467 = scmp.eq.s32.totalorder %s36, 1
      %p468 = scmp.ne.s32.totalorder %s463, %s465
      %p469 = scmp.eq.s32.totalorder %s36, 0
      %p470 = por %p468, %p469
      %p471 = scmp.ne.s32.totalorder %s463, %s465
      %p472 = scmp.eq.s32.totalorder %s41, 1
      %p473 = por %p471, %p472
      %p474 = scmp.ne.s32.totalorder %s465, %s466
      %p475 = scmp.eq.s32.totalorder %s41, 0
      %p476 = por %p474, %p475
      %p477 = scmp.ne.s32.totalorder %s465, %s466
      %p478 = scmp.eq.s32.totalorder %s42, 1
      %p479 = por %p477, %p478
      %p481 = scmp.ne.s32.totalorder %s466, %s480
      %p482 = scmp.eq.s32.totalorder %s42, 0
      %p483 = por %p481, %p482
      %s484 = ssub.s32 %s36, %s43
      %p485 = scmp.eq.s32.totalorder %s484, 0
      %s487 = sadd.s32 %s486, 1
      %s488 = scalar_select %p485, %s486, %s487
      %p491 = pneg %p485
      %p492 = scmp.eq.s32.totalorder %s36, 1
      %p493 = por %p491, %p492
      %p494 = scmp.ne.s32.totalorder %s486, %s489
      %p495 = scmp.eq.s32.totalorder %s36, 0
      %p496 = por %p494, %p495
      %p497 = scmp.ne.s32.totalorder %s486, %s489
      %p498 = scmp.eq.s32.totalorder %s41, 1
      %p499 = por %p497, %p498
      %p500 = scmp.ne.s32.totalorder %s489, %s490
      %p501 = scmp.eq.s32.totalorder %s41, 0
      %p502 = por %p500, %p501
      %p503 = scmp.ne.s32.totalorder %s489, %s490
      %p504 = scmp.eq.s32.totalorder %s42, 1
      %p505 = por %p503, %p504
      %p507 = scmp.ne.s32.totalorder %s490, %s506
      %p508 = scmp.eq.s32.totalorder %s42, 0
      %p509 = por %p507, %p508
      %p510 = scmp.le.s32.totalorder 1, %s36
      %p511 = scmp.lt.s32.totalorder %s36, 3
      %p512 = pnand %p510, %p511
      %p513 = pneg %p512
      // Predicated region
      $region9: #{tpu_custom_call.1} parent=5 // pred_check
        _
      $region10: #{tpu_custom_call.1} parent=5 // pred_check_branch
        %515 = sbr.rel (%p512) target = $region12
      $region11: #{tpu_custom_call.1} parent=5 // pred_region
        %s516 = ssub.s32 %s36, 1
        // Predicated region
        $region13: #{tpu_custom_call.1} parent=11 // pred_check
          %p517 = pneg %p161
        $region14: #{tpu_custom_call.1} parent=11 // pred_check_branch
          %519 = sbr.rel (%p517) target = $region16
        $region15: #{tpu_custom_call.1} parent=11 // pred_region
          _
        $region16: #{tpu_custom_call.1} parent=11 // pred_fallthru
          _
        // Predicated region
        $region17: #{tpu_custom_call.1} parent=11 // pred_check
          %p520 = pneg %p182
        $region18: #{tpu_custom_call.1} parent=11 // pred_check_branch
          %522 = sbr.rel (%p520) target = $region20
        $region19: #{tpu_custom_call.1} parent=11 // pred_region
          _
        $region20: #{tpu_custom_call.1} parent=11 // pred_fallthru
          _
        // Predicated region
        $region21: #{tpu_custom_call.1} parent=11 // pred_check
          %p523 = pneg %p203
        $region22: #{tpu_custom_call.1} parent=11 // pred_check_branch
          %525 = sbr.rel (%p523) target = $region24
        $region23: #{tpu_custom_call.1} parent=11 // pred_region
          _
        $region24: #{tpu_custom_call.1} parent=11 // pred_fallthru
          _
        // Predicated region
        $region25: #{tpu_custom_call.1} parent=11 // pred_check
          %p526 = pneg %p224
        $region26: #{tpu_custom_call.1} parent=11 // pred_check_branch
          %528 = sbr.rel (%p526) target = $region28
        $region27: #{tpu_custom_call.1} parent=11 // pred_region
          _
        $region28: #{tpu_custom_call.1} parent=11 // pred_fallthru
          _
        // Predicated region
        $region29: #{tpu_custom_call.1} parent=11 // pred_check
          %p529 = pneg %p245
        $region30: #{tpu_custom_call.1} parent=11 // pred_check_branch
          %531 = sbr.rel (%p529) target = $region32
        $region31: #{tpu_custom_call.1} parent=11 // pred_region
          %s533 = ssub.s32 1024, 1024
          %534 = vsyncadd [#allocation7], %s533
          %s535 = sshll.u32 [#allocation6], 4
          %s536 = int_to_ptr.vmem [resolvable:$true] %s535
          %541 = dma.hbm_to_vmem [thread:$0]  %s8, 1024, %s536, [#allocation7], 128, 128, 8
        $region32: #{tpu_custom_call.1} parent=11 // pred_fallthru
          _
        // Predicated region
        $region33: #{tpu_custom_call.1} parent=11 // pred_check
          %p542 = pneg %p266
        $region34: #{tpu_custom_call.1} parent=11 // pred_check_branch
          %544 = sbr.rel (%p542) target = $region36
        $region35: #{tpu_custom_call.1} parent=11 // pred_region
          %s546 = ssub.s32 2048, 2048
          %547 = vsyncadd [#allocation7], %s546
          %s548 = sshll.u32 [#allocation8], 4
          %s549 = int_to_ptr.vmem [resolvable:$true] %s548
          %554 = dma.hbm_to_vmem [thread:$0]  %s9, 2048, %s549, [#allocation7], 256, 256, 16
        $region36: #{tpu_custom_call.1} parent=11 // pred_fallthru
          _
        // Predicated region
        $region37: #{tpu_custom_call.1} parent=11 // pred_check
          %p555 = pneg %p287
        $region38: #{tpu_custom_call.1} parent=11 // pred_check_branch
          %557 = sbr.rel (%p555) target = $region40
        $region39: #{tpu_custom_call.1} parent=11 // pred_region
          _
        $region40: #{tpu_custom_call.1} parent=11 // pred_fallthru
          _
        // Predicated region
        $region41: #{tpu_custom_call.1} parent=11 // pred_check
          %p558 = pneg %p308
        $region42: #{tpu_custom_call.1} parent=11 // pred_check_branch
          %560 = sbr.rel (%p558) target = $region44
        $region43: #{tpu_custom_call.1} parent=11 // pred_region
          _
        $region44: #{tpu_custom_call.1} parent=11 // pred_fallthru
          _
        // Predicated region
        $region45: #{tpu_custom_call.1} parent=11 // pred_check
          %p561 = pneg %p329
        $region46: #{tpu_custom_call.1} parent=11 // pred_check_branch
          %563 = sbr.rel (%p561) target = $region48
        $region47: #{tpu_custom_call.1} parent=11 // pred_region
          _
        $region48: #{tpu_custom_call.1} parent=11 // pred_fallthru
          _
        // Predicated region
        $region49: #{tpu_custom_call.1} parent=11 // pred_check
          %p564 = pneg %p350
        $region50: #{tpu_custom_call.1} parent=11 // pred_check_branch
          %566 = sbr.rel (%p564) target = $region52
        $region51: #{tpu_custom_call.1} parent=11 // pred_region
          _
        $region52: #{tpu_custom_call.1} parent=11 // pred_fallthru
          _
        // Predicated region
        $region53: #{tpu_custom_call.1} parent=11 // pred_check
          %p567 = pneg %p371
        $region54: #{tpu_custom_call.1} parent=11 // pred_check_branch
          %569 = sbr.rel (%p567) target = $region56
        $region55: #{tpu_custom_call.1} parent=11 // pred_region
          _
        $region56: #{tpu_custom_call.1} parent=11 // pred_fallthru
          _
        // Predicated region
        $region57: #{tpu_custom_call.1} parent=11 // pred_check
          %p570 = pneg %p392
        $region58: #{tpu_custom_call.1} parent=11 // pred_check_branch
          %572 = sbr.rel (%p570) target = $region60
        $region59: #{tpu_custom_call.1} parent=11 // pred_region
          _
        $region60: #{tpu_custom_call.1} parent=11 // pred_fallthru
          _
        // Predicated region
        $region61: #{tpu_custom_call.1} parent=11 // pred_check
          %p573 = pneg %p413
        $region62: #{tpu_custom_call.1} parent=11 // pred_check_branch
          %575 = sbr.rel (%p573) target = $region64
        $region63: #{tpu_custom_call.1} parent=11 // pred_region
          %s577 = ssub.s32 2048, 2048
          %578 = vsyncadd [#allocation10], %s577
          %s579 = sshll.u32 [#allocation9], 4
          %s580 = int_to_ptr.vmem [resolvable:$true] %s579
          %585 = dma.hbm_to_vmem [thread:$0]  %s16, 2048, %s580, [#allocation10], 128, 128, 8
        $region64: #{tpu_custom_call.1} parent=11 // pred_fallthru
          _
        // Predicated region
        $region65: #{tpu_custom_call.1} parent=11 // pred_check
          %p586 = pneg %p434
        $region66: #{tpu_custom_call.1} parent=11 // pred_check_branch
          %588 = sbr.rel (%p586) target = $region68
        $region67: #{tpu_custom_call.1} parent=11 // pred_region
          _
        $region68: #{tpu_custom_call.1} parent=11 // pred_fallthru
          _
        // Predicated region
        $region69: #{tpu_custom_call.1} parent=11 // pred_check
          %p589 = pneg %p455
        $region70: #{tpu_custom_call.1} parent=11 // pred_check_branch
          %591 = sbr.rel (%p589) target = $region72
        $region71: #{tpu_custom_call.1} parent=11 // pred_region
          _
        $region72: #{tpu_custom_call.1} parent=11 // pred_fallthru
          _
        // Predicated region
        $region73: #{tpu_custom_call.1} parent=11 // pred_check
          %p592 = pneg %p476
        $region74: #{tpu_custom_call.1} parent=11 // pred_check_branch
          %594 = sbr.rel (%p592) target = $region76
        $region75: #{tpu_custom_call.1} parent=11 // pred_region
          _
        $region76: #{tpu_custom_call.1} parent=11 // pred_fallthru
          _
      $region12: #{tpu_custom_call.1} parent=5 // pred_fallthru
        _
      %p595 = scmp.lt.s32.totalorder %s36, 2
      // Predicated region
      $region77: #{tpu_custom_call.1} parent=5 // pred_check
        %p596 = pneg %p595
      $region78: #{tpu_custom_call.1} parent=5 // pred_check_branch
        %598 = sbr.rel (%p596) target = $region80
      $region79: #{tpu_custom_call.1} parent=5 // pred_region
        // Predicated region
        $region81: #{tpu_custom_call.1} parent=79 // pred_check
          %p599 = pneg %p56
        $region82: #{tpu_custom_call.1} parent=79 // pred_check_branch
          %601 = sbr.rel (%p599) target = $region84
        $region83: #{tpu_custom_call.1} parent=79 // pred_region
          %p602 = scmp.lt.s32.totalorder %s36, 1
          %s603 = scalar_select %p602, %s36, 1
          %s604 = smul.addr %s603, 8
          %s605 = scalar_lea.vmem %s0, %s604
        $region84: #{tpu_custom_call.1} parent=79 // pred_fallthru
          _
        // Predicated region
        $region85: #{tpu_custom_call.1} parent=79 // pred_check
          %p606 = pneg %p82
        $region86: #{tpu_custom_call.1} parent=79 // pred_check_branch
          %608 = sbr.rel (%p606) target = $region88
        $region87: #{tpu_custom_call.1} parent=79 // pred_region
          %p609 = scmp.lt.s32.totalorder %s36, 1
          %s610 = scalar_select %p609, %s36, 1
          %s611 = scalar_lea.vmem %s1, %s610
        $region88: #{tpu_custom_call.1} parent=79 // pred_fallthru
          _
        // Predicated region
        $region89: #{tpu_custom_call.1} parent=79 // pred_check
          %p612 = pneg %p108
        $region90: #{tpu_custom_call.1} parent=79 // pred_check_branch
          %614 = sbr.rel (%p612) target = $region92
        $region91: #{tpu_custom_call.1} parent=79 // pred_region
          %s615 = sand.u32 %s98, 1
          %s616 = scalar_lea.sflag [#allocation4], %s615
          %s617 = sand.u32 %s98, 1
          %s618 = smul.addr %s617, 64
          %s619 = scalar_lea.vmem [#allocation3], %s618
          %s621 = ssub.s32 1024, 1024
          %622 = vsyncadd %s616, %s621
          %s623 = smul.addr %s36, 8
          %s624 = smul.addr %s623, 128
          %s625 = scalar_lea.hbm %s2, %s624
          %s626 = sshll.u32 %s619, 4
          %s627 = int_to_ptr.vmem [resolvable:$true] %s626
          %632 = dma.hbm_to_vmem [thread:$0]  %s625, 1024, %s627, %s616, 128, 128, 8
        $region92: #{tpu_custom_call.1} parent=79 // pred_fallthru
          _
        // Predicated region
        $region93: #{tpu_custom_call.1} parent=79 // pred_check
          %p633 = pneg %p134
        $region94: #{tpu_custom_call.1} parent=79 // pred_check_branch
          %635 = sbr.rel (%p633) target = $region96
        $region95: #{tpu_custom_call.1} parent=79 // pred_region
          %p636 = scmp.lt.s32.totalorder %s36, 1
          %s637 = scalar_select %p636, %s36, 1
          %s638 = smul.addr %s637, 8
          %s639 = scalar_lea.vmem %s3, %s638
        $region96: #{tpu_custom_call.1} parent=79 // pred_fallthru
          _
      $region80: #{tpu_custom_call.1} parent=5 // pred_fallthru
        _
      %p640 = scmp.le.s32.totalorder 1, %s36
      %p641 = scmp.lt.s32.totalorder %s36, 3
      %p642 = pnand %p640, %p641
      %p643 = pneg %p642
      // Predicated region
      $region97: #{tpu_custom_call.1} parent=5 // pred_check
        _
      $region98: #{tpu_custom_call.1} parent=5 // pred_check_branch
        %645 = sbr.rel (%p642) target = $region100
      $region99: #{tpu_custom_call.1} parent=5 // pred_region
        %s646 = ssub.s32 %s36, 1
        %s647 = sand.u32 %s101, 1
        %s648 = scalar_lea.sflag [#allocation4], %s647
        %s649 = sand.u32 %s101, 1
        %s650 = smul.addr %s649, 64
        %s651 = scalar_lea.vmem [#allocation3], %s650
        // Predicated region
        $region101: #{tpu_custom_call.1} parent=99 // pred_check
          %p652 = pneg %p114
        $region102: #{tpu_custom_call.1} parent=99 // pred_check_branch
          %654 = sbr.rel (%p652) target = $region104
        $region103: #{tpu_custom_call.1} parent=99 // pred_region
          %655 = dma.done %s648, 1024
        $region104: #{tpu_custom_call.1} parent=99 // pred_fallthru
          _
        // Predicated region
        $region105: #{tpu_custom_call.1} parent=99 // pred_check
          %p656 = pneg %p245
        $region106: #{tpu_custom_call.1} parent=99 // pred_check_branch
          %658 = sbr.rel (%p656) target = $region108
        $region107: #{tpu_custom_call.1} parent=99 // pred_region
          %659 = dma.done [#allocation7], 1024
        $region108: #{tpu_custom_call.1} parent=99 // pred_fallthru
          _
        // Predicated region
        $region109: #{tpu_custom_call.1} parent=99 // pred_check
          %p660 = pneg %p266
        $region110: #{tpu_custom_call.1} parent=99 // pred_check_branch
          %662 = sbr.rel (%p660) target = $region112
        $region111: #{tpu_custom_call.1} parent=99 // pred_region
          %663 = dma.done [#allocation7], 2048
        $region112: #{tpu_custom_call.1} parent=99 // pred_fallthru
          _
        // Predicated region
        $region113: #{tpu_custom_call.1} parent=99 // pred_check
          %p664 = pneg %p413
        $region114: #{tpu_custom_call.1} parent=99 // pred_check_branch
          %666 = sbr.rel (%p664) target = $region116
        $region115: #{tpu_custom_call.1} parent=99 // pred_region
          %667 = dma.done [#allocation10], 2048
        $region116: #{tpu_custom_call.1} parent=99 // pred_fallthru
          _
        %p668 = scmp.lt.s32.totalorder %s41, 1
        %s669 = scalar_select %p668, %s41, 1
        %s670 = smul.addr %s669, 8
        %s671 = scalar_lea.vmem %s0, %s670
        %p672 = pneg %p62
        %p673 = pneg %p59
        %p674 = scmp.lt.s32.totalorder %s41, 1
        %s675 = scalar_select %p674, %s41, 1
        %s676 = scalar_lea.vmem %s1, %s675
        %p677 = pneg %p88
        %p678 = pneg %p85
        %s679 = sand.u32 %s101, 1
        %s680 = scalar_lea.sflag [#allocation4], %s679
        %s681 = sand.u32 %s101, 1
        %s682 = smul.addr %s681, 64
        %s683 = scalar_lea.vmem [#allocation3], %s682
        %p684 = pneg %p114
        %p685 = pneg %p111
        %p686 = scmp.lt.s32.totalorder %s41, 1
        %s687 = scalar_select %p686, %s41, 1
        %s688 = smul.addr %s687, 8
        %s689 = scalar_lea.vmem %s3, %s688
        %p690 = pneg %p140
        %p691 = pneg %p137
        %p692 = pneg %p161
        %p693 = pneg %p158
        %p694 = pneg %p182
        %p695 = pneg %p179
        %p696 = pneg %p203
        %p697 = pneg %p200
        %p698 = pneg %p224
        %p699 = pneg %p221
        %p700 = pneg %p245
        %p701 = pneg %p242
        %p702 = pneg %p266
        %p703 = pneg %p263
        %p704 = pneg %p287
        %p705 = pneg %p284
        %p706 = pneg %p308
        %p707 = pneg %p305
        %p708 = pneg %p329
        %p709 = pneg %p326
        %p710 = pneg %p350
        %p711 = pneg %p347
        %p712 = pneg %p371
        %p713 = pneg %p368
        %p714 = pneg %p392
        %p715 = pneg %p389
        %p716 = pneg %p413
        %p717 = pneg %p410
        %p718 = pneg %p434
        %p719 = pneg %p431
        %p720 = pneg %p455
        %p721 = pneg %p452
        %p722 = pneg %p476
        %p723 = pneg %p473
        %p724 = pneg %p502
        %p725 = pneg %p499
        %s726 = sand.u32 %s489, 1
        %s727 = scalar_lea.sflag [#allocation5], %s726
        %s728 = sand.u32 %s489, 1
        %s729 = smul.addr %s728, 8
        %s730 = scalar_lea.vmem [#allocation11], %s729
        %p731 = scmp.lt.s32.totalorder %s41, 1
        %s732 = scalar_select %p731, %s41, 1
        %s733 = smul.addr %s732, 8
        %s734 = scalar_lea.vmem %s0, %s733
        %p735 = scmp.lt.s32.totalorder %s41, 1
        %s736 = scalar_select %p735, %s41, 1
        %s737 = scalar_lea.vmem %s1, %s736
        %p738 = scmp.lt.s32.totalorder %s41, 1
        %s739 = scalar_select %p738, %s41, 1
        %s740 = smul.addr %s739, 8
        %s741 = scalar_lea.vmem %s3, %s740
        %v742 = vld [vmem:[%s734] sm:$0xff]
        %v743 = vld [vmem:[%s737] sm:$0x1]
        %vm744 = vcmask 523264
        %v746 = vsel %vm744, %v742, 0
        %748 = vmatprep.subr.mxu0 0.0
        %749 = vmatpush1.xpose.msra.mxu0 %v746
        %750 = vmatprep.subr.mxu0 0.0
        %751 = vmatpush1.xpose.msra.mxu0 0.0
        %752 = vmatprep.subr.mxu0 0.0
        %753 = vmatpush1.xpose.msra.mxu0 0.0
        %754 = vmatprep.subr.mxu0 0.0
        %755 = vmatpush1.xpose.msra.mxu0 0.0
        %756 = vmatprep.subr.mxu0 0.0
        %757 = vmatpush1.xpose.msra.mxu0 0.0
        %758 = vmatprep.subr.mxu0 0.0
        %759 = vmatpush1.xpose.msra.mxu0 0.0
        %760 = vmatprep.subr.mxu0 0.0
        %761 = vmatpush1.xpose.msra.mxu0 0.0
        %762 = vmatprep.subr.mxu0 0.0
        %763 = vmatpush1.xpose.msra.mxu0 0.0
        %764 = vmatprep.subr.mxu0 0.0
        %765 = vmatpush1.xpose.msra.mxu0 0.0
        %766 = vmatprep.subr.mxu0 0.0
        %767 = vmatpush1.xpose.msra.mxu0 0.0
        %768 = vmatprep.subr.mxu0 0.0
        %769 = vmatpush1.xpose.msra.mxu0 0.0
        %770 = vmatprep.subr.mxu0 0.0
        %771 = vmatpush1.xpose.msra.mxu0 0.0
        %772 = vmatprep.subr.mxu0 0.0
        %773 = vmatpush1.xpose.msra.mxu0 0.0
        %774 = vmatprep.subr.mxu0 0.0
        %775 = vmatpush1.xpose.msra.mxu0 0.0
        %776 = vmatprep.subr.mxu0 0.0
        %777 = vmatpush1.xpose.msra.mxu0 0.0
        %778 = vmatprep.subr.mxu0 0.0
        %779 = vmatpush1.xpose.msra.mxu0 0.0
        %780 = vmatprep.subr.mxu0 0.0
        %781 = vmatpush1.xpose.msra.mxu0 0.0
        %782 = vmatprep.subr.mxu0 0.0
        %783 = vmatpush1.xpose.msra.mxu0 0.0
        %784 = vmatprep.subr.mxu0 0.0
        %785 = vmatpush1.xpose.msra.mxu0 0.0
        %786 = vmatprep.subr.mxu0 0.0
        %787 = vmatpush1.xpose.msra.mxu0 0.0
        %788 = vmatprep.subr.mxu0 0.0
        %789 = vmatpush1.xpose.msra.mxu0 0.0
        %790 = vmatprep.subr.mxu0 0.0
        %791 = vmatpush1.xpose.msra.mxu0 0.0
        %792 = vmatprep.subr.mxu0 0.0
        %793 = vmatpush1.xpose.msra.mxu0 0.0
        %794 = vmatprep.subr.mxu0 0.0
        %795 = vmatpush1.xpose.msra.mxu0 0.0
        %796 = vmatprep.subr.mxu0 0.0
        %797 = vmatpush1.xpose.msra.mxu0 0.0
        %798 = vmatprep.subr.mxu0 0.0
        %799 = vmatpush1.xpose.msra.mxu0 0.0
        %800 = vmatprep.subr.mxu0 0.0
        %801 = vmatpush1.xpose.msra.mxu0 0.0
        %802 = vmatprep.subr.mxu0 0.0
        %803 = vmatpush1.xpose.msra.mxu0 0.0
        %804 = vmatprep.subr.mxu0 0.0
        %805 = vmatpush1.xpose.msra.mxu0 0.0
        %806 = vmatprep.subr.mxu0 0.0
        %807 = vmatpush1.xpose.msra.mxu0 0.0
        %808 = vmatprep.subr.mxu0 0.0
        %809 = vmatpush1.xpose.msra.mxu0 0.0
        %810 = vmatprep.subr.mxu0 0.0
        %811 = vmatpush1.xpose.msra.mxu0 0.0
        %812 = vmatprep.mubr.f32.mxu0 0.0
        %813 = vmatmul.mubr.f32.gmra.mrb[0].mxu0 %v746
        %v814 = vpop.f32.mrb[0].mxu0
        %v815 = vadd.f32 0.0, %v814
        %v816 = vpop.f32.mrb[0].mxu0
        %817 = vdwg.mxu0
        %vm818 = vcmp.eq.f32.partialorder %v743, 0.0
        %v819 = vsel %vm818, 1, 0
        %v820 = vlaneseq
        %v821 = vshrl.u32 %v820, 7
        %v822 = vsub.s32 0, %v821
        %v823 = vrot.slane %v819, %v822
        %vm824 = vcmp.eq.s32.totalorder %v823, 1
        %v825 = vsel %vm824, -1e+09, %v815
        %vm826 = vcmask 64512
        %v827 = vsel %vm826, %v825, -inf
        %828 = vmax.xlane.f32.xlu0 %v827
        %v829 = vpop.xlane.xlu0 %828
        %v830 = vsub.f32 %v825, %v829
        %v831 = vmul.f32 %v830, 1.442695
        %v832 = vpow.pop %v831
        %v833 = vsel %vm826, %v832, 0.0
        %834 = vadd.xlane.f32.xlu0 %v833
        %v835 = vpop.xlane.xlu0 %834
        %v836 = vrcp.pop %v835
        %v837 = vmul.f32 %v832, %v836
        %v839 = vsel %vm826, %v837, 0
        %841 = vmatprep.subr.mxu0 0.0
        %842 = vmatpush1.msra.mxu0 %v742
        %843 = vmatprep.subr.mxu0 0.0
        %844 = vmatpush1.msra.mxu0 0.0
        %845 = vmatprep.subr.mxu0 0.0
        %846 = vmatpush1.msra.mxu0 0.0
        %847 = vmatprep.subr.mxu0 0.0
        %848 = vmatpush1.msra.mxu0 0.0
        %849 = vmatprep.subr.mxu0 0.0
        %850 = vmatpush1.msra.mxu0 0.0
        %851 = vmatprep.subr.mxu0 0.0
        %852 = vmatpush1.msra.mxu0 0.0
        %853 = vmatprep.subr.mxu0 0.0
        %854 = vmatpush1.msra.mxu0 0.0
        %855 = vmatprep.subr.mxu0 0.0
        %856 = vmatpush1.msra.mxu0 0.0
        %857 = vmatprep.subr.mxu0 0.0
        %858 = vmatpush1.msra.mxu0 0.0
        %859 = vmatprep.subr.mxu0 0.0
        %860 = vmatpush1.msra.mxu0 0.0
        %861 = vmatprep.subr.mxu0 0.0
        %862 = vmatpush1.msra.mxu0 0.0
        %863 = vmatprep.subr.mxu0 0.0
        %864 = vmatpush1.msra.mxu0 0.0
        %865 = vmatprep.subr.mxu0 0.0
        %866 = vmatpush1.msra.mxu0 0.0
        %867 = vmatprep.subr.mxu0 0.0
        %868 = vmatpush1.msra.mxu0 0.0
        %869 = vmatprep.subr.mxu0 0.0
        %870 = vmatpush1.msra.mxu0 0.0
        %871 = vmatprep.subr.mxu0 0.0
        %872 = vmatpush1.msra.mxu0 0.0
        %873 = vmatprep.subr.mxu0 0.0
        %874 = vmatpush1.msra.mxu0 0.0
        %875 = vmatprep.subr.mxu0 0.0
        %876 = vmatpush1.msra.mxu0 0.0
        %877 = vmatprep.subr.mxu0 0.0
        %878 = vmatpush1.msra.mxu0 0.0
        %879 = vmatprep.subr.mxu0 0.0
        %880 = vmatpush1.msra.mxu0 0.0
        %881 = vmatprep.subr.mxu0 0.0
        %882 = vmatpush1.msra.mxu0 0.0
        %883 = vmatprep.subr.mxu0 0.0
        %884 = vmatpush1.msra.mxu0 0.0
        %885 = vmatprep.subr.mxu0 0.0
        %886 = vmatpush1.msra.mxu0 0.0
        %887 = vmatprep.subr.mxu0 0.0
        %888 = vmatpush1.msra.mxu0 0.0
        %889 = vmatprep.subr.mxu0 0.0
        %890 = vmatpush1.msra.mxu0 0.0
        %891 = vmatprep.subr.mxu0 0.0
        %892 = vmatpush1.msra.mxu0 0.0
        %893 = vmatprep.subr.mxu0 0.0
        %894 = vmatpush1.msra.mxu0 0.0
        %895 = vmatprep.subr.mxu0 0.0
        %896 = vmatpush1.msra.mxu0 0.0
        %897 = vmatprep.subr.mxu0 0.0
        %898 = vmatpush1.msra.mxu0 0.0
        %899 = vmatprep.subr.mxu0 0.0
        %900 = vmatpush1.msra.mxu0 0.0
        %901 = vmatprep.subr.mxu0 0.0
        %902 = vmatpush1.msra.mxu0 0.0
        %903 = vmatprep.subr.mxu0 0.0
        %904 = vmatpush1.msra.mxu0 0.0
        %905 = vmatprep.mubr.f32.mxu0 0.0
        %906 = vmatmul.mubr.f32.gmra.mrb[0].mxu0 %v839
        %v907 = vpop.f32.mrb[0].mxu0
        %v908 = vadd.f32 0.0, %v907
        %v909 = vpop.f32.mrb[0].mxu0
        %910 = vdwg.mxu0
        %v911 = vadd.f32 %v742, %v908
        %v912 = vld [vmem:[%s741] sm:$0xff]
        %v913 = vlaneseq
        %v914 = vshrl.u32 %v913, 7
        %v915 = vsub.s32 0, %v914
        %v916 = vrot.slane %v912, %v915
        %918 = vbcast.lane.b32.xlu0 %v916, 256
        %v919 = vpop.permute.xlu0 %918
        %v920 = vlaneseq
        %v921 = vshrl.u32 %v920, 7
        %v922 = vsub.s32 1, %v921
        %v923 = vrot.slane %v912, %v922
        %925 = vbcast.lane.b32.xlu0 %v923, 256
        %v926 = vpop.permute.xlu0 %925
        %v927 = vlaneseq
        %v928 = vshrl.u32 %v927, 7
        %v929 = vsub.s32 2, %v928
        %v930 = vrot.slane %v912, %v929
        %932 = vbcast.lane.b32.xlu0 %v930, 256
        %v933 = vpop.permute.xlu0 %932
        %v934 = vlaneseq
        %v935 = vshrl.u32 %v934, 7
        %v936 = vsub.s32 3, %v935
        %v937 = vrot.slane %v912, %v936
        %939 = vbcast.lane.b32.xlu0 %v937, 256
        %v940 = vpop.permute.xlu0 %939
        %v941 = vlaneseq
        %v942 = vshrl.u32 %v941, 7
        %v943 = vsub.s32 4, %v942
        %v944 = vrot.slane %v912, %v943
        %946 = vbcast.lane.b32.xlu0 %v944, 256
        %v947 = vpop.permute.xlu0 %946
        %v948 = vlaneseq
        %v949 = vshrl.u32 %v948, 7
        %v950 = vsub.s32 5, %v949
        %v951 = vrot.slane %v912, %v950
        %953 = vbcast.lane.b32.xlu0 %v951, 256
        %v954 = vpop.permute.xlu0 %953
        %v955 = vlaneseq
        %v956 = vshrl.u32 %v955, 7
        %v957 = vsub.s32 6, %v956
        %v958 = vrot.slane %v912, %v957
        %960 = vbcast.lane.b32.xlu0 %v958, 256
        %v961 = vpop.permute.xlu0 %960
        %v962 = vlaneseq
        %v963 = vshrl.u32 %v962, 7
        %v964 = vsub.s32 7, %v963
        %v965 = vrot.slane %v912, %v964
        %967 = vbcast.lane.b32.xlu0 %v965, 256
        %v968 = vpop.permute.xlu0 %967
        %v969 = vlaneseq
        %v970 = vshrl.u32 %v969, 7
        %v971 = vsub.s32 0, %v970
        %v972 = vrot.slane %v919, %v971
        %v973 = vlaneseq
        %v974 = vshrl.u32 %v973, 7
        %v975 = vsub.s32 1, %v974
        %v976 = vrot.slane %v919, %v975
        %v977 = vlaneseq
        %v978 = vshrl.u32 %v977, 7
        %v979 = vsub.s32 2, %v978
        %v980 = vrot.slane %v919, %v979
        %v981 = vlaneseq
        %v982 = vshrl.u32 %v981, 7
        %v983 = vsub.s32 3, %v982
        %v984 = vrot.slane %v919, %v983
        %v985 = vlaneseq
        %v986 = vshrl.u32 %v985, 7
        %v987 = vsub.s32 4, %v986
        %v988 = vrot.slane %v919, %v987
        %v989 = vlaneseq
        %v990 = vshrl.u32 %v989, 7
        %v991 = vsub.s32 5, %v990
        %v992 = vrot.slane %v919, %v991
        %v993 = vlaneseq
        %v994 = vshrl.u32 %v993, 7
        %v995 = vsub.s32 6, %v994
        %v996 = vrot.slane %v919, %v995
        %v997 = vlaneseq
        %v998 = vshrl.u32 %v997, 7
        %v999 = vsub.s32 7, %v998
        %v1000 = vrot.slane %v919, %v999
        %v1001 = vlaneseq
        %v1002 = vshrl.u32 %v1001, 7
        %v1003 = vsub.s32 0, %v1002
        %v1004 = vrot.slane %v926, %v1003
        %v1005 = vlaneseq
        %v1006 = vshrl.u32 %v1005, 7
        %v1007 = vsub.s32 1, %v1006
        %v1008 = vrot.slane %v926, %v1007
        %v1009 = vlaneseq
        %v1010 = vshrl.u32 %v1009, 7
        %v1011 = vsub.s32 2, %v1010
        %v1012 = vrot.slane %v926, %v1011
        %v1013 = vlaneseq
        %v1014 = vshrl.u32 %v1013, 7
        %v1015 = vsub.s32 3, %v1014
        %v1016 = vrot.slane %v926, %v1015
        %v1017 = vlaneseq
        %v1018 = vshrl.u32 %v1017, 7
        %v1019 = vsub.s32 4, %v1018
        %v1020 = vrot.slane %v926, %v1019
        %v1021 = vlaneseq
        %v1022 = vshrl.u32 %v1021, 7
        %v1023 = vsub.s32 5, %v1022
        %v1024 = vrot.slane %v926, %v1023
        %v1025 = vlaneseq
        %v1026 = vshrl.u32 %v1025, 7
        %v1027 = vsub.s32 6, %v1026
        %v1028 = vrot.slane %v926, %v1027
        %v1029 = vlaneseq
        %v1030 = vshrl.u32 %v1029, 7
        %v1031 = vsub.s32 7, %v1030
        %v1032 = vrot.slane %v926, %v1031
        %v1033 = vlaneseq
        %v1034 = vshrl.u32 %v1033, 7
        %v1035 = vsub.s32 0, %v1034
        %v1036 = vrot.slane %v933, %v1035
        %v1037 = vlaneseq
        %v1038 = vshrl.u32 %v1037, 7
        %v1039 = vsub.s32 1, %v1038
        %v1040 = vrot.slane %v933, %v1039
        %v1041 = vlaneseq
        %v1042 = vshrl.u32 %v1041, 7
        %v1043 = vsub.s32 2, %v1042
        %v1044 = vrot.slane %v933, %v1043
        %v1045 = vlaneseq
        %v1046 = vshrl.u32 %v1045, 7
        %v1047 = vsub.s32 3, %v1046
        %v1048 = vrot.slane %v933, %v1047
        %v1049 = vlaneseq
        %v1050 = vshrl.u32 %v1049, 7
        %v1051 = vsub.s32 4, %v1050
        %v1052 = vrot.slane %v933, %v1051
        %v1053 = vlaneseq
        %v1054 = vshrl.u32 %v1053, 7
        %v1055 = vsub.s32 5, %v1054
        %v1056 = vrot.slane %v933, %v1055
        %v1057 = vlaneseq
        %v1058 = vshrl.u32 %v1057, 7
        %v1059 = vsub.s32 6, %v1058
        %v1060 = vrot.slane %v933, %v1059
        %v1061 = vlaneseq
        %v1062 = vshrl.u32 %v1061, 7
        %v1063 = vsub.s32 7, %v1062
        %v1064 = vrot.slane %v933, %v1063
        %v1065 = vlaneseq
        %v1066 = vshrl.u32 %v1065, 7
        %v1067 = vsub.s32 0, %v1066
        %v1068 = vrot.slane %v940, %v1067
        %v1069 = vlaneseq
        %v1070 = vshrl.u32 %v1069, 7
        %v1071 = vsub.s32 1, %v1070
        %v1072 = vrot.slane %v940, %v1071
        %v1073 = vlaneseq
        %v1074 = vshrl.u32 %v1073, 7
        %v1075 = vsub.s32 2, %v1074
        %v1076 = vrot.slane %v940, %v1075
        %v1077 = vlaneseq
        %v1078 = vshrl.u32 %v1077, 7
        %v1079 = vsub.s32 3, %v1078
        %v1080 = vrot.slane %v940, %v1079
        %v1081 = vlaneseq
        %v1082 = vshrl.u32 %v1081, 7
        %v1083 = vsub.s32 4, %v1082
        %v1084 = vrot.slane %v940, %v1083
        %v1085 = vlaneseq
        %v1086 = vshrl.u32 %v1085, 7
        %v1087 = vsub.s32 5, %v1086
        %v1088 = vrot.slane %v940, %v1087
        %v1089 = vlaneseq
        %v1090 = vshrl.u32 %v1089, 7
        %v1091 = vsub.s32 6, %v1090
        %v1092 = vrot.slane %v940, %v1091
        %v1093 = vlaneseq
        %v1094 = vshrl.u32 %v1093, 7
        %v1095 = vsub.s32 7, %v1094
        %v1096 = vrot.slane %v940, %v1095
        %v1097 = vlaneseq
        %v1098 = vshrl.u32 %v1097, 7
        %v1099 = vsub.s32 0, %v1098
        %v1100 = vrot.slane %v947, %v1099
        %v1101 = vlaneseq
        %v1102 = vshrl.u32 %v1101, 7
        %v1103 = vsub.s32 1, %v1102
        %v1104 = vrot.slane %v947, %v1103
        %v1105 = vlaneseq
        %v1106 = vshrl.u32 %v1105, 7
        %v1107 = vsub.s32 2, %v1106
        %v1108 = vrot.slane %v947, %v1107
        %v1109 = vlaneseq
        %v1110 = vshrl.u32 %v1109, 7
        %v1111 = vsub.s32 3, %v1110
        %v1112 = vrot.slane %v947, %v1111
        %v1113 = vlaneseq
        %v1114 = vshrl.u32 %v1113, 7
        %v1115 = vsub.s32 4, %v1114
        %v1116 = vrot.slane %v947, %v1115
        %v1117 = vlaneseq
        %v1118 = vshrl.u32 %v1117, 7
        %v1119 = vsub.s32 5, %v1118
        %v1120 = vrot.slane %v947, %v1119
        %v1121 = vlaneseq
        %v1122 = vshrl.u32 %v1121, 7
        %v1123 = vsub.s32 6, %v1122
        %v1124 = vrot.slane %v947, %v1123
        %v1125 = vlaneseq
        %v1126 = vshrl.u32 %v1125, 7
        %v1127 = vsub.s32 7, %v1126
        %v1128 = vrot.slane %v947, %v1127
        %v1129 = vlaneseq
        %v1130 = vshrl.u32 %v1129, 7
        %v1131 = vsub.s32 0, %v1130
        %v1132 = vrot.slane %v954, %v1131
        %v1133 = vlaneseq
        %v1134 = vshrl.u32 %v1133, 7
        %v1135 = vsub.s32 1, %v1134
        %v1136 = vrot.slane %v954, %v1135
        %v1137 = vlaneseq
        %v1138 = vshrl.u32 %v1137, 7
        %v1139 = vsub.s32 2, %v1138
        %v1140 = vrot.slane %v954, %v1139
        %v1141 = vlaneseq
        %v1142 = vshrl.u32 %v1141, 7
        %v1143 = vsub.s32 3, %v1142
        %v1144 = vrot.slane %v954, %v1143
        %v1145 = vlaneseq
        %v1146 = vshrl.u32 %v1145, 7
        %v1147 = vsub.s32 4, %v1146
        %v1148 = vrot.slane %v954, %v1147
        %v1149 = vlaneseq
        %v1150 = vshrl.u32 %v1149, 7
        %v1151 = vsub.s32 5, %v1150
        %v1152 = vrot.slane %v954, %v1151
        %v1153 = vlaneseq
        %v1154 = vshrl.u32 %v1153, 7
        %v1155 = vsub.s32 6, %v1154
        %v1156 = vrot.slane %v954, %v1155
        %v1157 = vlaneseq
        %v1158 = vshrl.u32 %v1157, 7
        %v1159 = vsub.s32 7, %v1158
        %v1160 = vrot.slane %v954, %v1159
        %v1161 = vlaneseq
        %v1162 = vshrl.u32 %v1161, 7
        %v1163 = vsub.s32 0, %v1162
        %v1164 = vrot.slane %v961, %v1163
        %v1165 = vlaneseq
        %v1166 = vshrl.u32 %v1165, 7
        %v1167 = vsub.s32 1, %v1166
        %v1168 = vrot.slane %v961, %v1167
        %v1169 = vlaneseq
        %v1170 = vshrl.u32 %v1169, 7
        %v1171 = vsub.s32 2, %v1170
        %v1172 = vrot.slane %v961, %v1171
        %v1173 = vlaneseq
        %v1174 = vshrl.u32 %v1173, 7
        %v1175 = vsub.s32 3, %v1174
        %v1176 = vrot.slane %v961, %v1175
        %v1177 = vlaneseq
        %v1178 = vshrl.u32 %v1177, 7
        %v1179 = vsub.s32 4, %v1178
        %v1180 = vrot.slane %v961, %v1179
        %v1181 = vlaneseq
        %v1182 = vshrl.u32 %v1181, 7
        %v1183 = vsub.s32 5, %v1182
        %v1184 = vrot.slane %v961, %v1183
        %v1185 = vlaneseq
        %v1186 = vshrl.u32 %v1185, 7
        %v1187 = vsub.s32 6, %v1186
        %v1188 = vrot.slane %v961, %v1187
        %v1189 = vlaneseq
        %v1190 = vshrl.u32 %v1189, 7
        %v1191 = vsub.s32 7, %v1190
        %v1192 = vrot.slane %v961, %v1191
        %v1193 = vlaneseq
        %v1194 = vshrl.u32 %v1193, 7
        %v1195 = vsub.s32 0, %v1194
        %v1196 = vrot.slane %v968, %v1195
        %v1197 = vlaneseq
        %v1198 = vshrl.u32 %v1197, 7
        %v1199 = vsub.s32 1, %v1198
        %v1200 = vrot.slane %v968, %v1199
        %v1201 = vlaneseq
        %v1202 = vshrl.u32 %v1201, 7
        %v1203 = vsub.s32 2, %v1202
        %v1204 = vrot.slane %v968, %v1203
        %v1205 = vlaneseq
        %v1206 = vshrl.u32 %v1205, 7
        %v1207 = vsub.s32 3, %v1206
        %v1208 = vrot.slane %v968, %v1207
        %v1209 = vlaneseq
        %v1210 = vshrl.u32 %v1209, 7
        %v1211 = vsub.s32 4, %v1210
        %v1212 = vrot.slane %v968, %v1211
        %v1213 = vlaneseq
        %v1214 = vshrl.u32 %v1213, 7
        %v1215 = vsub.s32 5, %v1214
        %v1216 = vrot.slane %v968, %v1215
        %v1217 = vlaneseq
        %v1218 = vshrl.u32 %v1217, 7
        %v1219 = vsub.s32 6, %v1218
        %v1220 = vrot.slane %v968, %v1219
        %v1221 = vlaneseq
        %v1222 = vshrl.u32 %v1221, 7
        %v1223 = vsub.s32 7, %v1222
        %v1224 = vrot.slane %v968, %v1223
        %v1225 = vld [vmem:[%s651] sm:$0xff]
        %v1226 = vld [vmem:[%s651 + $0x8] sm:$0xff]
        %v1227 = vld [vmem:[%s651 + $0x10] sm:$0xff]
        %v1228 = vld [vmem:[%s651 + $0x18] sm:$0xff]
        %v1229 = vld [vmem:[%s651 + $0x20] sm:$0xff]
        %v1230 = vld [vmem:[%s651 + $0x28] sm:$0xff]
        %v1231 = vld [vmem:[%s651 + $0x30] sm:$0xff]
        %v1232 = vld [vmem:[%s651 + $0x38] sm:$0xff]
        %v1233 = vld [vmem:[#allocation8] sm:$0xff]
        %v1234 = vld [vmem:[#allocation8 + $0x8] sm:$0xff]
        %v1235 = vld [vmem:[#allocation8 + $0x10] sm:$0xff]
        %v1236 = vld [vmem:[#allocation8 + $0x18] sm:$0xff]
        %v1237 = vld [vmem:[#allocation8 + $0x20] sm:$0xff]
        %v1238 = vld [vmem:[#allocation8 + $0x28] sm:$0xff]
        %v1239 = vld [vmem:[#allocation8 + $0x30] sm:$0xff]
        %v1240 = vld [vmem:[#allocation8 + $0x38] sm:$0xff]
        %v1241 = vld [vmem:[#allocation8 + $0x40] sm:$0xff]
        %v1242 = vld [vmem:[#allocation8 + $0x48] sm:$0xff]
        %v1243 = vld [vmem:[#allocation8 + $0x50] sm:$0xff]
        %v1244 = vld [vmem:[#allocation8 + $0x58] sm:$0xff]
        %v1245 = vld [vmem:[#allocation8 + $0x60] sm:$0xff]
        %v1246 = vld [vmem:[#allocation8 + $0x68] sm:$0xff]
        %v1247 = vld [vmem:[#allocation8 + $0x70] sm:$0xff]
        %v1248 = vld [vmem:[#allocation8 + $0x78] sm:$0xff]
        %v1249 = vld [vmem:[%s10] sm:$0x3]
        %v1251 = vlaneseq
        %v1252 = vshrl.u32 %v1251, 7
        %v1253 = vsub.s32 0, %v1252
        %v1254 = vrot.slane %v1249, %v1253
        %v1255 = vlaneseq
        %v1256 = vshrl.u32 %v1255, 7
        %v1257 = vsub.s32 1, %v1256
        %v1258 = vrot.slane %v1249, %v1257
        %v1262 = vsel %vm744, %v1225, 0
        %v1265 = vsel %vm744, %v1226, 0
        %v1268 = vsel %vm744, %v1227, 0
        %v1271 = vsel %vm744, %v1228, 0
        %v1274 = vsel %vm744, %v1229, 0
        %v1277 = vsel %vm744, %v1230, 0
        %v1280 = vsel %vm744, %v1231, 0
        %v1283 = vsel %vm744, %v1232, 0
        %1285 = vmatprep.subr.mxu0 %v1234
        %1286 = vmatpush1.msra.mxu0 %v1233
        %1287 = vmatprep.subr.mxu0 %v1236
        %1288 = vmatpush1.msra.mxu0 %v1235
        %1289 = vmatprep.subr.mxu0 %v1238
        %1290 = vmatpush1.msra.mxu0 %v1237
        %1291 = vmatprep.subr.mxu0 %v1240
        %1292 = vmatpush1.msra.mxu0 %v1239
        %1293 = vmatprep.subr.mxu0 %v1242
        %1294 = vmatpush1.msra.mxu0 %v1241
        %1295 = vmatprep.subr.mxu0 %v1244
        %1296 = vmatpush1.msra.mxu0 %v1243
        %1297 = vmatprep.subr.mxu0 %v1246
        %1298 = vmatpush1.msra.mxu0 %v1245
        %1299 = vmatprep.subr.mxu0 %v1248
        %1300 = vmatpush1.msra.mxu0 %v1247
        %1301 = vmatprep.subr.mxu0 0.0
        %1302 = vmatpush1.msra.mxu0 0.0
        %1303 = vmatprep.subr.mxu0 0.0
        %1304 = vmatpush1.msra.mxu0 0.0
        %1305 = vmatprep.subr.mxu0 0.0
        %1306 = vmatpush1.msra.mxu0 0.0
        %1307 = vmatprep.subr.mxu0 0.0
        %1308 = vmatpush1.msra.mxu0 0.0
        %1309 = vmatprep.subr.mxu0 0.0
        %1310 = vmatpush1.msra.mxu0 0.0
        %1311 = vmatprep.subr.mxu0 0.0
        %1312 = vmatpush1.msra.mxu0 0.0
        %1313 = vmatprep.subr.mxu0 0.0
        %1314 = vmatpush1.msra.mxu0 0.0
        %1315 = vmatprep.subr.mxu0 0.0
        %1316 = vmatpush1.msra.mxu0 0.0
        %1317 = vmatprep.subr.mxu0 0.0
        %1318 = vmatpush1.msra.mxu0 0.0
        %1319 = vmatprep.subr.mxu0 0.0
        %1320 = vmatpush1.msra.mxu0 0.0
        %1321 = vmatprep.subr.mxu0 0.0
        %1322 = vmatpush1.msra.mxu0 0.0
        %1323 = vmatprep.subr.mxu0 0.0
        %1324 = vmatpush1.msra.mxu0 0.0
        %1325 = vmatprep.subr.mxu0 0.0
        %1326 = vmatpush1.msra.mxu0 0.0
        %1327 = vmatprep.subr.mxu0 0.0
        %1328 = vmatpush1.msra.mxu0 0.0
        %1329 = vmatprep.subr.mxu0 0.0
        %1330 = vmatpush1.msra.mxu0 0.0
        %1331 = vmatprep.subr.mxu0 0.0
        %1332 = vmatpush1.msra.mxu0 0.0
        %1333 = vmatprep.subr.mxu0 0.0
        %1334 = vmatpush1.msra.mxu0 0.0
        %1335 = vmatprep.subr.mxu0 0.0
        %1336 = vmatpush1.msra.mxu0 0.0
        %1337 = vmatprep.subr.mxu0 0.0
        %1338 = vmatpush1.msra.mxu0 0.0
        %1339 = vmatprep.subr.mxu0 0.0
        %1340 = vmatpush1.msra.mxu0 0.0
        %1341 = vmatprep.subr.mxu0 0.0
        %1342 = vmatpush1.msra.mxu0 0.0
        %1343 = vmatprep.subr.mxu0 0.0
        %1344 = vmatpush1.msra.mxu0 0.0
        %1345 = vmatprep.subr.mxu0 0.0
        %1346 = vmatpush1.msra.mxu0 0.0
        %1347 = vmatprep.subr.mxu0 0.0
        %1348 = vmatpush1.msra.mxu0 0.0
        %1349 = vmatprep.mubr.f32.mxu0 0.0
        %1350 = vmatmul.mubr.f32.gmra.mrb[0].mxu0 %v1262
        %v1351 = vpop.f32.mrb[0].mxu0
        %v1352 = vadd.f32 %v1254, %v1351
        %v1353 = vpop.f32.mrb[0].mxu0
        %v1354 = vadd.f32 %v1258, %v1353
        %1355 = vmatprep.mubr.f32.mxu0 0.0
        %1356 = vmatmul.mubr.f32.gmra.mrb[0].mxu0 %v1265
        %v1357 = vpop.f32.mrb[0].mxu0
        %v1358 = vadd.f32 %v1254, %v1357
        %v1359 = vpop.f32.mrb[0].mxu0
        %v1360 = vadd.f32 %v1258, %v1359
        %1361 = vmatprep.mubr.f32.mxu0 0.0
        %1362 = vmatmul.mubr.f32.gmra.mrb[0].mxu0 %v1268
        %v1363 = vpop.f32.mrb[0].mxu0
        %v1364 = vadd.f32 %v1254, %v1363
        %v1365 = vpop.f32.mrb[0].mxu0
        %v1366 = vadd.f32 %v1258, %v1365
        %1367 = vmatprep.mubr.f32.mxu0 0.0
        %1368 = vmatmul.mubr.f32.gmra.mrb[0].mxu0 %v1271
        %v1369 = vpop.f32.mrb[0].mxu0
        %v1370 = vadd.f32 %v1254, %v1369
        %v1371 = vpop.f32.mrb[0].mxu0
        %v1372 = vadd.f32 %v1258, %v1371
        %1373 = vmatprep.mubr.f32.mxu0 0.0
        %1374 = vmatmul.mubr.f32.gmra.mrb[0].mxu0 %v1274
        %v1375 = vpop.f32.mrb[0].mxu0
        %v1376 = vadd.f32 %v1254, %v1375
        %v1377 = vpop.f32.mrb[0].mxu0
        %v1378 = vadd.f32 %v1258, %v1377
        %1379 = vmatprep.mubr.f32.mxu0 0.0
        %1380 = vmatmul.mubr.f32.gmra.mrb[0].mxu0 %v1277
        %v1381 = vpop.f32.mrb[0].mxu0
        %v1382 = vadd.f32 %v1254, %v1381
        %v1383 = vpop.f32.mrb[0].mxu0
        %v1384 = vadd.f32 %v1258, %v1383
        %1385 = vmatprep.mubr.f32.mxu0 0.0
        %1386 = vmatmul.mubr.f32.gmra.mrb[0].mxu0 %v1280
        %v1387 = vpop.f32.mrb[0].mxu0
        %v1388 = vadd.f32 %v1254, %v1387
        %v1389 = vpop.f32.mrb[0].mxu0
        %v1390 = vadd.f32 %v1258, %v1389
        %1391 = vmatprep.mubr.f32.mxu0 0.0
        %1392 = vmatmul.mubr.f32.gmra.mrb[0].mxu0 %v1283
        %v1393 = vpop.f32.mrb[0].mxu0
        %v1394 = vadd.f32 %v1254, %v1393
        %v1395 = vpop.f32.mrb[0].mxu0
        %v1396 = vadd.f32 %v1258, %v1395
        %1397 = vdwg.mxu0
        %v1406 = vcombine.high %v1352, %v1352
        %v1408 = vunpack.c.l.s4 1966171168
        %v1409 = vunpack.c.0.s8 %v1408
        %v1410 = vlaneseq
        %v1411 = vshrl.u32 %v1410, 7
        %v1412 = vsub.s32 %v1409, %v1411
        %v1413 = vrot.slane %v1352, %v1412
        %v1415 = vunpack.c.l.s4 1966171168
        %v1416 = vunpack.c.0.s8 %v1415
        %v1417 = vlaneseq
        %v1418 = vshrl.u32 %v1417, 7
        %v1419 = vsub.s32 %v1416, %v1418
        %v1420 = vrot.slane %v1406, %v1419
        %v1421 = vcombine.high %v1413, %v1413
        %v1422 = vcombine.high %v1420, %v1420
        %v1424 = vunpack.c.l.s4 1966171168
        %v1425 = vunpack.c.0.s8 %v1424
        %v1426 = vlaneseq
        %v1427 = vshrl.u32 %v1426, 7
        %v1428 = vsub.s32 %v1425, %v1427
        %v1429 = vrot.slane %v1413, %v1428
        %v1431 = vunpack.c.l.s4 1966171168
        %v1432 = vunpack.c.0.s8 %v1431
        %v1433 = vlaneseq
        %v1434 = vshrl.u32 %v1433, 7
        %v1435 = vsub.s32 %v1432, %v1434
        %v1436 = vrot.slane %v1420, %v1435
        %v1438 = vunpack.c.l.s4 1966171168
        %v1439 = vunpack.c.0.s8 %v1438
        %v1440 = vlaneseq
        %v1441 = vshrl.u32 %v1440, 7
        %v1442 = vsub.s32 %v1439, %v1441
        %v1443 = vrot.slane %v1421, %v1442
        %v1445 = vunpack.c.l.s4 1966171168
        %v1446 = vunpack.c.0.s8 %v1445
        %v1447 = vlaneseq
        %v1448 = vshrl.u32 %v1447, 7
        %v1449 = vsub.s32 %v1446, %v1448
        %v1450 = vrot.slane %v1422, %v1449
        %v1451 = vcombine.high %v1429, %v1429
        %v1452 = vcombine.high %v1436, %v1436
        %v1453 = vcombine.high %v1443, %v1443
        %v1454 = vcombine.high %v1450, %v1450
        %v1455 = vcombine.high %v1358, %v1358
        %v1457 = vunpack.c.l.s4 1966171168
        %v1458 = vunpack.c.0.s8 %v1457
        %v1459 = vlaneseq
        %v1460 = vshrl.u32 %v1459, 7
        %v1461 = vsub.s32 %v1458, %v1460
        %v1462 = vrot.slane %v1358, %v1461
        %v1464 = vunpack.c.l.s4 1966171168
        %v1465 = vunpack.c.0.s8 %v1464
        %v1466 = vlaneseq
        %v1467 = vshrl.u32 %v1466, 7
        %v1468 = vsub.s32 %v1465, %v1467
        %v1469 = vrot.slane %v1455, %v1468
        %v1470 = vcombine.high %v1462, %v1462
        %v1471 = vcombine.high %v1469, %v1469
        %v1473 = vunpack.c.l.s4 1966171168
        %v1474 = vunpack.c.0.s8 %v1473
        %v1475 = vlaneseq
        %v1476 = vshrl.u32 %v1475, 7
        %v1477 = vsub.s32 %v1474, %v1476
        %v1478 = vrot.slane %v1462, %v1477
        %v1480 = vunpack.c.l.s4 1966171168
        %v1481 = vunpack.c.0.s8 %v1480
        %v1482 = vlaneseq
        %v1483 = vshrl.u32 %v1482, 7
        %v1484 = vsub.s32 %v1481, %v1483
        %v1485 = vrot.slane %v1469, %v1484
        %v1487 = vunpack.c.l.s4 1966171168
        %v1488 = vunpack.c.0.s8 %v1487
        %v1489 = vlaneseq
        %v1490 = vshrl.u32 %v1489, 7
        %v1491 = vsub.s32 %v1488, %v1490
        %v1492 = vrot.slane %v1470, %v1491
        %v1494 = vunpack.c.l.s4 1966171168
        %v1495 = vunpack.c.0.s8 %v1494
        %v1496 = vlaneseq
        %v1497 = vshrl.u32 %v1496, 7
        %v1498 = vsub.s32 %v1495, %v1497
        %v1499 = vrot.slane %v1471, %v1498
        %v1500 = vcombine.high %v1478, %v1478
        %v1501 = vcombine.high %v1485, %v1485
        %v1502 = vcombine.high %v1492, %v1492
        %v1503 = vcombine.high %v1499, %v1499
        %v1504 = vcombine.high %v1364, %v1364
        %v1506 = vunpack.c.l.s4 1966171168
        %v1507 = vunpack.c.0.s8 %v1506
        %v1508 = vlaneseq
        %v1509 = vshrl.u32 %v1508, 7
        %v1510 = vsub.s32 %v1507, %v1509
        %v1511 = vrot.slane %v1364, %v1510
        %v1513 = vunpack.c.l.s4 1966171168
        %v1514 = vunpack.c.0.s8 %v1513
        %v1515 = vlaneseq
        %v1516 = vshrl.u32 %v1515, 7
        %v1517 = vsub.s32 %v1514, %v1516
        %v1518 = vrot.slane %v1504, %v1517
        %v1519 = vcombine.high %v1511, %v1511
        %v1520 = vcombine.high %v1518, %v1518
        %v1522 = vunpack.c.l.s4 1966171168
        %v1523 = vunpack.c.0.s8 %v1522
        %v1524 = vlaneseq
        %v1525 = vshrl.u32 %v1524, 7
        %v1526 = vsub.s32 %v1523, %v1525
        %v1527 = vrot.slane %v1511, %v1526
        %v1529 = vunpack.c.l.s4 1966171168
        %v1530 = vunpack.c.0.s8 %v1529
        %v1531 = vlaneseq
        %v1532 = vshrl.u32 %v1531, 7
        %v1533 = vsub.s32 %v1530, %v1532
        %v1534 = vrot.slane %v1518, %v1533
        %v1536 = vunpack.c.l.s4 1966171168
        %v1537 = vunpack.c.0.s8 %v1536
        %v1538 = vlaneseq
        %v1539 = vshrl.u32 %v1538, 7
        %v1540 = vsub.s32 %v1537, %v1539
        %v1541 = vrot.slane %v1519, %v1540
        %v1543 = vunpack.c.l.s4 1966171168
        %v1544 = vunpack.c.0.s8 %v1543
        %v1545 = vlaneseq
        %v1546 = vshrl.u32 %v1545, 7
        %v1547 = vsub.s32 %v1544, %v1546
        %v1548 = vrot.slane %v1520, %v1547
        %v1549 = vcombine.high %v1527, %v1527
        %v1550 = vcombine.high %v1534, %v1534
        %v1551 = vcombine.high %v1541, %v1541
        %v1552 = vcombine.high %v1548, %v1548
        %v1553 = vcombine.high %v1370, %v1370
        %v1555 = vunpack.c.l.s4 1966171168
        %v1556 = vunpack.c.0.s8 %v1555
        %v1557 = vlaneseq
        %v1558 = vshrl.u32 %v1557, 7
        %v1559 = vsub.s32 %v1556, %v1558
        %v1560 = vrot.slane %v1370, %v1559
        %v1562 = vunpack.c.l.s4 1966171168
        %v1563 = vunpack.c.0.s8 %v1562
        %v1564 = vlaneseq
        %v1565 = vshrl.u32 %v1564, 7
        %v1566 = vsub.s32 %v1563, %v1565
        %v1567 = vrot.slane %v1553, %v1566
        %v1568 = vcombine.high %v1560, %v1560
        %v1569 = vcombine.high %v1567, %v1567
        %v1571 = vunpack.c.l.s4 1966171168
        %v1572 = vunpack.c.0.s8 %v1571
        %v1573 = vlaneseq
        %v1574 = vshrl.u32 %v1573, 7
        %v1575 = vsub.s32 %v1572, %v1574
        %v1576 = vrot.slane %v1560, %v1575
        %v1578 = vunpack.c.l.s4 1966171168
        %v1579 = vunpack.c.0.s8 %v1578
        %v1580 = vlaneseq
        %v1581 = vshrl.u32 %v1580, 7
        %v1582 = vsub.s32 %v1579, %v1581
        %v1583 = vrot.slane %v1567, %v1582
        %v1585 = vunpack.c.l.s4 1966171168
        %v1586 = vunpack.c.0.s8 %v1585
        %v1587 = vlaneseq
        %v1588 = vshrl.u32 %v1587, 7
        %v1589 = vsub.s32 %v1586, %v1588
        %v1590 = vrot.slane %v1568, %v1589
        %v1592 = vunpack.c.l.s4 1966171168
        %v1593 = vunpack.c.0.s8 %v1592
        %v1594 = vlaneseq
        %v1595 = vshrl.u32 %v1594, 7
        %v1596 = vsub.s32 %v1593, %v1595
        %v1597 = vrot.slane %v1569, %v1596
        %v1598 = vcombine.high %v1576, %v1576
        %v1599 = vcombine.high %v1583, %v1583
        %v1600 = vcombine.high %v1590, %v1590
        %v1601 = vcombine.high %v1597, %v1597
        %v1602 = vcombine.high %v1376, %v1376
        %v1604 = vunpack.c.l.s4 1966171168
        %v1605 = vunpack.c.0.s8 %v1604
        %v1606 = vlaneseq
        %v1607 = vshrl.u32 %v1606, 7
        %v1608 = vsub.s32 %v1605, %v1607
        %v1609 = vrot.slane %v1376, %v1608
        %v1611 = vunpack.c.l.s4 1966171168
        %v1612 = vunpack.c.0.s8 %v1611
        %v1613 = vlaneseq
        %v1614 = vshrl.u32 %v1613, 7
        %v1615 = vsub.s32 %v1612, %v1614
        %v1616 = vrot.slane %v1602, %v1615
        %v1617 = vcombine.high %v1609, %v1609
        %v1618 = vcombine.high %v1616, %v1616
        %v1620 = vunpack.c.l.s4 1966171168
        %v1621 = vunpack.c.0.s8 %v1620
        %v1622 = vlaneseq
        %v1623 = vshrl.u32 %v1622, 7
        %v1624 = vsub.s32 %v1621, %v1623
        %v1625 = vrot.slane %v1609, %v1624
        %v1627 = vunpack.c.l.s4 1966171168
        %v1628 = vunpack.c.0.s8 %v1627
        %v1629 = vlaneseq
        %v1630 = vshrl.u32 %v1629, 7
        %v1631 = vsub.s32 %v1628, %v1630
        %v1632 = vrot.slane %v1616, %v1631
        %v1634 = vunpack.c.l.s4 1966171168
        %v1635 = vunpack.c.0.s8 %v1634
        %v1636 = vlaneseq
        %v1637 = vshrl.u32 %v1636, 7
        %v1638 = vsub.s32 %v1635, %v1637
        %v1639 = vrot.slane %v1617, %v1638
        %v1641 = vunpack.c.l.s4 1966171168
        %v1642 = vunpack.c.0.s8 %v1641
        %v1643 = vlaneseq
        %v1644 = vshrl.u32 %v1643, 7
        %v1645 = vsub.s32 %v1642, %v1644
        %v1646 = vrot.slane %v1618, %v1645
        %v1647 = vcombine.high %v1625, %v1625
        %v1648 = vcombine.high %v1632, %v1632
        %v1649 = vcombine.high %v1639, %v1639
        %v1650 = vcombine.high %v1646, %v1646
        %v1651 = vcombine.high %v1382, %v1382
        %v1653 = vunpack.c.l.s4 1966171168
        %v1654 = vunpack.c.0.s8 %v1653
        %v1655 = vlaneseq
        %v1656 = vshrl.u32 %v1655, 7
        %v1657 = vsub.s32 %v1654, %v1656
        %v1658 = vrot.slane %v1382, %v1657
        %v1660 = vunpack.c.l.s4 1966171168
        %v1661 = vunpack.c.0.s8 %v1660
        %v1662 = vlaneseq
        %v1663 = vshrl.u32 %v1662, 7
        %v1664 = vsub.s32 %v1661, %v1663
        %v1665 = vrot.slane %v1651, %v1664
        %v1666 = vcombine.high %v1658, %v1658
        %v1667 = vcombine.high %v1665, %v1665
        %v1669 = vunpack.c.l.s4 1966171168
        %v1670 = vunpack.c.0.s8 %v1669
        %v1671 = vlaneseq
        %v1672 = vshrl.u32 %v1671, 7
        %v1673 = vsub.s32 %v1670, %v1672
        %v1674 = vrot.slane %v1658, %v1673
        %v1676 = vunpack.c.l.s4 1966171168
        %v1677 = vunpack.c.0.s8 %v1676
        %v1678 = vlaneseq
        %v1679 = vshrl.u32 %v1678, 7
        %v1680 = vsub.s32 %v1677, %v1679
        %v1681 = vrot.slane %v1665, %v1680
        %v1683 = vunpack.c.l.s4 1966171168
        %v1684 = vunpack.c.0.s8 %v1683
        %v1685 = vlaneseq
        %v1686 = vshrl.u32 %v1685, 7
        %v1687 = vsub.s32 %v1684, %v1686
        %v1688 = vrot.slane %v1666, %v1687
        %v1690 = vunpack.c.l.s4 1966171168
        %v1691 = vunpack.c.0.s8 %v1690
        %v1692 = vlaneseq
        %v1693 = vshrl.u32 %v1692, 7
        %v1694 = vsub.s32 %v1691, %v1693
        %v1695 = vrot.slane %v1667, %v1694
        %v1696 = vcombine.high %v1674, %v1674
        %v1697 = vcombine.high %v1681, %v1681
        %v1698 = vcombine.high %v1688, %v1688
        %v1699 = vcombine.high %v1695, %v1695
        %v1700 = vcombine.high %v1388, %v1388
        %v1702 = vunpack.c.l.s4 1966171168
        %v1703 = vunpack.c.0.s8 %v1702
        %v1704 = vlaneseq
        %v1705 = vshrl.u32 %v1704, 7
        %v1706 = vsub.s32 %v1703, %v1705
        %v1707 = vrot.slane %v1388, %v1706
        %v1709 = vunpack.c.l.s4 1966171168
        %v1710 = vunpack.c.0.s8 %v1709
        %v1711 = vlaneseq
        %v1712 = vshrl.u32 %v1711, 7
        %v1713 = vsub.s32 %v1710, %v1712
        %v1714 = vrot.slane %v1700, %v1713
        %v1715 = vcombine.high %v1707, %v1707
        %v1716 = vcombine.high %v1714, %v1714
        %v1718 = vunpack.c.l.s4 1966171168
        %v1719 = vunpack.c.0.s8 %v1718
        %v1720 = vlaneseq
        %v1721 = vshrl.u32 %v1720, 7
        %v1722 = vsub.s32 %v1719, %v1721
        %v1723 = vrot.slane %v1707, %v1722
        %v1725 = vunpack.c.l.s4 1966171168
        %v1726 = vunpack.c.0.s8 %v1725
        %v1727 = vlaneseq
        %v1728 = vshrl.u32 %v1727, 7
        %v1729 = vsub.s32 %v1726, %v1728
        %v1730 = vrot.slane %v1714, %v1729
        %v1732 = vunpack.c.l.s4 1966171168
        %v1733 = vunpack.c.0.s8 %v1732
        %v1734 = vlaneseq
        %v1735 = vshrl.u32 %v1734, 7
        %v1736 = vsub.s32 %v1733, %v1735
        %v1737 = vrot.slane %v1715, %v1736
        %v1739 = vunpack.c.l.s4 1966171168
        %v1740 = vunpack.c.0.s8 %v1739
        %v1741 = vlaneseq
        %v1742 = vshrl.u32 %v1741, 7
        %v1743 = vsub.s32 %v1740, %v1742
        %v1744 = vrot.slane %v1716, %v1743
        %v1745 = vcombine.high %v1723, %v1723
        %v1746 = vcombine.high %v1730, %v1730
        %v1747 = vcombine.high %v1737, %v1737
        %v1748 = vcombine.high %v1744, %v1744
        %v1749 = vcombine.high %v1394, %v1394
        %v1751 = vunpack.c.l.s4 1966171168
        %v1752 = vunpack.c.0.s8 %v1751
        %v1753 = vlaneseq
        %v1754 = vshrl.u32 %v1753, 7
        %v1755 = vsub.s32 %v1752, %v1754
        %v1756 = vrot.slane %v1394, %v1755
        %v1758 = vunpack.c.l.s4 1966171168
        %v1759 = vunpack.c.0.s8 %v1758
        %v1760 = vlaneseq
        %v1761 = vshrl.u32 %v1760, 7
        %v1762 = vsub.s32 %v1759, %v1761
        %v1763 = vrot.slane %v1749, %v1762
        %v1764 = vcombine.high %v1756, %v1756
        %v1765 = vcombine.high %v1763, %v1763
        %v1767 = vunpack.c.l.s4 1966171168
        %v1768 = vunpack.c.0.s8 %v1767
        %v1769 = vlaneseq
        %v1770 = vshrl.u32 %v1769, 7
        %v1771 = vsub.s32 %v1768, %v1770
        %v1772 = vrot.slane %v1756, %v1771
        %v1774 = vunpack.c.l.s4 1966171168
        %v1775 = vunpack.c.0.s8 %v1774
        %v1776 = vlaneseq
        %v1777 = vshrl.u32 %v1776, 7
        %v1778 = vsub.s32 %v1775, %v1777
        %v1779 = vrot.slane %v1763, %v1778
        %v1781 = vunpack.c.l.s4 1966171168
        %v1782 = vunpack.c.0.s8 %v1781
        %v1783 = vlaneseq
        %v1784 = vshrl.u32 %v1783, 7
        %v1785 = vsub.s32 %v1782, %v1784
        %v1786 = vrot.slane %v1764, %v1785
        %v1788 = vunpack.c.l.s4 1966171168
        %v1789 = vunpack.c.0.s8 %v1788
        %v1790 = vlaneseq
        %v1791 = vshrl.u32 %v1790, 7
        %v1792 = vsub.s32 %v1789, %v1791
        %v1793 = vrot.slane %v1765, %v1792
        %v1794 = vcombine.high %v1772, %v1772
        %v1795 = vcombine.high %v1779, %v1779
        %v1796 = vcombine.high %v1786, %v1786
        %v1797 = vcombine.high %v1793, %v1793
        %v1798 = vlaneseq
        %v1799 = vshrl.u32 %v1798, 7
        %v1800 = vsub.s32 0, %v1799
        %v1801 = vrot.slane %v1429, %v1800
        %v1802 = vlaneseq
        %v1803 = vshrl.u32 %v1802, 7
        %v1804 = vsub.s32 0, %v1803
        %v1805 = vrot.slane %v1443, %v1804
        %v1806 = vlaneseq
        %v1807 = vshrl.u32 %v1806, 7
        %v1808 = vsub.s32 0, %v1807
        %v1809 = vrot.slane %v1451, %v1808
        %v1810 = vlaneseq
        %v1811 = vshrl.u32 %v1810, 7
        %v1812 = vsub.s32 0, %v1811
        %v1813 = vrot.slane %v1453, %v1812
        %v1814 = vlaneseq
        %v1815 = vshrl.u32 %v1814, 7
        %v1816 = vsub.s32 0, %v1815
        %v1817 = vrot.slane %v1436, %v1816
        %v1818 = vlaneseq
        %v1819 = vshrl.u32 %v1818, 7
        %v1820 = vsub.s32 0, %v1819
        %v1821 = vrot.slane %v1450, %v1820
        %v1822 = vlaneseq
        %v1823 = vshrl.u32 %v1822, 7
        %v1824 = vsub.s32 0, %v1823
        %v1825 = vrot.slane %v1452, %v1824
        %v1826 = vlaneseq
        %v1827 = vshrl.u32 %v1826, 7
        %v1828 = vsub.s32 0, %v1827
        %v1829 = vrot.slane %v1454, %v1828
        %v1830 = vlaneseq
        %v1831 = vshrl.u32 %v1830, 7
        %v1832 = vsub.s32 0, %v1831
        %v1833 = vrot.slane %v1478, %v1832
        %v1834 = vlaneseq
        %v1835 = vshrl.u32 %v1834, 7
        %v1836 = vsub.s32 0, %v1835
        %v1837 = vrot.slane %v1492, %v1836
        %v1838 = vlaneseq
        %v1839 = vshrl.u32 %v1838, 7
        %v1840 = vsub.s32 0, %v1839
        %v1841 = vrot.slane %v1500, %v1840
        %v1842 = vlaneseq
        %v1843 = vshrl.u32 %v1842, 7
        %v1844 = vsub.s32 0, %v1843
        %v1845 = vrot.slane %v1502, %v1844
        %v1846 = vlaneseq
        %v1847 = vshrl.u32 %v1846, 7
        %v1848 = vsub.s32 0, %v1847
        %v1849 = vrot.slane %v1485, %v1848
        %v1850 = vlaneseq
        %v1851 = vshrl.u32 %v1850, 7
        %v1852 = vsub.s32 0, %v1851
        %v1853 = vrot.slane %v1499, %v1852
        %v1854 = vlaneseq
        %v1855 = vshrl.u32 %v1854, 7
        %v1856 = vsub.s32 0, %v1855
        %v1857 = vrot.slane %v1501, %v1856
        %v1858 = vlaneseq
        %v1859 = vshrl.u32 %v1858, 7
        %v1860 = vsub.s32 0, %v1859
        %v1861 = vrot.slane %v1503, %v1860
        %v1862 = vlaneseq
        %v1863 = vshrl.u32 %v1862, 7
        %v1864 = vsub.s32 0, %v1863
        %v1865 = vrot.slane %v1527, %v1864
        %v1866 = vlaneseq
        %v1867 = vshrl.u32 %v1866, 7
        %v1868 = vsub.s32 0, %v1867
        %v1869 = vrot.slane %v1541, %v1868
        %v1870 = vlaneseq
        %v1871 = vshrl.u32 %v1870, 7
        %v1872 = vsub.s32 0, %v1871
        %v1873 = vrot.slane %v1549, %v1872
        %v1874 = vlaneseq
        %v1875 = vshrl.u32 %v1874, 7
        %v1876 = vsub.s32 0, %v1875
        %v1877 = vrot.slane %v1551, %v1876
        %v1878 = vlaneseq
        %v1879 = vshrl.u32 %v1878, 7
        %v1880 = vsub.s32 0, %v1879
        %v1881 = vrot.slane %v1534, %v1880
        %v1882 = vlaneseq
        %v1883 = vshrl.u32 %v1882, 7
        %v1884 = vsub.s32 0, %v1883
        %v1885 = vrot.slane %v1548, %v1884
        %v1886 = vlaneseq
        %v1887 = vshrl.u32 %v1886, 7
        %v1888 = vsub.s32 0, %v1887
        %v1889 = vrot.slane %v1550, %v1888
        %v1890 = vlaneseq
        %v1891 = vshrl.u32 %v1890, 7
        %v1892 = vsub.s32 0, %v1891
        %v1893 = vrot.slane %v1552, %v1892
        %v1894 = vlaneseq
        %v1895 = vshrl.u32 %v1894, 7
        %v1896 = vsub.s32 0, %v1895
        %v1897 = vrot.slane %v1576, %v1896
        %v1898 = vlaneseq
        %v1899 = vshrl.u32 %v1898, 7
        %v1900 = vsub.s32 0, %v1899
        %v1901 = vrot.slane %v1590, %v1900
        %v1902 = vlaneseq
        %v1903 = vshrl.u32 %v1902, 7
        %v1904 = vsub.s32 0, %v1903
        %v1905 = vrot.slane %v1598, %v1904
        %v1906 = vlaneseq
        %v1907 = vshrl.u32 %v1906, 7
        %v1908 = vsub.s32 0, %v1907
        %v1909 = vrot.slane %v1600, %v1908
        %v1910 = vlaneseq
        %v1911 = vshrl.u32 %v1910, 7
        %v1912 = vsub.s32 0, %v1911
        %v1913 = vrot.slane %v1583, %v1912
        %v1914 = vlaneseq
        %v1915 = vshrl.u32 %v1914, 7
        %v1916 = vsub.s32 0, %v1915
        %v1917 = vrot.slane %v1597, %v1916
        %v1918 = vlaneseq
        %v1919 = vshrl.u32 %v1918, 7
        %v1920 = vsub.s32 0, %v1919
        %v1921 = vrot.slane %v1599, %v1920
        %v1922 = vlaneseq
        %v1923 = vshrl.u32 %v1922, 7
        %v1924 = vsub.s32 0, %v1923
        %v1925 = vrot.slane %v1601, %v1924
        %v1926 = vlaneseq
        %v1927 = vshrl.u32 %v1926, 7
        %v1928 = vsub.s32 0, %v1927
        %v1929 = vrot.slane %v1625, %v1928
        %v1930 = vlaneseq
        %v1931 = vshrl.u32 %v1930, 7
        %v1932 = vsub.s32 0, %v1931
        %v1933 = vrot.slane %v1639, %v1932
        %v1934 = vlaneseq
        %v1935 = vshrl.u32 %v1934, 7
        %v1936 = vsub.s32 0, %v1935
        %v1937 = vrot.slane %v1647, %v1936
        %v1938 = vlaneseq
        %v1939 = vshrl.u32 %v1938, 7
        %v1940 = vsub.s32 0, %v1939
        %v1941 = vrot.slane %v1649, %v1940
        %v1942 = vlaneseq
        %v1943 = vshrl.u32 %v1942, 7
        %v1944 = vsub.s32 0, %v1943
        %v1945 = vrot.slane %v1632, %v1944
        %v1946 = vlaneseq
        %v1947 = vshrl.u32 %v1946, 7
        %v1948 = vsub.s32 0, %v1947
        %v1949 = vrot.slane %v1646, %v1948
        %v1950 = vlaneseq
        %v1951 = vshrl.u32 %v1950, 7
        %v1952 = vsub.s32 0, %v1951
        %v1953 = vrot.slane %v1648, %v1952
        %v1954 = vlaneseq
        %v1955 = vshrl.u32 %v1954, 7
        %v1956 = vsub.s32 0, %v1955
        %v1957 = vrot.slane %v1650, %v1956
        %v1958 = vlaneseq
        %v1959 = vshrl.u32 %v1958, 7
        %v1960 = vsub.s32 0, %v1959
        %v1961 = vrot.slane %v1674, %v1960
        %v1962 = vlaneseq
        %v1963 = vshrl.u32 %v1962, 7
        %v1964 = vsub.s32 0, %v1963
        %v1965 = vrot.slane %v1688, %v1964
        %v1966 = vlaneseq
        %v1967 = vshrl.u32 %v1966, 7
        %v1968 = vsub.s32 0, %v1967
        %v1969 = vrot.slane %v1696, %v1968
        %v1970 = vlaneseq
        %v1971 = vshrl.u32 %v1970, 7
        %v1972 = vsub.s32 0, %v1971
        %v1973 = vrot.slane %v1698, %v1972
        %v1974 = vlaneseq
        %v1975 = vshrl.u32 %v1974, 7
        %v1976 = vsub.s32 0, %v1975
        %v1977 = vrot.slane %v1681, %v1976
        %v1978 = vlaneseq
        %v1979 = vshrl.u32 %v1978, 7
        %v1980 = vsub.s32 0, %v1979
        %v1981 = vrot.slane %v1695, %v1980
        %v1982 = vlaneseq
        %v1983 = vshrl.u32 %v1982, 7
        %v1984 = vsub.s32 0, %v1983
        %v1985 = vrot.slane %v1697, %v1984
        %v1986 = vlaneseq
        %v1987 = vshrl.u32 %v1986, 7
        %v1988 = vsub.s32 0, %v1987
        %v1989 = vrot.slane %v1699, %v1988
        %v1990 = vlaneseq
        %v1991 = vshrl.u32 %v1990, 7
        %v1992 = vsub.s32 0, %v1991
        %v1993 = vrot.slane %v1723, %v1992
        %v1994 = vlaneseq
        %v1995 = vshrl.u32 %v1994, 7
        %v1996 = vsub.s32 0, %v1995
        %v1997 = vrot.slane %v1737, %v1996
        %v1998 = vlaneseq
        %v1999 = vshrl.u32 %v1998, 7
        %v2000 = vsub.s32 0, %v1999
        %v2001 = vrot.slane %v1745, %v2000
        %v2002 = vlaneseq
        %v2003 = vshrl.u32 %v2002, 7
        %v2004 = vsub.s32 0, %v2003
        %v2005 = vrot.slane %v1747, %v2004
        %v2006 = vlaneseq
        %v2007 = vshrl.u32 %v2006, 7
        %v2008 = vsub.s32 0, %v2007
        %v2009 = vrot.slane %v1730, %v2008
        %v2010 = vlaneseq
        %v2011 = vshrl.u32 %v2010, 7
        %v2012 = vsub.s32 0, %v2011
        %v2013 = vrot.slane %v1744, %v2012
        %v2014 = vlaneseq
        %v2015 = vshrl.u32 %v2014, 7
        %v2016 = vsub.s32 0, %v2015
        %v2017 = vrot.slane %v1746, %v2016
        %v2018 = vlaneseq
        %v2019 = vshrl.u32 %v2018, 7
        %v2020 = vsub.s32 0, %v2019
        %v2021 = vrot.slane %v1748, %v2020
        %v2022 = vlaneseq
        %v2023 = vshrl.u32 %v2022, 7
        %v2024 = vsub.s32 0, %v2023
        %v2025 = vrot.slane %v1772, %v2024
        %v2026 = vlaneseq
        %v2027 = vshrl.u32 %v2026, 7
        %v2028 = vsub.s32 0, %v2027
        %v2029 = vrot.slane %v1786, %v2028
        %v2030 = vlaneseq
        %v2031 = vshrl.u32 %v2030, 7
        %v2032 = vsub.s32 0, %v2031
        %v2033 = vrot.slane %v1794, %v2032
        %v2034 = vlaneseq
        %v2035 = vshrl.u32 %v2034, 7
        %v2036 = vsub.s32 0, %v2035
        %v2037 = vrot.slane %v1796, %v2036
        %v2038 = vlaneseq
        %v2039 = vshrl.u32 %v2038, 7
        %v2040 = vsub.s32 0, %v2039
        %v2041 = vrot.slane %v1779, %v2040
        %v2042 = vlaneseq
        %v2043 = vshrl.u32 %v2042, 7
        %v2044 = vsub.s32 0, %v2043
        %v2045 = vrot.slane %v1793, %v2044
        %v2046 = vlaneseq
        %v2047 = vshrl.u32 %v2046, 7
        %v2048 = vsub.s32 0, %v2047
        %v2049 = vrot.slane %v1795, %v2048
        %v2050 = vlaneseq
        %v2051 = vshrl.u32 %v2050, 7
        %v2052 = vsub.s32 0, %v2051
        %v2053 = vrot.slane %v1797, %v2052
        %2118 = vrot.lane.b32.xlu0 %v1352, 64
        %v2119 = vpop.permute.xlu0 %2118
        %2120 = vrot.lane.b32.xlu0 %v1358, 64
        %v2121 = vpop.permute.xlu0 %2120
        %2122 = vrot.lane.b32.xlu0 %v1364, 64
        %v2123 = vpop.permute.xlu0 %2122
        %2124 = vrot.lane.b32.xlu0 %v1370, 64
        %v2125 = vpop.permute.xlu0 %2124
        %2126 = vrot.lane.b32.xlu0 %v1376, 64
        %v2127 = vpop.permute.xlu0 %2126
        %2128 = vrot.lane.b32.xlu0 %v1382, 64
        %v2129 = vpop.permute.xlu0 %2128
        %2130 = vrot.lane.b32.xlu0 %v1388, 64
        %v2131 = vpop.permute.xlu0 %2130
        %2132 = vrot.lane.b32.xlu0 %v1394, 64
        %v2133 = vpop.permute.xlu0 %2132
        %v2142 = vmul.f32 %v1801, %v2119
        %v2143 = vmul.f32 %v1805, %v2119
        %v2144 = vmul.f32 %v1809, %v2119
        %v2145 = vmul.f32 %v1813, %v2119
        %v2146 = vmul.f32 %v1817, %v2119
        %v2147 = vmul.f32 %v1821, %v2119
        %v2148 = vmul.f32 %v1825, %v2119
        %v2149 = vmul.f32 %v1829, %v2119
        %v2150 = vmul.f32 %v1833, %v2121
        %v2151 = vmul.f32 %v1837, %v2121
        %v2152 = vmul.f32 %v1841, %v2121
        %v2153 = vmul.f32 %v1845, %v2121
        %v2154 = vmul.f32 %v1849, %v2121
        %v2155 = vmul.f32 %v1853, %v2121
        %v2156 = vmul.f32 %v1857, %v2121
        %v2157 = vmul.f32 %v1861, %v2121
        %v2158 = vmul.f32 %v1865, %v2123
        %v2159 = vmul.f32 %v1869, %v2123
        %v2160 = vmul.f32 %v1873, %v2123
        %v2161 = vmul.f32 %v1877, %v2123
        %v2162 = vmul.f32 %v1881, %v2123
        %v2163 = vmul.f32 %v1885, %v2123
        %v2164 = vmul.f32 %v1889, %v2123
        %v2165 = vmul.f32 %v1893, %v2123
        %v2166 = vmul.f32 %v1897, %v2125
        %v2167 = vmul.f32 %v1901, %v2125
        %v2168 = vmul.f32 %v1905, %v2125
        %v2169 = vmul.f32 %v1909, %v2125
        %v2170 = vmul.f32 %v1913, %v2125
        %v2171 = vmul.f32 %v1917, %v2125
        %v2172 = vmul.f32 %v1921, %v2125
        %v2173 = vmul.f32 %v1925, %v2125
        %v2174 = vmul.f32 %v1929, %v2127
        %v2175 = vmul.f32 %v1933, %v2127
        %v2176 = vmul.f32 %v1937, %v2127
        %v2177 = vmul.f32 %v1941, %v2127
        %v2178 = vmul.f32 %v1945, %v2127
        %v2179 = vmul.f32 %v1949, %v2127
        %v2180 = vmul.f32 %v1953, %v2127
        %v2181 = vmul.f32 %v1957, %v2127
        %v2182 = vmul.f32 %v1961, %v2129
        %v2183 = vmul.f32 %v1965, %v2129
        %v2184 = vmul.f32 %v1969, %v2129
        %v2185 = vmul.f32 %v1973, %v2129
        %v2186 = vmul.f32 %v1977, %v2129
        %v2187 = vmul.f32 %v1981, %v2129
        %v2188 = vmul.f32 %v1985, %v2129
        %v2189 = vmul.f32 %v1989, %v2129
        %v2190 = vmul.f32 %v1993, %v2131
        %v2191 = vmul.f32 %v1997, %v2131
        %v2192 = vmul.f32 %v2001, %v2131
        %v2193 = vmul.f32 %v2005, %v2131
        %v2194 = vmul.f32 %v2009, %v2131
        %v2195 = vmul.f32 %v2013, %v2131
        %v2196 = vmul.f32 %v2017, %v2131
        %v2197 = vmul.f32 %v2021, %v2131
        %v2198 = vmul.f32 %v2025, %v2133
        %v2199 = vmul.f32 %v2029, %v2133
        %v2200 = vmul.f32 %v2033, %v2133
        %v2201 = vmul.f32 %v2037, %v2133
        %v2202 = vmul.f32 %v2041, %v2133
        %v2203 = vmul.f32 %v2045, %v2133
        %v2204 = vmul.f32 %v2049, %v2133
        %v2205 = vmul.f32 %v2053, %v2133
        %v2206 = vld [vmem:[%s4] sm:$0xff]
        %v2207 = vld [vmem:[%s4 + $0x8] sm:$0xff]
        %v2208 = vld [vmem:[%s4 + $0x10] sm:$0xff]
        %v2209 = vld [vmem:[%s4 + $0x18] sm:$0xff]
        %v2210 = vld [vmem:[%s4 + $0x20] sm:$0xff]
        %v2211 = vld [vmem:[%s4 + $0x28] sm:$0xff]
        %v2212 = vld [vmem:[%s4 + $0x30] sm:$0xff]
        %v2213 = vld [vmem:[%s4 + $0x38] sm:$0xff]
        %v2215 = vsel %vm744, %v2142, 0
        %v2218 = vsel %vm744, %v2143, 0
        %v2221 = vsel %vm744, %v2144, 0
        %v2224 = vsel %vm744, %v2145, 0
        %v2227 = vsel %vm744, %v2146, 0
        %v2230 = vsel %vm744, %v2147, 0
        %v2233 = vsel %vm744, %v2148, 0
        %v2236 = vsel %vm744, %v2149, 0
        %v2239 = vsel %vm744, %v2150, 0
        %v2242 = vsel %vm744, %v2151, 0
        %v2245 = vsel %vm744, %v2152, 0
        %v2248 = vsel %vm744, %v2153, 0
        %v2251 = vsel %vm744, %v2154, 0
        %v2254 = vsel %vm744, %v2155, 0
        %v2257 = vsel %vm744, %v2156, 0
        %v2260 = vsel %vm744, %v2157, 0
        %v2263 = vsel %vm744, %v2158, 0
        %v2266 = vsel %vm744, %v2159, 0
        %v2269 = vsel %vm744, %v2160, 0
        %v2272 = vsel %vm744, %v2161, 0
        %v2275 = vsel %vm744, %v2162, 0
        %v2278 = vsel %vm744, %v2163, 0
        %v2281 = vsel %vm744, %v2164, 0
        %v2284 = vsel %vm744, %v2165, 0
        %v2287 = vsel %vm744, %v2166, 0
        %v2290 = vsel %vm744, %v2167, 0
        %v2293 = vsel %vm744, %v2168, 0
        %v2296 = vsel %vm744, %v2169, 0
        %v2299 = vsel %vm744, %v2170, 0
        %v2302 = vsel %vm744, %v2171, 0
        %v2305 = vsel %vm744, %v2172, 0
        %v2308 = vsel %vm744, %v2173, 0
        %v2311 = vsel %vm744, %v2174, 0
        %v2314 = vsel %vm744, %v2175, 0
        %v2317 = vsel %vm744, %v2176, 0
        %v2320 = vsel %vm744, %v2177, 0
        %v2323 = vsel %vm744, %v2178, 0
        %v2326 = vsel %vm744, %v2179, 0
        %v2329 = vsel %vm744, %v2180, 0
        %v2332 = vsel %vm744, %v2181, 0
        %v2335 = vsel %vm744, %v2182, 0
        %v2338 = vsel %vm744, %v2183, 0
        %v2341 = vsel %vm744, %v2184, 0
        %v2344 = vsel %vm744, %v2185, 0
        %v2347 = vsel %vm744, %v2186, 0
        %v2350 = vsel %vm744, %v2187, 0
        %v2353 = vsel %vm744, %v2188, 0
        %v2356 = vsel %vm744, %v2189, 0
        %v2359 = vsel %vm744, %v2190, 0
        %v2362 = vsel %vm744, %v2191, 0
        %v2365 = vsel %vm744, %v2192, 0
        %v2368 = vsel %vm744, %v2193, 0
        %v2371 = vsel %vm744, %v2194, 0
        %v2374 = vsel %vm744, %v2195, 0
        %v2377 = vsel %vm744, %v2196, 0
        %v2380 = vsel %vm744, %v2197, 0
        %v2383 = vsel %vm744, %v2198, 0
        %v2386 = vsel %vm744, %v2199, 0
        %v2389 = vsel %vm744, %v2200, 0
        %v2392 = vsel %vm744, %v2201, 0
        %v2395 = vsel %vm744, %v2202, 0
        %v2398 = vsel %vm744, %v2203, 0
        %v2401 = vsel %vm744, %v2204, 0
        %v2404 = vsel %vm744, %v2205, 0
        %2406 = vmatprep.subr.mxu0 0.0
        %2407 = vmatpush1.msra.mxu0 %v2206
        %2408 = vmatprep.subr.mxu0 0.0
        %2409 = vmatpush1.msra.mxu0 %v2207
        %2410 = vmatprep.subr.mxu0 0.0
        %2411 = vmatpush1.msra.mxu0 %v2208
        %2412 = vmatprep.subr.mxu0 0.0
        %2413 = vmatpush1.msra.mxu0 %v2209
        %2414 = vmatprep.subr.mxu0 0.0
        %2415 = vmatpush1.msra.mxu0 %v2210
        %2416 = vmatprep.subr.mxu0 0.0
        %2417 = vmatpush1.msra.mxu0 %v2211
        %2418 = vmatprep.subr.mxu0 0.0
        %2419 = vmatpush1.msra.mxu0 %v2212
        %2420 = vmatprep.subr.mxu0 0.0
        %2421 = vmatpush1.msra.mxu0 %v2213
        %2422 = vmatprep.subr.mxu0 0.0
        %2423 = vmatpush1.msra.mxu0 0.0
        %2424 = vmatprep.subr.mxu0 0.0
        %2425 = vmatpush1.msra.mxu0 0.0
        %2426 = vmatprep.subr.mxu0 0.0
        %2427 = vmatpush1.msra.mxu0 0.0
        %2428 = vmatprep.subr.mxu0 0.0
        %2429 = vmatpush1.msra.mxu0 0.0
        %2430 = vmatprep.subr.mxu0 0.0
        %2431 = vmatpush1.msra.mxu0 0.0
        %2432 = vmatprep.subr.mxu0 0.0
        %2433 = vmatpush1.msra.mxu0 0.0
        %2434 = vmatprep.subr.mxu0 0.0
        %2435 = vmatpush1.msra.mxu0 0.0
        %2436 = vmatprep.subr.mxu0 0.0
        %2437 = vmatpush1.msra.mxu0 0.0
        %2438 = vmatprep.subr.mxu0 0.0
        %2439 = vmatpush1.msra.mxu0 0.0
        %2440 = vmatprep.subr.mxu0 0.0
        %2441 = vmatpush1.msra.mxu0 0.0
        %2442 = vmatprep.subr.mxu0 0.0
        %2443 = vmatpush1.msra.mxu0 0.0
        %2444 = vmatprep.subr.mxu0 0.0
        %2445 = vmatpush1.msra.mxu0 0.0
        %2446 = vmatprep.subr.mxu0 0.0
        %2447 = vmatpush1.msra.mxu0 0.0
        %2448 = vmatprep.subr.mxu0 0.0
        %2449 = vmatpush1.msra.mxu0 0.0
        %2450 = vmatprep.subr.mxu0 0.0
        %2451 = vmatpush1.msra.mxu0 0.0
        %2452 = vmatprep.subr.mxu0 0.0
        %2453 = vmatpush1.msra.mxu0 0.0
        %2454 = vmatprep.subr.mxu0 0.0
        %2455 = vmatpush1.msra.mxu0 0.0
        %2456 = vmatprep.subr.mxu0 0.0
        %2457 = vmatpush1.msra.mxu0 0.0
        %2458 = vmatprep.subr.mxu0 0.0
        %2459 = vmatpush1.msra.mxu0 0.0
        %2460 = vmatprep.subr.mxu0 0.0
        %2461 = vmatpush1.msra.mxu0 0.0
        %2462 = vmatprep.subr.mxu0 0.0
        %2463 = vmatpush1.msra.mxu0 0.0
        %2464 = vmatprep.subr.mxu0 0.0
        %2465 = vmatpush1.msra.mxu0 0.0
        %2466 = vmatprep.subr.mxu0 0.0
        %2467 = vmatpush1.msra.mxu0 0.0
        %2468 = vmatprep.subr.mxu0 0.0
        %2469 = vmatpush1.msra.mxu0 0.0
        %2470 = vmatprep.mubr.f32.mxu0 0.0
        %2471 = vmatmul.mubr.f32.gmra.mrb[0].mxu0 %v2215
        %v2472 = vpop.f32.mrb[0].mxu0
        %v2473 = vadd.f32 0.0, %v2472
        %v2474 = vpop.f32.mrb[0].mxu0
        %2475 = vmatprep.mubr.f32.mxu0 0.0
        %2476 = vmatmul.mubr.f32.gmra.mrb[0].mxu0 %v2218
        %v2477 = vpop.f32.mrb[0].mxu0
        %v2478 = vadd.f32 0.0, %v2477
        %v2479 = vpop.f32.mrb[0].mxu0
        %2480 = vmatprep.mubr.f32.mxu0 0.0
        %2481 = vmatmul.mubr.f32.gmra.mrb[0].mxu0 %v2221
        %v2482 = vpop.f32.mrb[0].mxu0
        %v2483 = vadd.f32 0.0, %v2482
        %v2484 = vpop.f32.mrb[0].mxu0
        %2485 = vmatprep.mubr.f32.mxu0 0.0
        %2486 = vmatmul.mubr.f32.gmra.mrb[0].mxu0 %v2224
        %v2487 = vpop.f32.mrb[0].mxu0
        %v2488 = vadd.f32 0.0, %v2487
        %v2489 = vpop.f32.mrb[0].mxu0
        %2490 = vmatprep.mubr.f32.mxu0 0.0
        %2491 = vmatmul.mubr.f32.gmra.mrb[0].mxu0 %v2227
        %v2492 = vpop.f32.mrb[0].mxu0
        %v2493 = vadd.f32 0.0, %v2492
        %v2494 = vpop.f32.mrb[0].mxu0
        %2495 = vmatprep.mubr.f32.mxu0 0.0
        %2496 = vmatmul.mubr.f32.gmra.mrb[0].mxu0 %v2230
        %v2497 = vpop.f32.mrb[0].mxu0
        %v2498 = vadd.f32 0.0, %v2497
        %v2499 = vpop.f32.mrb[0].mxu0
        %2500 = vmatprep.mubr.f32.mxu0 0.0
        %2501 = vmatmul.mubr.f32.gmra.mrb[0].mxu0 %v2233
        %v2502 = vpop.f32.mrb[0].mxu0
        %v2503 = vadd.f32 0.0, %v2502
        %v2504 = vpop.f32.mrb[0].mxu0
        %2505 = vmatprep.mubr.f32.mxu0 0.0
        %2506 = vmatmul.mubr.f32.gmra.mrb[0].mxu0 %v2236
        %v2507 = vpop.f32.mrb[0].mxu0
        %v2508 = vadd.f32 0.0, %v2507
        %v2509 = vpop.f32.mrb[0].mxu0
        %2510 = vmatprep.mubr.f32.mxu0 0.0
        %2511 = vmatmul.mubr.f32.gmra.mrb[0].mxu0 %v2239
        %v2512 = vpop.f32.mrb[0].mxu0
        %v2513 = vadd.f32 0.0, %v2512
        %v2514 = vpop.f32.mrb[0].mxu0
        %2515 = vmatprep.mubr.f32.mxu0 0.0
        %2516 = vmatmul.mubr.f32.gmra.mrb[0].mxu0 %v2242
        %v2517 = vpop.f32.mrb[0].mxu0
        %v2518 = vadd.f32 0.0, %v2517
        %v2519 = vpop.f32.mrb[0].mxu0
        %2520 = vmatprep.mubr.f32.mxu0 0.0
        %2521 = vmatmul.mubr.f32.gmra.mrb[0].mxu0 %v2245
        %v2522 = vpop.f32.mrb[0].mxu0
        %v2523 = vadd.f32 0.0, %v2522
        %v2524 = vpop.f32.mrb[0].mxu0
        %2525 = vmatprep.mubr.f32.mxu0 0.0
        %2526 = vmatmul.mubr.f32.gmra.mrb[0].mxu0 %v2248
        %v2527 = vpop.f32.mrb[0].mxu0
        %v2528 = vadd.f32 0.0, %v2527
        %v2529 = vpop.f32.mrb[0].mxu0
        %2530 = vmatprep.mubr.f32.mxu0 0.0
        %2531 = vmatmul.mubr.f32.gmra.mrb[0].mxu0 %v2251
        %v2532 = vpop.f32.mrb[0].mxu0
        %v2533 = vadd.f32 0.0, %v2532
        %v2534 = vpop.f32.mrb[0].mxu0
        %2535 = vmatprep.mubr.f32.mxu0 0.0
        %2536 = vmatmul.mubr.f32.gmra.mrb[0].mxu0 %v2254
        %v2537 = vpop.f32.mrb[0].mxu0
        %v2538 = vadd.f32 0.0, %v2537
        %v2539 = vpop.f32.mrb[0].mxu0
        %2540 = vmatprep.mubr.f32.mxu0 0.0
        %2541 = vmatmul.mubr.f32.gmra.mrb[0].mxu0 %v2257
        %v2542 = vpop.f32.mrb[0].mxu0
        %v2543 = vadd.f32 0.0, %v2542
        %v2544 = vpop.f32.mrb[0].mxu0
        %2545 = vmatprep.mubr.f32.mxu0 0.0
        %2546 = vmatmul.mubr.f32.gmra.mrb[0].mxu0 %v2260
        %v2547 = vpop.f32.mrb[0].mxu0
        %v2548 = vadd.f32 0.0, %v2547
        %v2549 = vpop.f32.mrb[0].mxu0
        %2550 = vmatprep.mubr.f32.mxu0 0.0
        %2551 = vmatmul.mubr.f32.gmra.mrb[0].mxu0 %v2263
        %v2552 = vpop.f32.mrb[0].mxu0
        %v2553 = vadd.f32 0.0, %v2552
        %v2554 = vpop.f32.mrb[0].mxu0
        %2555 = vmatprep.mubr.f32.mxu0 0.0
        %2556 = vmatmul.mubr.f32.gmra.mrb[0].mxu0 %v2266
        %v2557 = vpop.f32.mrb[0].mxu0
        %v2558 = vadd.f32 0.0, %v2557
        %v2559 = vpop.f32.mrb[0].mxu0
        %2560 = vmatprep.mubr.f32.mxu0 0.0
        %2561 = vmatmul.mubr.f32.gmra.mrb[0].mxu0 %v2269
        %v2562 = vpop.f32.mrb[0].mxu0
        %v2563 = vadd.f32 0.0, %v2562
        %v2564 = vpop.f32.mrb[0].mxu0
        %2565 = vmatprep.mubr.f32.mxu0 0.0
        %2566 = vmatmul.mubr.f32.gmra.mrb[0].mxu0 %v2272
        %v2567 = vpop.f32.mrb[0].mxu0
        %v2568 = vadd.f32 0.0, %v2567
        %v2569 = vpop.f32.mrb[0].mxu0
        %2570 = vmatprep.mubr.f32.mxu0 0.0
        %2571 = vmatmul.mubr.f32.gmra.mrb[0].mxu0 %v2275
        %v2572 = vpop.f32.mrb[0].mxu0
        %v2573 = vadd.f32 0.0, %v2572
        %v2574 = vpop.f32.mrb[0].mxu0
        %2575 = vmatprep.mubr.f32.mxu0 0.0
        %2576 = vmatmul.mubr.f32.gmra.mrb[0].mxu0 %v2278
        %v2577 = vpop.f32.mrb[0].mxu0
        %v2578 = vadd.f32 0.0, %v2577
        %v2579 = vpop.f32.mrb[0].mxu0
        %2580 = vmatprep.mubr.f32.mxu0 0.0
        %2581 = vmatmul.mubr.f32.gmra.mrb[0].mxu0 %v2281
        %v2582 = vpop.f32.mrb[0].mxu0
        %v2583 = vadd.f32 0.0, %v2582
        %v2584 = vpop.f32.mrb[0].mxu0
        %2585 = vmatprep.mubr.f32.mxu0 0.0
        %2586 = vmatmul.mubr.f32.gmra.mrb[0].mxu0 %v2284
        %v2587 = vpop.f32.mrb[0].mxu0
        %v2588 = vadd.f32 0.0, %v2587
        %v2589 = vpop.f32.mrb[0].mxu0
        %2590 = vmatprep.mubr.f32.mxu0 0.0
        %2591 = vmatmul.mubr.f32.gmra.mrb[0].mxu0 %v2287
        %v2592 = vpop.f32.mrb[0].mxu0
        %v2593 = vadd.f32 0.0, %v2592
        %v2594 = vpop.f32.mrb[0].mxu0
        %2595 = vmatprep.mubr.f32.mxu0 0.0
        %2596 = vmatmul.mubr.f32.gmra.mrb[0].mxu0 %v2290
        %v2597 = vpop.f32.mrb[0].mxu0
        %v2598 = vadd.f32 0.0, %v2597
        %v2599 = vpop.f32.mrb[0].mxu0
        %2600 = vmatprep.mubr.f32.mxu0 0.0
        %2601 = vmatmul.mubr.f32.gmra.mrb[0].mxu0 %v2293
        %v2602 = vpop.f32.mrb[0].mxu0
        %v2603 = vadd.f32 0.0, %v2602
        %v2604 = vpop.f32.mrb[0].mxu0
        %2605 = vmatprep.mubr.f32.mxu0 0.0
        %2606 = vmatmul.mubr.f32.gmra.mrb[0].mxu0 %v2296
        %v2607 = vpop.f32.mrb[0].mxu0
        %v2608 = vadd.f32 0.0, %v2607
        %v2609 = vpop.f32.mrb[0].mxu0
        %2610 = vmatprep.mubr.f32.mxu0 0.0
        %2611 = vmatmul.mubr.f32.gmra.mrb[0].mxu0 %v2299
        %v2612 = vpop.f32.mrb[0].mxu0
        %v2613 = vadd.f32 0.0, %v2612
        %v2614 = vpop.f32.mrb[0].mxu0
        %2615 = vmatprep.mubr.f32.mxu0 0.0
        %2616 = vmatmul.mubr.f32.gmra.mrb[0].mxu0 %v2302
        %v2617 = vpop.f32.mrb[0].mxu0
        %v2618 = vadd.f32 0.0, %v2617
        %v2619 = vpop.f32.mrb[0].mxu0
        %2620 = vmatprep.mubr.f32.mxu0 0.0
        %2621 = vmatmul.mubr.f32.gmra.mrb[0].mxu0 %v2305
        %v2622 = vpop.f32.mrb[0].mxu0
        %v2623 = vadd.f32 0.0, %v2622
        %v2624 = vpop.f32.mrb[0].mxu0
        %2625 = vmatprep.mubr.f32.mxu0 0.0
        %2626 = vmatmul.mubr.f32.gmra.mrb[0].mxu0 %v2308
        %v2627 = vpop.f32.mrb[0].mxu0
        %v2628 = vadd.f32 0.0, %v2627
        %v2629 = vpop.f32.mrb[0].mxu0
        %2630 = vmatprep.mubr.f32.mxu0 0.0
        %2631 = vmatmul.mubr.f32.gmra.mrb[0].mxu0 %v2311
        %v2632 = vpop.f32.mrb[0].mxu0
        %v2633 = vadd.f32 0.0, %v2632
        %v2634 = vpop.f32.mrb[0].mxu0
        %2635 = vmatprep.mubr.f32.mxu0 0.0
        %2636 = vmatmul.mubr.f32.gmra.mrb[0].mxu0 %v2314
        %v2637 = vpop.f32.mrb[0].mxu0
        %v2638 = vadd.f32 0.0, %v2637
        %v2639 = vpop.f32.mrb[0].mxu0
        %2640 = vmatprep.mubr.f32.mxu0 0.0
        %2641 = vmatmul.mubr.f32.gmra.mrb[0].mxu0 %v2317
        %v2642 = vpop.f32.mrb[0].mxu0
        %v2643 = vadd.f32 0.0, %v2642
        %v2644 = vpop.f32.mrb[0].mxu0
        %2645 = vmatprep.mubr.f32.mxu0 0.0
        %2646 = vmatmul.mubr.f32.gmra.mrb[0].mxu0 %v2320
        %v2647 = vpop.f32.mrb[0].mxu0
        %v2648 = vadd.f32 0.0, %v2647
        %v2649 = vpop.f32.mrb[0].mxu0
        %2650 = vmatprep.mubr.f32.mxu0 0.0
        %2651 = vmatmul.mubr.f32.gmra.mrb[0].mxu0 %v2323
        %v2652 = vpop.f32.mrb[0].mxu0
        %v2653 = vadd.f32 0.0, %v2652
        %v2654 = vpop.f32.mrb[0].mxu0
        %2655 = vmatprep.mubr.f32.mxu0 0.0
        %2656 = vmatmul.mubr.f32.gmra.mrb[0].mxu0 %v2326
        %v2657 = vpop.f32.mrb[0].mxu0
        %v2658 = vadd.f32 0.0, %v2657
        %v2659 = vpop.f32.mrb[0].mxu0
        %2660 = vmatprep.mubr.f32.mxu0 0.0
        %2661 = vmatmul.mubr.f32.gmra.mrb[0].mxu0 %v2329
        %v2662 = vpop.f32.mrb[0].mxu0
        %v2663 = vadd.f32 0.0, %v2662
        %v2664 = vpop.f32.mrb[0].mxu0
        %2665 = vmatprep.mubr.f32.mxu0 0.0
        %2666 = vmatmul.mubr.f32.gmra.mrb[0].mxu0 %v2332
        %v2667 = vpop.f32.mrb[0].mxu0
        %v2668 = vadd.f32 0.0, %v2667
        %v2669 = vpop.f32.mrb[0].mxu0
        %2670 = vmatprep.mubr.f32.mxu0 0.0
        %2671 = vmatmul.mubr.f32.gmra.mrb[0].mxu0 %v2335
        %v2672 = vpop.f32.mrb[0].mxu0
        %v2673 = vadd.f32 0.0, %v2672
        %v2674 = vpop.f32.mrb[0].mxu0
        %2675 = vmatprep.mubr.f32.mxu0 0.0
        %2676 = vmatmul.mubr.f32.gmra.mrb[0].mxu0 %v2338
        %v2677 = vpop.f32.mrb[0].mxu0
        %v2678 = vadd.f32 0.0, %v2677
        %v2679 = vpop.f32.mrb[0].mxu0
        %2680 = vmatprep.mubr.f32.mxu0 0.0
        %2681 = vmatmul.mubr.f32.gmra.mrb[0].mxu0 %v2341
        %v2682 = vpop.f32.mrb[0].mxu0
        %v2683 = vadd.f32 0.0, %v2682
        %v2684 = vpop.f32.mrb[0].mxu0
        %2685 = vmatprep.mubr.f32.mxu0 0.0
        %2686 = vmatmul.mubr.f32.gmra.mrb[0].mxu0 %v2344
        %v2687 = vpop.f32.mrb[0].mxu0
        %v2688 = vadd.f32 0.0, %v2687
        %v2689 = vpop.f32.mrb[0].mxu0
        %2690 = vmatprep.mubr.f32.mxu0 0.0
        %2691 = vmatmul.mubr.f32.gmra.mrb[0].mxu0 %v2347
        %v2692 = vpop.f32.mrb[0].mxu0
        %v2693 = vadd.f32 0.0, %v2692
        %v2694 = vpop.f32.mrb[0].mxu0
        %2695 = vmatprep.mubr.f32.mxu0 0.0
        %2696 = vmatmul.mubr.f32.gmra.mrb[0].mxu0 %v2350
        %v2697 = vpop.f32.mrb[0].mxu0
        %v2698 = vadd.f32 0.0, %v2697
        %v2699 = vpop.f32.mrb[0].mxu0
        %2700 = vmatprep.mubr.f32.mxu0 0.0
        %2701 = vmatmul.mubr.f32.gmra.mrb[0].mxu0 %v2353
        %v2702 = vpop.f32.mrb[0].mxu0
        %v2703 = vadd.f32 0.0, %v2702
        %v2704 = vpop.f32.mrb[0].mxu0
        %2705 = vmatprep.mubr.f32.mxu0 0.0
        %2706 = vmatmul.mubr.f32.gmra.mrb[0].mxu0 %v2356
        %v2707 = vpop.f32.mrb[0].mxu0
        %v2708 = vadd.f32 0.0, %v2707
        %v2709 = vpop.f32.mrb[0].mxu0
        %2710 = vmatprep.mubr.f32.mxu0 0.0
        %2711 = vmatmul.mubr.f32.gmra.mrb[0].mxu0 %v2359
        %v2712 = vpop.f32.mrb[0].mxu0
        %v2713 = vadd.f32 0.0, %v2712
        %v2714 = vpop.f32.mrb[0].mxu0
        %2715 = vmatprep.mubr.f32.mxu0 0.0
        %2716 = vmatmul.mubr.f32.gmra.mrb[0].mxu0 %v2362
        %v2717 = vpop.f32.mrb[0].mxu0
        %v2718 = vadd.f32 0.0, %v2717
        %v2719 = vpop.f32.mrb[0].mxu0
        %2720 = vmatprep.mubr.f32.mxu0 0.0
        %2721 = vmatmul.mubr.f32.gmra.mrb[0].mxu0 %v2365
        %v2722 = vpop.f32.mrb[0].mxu0
        %v2723 = vadd.f32 0.0, %v2722
        %v2724 = vpop.f32.mrb[0].mxu0
        %2725 = vmatprep.mubr.f32.mxu0 0.0
        %2726 = vmatmul.mubr.f32.gmra.mrb[0].mxu0 %v2368
        %v2727 = vpop.f32.mrb[0].mxu0
        %v2728 = vadd.f32 0.0, %v2727
        %v2729 = vpop.f32.mrb[0].mxu0
        %2730 = vmatprep.mubr.f32.mxu0 0.0
        %2731 = vmatmul.mubr.f32.gmra.mrb[0].mxu0 %v2371
        %v2732 = vpop.f32.mrb[0].mxu0
        %v2733 = vadd.f32 0.0, %v2732
        %v2734 = vpop.f32.mrb[0].mxu0
        %2735 = vmatprep.mubr.f32.mxu0 0.0
        %2736 = vmatmul.mubr.f32.gmra.mrb[0].mxu0 %v2374
        %v2737 = vpop.f32.mrb[0].mxu0
        %v2738 = vadd.f32 0.0, %v2737
        %v2739 = vpop.f32.mrb[0].mxu0
        %2740 = vmatprep.mubr.f32.mxu0 0.0
        %2741 = vmatmul.mubr.f32.gmra.mrb[0].mxu0 %v2377
        %v2742 = vpop.f32.mrb[0].mxu0
        %v2743 = vadd.f32 0.0, %v2742
        %v2744 = vpop.f32.mrb[0].mxu0
        %2745 = vmatprep.mubr.f32.mxu0 0.0
        %2746 = vmatmul.mubr.f32.gmra.mrb[0].mxu0 %v2380
        %v2747 = vpop.f32.mrb[0].mxu0
        %v2748 = vadd.f32 0.0, %v2747
        %v2749 = vpop.f32.mrb[0].mxu0
        %2750 = vmatprep.mubr.f32.mxu0 0.0
        %2751 = vmatmul.mubr.f32.gmra.mrb[0].mxu0 %v2383
        %v2752 = vpop.f32.mrb[0].mxu0
        %v2753 = vadd.f32 0.0, %v2752
        %v2754 = vpop.f32.mrb[0].mxu0
        %2755 = vmatprep.mubr.f32.mxu0 0.0
        %2756 = vmatmul.mubr.f32.gmra.mrb[0].mxu0 %v2386
        %v2757 = vpop.f32.mrb[0].mxu0
        %v2758 = vadd.f32 0.0, %v2757
        %v2759 = vpop.f32.mrb[0].mxu0
        %2760 = vmatprep.mubr.f32.mxu0 0.0
        %2761 = vmatmul.mubr.f32.gmra.mrb[0].mxu0 %v2389
        %v2762 = vpop.f32.mrb[0].mxu0
        %v2763 = vadd.f32 0.0, %v2762
        %v2764 = vpop.f32.mrb[0].mxu0
        %2765 = vmatprep.mubr.f32.mxu0 0.0
        %2766 = vmatmul.mubr.f32.gmra.mrb[0].mxu0 %v2392
        %v2767 = vpop.f32.mrb[0].mxu0
        %v2768 = vadd.f32 0.0, %v2767
        %v2769 = vpop.f32.mrb[0].mxu0
        %2770 = vmatprep.mubr.f32.mxu0 0.0
        %2771 = vmatmul.mubr.f32.gmra.mrb[0].mxu0 %v2395
        %v2772 = vpop.f32.mrb[0].mxu0
        %v2773 = vadd.f32 0.0, %v2772
        %v2774 = vpop.f32.mrb[0].mxu0
        %2775 = vmatprep.mubr.f32.mxu0 0.0
        %2776 = vmatmul.mubr.f32.gmra.mrb[0].mxu0 %v2398
        %v2777 = vpop.f32.mrb[0].mxu0
        %v2778 = vadd.f32 0.0, %v2777
        %v2779 = vpop.f32.mrb[0].mxu0
        %2780 = vmatprep.mubr.f32.mxu0 0.0
        %2781 = vmatmul.mubr.f32.gmra.mrb[0].mxu0 %v2401
        %v2782 = vpop.f32.mrb[0].mxu0
        %v2783 = vadd.f32 0.0, %v2782
        %v2784 = vpop.f32.mrb[0].mxu0
        %2785 = vmatprep.mubr.f32.mxu0 0.0
        %2786 = vmatmul.mubr.f32.gmra.mrb[0].mxu0 %v2404
        %v2787 = vpop.f32.mrb[0].mxu0
        %v2788 = vadd.f32 0.0, %v2787
        %v2789 = vpop.f32.mrb[0].mxu0
        %2790 = vdwg.mxu0
        %vm2791 = vcmp.eq.f32.partialorder %v972, 0.0
        %vm2792 = vcmp.eq.f32.partialorder %v976, 0.0
        %vm2793 = vcmp.eq.f32.partialorder %v980, 0.0
        %vm2794 = vcmp.eq.f32.partialorder %v984, 0.0
        %vm2795 = vcmp.eq.f32.partialorder %v988, 0.0
        %vm2796 = vcmp.eq.f32.partialorder %v992, 0.0
        %vm2797 = vcmp.eq.f32.partialorder %v996, 0.0
        %vm2798 = vcmp.eq.f32.partialorder %v1000, 0.0
        %vm2799 = vcmp.eq.f32.partialorder %v1004, 0.0
        %vm2800 = vcmp.eq.f32.partialorder %v1008, 0.0
        %vm2801 = vcmp.eq.f32.partialorder %v1012, 0.0
        %vm2802 = vcmp.eq.f32.partialorder %v1016, 0.0
        %vm2803 = vcmp.eq.f32.partialorder %v1020, 0.0
        %vm2804 = vcmp.eq.f32.partialorder %v1024, 0.0
        %vm2805 = vcmp.eq.f32.partialorder %v1028, 0.0
        %vm2806 = vcmp.eq.f32.partialorder %v1032, 0.0
        %vm2807 = vcmp.eq.f32.partialorder %v1036, 0.0
        %vm2808 = vcmp.eq.f32.partialorder %v1040, 0.0
        %vm2809 = vcmp.eq.f32.partialorder %v1044, 0.0
        %vm2810 = vcmp.eq.f32.partialorder %v1048, 0.0
        %vm2811 = vcmp.eq.f32.partialorder %v1052, 0.0
        %vm2812 = vcmp.eq.f32.partialorder %v1056, 0.0
        %vm2813 = vcmp.eq.f32.partialorder %v1060, 0.0
        %vm2814 = vcmp.eq.f32.partialorder %v1064, 0.0
        %vm2815 = vcmp.eq.f32.partialorder %v1068, 0.0
        %vm2816 = vcmp.eq.f32.partialorder %v1072, 0.0
        %vm2817 = vcmp.eq.f32.partialorder %v1076, 0.0
        %vm2818 = vcmp.eq.f32.partialorder %v1080, 0.0
        %vm2819 = vcmp.eq.f32.partialorder %v1084, 0.0
        %vm2820 = vcmp.eq.f32.partialorder %v1088, 0.0
        %vm2821 = vcmp.eq.f32.partialorder %v1092, 0.0
        %vm2822 = vcmp.eq.f32.partialorder %v1096, 0.0
        %vm2823 = vcmp.eq.f32.partialorder %v1100, 0.0
        %vm2824 = vcmp.eq.f32.partialorder %v1104, 0.0
        %vm2825 = vcmp.eq.f32.partialorder %v1108, 0.0
        %vm2826 = vcmp.eq.f32.partialorder %v1112, 0.0
        %vm2827 = vcmp.eq.f32.partialorder %v1116, 0.0
        %vm2828 = vcmp.eq.f32.partialorder %v1120, 0.0
        %vm2829 = vcmp.eq.f32.partialorder %v1124, 0.0
        %vm2830 = vcmp.eq.f32.partialorder %v1128, 0.0
        %vm2831 = vcmp.eq.f32.partialorder %v1132, 0.0
        %vm2832 = vcmp.eq.f32.partialorder %v1136, 0.0
        %vm2833 = vcmp.eq.f32.partialorder %v1140, 0.0
        %vm2834 = vcmp.eq.f32.partialorder %v1144, 0.0
        %vm2835 = vcmp.eq.f32.partialorder %v1148, 0.0
        %vm2836 = vcmp.eq.f32.partialorder %v1152, 0.0
        %vm2837 = vcmp.eq.f32.partialorder %v1156, 0.0
        %vm2838 = vcmp.eq.f32.partialorder %v1160, 0.0
        %vm2839 = vcmp.eq.f32.partialorder %v1164, 0.0
        %vm2840 = vcmp.eq.f32.partialorder %v1168, 0.0
        %vm2841 = vcmp.eq.f32.partialorder %v1172, 0.0
        %vm2842 = vcmp.eq.f32.partialorder %v1176, 0.0
        %vm2843 = vcmp.eq.f32.partialorder %v1180, 0.0
        %vm2844 = vcmp.eq.f32.partialorder %v1184, 0.0
        %vm2845 = vcmp.eq.f32.partialorder %v1188, 0.0
        %vm2846 = vcmp.eq.f32.partialorder %v1192, 0.0
        %vm2847 = vcmp.eq.f32.partialorder %v1196, 0.0
        %vm2848 = vcmp.eq.f32.partialorder %v1200, 0.0
        %vm2849 = vcmp.eq.f32.partialorder %v1204, 0.0
        %vm2850 = vcmp.eq.f32.partialorder %v1208, 0.0
        %vm2851 = vcmp.eq.f32.partialorder %v1212, 0.0
        %vm2852 = vcmp.eq.f32.partialorder %v1216, 0.0
        %vm2853 = vcmp.eq.f32.partialorder %v1220, 0.0
        %vm2854 = vcmp.eq.f32.partialorder %v1224, 0.0
        %v2855 = vsel %vm2791, 1, 0
        %v2856 = vsel %vm2792, 1, 0
        %v2857 = vsel %vm2793, 1, 0
        %v2858 = vsel %vm2794, 1, 0
        %v2859 = vsel %vm2795, 1, 0
        %v2860 = vsel %vm2796, 1, 0
        %v2861 = vsel %vm2797, 1, 0
        %v2862 = vsel %vm2798, 1, 0
        %v2863 = vsel %vm2799, 1, 0
        %v2864 = vsel %vm2800, 1, 0
        %v2865 = vsel %vm2801, 1, 0
        %v2866 = vsel %vm2802, 1, 0
        %v2867 = vsel %vm2803, 1, 0
        %v2868 = vsel %vm2804, 1, 0
        %v2869 = vsel %vm2805, 1, 0
        %v2870 = vsel %vm2806, 1, 0
        %v2871 = vsel %vm2807, 1, 0
        %v2872 = vsel %vm2808, 1, 0
        %v2873 = vsel %vm2809, 1, 0
        %v2874 = vsel %vm2810, 1, 0
        %v2875 = vsel %vm2811, 1, 0
        %v2876 = vsel %vm2812, 1, 0
        %v2877 = vsel %vm2813, 1, 0
        %v2878 = vsel %vm2814, 1, 0
        %v2879 = vsel %vm2815, 1, 0
        %v2880 = vsel %vm2816, 1, 0
        %v2881 = vsel %vm2817, 1, 0
        %v2882 = vsel %vm2818, 1, 0
        %v2883 = vsel %vm2819, 1, 0
        %v2884 = vsel %vm2820, 1, 0
        %v2885 = vsel %vm2821, 1, 0
        %v2886 = vsel %vm2822, 1, 0
        %v2887 = vsel %vm2823, 1, 0
        %v2888 = vsel %vm2824, 1, 0
        %v2889 = vsel %vm2825, 1, 0
        %v2890 = vsel %vm2826, 1, 0
        %v2891 = vsel %vm2827, 1, 0
        %v2892 = vsel %vm2828, 1, 0
        %v2893 = vsel %vm2829, 1, 0
        %v2894 = vsel %vm2830, 1, 0
        %v2895 = vsel %vm2831, 1, 0
        %v2896 = vsel %vm2832, 1, 0
        %v2897 = vsel %vm2833, 1, 0
        %v2898 = vsel %vm2834, 1, 0
        %v2899 = vsel %vm2835, 1, 0
        %v2900 = vsel %vm2836, 1, 0
        %v2901 = vsel %vm2837, 1, 0
        %v2902 = vsel %vm2838, 1, 0
        %v2903 = vsel %vm2839, 1, 0
        %v2904 = vsel %vm2840, 1, 0
        %v2905 = vsel %vm2841, 1, 0
        %v2906 = vsel %vm2842, 1, 0
        %v2907 = vsel %vm2843, 1, 0
        %v2908 = vsel %vm2844, 1, 0
        %v2909 = vsel %vm2845, 1, 0
        %v2910 = vsel %vm2846, 1, 0
        %v2911 = vsel %vm2847, 1, 0
        %v2912 = vsel %vm2848, 1, 0
        %v2913 = vsel %vm2849, 1, 0
        %v2914 = vsel %vm2850, 1, 0
        %v2915 = vsel %vm2851, 1, 0
        %v2916 = vsel %vm2852, 1, 0
        %v2917 = vsel %vm2853, 1, 0
        %v2918 = vsel %vm2854, 1, 0
        %vm2919 = vcmp.eq.s32.totalorder %v2855, 1
        %vm2920 = vcmp.eq.s32.totalorder %v2856, 1
        %vm2921 = vcmp.eq.s32.totalorder %v2857, 1
        %vm2922 = vcmp.eq.s32.totalorder %v2858, 1
        %vm2923 = vcmp.eq.s32.totalorder %v2859, 1
        %vm2924 = vcmp.eq.s32.totalorder %v2860, 1
        %vm2925 = vcmp.eq.s32.totalorder %v2861, 1
        %vm2926 = vcmp.eq.s32.totalorder %v2862, 1
        %vm2927 = vcmp.eq.s32.totalorder %v2863, 1
        %vm2928 = vcmp.eq.s32.totalorder %v2864, 1
        %vm2929 = vcmp.eq.s32.totalorder %v2865, 1
        %vm2930 = vcmp.eq.s32.totalorder %v2866, 1
        %vm2931 = vcmp.eq.s32.totalorder %v2867, 1
        %vm2932 = vcmp.eq.s32.totalorder %v2868, 1
        %vm2933 = vcmp.eq.s32.totalorder %v2869, 1
        %vm2934 = vcmp.eq.s32.totalorder %v2870, 1
        %vm2935 = vcmp.eq.s32.totalorder %v2871, 1
        %vm2936 = vcmp.eq.s32.totalorder %v2872, 1
        %vm2937 = vcmp.eq.s32.totalorder %v2873, 1
        %vm2938 = vcmp.eq.s32.totalorder %v2874, 1
        %vm2939 = vcmp.eq.s32.totalorder %v2875, 1
        %vm2940 = vcmp.eq.s32.totalorder %v2876, 1
        %vm2941 = vcmp.eq.s32.totalorder %v2877, 1
        %vm2942 = vcmp.eq.s32.totalorder %v2878, 1
        %vm2943 = vcmp.eq.s32.totalorder %v2879, 1
        %vm2944 = vcmp.eq.s32.totalorder %v2880, 1
        %vm2945 = vcmp.eq.s32.totalorder %v2881, 1
        %vm2946 = vcmp.eq.s32.totalorder %v2882, 1
        %vm2947 = vcmp.eq.s32.totalorder %v2883, 1
        %vm2948 = vcmp.eq.s32.totalorder %v2884, 1
        %vm2949 = vcmp.eq.s32.totalorder %v2885, 1
        %vm2950 = vcmp.eq.s32.totalorder %v2886, 1
        %vm2951 = vcmp.eq.s32.totalorder %v2887, 1
        %vm2952 = vcmp.eq.s32.totalorder %v2888, 1
        %vm2953 = vcmp.eq.s32.totalorder %v2889, 1
        %vm2954 = vcmp.eq.s32.totalorder %v2890, 1
        %vm2955 = vcmp.eq.s32.totalorder %v2891, 1
        %vm2956 = vcmp.eq.s32.totalorder %v2892, 1
        %vm2957 = vcmp.eq.s32.totalorder %v2893, 1
        %vm2958 = vcmp.eq.s32.totalorder %v2894, 1
        %vm2959 = vcmp.eq.s32.totalorder %v2895, 1
        %vm2960 = vcmp.eq.s32.totalorder %v2896, 1
        %vm2961 = vcmp.eq.s32.totalorder %v2897, 1
        %vm2962 = vcmp.eq.s32.totalorder %v2898, 1
        %vm2963 = vcmp.eq.s32.totalorder %v2899, 1
        %vm2964 = vcmp.eq.s32.totalorder %v2900, 1
        %vm2965 = vcmp.eq.s32.totalorder %v2901, 1
        %vm2966 = vcmp.eq.s32.totalorder %v2902, 1
        %vm2967 = vcmp.eq.s32.totalorder %v2903, 1
        %vm2968 = vcmp.eq.s32.totalorder %v2904, 1
        %vm2969 = vcmp.eq.s32.totalorder %v2905, 1
        %vm2970 = vcmp.eq.s32.totalorder %v2906, 1
        %vm2971 = vcmp.eq.s32.totalorder %v2907, 1
        %vm2972 = vcmp.eq.s32.totalorder %v2908, 1
        %vm2973 = vcmp.eq.s32.totalorder %v2909, 1
        %vm2974 = vcmp.eq.s32.totalorder %v2910, 1
        %vm2975 = vcmp.eq.s32.totalorder %v2911, 1
        %vm2976 = vcmp.eq.s32.totalorder %v2912, 1
        %vm2977 = vcmp.eq.s32.totalorder %v2913, 1
        %vm2978 = vcmp.eq.s32.totalorder %v2914, 1
        %vm2979 = vcmp.eq.s32.totalorder %v2915, 1
        %vm2980 = vcmp.eq.s32.totalorder %v2916, 1
        %vm2981 = vcmp.eq.s32.totalorder %v2917, 1
        %vm2982 = vcmp.eq.s32.totalorder %v2918, 1
        %v2983 = vsel %vm2919, -10000.0, %v2473
        %v2984 = vsel %vm2920, -10000.0, %v2478
        %v2985 = vsel %vm2921, -10000.0, %v2483
        %v2986 = vsel %vm2922, -10000.0, %v2488
        %v2987 = vsel %vm2923, -10000.0, %v2493
        %v2988 = vsel %vm2924, -10000.0, %v2498
        %v2989 = vsel %vm2925, -10000.0, %v2503
        %v2990 = vsel %vm2926, -10000.0, %v2508
        %v2991 = vsel %vm2927, -10000.0, %v2513
        %v2992 = vsel %vm2928, -10000.0, %v2518
        %v2993 = vsel %vm2929, -10000.0, %v2523
        %v2994 = vsel %vm2930, -10000.0, %v2528
        %v2995 = vsel %vm2931, -10000.0, %v2533
        %v2996 = vsel %vm2932, -10000.0, %v2538
        %v2997 = vsel %vm2933, -10000.0, %v2543
        %v2998 = vsel %vm2934, -10000.0, %v2548
        %v2999 = vsel %vm2935, -10000.0, %v2553
        %v3000 = vsel %vm2936, -10000.0, %v2558
        %v3001 = vsel %vm2937, -10000.0, %v2563
        %v3002 = vsel %vm2938, -10000.0, %v2568
        %v3003 = vsel %vm2939, -10000.0, %v2573
        %v3004 = vsel %vm2940, -10000.0, %v2578
        %v3005 = vsel %vm2941, -10000.0, %v2583
        %v3006 = vsel %vm2942, -10000.0, %v2588
        %v3007 = vsel %vm2943, -10000.0, %v2593
        %v3008 = vsel %vm2944, -10000.0, %v2598
        %v3009 = vsel %vm2945, -10000.0, %v2603
        %v3010 = vsel %vm2946, -10000.0, %v2608
        %v3011 = vsel %vm2947, -10000.0, %v2613
        %v3012 = vsel %vm2948, -10000.0, %v2618
        %v3013 = vsel %vm2949, -10000.0, %v2623
        %v3014 = vsel %vm2950, -10000.0, %v2628
        %v3015 = vsel %vm2951, -10000.0, %v2633
        %v3016 = vsel %vm2952, -10000.0, %v2638
        %v3017 = vsel %vm2953, -10000.0, %v2643
        %v3018 = vsel %vm2954, -10000.0, %v2648
        %v3019 = vsel %vm2955, -10000.0, %v2653
        %v3020 = vsel %vm2956, -10000.0, %v2658
        %v3021 = vsel %vm2957, -10000.0, %v2663
        %v3022 = vsel %vm2958, -10000.0, %v2668
        %v3023 = vsel %vm2959, -10000.0, %v2673
        %v3024 = vsel %vm2960, -10000.0, %v2678
        %v3025 = vsel %vm2961, -10000.0, %v2683
        %v3026 = vsel %vm2962, -10000.0, %v2688
        %v3027 = vsel %vm2963, -10000.0, %v2693
        %v3028 = vsel %vm2964, -10000.0, %v2698
        %v3029 = vsel %vm2965, -10000.0, %v2703
        %v3030 = vsel %vm2966, -10000.0, %v2708
        %v3031 = vsel %vm2967, -10000.0, %v2713
        %v3032 = vsel %vm2968, -10000.0, %v2718
        %v3033 = vsel %vm2969, -10000.0, %v2723
        %v3034 = vsel %vm2970, -10000.0, %v2728
        %v3035 = vsel %vm2971, -10000.0, %v2733
        %v3036 = vsel %vm2972, -10000.0, %v2738
        %v3037 = vsel %vm2973, -10000.0, %v2743
        %v3038 = vsel %vm2974, -10000.0, %v2748
        %v3039 = vsel %vm2975, -10000.0, %v2753
        %v3040 = vsel %vm2976, -10000.0, %v2758
        %v3041 = vsel %vm2977, -10000.0, %v2763
        %v3042 = vsel %vm2978, -10000.0, %v2768
        %v3043 = vsel %vm2979, -10000.0, %v2773
        %v3044 = vsel %vm2980, -10000.0, %v2778
        %v3045 = vsel %vm2981, -10000.0, %v2783
        %v3046 = vsel %vm2982, -10000.0, %v2788
        %vm3047 = vcmask 31744
        %v3048 = vsel %vm3047, %v2983, -inf
        %v3049 = vrot.slane %v3048, 4
        %v3050 = vmax.f32 %v3048, %v3049
        %v3051 = vrot.slane %v3050, 2
        %v3052 = vmax.f32 %v3050, %v3051
        %v3053 = vrot.slane %v3052, 1
        %v3054 = vmax.f32 %v3052, %v3053
        %v3055 = vsel %vm3047, %v2984, -inf
        %v3056 = vrot.slane %v3055, 4
        %v3057 = vmax.f32 %v3055, %v3056
        %v3058 = vrot.slane %v3057, 2
        %v3059 = vmax.f32 %v3057, %v3058
        %v3060 = vrot.slane %v3059, 1
        %v3061 = vmax.f32 %v3059, %v3060
        %v3062 = vsel %vm3047, %v2985, -inf
        %v3063 = vrot.slane %v3062, 4
        %v3064 = vmax.f32 %v3062, %v3063
        %v3065 = vrot.slane %v3064, 2
        %v3066 = vmax.f32 %v3064, %v3065
        %v3067 = vrot.slane %v3066, 1
        %v3068 = vmax.f32 %v3066, %v3067
        %v3069 = vsel %vm3047, %v2986, -inf
        %v3070 = vrot.slane %v3069, 4
        %v3071 = vmax.f32 %v3069, %v3070
        %v3072 = vrot.slane %v3071, 2
        %v3073 = vmax.f32 %v3071, %v3072
        %v3074 = vrot.slane %v3073, 1
        %v3075 = vmax.f32 %v3073, %v3074
        %v3076 = vsel %vm3047, %v2987, -inf
        %v3077 = vrot.slane %v3076, 4
        %v3078 = vmax.f32 %v3076, %v3077
        %v3079 = vrot.slane %v3078, 2
        %v3080 = vmax.f32 %v3078, %v3079
        %v3081 = vrot.slane %v3080, 1
        %v3082 = vmax.f32 %v3080, %v3081
        %v3083 = vsel %vm3047, %v2988, -inf
        %v3084 = vrot.slane %v3083, 4
        %v3085 = vmax.f32 %v3083, %v3084
        %v3086 = vrot.slane %v3085, 2
        %v3087 = vmax.f32 %v3085, %v3086
        %v3088 = vrot.slane %v3087, 1
        %v3089 = vmax.f32 %v3087, %v3088
        %v3090 = vsel %vm3047, %v2989, -inf
        %v3091 = vrot.slane %v3090, 4
        %v3092 = vmax.f32 %v3090, %v3091
        %v3093 = vrot.slane %v3092, 2
        %v3094 = vmax.f32 %v3092, %v3093
        %v3095 = vrot.slane %v3094, 1
        %v3096 = vmax.f32 %v3094, %v3095
        %v3097 = vsel %vm3047, %v2990, -inf
        %v3098 = vrot.slane %v3097, 4
        %v3099 = vmax.f32 %v3097, %v3098
        %v3100 = vrot.slane %v3099, 2
        %v3101 = vmax.f32 %v3099, %v3100
        %v3102 = vrot.slane %v3101, 1
        %v3103 = vmax.f32 %v3101, %v3102
        %v3104 = vsel %vm3047, %v2991, -inf
        %v3105 = vrot.slane %v3104, 4
        %v3106 = vmax.f32 %v3104, %v3105
        %v3107 = vrot.slane %v3106, 2
        %v3108 = vmax.f32 %v3106, %v3107
        %v3109 = vrot.slane %v3108, 1
        %v3110 = vmax.f32 %v3108, %v3109
        %v3111 = vsel %vm3047, %v2992, -inf
        %v3112 = vrot.slane %v3111, 4
        %v3113 = vmax.f32 %v3111, %v3112
        %v3114 = vrot.slane %v3113, 2
        %v3115 = vmax.f32 %v3113, %v3114
        %v3116 = vrot.slane %v3115, 1
        %v3117 = vmax.f32 %v3115, %v3116
        %v3118 = vsel %vm3047, %v2993, -inf
        %v3119 = vrot.slane %v3118, 4
        %v3120 = vmax.f32 %v3118, %v3119
        %v3121 = vrot.slane %v3120, 2
        %v3122 = vmax.f32 %v3120, %v3121
        %v3123 = vrot.slane %v3122, 1
        %v3124 = vmax.f32 %v3122, %v3123
        %v3125 = vsel %vm3047, %v2994, -inf
        %v3126 = vrot.slane %v3125, 4
        %v3127 = vmax.f32 %v3125, %v3126
        %v3128 = vrot.slane %v3127, 2
        %v3129 = vmax.f32 %v3127, %v3128
        %v3130 = vrot.slane %v3129, 1
        %v3131 = vmax.f32 %v3129, %v3130
        %v3132 = vsel %vm3047, %v2995, -inf
        %v3133 = vrot.slane %v3132, 4
        %v3134 = vmax.f32 %v3132, %v3133
        %v3135 = vrot.slane %v3134, 2
        %v3136 = vmax.f32 %v3134, %v3135
        %v3137 = vrot.slane %v3136, 1
        %v3138 = vmax.f32 %v3136, %v3137
        %v3139 = vsel %vm3047, %v2996, -inf
        %v3140 = vrot.slane %v3139, 4
        %v3141 = vmax.f32 %v3139, %v3140
        %v3142 = vrot.slane %v3141, 2
        %v3143 = vmax.f32 %v3141, %v3142
        %v3144 = vrot.slane %v3143, 1
        %v3145 = vmax.f32 %v3143, %v3144
        %v3146 = vsel %vm3047, %v2997, -inf
        %v3147 = vrot.slane %v3146, 4
        %v3148 = vmax.f32 %v3146, %v3147
        %v3149 = vrot.slane %v3148, 2
        %v3150 = vmax.f32 %v3148, %v3149
        %v3151 = vrot.slane %v3150, 1
        %v3152 = vmax.f32 %v3150, %v3151
        %v3153 = vsel %vm3047, %v2998, -inf
        %v3154 = vrot.slane %v3153, 4
        %v3155 = vmax.f32 %v3153, %v3154
        %v3156 = vrot.slane %v3155, 2
        %v3157 = vmax.f32 %v3155, %v3156
        %v3158 = vrot.slane %v3157, 1
        %v3159 = vmax.f32 %v3157, %v3158
        %v3160 = vsel %vm3047, %v2999, -inf
        %v3161 = vrot.slane %v3160, 4
        %v3162 = vmax.f32 %v3160, %v3161
        %v3163 = vrot.slane %v3162, 2
        %v3164 = vmax.f32 %v3162, %v3163
        %v3165 = vrot.slane %v3164, 1
        %v3166 = vmax.f32 %v3164, %v3165
        %v3167 = vsel %vm3047, %v3000, -inf
        %v3168 = vrot.slane %v3167, 4
        %v3169 = vmax.f32 %v3167, %v3168
        %v3170 = vrot.slane %v3169, 2
        %v3171 = vmax.f32 %v3169, %v3170
        %v3172 = vrot.slane %v3171, 1
        %v3173 = vmax.f32 %v3171, %v3172
        %v3174 = vsel %vm3047, %v3001, -inf
        %v3175 = vrot.slane %v3174, 4
        %v3176 = vmax.f32 %v3174, %v3175
        %v3177 = vrot.slane %v3176, 2
        %v3178 = vmax.f32 %v3176, %v3177
        %v3179 = vrot.slane %v3178, 1
        %v3180 = vmax.f32 %v3178, %v3179
        %v3181 = vsel %vm3047, %v3002, -inf
        %v3182 = vrot.slane %v3181, 4
        %v3183 = vmax.f32 %v3181, %v3182
        %v3184 = vrot.slane %v3183, 2
        %v3185 = vmax.f32 %v3183, %v3184
        %v3186 = vrot.slane %v3185, 1
        %v3187 = vmax.f32 %v3185, %v3186
        %v3188 = vsel %vm3047, %v3003, -inf
        %v3189 = vrot.slane %v3188, 4
        %v3190 = vmax.f32 %v3188, %v3189
        %v3191 = vrot.slane %v3190, 2
        %v3192 = vmax.f32 %v3190, %v3191
        %v3193 = vrot.slane %v3192, 1
        %v3194 = vmax.f32 %v3192, %v3193
        %v3195 = vsel %vm3047, %v3004, -inf
        %v3196 = vrot.slane %v3195, 4
        %v3197 = vmax.f32 %v3195, %v3196
        %v3198 = vrot.slane %v3197, 2
        %v3199 = vmax.f32 %v3197, %v3198
        %v3200 = vrot.slane %v3199, 1
        %v3201 = vmax.f32 %v3199, %v3200
        %v3202 = vsel %vm3047, %v3005, -inf
        %v3203 = vrot.slane %v3202, 4
        %v3204 = vmax.f32 %v3202, %v3203
        %v3205 = vrot.slane %v3204, 2
        %v3206 = vmax.f32 %v3204, %v3205
        %v3207 = vrot.slane %v3206, 1
        %v3208 = vmax.f32 %v3206, %v3207
        %v3209 = vsel %vm3047, %v3006, -inf
        %v3210 = vrot.slane %v3209, 4
        %v3211 = vmax.f32 %v3209, %v3210
        %v3212 = vrot.slane %v3211, 2
        %v3213 = vmax.f32 %v3211, %v3212
        %v3214 = vrot.slane %v3213, 1
        %v3215 = vmax.f32 %v3213, %v3214
        %v3216 = vsel %vm3047, %v3007, -inf
        %v3217 = vrot.slane %v3216, 4
        %v3218 = vmax.f32 %v3216, %v3217
        %v3219 = vrot.slane %v3218, 2
        %v3220 = vmax.f32 %v3218, %v3219
        %v3221 = vrot.slane %v3220, 1
        %v3222 = vmax.f32 %v3220, %v3221
        %v3223 = vsel %vm3047, %v3008, -inf
        %v3224 = vrot.slane %v3223, 4
        %v3225 = vmax.f32 %v3223, %v3224
        %v3226 = vrot.slane %v3225, 2
        %v3227 = vmax.f32 %v3225, %v3226
        %v3228 = vrot.slane %v3227, 1
        %v3229 = vmax.f32 %v3227, %v3228
        %v3230 = vsel %vm3047, %v3009, -inf
        %v3231 = vrot.slane %v3230, 4
        %v3232 = vmax.f32 %v3230, %v3231
        %v3233 = vrot.slane %v3232, 2
        %v3234 = vmax.f32 %v3232, %v3233
        %v3235 = vrot.slane %v3234, 1
        %v3236 = vmax.f32 %v3234, %v3235
        %v3237 = vsel %vm3047, %v3010, -inf
        %v3238 = vrot.slane %v3237, 4
        %v3239 = vmax.f32 %v3237, %v3238
        %v3240 = vrot.slane %v3239, 2
        %v3241 = vmax.f32 %v3239, %v3240
        %v3242 = vrot.slane %v3241, 1
        %v3243 = vmax.f32 %v3241, %v3242
        %v3244 = vsel %vm3047, %v3011, -inf
        %v3245 = vrot.slane %v3244, 4
        %v3246 = vmax.f32 %v3244, %v3245
        %v3247 = vrot.slane %v3246, 2
        %v3248 = vmax.f32 %v3246, %v3247
        %v3249 = vrot.slane %v3248, 1
        %v3250 = vmax.f32 %v3248, %v3249
        %v3251 = vsel %vm3047, %v3012, -inf
        %v3252 = vrot.slane %v3251, 4
        %v3253 = vmax.f32 %v3251, %v3252
        %v3254 = vrot.slane %v3253, 2
        %v3255 = vmax.f32 %v3253, %v3254
        %v3256 = vrot.slane %v3255, 1
        %v3257 = vmax.f32 %v3255, %v3256
        %v3258 = vsel %vm3047, %v3013, -inf
        %v3259 = vrot.slane %v3258, 4
        %v3260 = vmax.f32 %v3258, %v3259
        %v3261 = vrot.slane %v3260, 2
        %v3262 = vmax.f32 %v3260, %v3261
        %v3263 = vrot.slane %v3262, 1
        %v3264 = vmax.f32 %v3262, %v3263
        %v3265 = vsel %vm3047, %v3014, -inf
        %v3266 = vrot.slane %v3265, 4
        %v3267 = vmax.f32 %v3265, %v3266
        %v3268 = vrot.slane %v3267, 2
        %v3269 = vmax.f32 %v3267, %v3268
        %v3270 = vrot.slane %v3269, 1
        %v3271 = vmax.f32 %v3269, %v3270
        %v3272 = vsel %vm3047, %v3015, -inf
        %v3273 = vrot.slane %v3272, 4
        %v3274 = vmax.f32 %v3272, %v3273
        %v3275 = vrot.slane %v3274, 2
        %v3276 = vmax.f32 %v3274, %v3275
        %v3277 = vrot.slane %v3276, 1
        %v3278 = vmax.f32 %v3276, %v3277
        %v3279 = vsel %vm3047, %v3016, -inf
        %v3280 = vrot.slane %v3279, 4
        %v3281 = vmax.f32 %v3279, %v3280
        %v3282 = vrot.slane %v3281, 2
        %v3283 = vmax.f32 %v3281, %v3282
        %v3284 = vrot.slane %v3283, 1
        %v3285 = vmax.f32 %v3283, %v3284
        %v3286 = vsel %vm3047, %v3017, -inf
        %v3287 = vrot.slane %v3286, 4
        %v3288 = vmax.f32 %v3286, %v3287
        %v3289 = vrot.slane %v3288, 2
        %v3290 = vmax.f32 %v3288, %v3289
        %v3291 = vrot.slane %v3290, 1
        %v3292 = vmax.f32 %v3290, %v3291
        %v3293 = vsel %vm3047, %v3018, -inf
        %v3294 = vrot.slane %v3293, 4
        %v3295 = vmax.f32 %v3293, %v3294
        %v3296 = vrot.slane %v3295, 2
        %v3297 = vmax.f32 %v3295, %v3296
        %v3298 = vrot.slane %v3297, 1
        %v3299 = vmax.f32 %v3297, %v3298
        %v3300 = vsel %vm3047, %v3019, -inf
        %v3301 = vrot.slane %v3300, 4
        %v3302 = vmax.f32 %v3300, %v3301
        %v3303 = vrot.slane %v3302, 2
        %v3304 = vmax.f32 %v3302, %v3303
        %v3305 = vrot.slane %v3304, 1
        %v3306 = vmax.f32 %v3304, %v3305
        %v3307 = vsel %vm3047, %v3020, -inf
        %v3308 = vrot.slane %v3307, 4
        %v3309 = vmax.f32 %v3307, %v3308
        %v3310 = vrot.slane %v3309, 2
        %v3311 = vmax.f32 %v3309, %v3310
        %v3312 = vrot.slane %v3311, 1
        %v3313 = vmax.f32 %v3311, %v3312
        %v3314 = vsel %vm3047, %v3021, -inf
        %v3315 = vrot.slane %v3314, 4
        %v3316 = vmax.f32 %v3314, %v3315
        %v3317 = vrot.slane %v3316, 2
        %v3318 = vmax.f32 %v3316, %v3317
        %v3319 = vrot.slane %v3318, 1
        %v3320 = vmax.f32 %v3318, %v3319
        %v3321 = vsel %vm3047, %v3022, -inf
        %v3322 = vrot.slane %v3321, 4
        %v3323 = vmax.f32 %v3321, %v3322
        %v3324 = vrot.slane %v3323, 2
        %v3325 = vmax.f32 %v3323, %v3324
        %v3326 = vrot.slane %v3325, 1
        %v3327 = vmax.f32 %v3325, %v3326
        %v3328 = vsel %vm3047, %v3023, -inf
        %v3329 = vrot.slane %v3328, 4
        %v3330 = vmax.f32 %v3328, %v3329
        %v3331 = vrot.slane %v3330, 2
        %v3332 = vmax.f32 %v3330, %v3331
        %v3333 = vrot.slane %v3332, 1
        %v3334 = vmax.f32 %v3332, %v3333
        %v3335 = vsel %vm3047, %v3024, -inf
        %v3336 = vrot.slane %v3335, 4
        %v3337 = vmax.f32 %v3335, %v3336
        %v3338 = vrot.slane %v3337, 2
        %v3339 = vmax.f32 %v3337, %v3338
        %v3340 = vrot.slane %v3339, 1
        %v3341 = vmax.f32 %v3339, %v3340
        %v3342 = vsel %vm3047, %v3025, -inf
        %v3343 = vrot.slane %v3342, 4
        %v3344 = vmax.f32 %v3342, %v3343
        %v3345 = vrot.slane %v3344, 2
        %v3346 = vmax.f32 %v3344, %v3345
        %v3347 = vrot.slane %v3346, 1
        %v3348 = vmax.f32 %v3346, %v3347
        %v3349 = vsel %vm3047, %v3026, -inf
        %v3350 = vrot.slane %v3349, 4
        %v3351 = vmax.f32 %v3349, %v3350
        %v3352 = vrot.slane %v3351, 2
        %v3353 = vmax.f32 %v3351, %v3352
        %v3354 = vrot.slane %v3353, 1
        %v3355 = vmax.f32 %v3353, %v3354
        %v3356 = vsel %vm3047, %v3027, -inf
        %v3357 = vrot.slane %v3356, 4
        %v3358 = vmax.f32 %v3356, %v3357
        %v3359 = vrot.slane %v3358, 2
        %v3360 = vmax.f32 %v3358, %v3359
        %v3361 = vrot.slane %v3360, 1
        %v3362 = vmax.f32 %v3360, %v3361
        %v3363 = vsel %vm3047, %v3028, -inf
        %v3364 = vrot.slane %v3363, 4
        %v3365 = vmax.f32 %v3363, %v3364
        %v3366 = vrot.slane %v3365, 2
        %v3367 = vmax.f32 %v3365, %v3366
        %v3368 = vrot.slane %v3367, 1
        %v3369 = vmax.f32 %v3367, %v3368
        %v3370 = vsel %vm3047, %v3029, -inf
        %v3371 = vrot.slane %v3370, 4
        %v3372 = vmax.f32 %v3370, %v3371
        %v3373 = vrot.slane %v3372, 2
        %v3374 = vmax.f32 %v3372, %v3373
        %v3375 = vrot.slane %v3374, 1
        %v3376 = vmax.f32 %v3374, %v3375
        %v3377 = vsel %vm3047, %v3030, -inf
        %v3378 = vrot.slane %v3377, 4
        %v3379 = vmax.f32 %v3377, %v3378
        %v3380 = vrot.slane %v3379, 2
        %v3381 = vmax.f32 %v3379, %v3380
        %v3382 = vrot.slane %v3381, 1
        %v3383 = vmax.f32 %v3381, %v3382
        %v3384 = vsel %vm3047, %v3031, -inf
        %v3385 = vrot.slane %v3384, 4
        %v3386 = vmax.f32 %v3384, %v3385
        %v3387 = vrot.slane %v3386, 2
        %v3388 = vmax.f32 %v3386, %v3387
        %v3389 = vrot.slane %v3388, 1
        %v3390 = vmax.f32 %v3388, %v3389
        %v3391 = vsel %vm3047, %v3032, -inf
        %v3392 = vrot.slane %v3391, 4
        %v3393 = vmax.f32 %v3391, %v3392
        %v3394 = vrot.slane %v3393, 2
        %v3395 = vmax.f32 %v3393, %v3394
        %v3396 = vrot.slane %v3395, 1
        %v3397 = vmax.f32 %v3395, %v3396
        %v3398 = vsel %vm3047, %v3033, -inf
        %v3399 = vrot.slane %v3398, 4
        %v3400 = vmax.f32 %v3398, %v3399
        %v3401 = vrot.slane %v3400, 2
        %v3402 = vmax.f32 %v3400, %v3401
        %v3403 = vrot.slane %v3402, 1
        %v3404 = vmax.f32 %v3402, %v3403
        %v3405 = vsel %vm3047, %v3034, -inf
        %v3406 = vrot.slane %v3405, 4
        %v3407 = vmax.f32 %v3405, %v3406
        %v3408 = vrot.slane %v3407, 2
        %v3409 = vmax.f32 %v3407, %v3408
        %v3410 = vrot.slane %v3409, 1
        %v3411 = vmax.f32 %v3409, %v3410
        %v3412 = vsel %vm3047, %v3035, -inf
        %v3413 = vrot.slane %v3412, 4
        %v3414 = vmax.f32 %v3412, %v3413
        %v3415 = vrot.slane %v3414, 2
        %v3416 = vmax.f32 %v3414, %v3415
        %v3417 = vrot.slane %v3416, 1
        %v3418 = vmax.f32 %v3416, %v3417
        %v3419 = vsel %vm3047, %v3036, -inf
        %v3420 = vrot.slane %v3419, 4
        %v3421 = vmax.f32 %v3419, %v3420
        %v3422 = vrot.slane %v3421, 2
        %v3423 = vmax.f32 %v3421, %v3422
        %v3424 = vrot.slane %v3423, 1
        %v3425 = vmax.f32 %v3423, %v3424
        %v3426 = vsel %vm3047, %v3037, -inf
        %v3427 = vrot.slane %v3426, 4
        %v3428 = vmax.f32 %v3426, %v3427
        %v3429 = vrot.slane %v3428, 2
        %v3430 = vmax.f32 %v3428, %v3429
        %v3431 = vrot.slane %v3430, 1
        %v3432 = vmax.f32 %v3430, %v3431
        %v3433 = vsel %vm3047, %v3038, -inf
        %v3434 = vrot.slane %v3433, 4
        %v3435 = vmax.f32 %v3433, %v3434
        %v3436 = vrot.slane %v3435, 2
        %v3437 = vmax.f32 %v3435, %v3436
        %v3438 = vrot.slane %v3437, 1
        %v3439 = vmax.f32 %v3437, %v3438
        %v3440 = vsel %vm3047, %v3039, -inf
        %v3441 = vrot.slane %v3440, 4
        %v3442 = vmax.f32 %v3440, %v3441
        %v3443 = vrot.slane %v3442, 2
        %v3444 = vmax.f32 %v3442, %v3443
        %v3445 = vrot.slane %v3444, 1
        %v3446 = vmax.f32 %v3444, %v3445
        %v3447 = vsel %vm3047, %v3040, -inf
        %v3448 = vrot.slane %v3447, 4
        %v3449 = vmax.f32 %v3447, %v3448
        %v3450 = vrot.slane %v3449, 2
        %v3451 = vmax.f32 %v3449, %v3450
        %v3452 = vrot.slane %v3451, 1
        %v3453 = vmax.f32 %v3451, %v3452
        %v3454 = vsel %vm3047, %v3041, -inf
        %v3455 = vrot.slane %v3454, 4
        %v3456 = vmax.f32 %v3454, %v3455
        %v3457 = vrot.slane %v3456, 2
        %v3458 = vmax.f32 %v3456, %v3457
        %v3459 = vrot.slane %v3458, 1
        %v3460 = vmax.f32 %v3458, %v3459
        %v3461 = vsel %vm3047, %v3042, -inf
        %v3462 = vrot.slane %v3461, 4
        %v3463 = vmax.f32 %v3461, %v3462
        %v3464 = vrot.slane %v3463, 2
        %v3465 = vmax.f32 %v3463, %v3464
        %v3466 = vrot.slane %v3465, 1
        %v3467 = vmax.f32 %v3465, %v3466
        %v3468 = vsel %vm3047, %v3043, -inf
        %v3469 = vrot.slane %v3468, 4
        %v3470 = vmax.f32 %v3468, %v3469
        %v3471 = vrot.slane %v3470, 2
        %v3472 = vmax.f32 %v3470, %v3471
        %v3473 = vrot.slane %v3472, 1
        %v3474 = vmax.f32 %v3472, %v3473
        %v3475 = vsel %vm3047, %v3044, -inf
        %v3476 = vrot.slane %v3475, 4
        %v3477 = vmax.f32 %v3475, %v3476
        %v3478 = vrot.slane %v3477, 2
        %v3479 = vmax.f32 %v3477, %v3478
        %v3480 = vrot.slane %v3479, 1
        %v3481 = vmax.f32 %v3479, %v3480
        %v3482 = vsel %vm3047, %v3045, -inf
        %v3483 = vrot.slane %v3482, 4
        %v3484 = vmax.f32 %v3482, %v3483
        %v3485 = vrot.slane %v3484, 2
        %v3486 = vmax.f32 %v3484, %v3485
        %v3487 = vrot.slane %v3486, 1
        %v3488 = vmax.f32 %v3486, %v3487
        %v3489 = vsel %vm3047, %v3046, -inf
        %v3490 = vrot.slane %v3489, 4
        %v3491 = vmax.f32 %v3489, %v3490
        %v3492 = vrot.slane %v3491, 2
        %v3493 = vmax.f32 %v3491, %v3492
        %v3494 = vrot.slane %v3493, 1
        %v3495 = vmax.f32 %v3493, %v3494
        %v3496 = vsub.f32 %v2983, %v3054
        %v3497 = vsub.f32 %v2984, %v3061
        %v3498 = vsub.f32 %v2985, %v3068
        %v3499 = vsub.f32 %v2986, %v3075
        %v3500 = vsub.f32 %v2987, %v3082
        %v3501 = vsub.f32 %v2988, %v3089
        %v3502 = vsub.f32 %v2989, %v3096
        %v3503 = vsub.f32 %v2990, %v3103
        %v3504 = vsub.f32 %v2991, %v3110
        %v3505 = vsub.f32 %v2992, %v3117
        %v3506 = vsub.f32 %v2993, %v3124
        %v3507 = vsub.f32 %v2994, %v3131
        %v3508 = vsub.f32 %v2995, %v3138
        %v3509 = vsub.f32 %v2996, %v3145
        %v3510 = vsub.f32 %v2997, %v3152
        %v3511 = vsub.f32 %v2998, %v3159
        %v3512 = vsub.f32 %v2999, %v3166
        %v3513 = vsub.f32 %v3000, %v3173
        %v3514 = vsub.f32 %v3001, %v3180
        %v3515 = vsub.f32 %v3002, %v3187
        %v3516 = vsub.f32 %v3003, %v3194
        %v3517 = vsub.f32 %v3004, %v3201
        %v3518 = vsub.f32 %v3005, %v3208
        %v3519 = vsub.f32 %v3006, %v3215
        %v3520 = vsub.f32 %v3007, %v3222
        %v3521 = vsub.f32 %v3008, %v3229
        %v3522 = vsub.f32 %v3009, %v3236
        %v3523 = vsub.f32 %v3010, %v3243
        %v3524 = vsub.f32 %v3011, %v3250
        %v3525 = vsub.f32 %v3012, %v3257
        %v3526 = vsub.f32 %v3013, %v3264
        %v3527 = vsub.f32 %v3014, %v3271
        %v3528 = vsub.f32 %v3015, %v3278
        %v3529 = vsub.f32 %v3016, %v3285
        %v3530 = vsub.f32 %v3017, %v3292
        %v3531 = vsub.f32 %v3018, %v3299
        %v3532 = vsub.f32 %v3019, %v3306
        %v3533 = vsub.f32 %v3020, %v3313
        %v3534 = vsub.f32 %v3021, %v3320
        %v3535 = vsub.f32 %v3022, %v3327
        %v3536 = vsub.f32 %v3023, %v3334
        %v3537 = vsub.f32 %v3024, %v3341
        %v3538 = vsub.f32 %v3025, %v3348
        %v3539 = vsub.f32 %v3026, %v3355
        %v3540 = vsub.f32 %v3027, %v3362
        %v3541 = vsub.f32 %v3028, %v3369
        %v3542 = vsub.f32 %v3029, %v3376
        %v3543 = vsub.f32 %v3030, %v3383
        %v3544 = vsub.f32 %v3031, %v3390
        %v3545 = vsub.f32 %v3032, %v3397
        %v3546 = vsub.f32 %v3033, %v3404
        %v3547 = vsub.f32 %v3034, %v3411
        %v3548 = vsub.f32 %v3035, %v3418
        %v3549 = vsub.f32 %v3036, %v3425
        %v3550 = vsub.f32 %v3037, %v3432
        %v3551 = vsub.f32 %v3038, %v3439
        %v3552 = vsub.f32 %v3039, %v3446
        %v3553 = vsub.f32 %v3040, %v3453
        %v3554 = vsub.f32 %v3041, %v3460
        %v3555 = vsub.f32 %v3042, %v3467
        %v3556 = vsub.f32 %v3043, %v3474
        %v3557 = vsub.f32 %v3044, %v3481
        %v3558 = vsub.f32 %v3045, %v3488
        %v3559 = vsub.f32 %v3046, %v3495
        %v3560 = vmul.f32 %v3496, 1.442695
        %v3561 = vpow.pop %v3560
        %v3562 = vmul.f32 %v3497, 1.442695
        %v3563 = vpow.pop %v3562
        %v3564 = vmul.f32 %v3498, 1.442695
        %v3565 = vpow.pop %v3564
        %v3566 = vmul.f32 %v3499, 1.442695
        %v3567 = vpow.pop %v3566
        %v3568 = vmul.f32 %v3500, 1.442695
        %v3569 = vpow.pop %v3568
        %v3570 = vmul.f32 %v3501, 1.442695
        %v3571 = vpow.pop %v3570
        %v3572 = vmul.f32 %v3502, 1.442695
        %v3573 = vpow.pop %v3572
        %v3574 = vmul.f32 %v3503, 1.442695
        %v3575 = vpow.pop %v3574
        %v3576 = vmul.f32 %v3504, 1.442695
        %v3577 = vpow.pop %v3576
        %v3578 = vmul.f32 %v3505, 1.442695
        %v3579 = vpow.pop %v3578
        %v3580 = vmul.f32 %v3506, 1.442695
        %v3581 = vpow.pop %v3580
        %v3582 = vmul.f32 %v3507, 1.442695
        %v3583 = vpow.pop %v3582
        %v3584 = vmul.f32 %v3508, 1.442695
        %v3585 = vpow.pop %v3584
        %v3586 = vmul.f32 %v3509, 1.442695
        %v3587 = vpow.pop %v3586
        %v3588 = vmul.f32 %v3510, 1.442695
        %v3589 = vpow.pop %v3588
        %v3590 = vmul.f32 %v3511, 1.442695
        %v3591 = vpow.pop %v3590
        %v3592 = vmul.f32 %v3512, 1.442695
        %v3593 = vpow.pop %v3592
        %v3594 = vmul.f32 %v3513, 1.442695
        %v3595 = vpow.pop %v3594
        %v3596 = vmul.f32 %v3514, 1.442695
        %v3597 = vpow.pop %v3596
        %v3598 = vmul.f32 %v3515, 1.442695
        %v3599 = vpow.pop %v3598
        %v3600 = vmul.f32 %v3516, 1.442695
        %v3601 = vpow.pop %v3600
        %v3602 = vmul.f32 %v3517, 1.442695
        %v3603 = vpow.pop %v3602
        %v3604 = vmul.f32 %v3518, 1.442695
        %v3605 = vpow.pop %v3604
        %v3606 = vmul.f32 %v3519, 1.442695
        %v3607 = vpow.pop %v3606
        %v3608 = vmul.f32 %v3520, 1.442695
        %v3609 = vpow.pop %v3608
        %v3610 = vmul.f32 %v3521, 1.442695
        %v3611 = vpow.pop %v3610
        %v3612 = vmul.f32 %v3522, 1.442695
        %v3613 = vpow.pop %v3612
        %v3614 = vmul.f32 %v3523, 1.442695
        %v3615 = vpow.pop %v3614
        %v3616 = vmul.f32 %v3524, 1.442695
        %v3617 = vpow.pop %v3616
        %v3618 = vmul.f32 %v3525, 1.442695
        %v3619 = vpow.pop %v3618
        %v3620 = vmul.f32 %v3526, 1.442695
        %v3621 = vpow.pop %v3620
        %v3622 = vmul.f32 %v3527, 1.442695
        %v3623 = vpow.pop %v3622
        %v3624 = vmul.f32 %v3528, 1.442695
        %v3625 = vpow.pop %v3624
        %v3626 = vmul.f32 %v3529, 1.442695
        %v3627 = vpow.pop %v3626
        %v3628 = vmul.f32 %v3530, 1.442695
        %v3629 = vpow.pop %v3628
        %v3630 = vmul.f32 %v3531, 1.442695
        %v3631 = vpow.pop %v3630
        %v3632 = vmul.f32 %v3532, 1.442695
        %v3633 = vpow.pop %v3632
        %v3634 = vmul.f32 %v3533, 1.442695
        %v3635 = vpow.pop %v3634
        %v3636 = vmul.f32 %v3534, 1.442695
        %v3637 = vpow.pop %v3636
        %v3638 = vmul.f32 %v3535, 1.442695
        %v3639 = vpow.pop %v3638
        %v3640 = vmul.f32 %v3536, 1.442695
        %v3641 = vpow.pop %v3640
        %v3642 = vmul.f32 %v3537, 1.442695
        %v3643 = vpow.pop %v3642
        %v3644 = vmul.f32 %v3538, 1.442695
        %v3645 = vpow.pop %v3644
        %v3646 = vmul.f32 %v3539, 1.442695
        %v3647 = vpow.pop %v3646
        %v3648 = vmul.f32 %v3540, 1.442695
        %v3649 = vpow.pop %v3648
        %v3650 = vmul.f32 %v3541, 1.442695
        %v3651 = vpow.pop %v3650
        %v3652 = vmul.f32 %v3542, 1.442695
        %v3653 = vpow.pop %v3652
        %v3654 = vmul.f32 %v3543, 1.442695
        %v3655 = vpow.pop %v3654
        %v3656 = vmul.f32 %v3544, 1.442695
        %v3657 = vpow.pop %v3656
        %v3658 = vmul.f32 %v3545, 1.442695
        %v3659 = vpow.pop %v3658
        %v3660 = vmul.f32 %v3546, 1.442695
        %v3661 = vpow.pop %v3660
        %v3662 = vmul.f32 %v3547, 1.442695
        %v3663 = vpow.pop %v3662
        %v3664 = vmul.f32 %v3548, 1.442695
        %v3665 = vpow.pop %v3664
        %v3666 = vmul.f32 %v3549, 1.442695
        %v3667 = vpow.pop %v3666
        %v3668 = vmul.f32 %v3550, 1.442695
        %v3669 = vpow.pop %v3668
        %v3670 = vmul.f32 %v3551, 1.442695
        %v3671 = vpow.pop %v3670
        %v3672 = vmul.f32 %v3552, 1.442695
        %v3673 = vpow.pop %v3672
        %v3674 = vmul.f32 %v3553, 1.442695
        %v3675 = vpow.pop %v3674
        %v3676 = vmul.f32 %v3554, 1.442695
        %v3677 = vpow.pop %v3676
        %v3678 = vmul.f32 %v3555, 1.442695
        %v3679 = vpow.pop %v3678
        %v3680 = vmul.f32 %v3556, 1.442695
        %v3681 = vpow.pop %v3680
        %v3682 = vmul.f32 %v3557, 1.442695
        %v3683 = vpow.pop %v3682
        %v3684 = vmul.f32 %v3558, 1.442695
        %v3685 = vpow.pop %v3684
        %v3686 = vmul.f32 %v3559, 1.442695
        %v3687 = vpow.pop %v3686
        %v3688 = vsel %vm3047, %v3561, 0.0
        %v3689 = vrot.slane %v3688, 4
        %v3690 = vadd.f32 %v3688, %v3689
        %v3691 = vrot.slane %v3690, 2
        %v3692 = vadd.f32 %v3690, %v3691
        %v3693 = vrot.slane %v3692, 1
        %v3694 = vadd.f32 %v3692, %v3693
        %v3695 = vsel %vm3047, %v3563, 0.0
        %v3696 = vrot.slane %v3695, 4
        %v3697 = vadd.f32 %v3695, %v3696
        %v3698 = vrot.slane %v3697, 2
        %v3699 = vadd.f32 %v3697, %v3698
        %v3700 = vrot.slane %v3699, 1
        %v3701 = vadd.f32 %v3699, %v3700
        %v3702 = vsel %vm3047, %v3565, 0.0
        %v3703 = vrot.slane %v3702, 4
        %v3704 = vadd.f32 %v3702, %v3703
        %v3705 = vrot.slane %v3704, 2
        %v3706 = vadd.f32 %v3704, %v3705
        %v3707 = vrot.slane %v3706, 1
        %v3708 = vadd.f32 %v3706, %v3707
        %v3709 = vsel %vm3047, %v3567, 0.0
        %v3710 = vrot.slane %v3709, 4
        %v3711 = vadd.f32 %v3709, %v3710
        %v3712 = vrot.slane %v3711, 2
        %v3713 = vadd.f32 %v3711, %v3712
        %v3714 = vrot.slane %v3713, 1
        %v3715 = vadd.f32 %v3713, %v3714
        %v3716 = vsel %vm3047, %v3569, 0.0
        %v3717 = vrot.slane %v3716, 4
        %v3718 = vadd.f32 %v3716, %v3717
        %v3719 = vrot.slane %v3718, 2
        %v3720 = vadd.f32 %v3718, %v3719
        %v3721 = vrot.slane %v3720, 1
        %v3722 = vadd.f32 %v3720, %v3721
        %v3723 = vsel %vm3047, %v3571, 0.0
        %v3724 = vrot.slane %v3723, 4
        %v3725 = vadd.f32 %v3723, %v3724
        %v3726 = vrot.slane %v3725, 2
        %v3727 = vadd.f32 %v3725, %v3726
        %v3728 = vrot.slane %v3727, 1
        %v3729 = vadd.f32 %v3727, %v3728
        %v3730 = vsel %vm3047, %v3573, 0.0
        %v3731 = vrot.slane %v3730, 4
        %v3732 = vadd.f32 %v3730, %v3731
        %v3733 = vrot.slane %v3732, 2
        %v3734 = vadd.f32 %v3732, %v3733
        %v3735 = vrot.slane %v3734, 1
        %v3736 = vadd.f32 %v3734, %v3735
        %v3737 = vsel %vm3047, %v3575, 0.0
        %v3738 = vrot.slane %v3737, 4
        %v3739 = vadd.f32 %v3737, %v3738
        %v3740 = vrot.slane %v3739, 2
        %v3741 = vadd.f32 %v3739, %v3740
        %v3742 = vrot.slane %v3741, 1
        %v3743 = vadd.f32 %v3741, %v3742
        %v3744 = vsel %vm3047, %v3577, 0.0
        %v3745 = vrot.slane %v3744, 4
        %v3746 = vadd.f32 %v3744, %v3745
        %v3747 = vrot.slane %v3746, 2
        %v3748 = vadd.f32 %v3746, %v3747
        %v3749 = vrot.slane %v3748, 1
        %v3750 = vadd.f32 %v3748, %v3749
        %v3751 = vsel %vm3047, %v3579, 0.0
        %v3752 = vrot.slane %v3751, 4
        %v3753 = vadd.f32 %v3751, %v3752
        %v3754 = vrot.slane %v3753, 2
        %v3755 = vadd.f32 %v3753, %v3754
        %v3756 = vrot.slane %v3755, 1
        %v3757 = vadd.f32 %v3755, %v3756
        %v3758 = vsel %vm3047, %v3581, 0.0
        %v3759 = vrot.slane %v3758, 4
        %v3760 = vadd.f32 %v3758, %v3759
        %v3761 = vrot.slane %v3760, 2
        %v3762 = vadd.f32 %v3760, %v3761
        %v3763 = vrot.slane %v3762, 1
        %v3764 = vadd.f32 %v3762, %v3763
        %v3765 = vsel %vm3047, %v3583, 0.0
        %v3766 = vrot.slane %v3765, 4
        %v3767 = vadd.f32 %v3765, %v3766
        %v3768 = vrot.slane %v3767, 2
        %v3769 = vadd.f32 %v3767, %v3768
        %v3770 = vrot.slane %v3769, 1
        %v3771 = vadd.f32 %v3769, %v3770
        %v3772 = vsel %vm3047, %v3585, 0.0
        %v3773 = vrot.slane %v3772, 4
        %v3774 = vadd.f32 %v3772, %v3773
        %v3775 = vrot.slane %v3774, 2
        %v3776 = vadd.f32 %v3774, %v3775
        %v3777 = vrot.slane %v3776, 1
        %v3778 = vadd.f32 %v3776, %v3777
        %v3779 = vsel %vm3047, %v3587, 0.0
        %v3780 = vrot.slane %v3779, 4
        %v3781 = vadd.f32 %v3779, %v3780
        %v3782 = vrot.slane %v3781, 2
        %v3783 = vadd.f32 %v3781, %v3782
        %v3784 = vrot.slane %v3783, 1
        %v3785 = vadd.f32 %v3783, %v3784
        %v3786 = vsel %vm3047, %v3589, 0.0
        %v3787 = vrot.slane %v3786, 4
        %v3788 = vadd.f32 %v3786, %v3787
        %v3789 = vrot.slane %v3788, 2
        %v3790 = vadd.f32 %v3788, %v3789
        %v3791 = vrot.slane %v3790, 1
        %v3792 = vadd.f32 %v3790, %v3791
        %v3793 = vsel %vm3047, %v3591, 0.0
        %v3794 = vrot.slane %v3793, 4
        %v3795 = vadd.f32 %v3793, %v3794
        %v3796 = vrot.slane %v3795, 2
        %v3797 = vadd.f32 %v3795, %v3796
        %v3798 = vrot.slane %v3797, 1
        %v3799 = vadd.f32 %v3797, %v3798
        %v3800 = vsel %vm3047, %v3593, 0.0
        %v3801 = vrot.slane %v3800, 4
        %v3802 = vadd.f32 %v3800, %v3801
        %v3803 = vrot.slane %v3802, 2
        %v3804 = vadd.f32 %v3802, %v3803
        %v3805 = vrot.slane %v3804, 1
        %v3806 = vadd.f32 %v3804, %v3805
        %v3807 = vsel %vm3047, %v3595, 0.0
        %v3808 = vrot.slane %v3807, 4
        %v3809 = vadd.f32 %v3807, %v3808
        %v3810 = vrot.slane %v3809, 2
        %v3811 = vadd.f32 %v3809, %v3810
        %v3812 = vrot.slane %v3811, 1
        %v3813 = vadd.f32 %v3811, %v3812
        %v3814 = vsel %vm3047, %v3597, 0.0
        %v3815 = vrot.slane %v3814, 4
        %v3816 = vadd.f32 %v3814, %v3815
        %v3817 = vrot.slane %v3816, 2
        %v3818 = vadd.f32 %v3816, %v3817
        %v3819 = vrot.slane %v3818, 1
        %v3820 = vadd.f32 %v3818, %v3819
        %v3821 = vsel %vm3047, %v3599, 0.0
        %v3822 = vrot.slane %v3821, 4
        %v3823 = vadd.f32 %v3821, %v3822
        %v3824 = vrot.slane %v3823, 2
        %v3825 = vadd.f32 %v3823, %v3824
        %v3826 = vrot.slane %v3825, 1
        %v3827 = vadd.f32 %v3825, %v3826
        %v3828 = vsel %vm3047, %v3601, 0.0
        %v3829 = vrot.slane %v3828, 4
        %v3830 = vadd.f32 %v3828, %v3829
        %v3831 = vrot.slane %v3830, 2
        %v3832 = vadd.f32 %v3830, %v3831
        %v3833 = vrot.slane %v3832, 1
        %v3834 = vadd.f32 %v3832, %v3833
        %v3835 = vsel %vm3047, %v3603, 0.0
        %v3836 = vrot.slane %v3835, 4
        %v3837 = vadd.f32 %v3835, %v3836
        %v3838 = vrot.slane %v3837, 2
        %v3839 = vadd.f32 %v3837, %v3838
        %v3840 = vrot.slane %v3839, 1
        %v3841 = vadd.f32 %v3839, %v3840
        %v3842 = vsel %vm3047, %v3605, 0.0
        %v3843 = vrot.slane %v3842, 4
        %v3844 = vadd.f32 %v3842, %v3843
        %v3845 = vrot.slane %v3844, 2
        %v3846 = vadd.f32 %v3844, %v3845
        %v3847 = vrot.slane %v3846, 1
        %v3848 = vadd.f32 %v3846, %v3847
        %v3849 = vsel %vm3047, %v3607, 0.0
        %v3850 = vrot.slane %v3849, 4
        %v3851 = vadd.f32 %v3849, %v3850
        %v3852 = vrot.slane %v3851, 2
        %v3853 = vadd.f32 %v3851, %v3852
        %v3854 = vrot.slane %v3853, 1
        %v3855 = vadd.f32 %v3853, %v3854
        %v3856 = vsel %vm3047, %v3609, 0.0
        %v3857 = vrot.slane %v3856, 4
        %v3858 = vadd.f32 %v3856, %v3857
        %v3859 = vrot.slane %v3858, 2
        %v3860 = vadd.f32 %v3858, %v3859
        %v3861 = vrot.slane %v3860, 1
        %v3862 = vadd.f32 %v3860, %v3861
        %v3863 = vsel %vm3047, %v3611, 0.0
        %v3864 = vrot.slane %v3863, 4
        %v3865 = vadd.f32 %v3863, %v3864
        %v3866 = vrot.slane %v3865, 2
        %v3867 = vadd.f32 %v3865, %v3866
        %v3868 = vrot.slane %v3867, 1
        %v3869 = vadd.f32 %v3867, %v3868
        %v3870 = vsel %vm3047, %v3613, 0.0
        %v3871 = vrot.slane %v3870, 4
        %v3872 = vadd.f32 %v3870, %v3871
        %v3873 = vrot.slane %v3872, 2
        %v3874 = vadd.f32 %v3872, %v3873
        %v3875 = vrot.slane %v3874, 1
        %v3876 = vadd.f32 %v3874, %v3875
        %v3877 = vsel %vm3047, %v3615, 0.0
        %v3878 = vrot.slane %v3877, 4
        %v3879 = vadd.f32 %v3877, %v3878
        %v3880 = vrot.slane %v3879, 2
        %v3881 = vadd.f32 %v3879, %v3880
        %v3882 = vrot.slane %v3881, 1
        %v3883 = vadd.f32 %v3881, %v3882
        %v3884 = vsel %vm3047, %v3617, 0.0
        %v3885 = vrot.slane %v3884, 4
        %v3886 = vadd.f32 %v3884, %v3885
        %v3887 = vrot.slane %v3886, 2
        %v3888 = vadd.f32 %v3886, %v3887
        %v3889 = vrot.slane %v3888, 1
        %v3890 = vadd.f32 %v3888, %v3889
        %v3891 = vsel %vm3047, %v3619, 0.0
        %v3892 = vrot.slane %v3891, 4
        %v3893 = vadd.f32 %v3891, %v3892
        %v3894 = vrot.slane %v3893, 2
        %v3895 = vadd.f32 %v3893, %v3894
        %v3896 = vrot.slane %v3895, 1
        %v3897 = vadd.f32 %v3895, %v3896
        %v3898 = vsel %vm3047, %v3621, 0.0
        %v3899 = vrot.slane %v3898, 4
        %v3900 = vadd.f32 %v3898, %v3899
        %v3901 = vrot.slane %v3900, 2
        %v3902 = vadd.f32 %v3900, %v3901
        %v3903 = vrot.slane %v3902, 1
        %v3904 = vadd.f32 %v3902, %v3903
        %v3905 = vsel %vm3047, %v3623, 0.0
        %v3906 = vrot.slane %v3905, 4
        %v3907 = vadd.f32 %v3905, %v3906
        %v3908 = vrot.slane %v3907, 2
        %v3909 = vadd.f32 %v3907, %v3908
        %v3910 = vrot.slane %v3909, 1
        %v3911 = vadd.f32 %v3909, %v3910
        %v3912 = vsel %vm3047, %v3625, 0.0
        %v3913 = vrot.slane %v3912, 4
        %v3914 = vadd.f32 %v3912, %v3913
        %v3915 = vrot.slane %v3914, 2
        %v3916 = vadd.f32 %v3914, %v3915
        %v3917 = vrot.slane %v3916, 1
        %v3918 = vadd.f32 %v3916, %v3917
        %v3919 = vsel %vm3047, %v3627, 0.0
        %v3920 = vrot.slane %v3919, 4
        %v3921 = vadd.f32 %v3919, %v3920
        %v3922 = vrot.slane %v3921, 2
        %v3923 = vadd.f32 %v3921, %v3922
        %v3924 = vrot.slane %v3923, 1
        %v3925 = vadd.f32 %v3923, %v3924
        %v3926 = vsel %vm3047, %v3629, 0.0
        %v3927 = vrot.slane %v3926, 4
        %v3928 = vadd.f32 %v3926, %v3927
        %v3929 = vrot.slane %v3928, 2
        %v3930 = vadd.f32 %v3928, %v3929
        %v3931 = vrot.slane %v3930, 1
        %v3932 = vadd.f32 %v3930, %v3931
        %v3933 = vsel %vm3047, %v3631, 0.0
        %v3934 = vrot.slane %v3933, 4
        %v3935 = vadd.f32 %v3933, %v3934
        %v3936 = vrot.slane %v3935, 2
        %v3937 = vadd.f32 %v3935, %v3936
        %v3938 = vrot.slane %v3937, 1
        %v3939 = vadd.f32 %v3937, %v3938
        %v3940 = vsel %vm3047, %v3633, 0.0
        %v3941 = vrot.slane %v3940, 4
        %v3942 = vadd.f32 %v3940, %v3941
        %v3943 = vrot.slane %v3942, 2
        %v3944 = vadd.f32 %v3942, %v3943
        %v3945 = vrot.slane %v3944, 1
        %v3946 = vadd.f32 %v3944, %v3945
        %v3947 = vsel %vm3047, %v3635, 0.0
        %v3948 = vrot.slane %v3947, 4
        %v3949 = vadd.f32 %v3947, %v3948
        %v3950 = vrot.slane %v3949, 2
        %v3951 = vadd.f32 %v3949, %v3950
        %v3952 = vrot.slane %v3951, 1
        %v3953 = vadd.f32 %v3951, %v3952
        %v3954 = vsel %vm3047, %v3637, 0.0
        %v3955 = vrot.slane %v3954, 4
        %v3956 = vadd.f32 %v3954, %v3955
        %v3957 = vrot.slane %v3956, 2
        %v3958 = vadd.f32 %v3956, %v3957
        %v3959 = vrot.slane %v3958, 1
        %v3960 = vadd.f32 %v3958, %v3959
        %v3961 = vsel %vm3047, %v3639, 0.0
        %v3962 = vrot.slane %v3961, 4
        %v3963 = vadd.f32 %v3961, %v3962
        %v3964 = vrot.slane %v3963, 2
        %v3965 = vadd.f32 %v3963, %v3964
        %v3966 = vrot.slane %v3965, 1
        %v3967 = vadd.f32 %v3965, %v3966
        %v3968 = vsel %vm3047, %v3641, 0.0
        %v3969 = vrot.slane %v3968, 4
        %v3970 = vadd.f32 %v3968, %v3969
        %v3971 = vrot.slane %v3970, 2
        %v3972 = vadd.f32 %v3970, %v3971
        %v3973 = vrot.slane %v3972, 1
        %v3974 = vadd.f32 %v3972, %v3973
        %v3975 = vsel %vm3047, %v3643, 0.0
        %v3976 = vrot.slane %v3975, 4
        %v3977 = vadd.f32 %v3975, %v3976
        %v3978 = vrot.slane %v3977, 2
        %v3979 = vadd.f32 %v3977, %v3978
        %v3980 = vrot.slane %v3979, 1
        %v3981 = vadd.f32 %v3979, %v3980
        %v3982 = vsel %vm3047, %v3645, 0.0
        %v3983 = vrot.slane %v3982, 4
        %v3984 = vadd.f32 %v3982, %v3983
        %v3985 = vrot.slane %v3984, 2
        %v3986 = vadd.f32 %v3984, %v3985
        %v3987 = vrot.slane %v3986, 1
        %v3988 = vadd.f32 %v3986, %v3987
        %v3989 = vsel %vm3047, %v3647, 0.0
        %v3990 = vrot.slane %v3989, 4
        %v3991 = vadd.f32 %v3989, %v3990
        %v3992 = vrot.slane %v3991, 2
        %v3993 = vadd.f32 %v3991, %v3992
        %v3994 = vrot.slane %v3993, 1
        %v3995 = vadd.f32 %v3993, %v3994
        %v3996 = vsel %vm3047, %v3649, 0.0
        %v3997 = vrot.slane %v3996, 4
        %v3998 = vadd.f32 %v3996, %v3997
        %v3999 = vrot.slane %v3998, 2
        %v4000 = vadd.f32 %v3998, %v3999
        %v4001 = vrot.slane %v4000, 1
        %v4002 = vadd.f32 %v4000, %v4001
        %v4003 = vsel %vm3047, %v3651, 0.0
        %v4004 = vrot.slane %v4003, 4
        %v4005 = vadd.f32 %v4003, %v4004
        %v4006 = vrot.slane %v4005, 2
        %v4007 = vadd.f32 %v4005, %v4006
        %v4008 = vrot.slane %v4007, 1
        %v4009 = vadd.f32 %v4007, %v4008
        %v4010 = vsel %vm3047, %v3653, 0.0
        %v4011 = vrot.slane %v4010, 4
        %v4012 = vadd.f32 %v4010, %v4011
        %v4013 = vrot.slane %v4012, 2
        %v4014 = vadd.f32 %v4012, %v4013
        %v4015 = vrot.slane %v4014, 1
        %v4016 = vadd.f32 %v4014, %v4015
        %v4017 = vsel %vm3047, %v3655, 0.0
        %v4018 = vrot.slane %v4017, 4
        %v4019 = vadd.f32 %v4017, %v4018
        %v4020 = vrot.slane %v4019, 2
        %v4021 = vadd.f32 %v4019, %v4020
        %v4022 = vrot.slane %v4021, 1
        %v4023 = vadd.f32 %v4021, %v4022
        %v4024 = vsel %vm3047, %v3657, 0.0
        %v4025 = vrot.slane %v4024, 4
        %v4026 = vadd.f32 %v4024, %v4025
        %v4027 = vrot.slane %v4026, 2
        %v4028 = vadd.f32 %v4026, %v4027
        %v4029 = vrot.slane %v4028, 1
        %v4030 = vadd.f32 %v4028, %v4029
        %v4031 = vsel %vm3047, %v3659, 0.0
        %v4032 = vrot.slane %v4031, 4
        %v4033 = vadd.f32 %v4031, %v4032
        %v4034 = vrot.slane %v4033, 2
        %v4035 = vadd.f32 %v4033, %v4034
        %v4036 = vrot.slane %v4035, 1
        %v4037 = vadd.f32 %v4035, %v4036
        %v4038 = vsel %vm3047, %v3661, 0.0
        %v4039 = vrot.slane %v4038, 4
        %v4040 = vadd.f32 %v4038, %v4039
        %v4041 = vrot.slane %v4040, 2
        %v4042 = vadd.f32 %v4040, %v4041
        %v4043 = vrot.slane %v4042, 1
        %v4044 = vadd.f32 %v4042, %v4043
        %v4045 = vsel %vm3047, %v3663, 0.0
        %v4046 = vrot.slane %v4045, 4
        %v4047 = vadd.f32 %v4045, %v4046
        %v4048 = vrot.slane %v4047, 2
        %v4049 = vadd.f32 %v4047, %v4048
        %v4050 = vrot.slane %v4049, 1
        %v4051 = vadd.f32 %v4049, %v4050
        %v4052 = vsel %vm3047, %v3665, 0.0
        %v4053 = vrot.slane %v4052, 4
        %v4054 = vadd.f32 %v4052, %v4053
        %v4055 = vrot.slane %v4054, 2
        %v4056 = vadd.f32 %v4054, %v4055
        %v4057 = vrot.slane %v4056, 1
        %v4058 = vadd.f32 %v4056, %v4057
        %v4059 = vsel %vm3047, %v3667, 0.0
        %v4060 = vrot.slane %v4059, 4
        %v4061 = vadd.f32 %v4059, %v4060
        %v4062 = vrot.slane %v4061, 2
        %v4063 = vadd.f32 %v4061, %v4062
        %v4064 = vrot.slane %v4063, 1
        %v4065 = vadd.f32 %v4063, %v4064
        %v4066 = vsel %vm3047, %v3669, 0.0
        %v4067 = vrot.slane %v4066, 4
        %v4068 = vadd.f32 %v4066, %v4067
        %v4069 = vrot.slane %v4068, 2
        %v4070 = vadd.f32 %v4068, %v4069
        %v4071 = vrot.slane %v4070, 1
        %v4072 = vadd.f32 %v4070, %v4071
        %v4073 = vsel %vm3047, %v3671, 0.0
        %v4074 = vrot.slane %v4073, 4
        %v4075 = vadd.f32 %v4073, %v4074
        %v4076 = vrot.slane %v4075, 2
        %v4077 = vadd.f32 %v4075, %v4076
        %v4078 = vrot.slane %v4077, 1
        %v4079 = vadd.f32 %v4077, %v4078
        %v4080 = vsel %vm3047, %v3673, 0.0
        %v4081 = vrot.slane %v4080, 4
        %v4082 = vadd.f32 %v4080, %v4081
        %v4083 = vrot.slane %v4082, 2
        %v4084 = vadd.f32 %v4082, %v4083
        %v4085 = vrot.slane %v4084, 1
        %v4086 = vadd.f32 %v4084, %v4085
        %v4087 = vsel %vm3047, %v3675, 0.0
        %v4088 = vrot.slane %v4087, 4
        %v4089 = vadd.f32 %v4087, %v4088
        %v4090 = vrot.slane %v4089, 2
        %v4091 = vadd.f32 %v4089, %v4090
        %v4092 = vrot.slane %v4091, 1
        %v4093 = vadd.f32 %v4091, %v4092
        %v4094 = vsel %vm3047, %v3677, 0.0
        %v4095 = vrot.slane %v4094, 4
        %v4096 = vadd.f32 %v4094, %v4095
        %v4097 = vrot.slane %v4096, 2
        %v4098 = vadd.f32 %v4096, %v4097
        %v4099 = vrot.slane %v4098, 1
        %v4100 = vadd.f32 %v4098, %v4099
        %v4101 = vsel %vm3047, %v3679, 0.0
        %v4102 = vrot.slane %v4101, 4
        %v4103 = vadd.f32 %v4101, %v4102
        %v4104 = vrot.slane %v4103, 2
        %v4105 = vadd.f32 %v4103, %v4104
        %v4106 = vrot.slane %v4105, 1
        %v4107 = vadd.f32 %v4105, %v4106
        %v4108 = vsel %vm3047, %v3681, 0.0
        %v4109 = vrot.slane %v4108, 4
        %v4110 = vadd.f32 %v4108, %v4109
        %v4111 = vrot.slane %v4110, 2
        %v4112 = vadd.f32 %v4110, %v4111
        %v4113 = vrot.slane %v4112, 1
        %v4114 = vadd.f32 %v4112, %v4113
        %v4115 = vsel %vm3047, %v3683, 0.0
        %v4116 = vrot.slane %v4115, 4
        %v4117 = vadd.f32 %v4115, %v4116
        %v4118 = vrot.slane %v4117, 2
        %v4119 = vadd.f32 %v4117, %v4118
        %v4120 = vrot.slane %v4119, 1
        %v4121 = vadd.f32 %v4119, %v4120
        %v4122 = vsel %vm3047, %v3685, 0.0
        %v4123 = vrot.slane %v4122, 4
        %v4124 = vadd.f32 %v4122, %v4123
        %v4125 = vrot.slane %v4124, 2
        %v4126 = vadd.f32 %v4124, %v4125
        %v4127 = vrot.slane %v4126, 1
        %v4128 = vadd.f32 %v4126, %v4127
        %v4129 = vsel %vm3047, %v3687, 0.0
        %v4130 = vrot.slane %v4129, 4
        %v4131 = vadd.f32 %v4129, %v4130
        %v4132 = vrot.slane %v4131, 2
        %v4133 = vadd.f32 %v4131, %v4132
        %v4134 = vrot.slane %v4133, 1
        %v4135 = vadd.f32 %v4133, %v4134
        %v4136 = vrcp.pop %v3694
        %v4137 = vmul.f32 %v3561, %v4136
        %v4138 = vrcp.pop %v3701
        %v4139 = vmul.f32 %v3563, %v4138
        %v4140 = vrcp.pop %v3708
        %v4141 = vmul.f32 %v3565, %v4140
        %v4142 = vrcp.pop %v3715
        %v4143 = vmul.f32 %v3567, %v4142
        %v4144 = vrcp.pop %v3722
        %v4145 = vmul.f32 %v3569, %v4144
        %v4146 = vrcp.pop %v3729
        %v4147 = vmul.f32 %v3571, %v4146
        %v4148 = vrcp.pop %v3736
        %v4149 = vmul.f32 %v3573, %v4148
        %v4150 = vrcp.pop %v3743
        %v4151 = vmul.f32 %v3575, %v4150
        %v4152 = vrcp.pop %v3750
        %v4153 = vmul.f32 %v3577, %v4152
        %v4154 = vrcp.pop %v3757
        %v4155 = vmul.f32 %v3579, %v4154
        %v4156 = vrcp.pop %v3764
        %v4157 = vmul.f32 %v3581, %v4156
        %v4158 = vrcp.pop %v3771
        %v4159 = vmul.f32 %v3583, %v4158
        %v4160 = vrcp.pop %v3778
        %v4161 = vmul.f32 %v3585, %v4160
        %v4162 = vrcp.pop %v3785
        %v4163 = vmul.f32 %v3587, %v4162
        %v4164 = vrcp.pop %v3792
        %v4165 = vmul.f32 %v3589, %v4164
        %v4166 = vrcp.pop %v3799
        %v4167 = vmul.f32 %v3591, %v4166
        %v4168 = vrcp.pop %v3806
        %v4169 = vmul.f32 %v3593, %v4168
        %v4170 = vrcp.pop %v3813
        %v4171 = vmul.f32 %v3595, %v4170
        %v4172 = vrcp.pop %v3820
        %v4173 = vmul.f32 %v3597, %v4172
        %v4174 = vrcp.pop %v3827
        %v4175 = vmul.f32 %v3599, %v4174
        %v4176 = vrcp.pop %v3834
        %v4177 = vmul.f32 %v3601, %v4176
        %v4178 = vrcp.pop %v3841
        %v4179 = vmul.f32 %v3603, %v4178
        %v4180 = vrcp.pop %v3848
        %v4181 = vmul.f32 %v3605, %v4180
        %v4182 = vrcp.pop %v3855
        %v4183 = vmul.f32 %v3607, %v4182
        %v4184 = vrcp.pop %v3862
        %v4185 = vmul.f32 %v3609, %v4184
        %v4186 = vrcp.pop %v3869
        %v4187 = vmul.f32 %v3611, %v4186
        %v4188 = vrcp.pop %v3876
        %v4189 = vmul.f32 %v3613, %v4188
        %v4190 = vrcp.pop %v3883
        %v4191 = vmul.f32 %v3615, %v4190
        %v4192 = vrcp.pop %v3890
        %v4193 = vmul.f32 %v3617, %v4192
        %v4194 = vrcp.pop %v3897
        %v4195 = vmul.f32 %v3619, %v4194
        %v4196 = vrcp.pop %v3904
        %v4197 = vmul.f32 %v3621, %v4196
        %v4198 = vrcp.pop %v3911
        %v4199 = vmul.f32 %v3623, %v4198
        %v4200 = vrcp.pop %v3918
        %v4201 = vmul.f32 %v3625, %v4200
        %v4202 = vrcp.pop %v3925
        %v4203 = vmul.f32 %v3627, %v4202
        %v4204 = vrcp.pop %v3932
        %v4205 = vmul.f32 %v3629, %v4204
        %v4206 = vrcp.pop %v3939
        %v4207 = vmul.f32 %v3631, %v4206
        %v4208 = vrcp.pop %v3946
        %v4209 = vmul.f32 %v3633, %v4208
        %v4210 = vrcp.pop %v3953
        %v4211 = vmul.f32 %v3635, %v4210
        %v4212 = vrcp.pop %v3960
        %v4213 = vmul.f32 %v3637, %v4212
        %v4214 = vrcp.pop %v3967
        %v4215 = vmul.f32 %v3639, %v4214
        %v4216 = vrcp.pop %v3974
        %v4217 = vmul.f32 %v3641, %v4216
        %v4218 = vrcp.pop %v3981
        %v4219 = vmul.f32 %v3643, %v4218
        %v4220 = vrcp.pop %v3988
        %v4221 = vmul.f32 %v3645, %v4220
        %v4222 = vrcp.pop %v3995
        %v4223 = vmul.f32 %v3647, %v4222
        %v4224 = vrcp.pop %v4002
        %v4225 = vmul.f32 %v3649, %v4224
        %v4226 = vrcp.pop %v4009
        %v4227 = vmul.f32 %v3651, %v4226
        %v4228 = vrcp.pop %v4016
        %v4229 = vmul.f32 %v3653, %v4228
        %v4230 = vrcp.pop %v4023
        %v4231 = vmul.f32 %v3655, %v4230
        %v4232 = vrcp.pop %v4030
        %v4233 = vmul.f32 %v3657, %v4232
        %v4234 = vrcp.pop %v4037
        %v4235 = vmul.f32 %v3659, %v4234
        %v4236 = vrcp.pop %v4044
        %v4237 = vmul.f32 %v3661, %v4236
        %v4238 = vrcp.pop %v4051
        %v4239 = vmul.f32 %v3663, %v4238
        %v4240 = vrcp.pop %v4058
        %v4241 = vmul.f32 %v3665, %v4240
        %v4242 = vrcp.pop %v4065
        %v4243 = vmul.f32 %v3667, %v4242
        %v4244 = vrcp.pop %v4072
        %v4245 = vmul.f32 %v3669, %v4244
        %v4246 = vrcp.pop %v4079
        %v4247 = vmul.f32 %v3671, %v4246
        %v4248 = vrcp.pop %v4086
        %v4249 = vmul.f32 %v3673, %v4248
        %v4250 = vrcp.pop %v4093
        %v4251 = vmul.f32 %v3675, %v4250
        %v4252 = vrcp.pop %v4100
        %v4253 = vmul.f32 %v3677, %v4252
        %v4254 = vrcp.pop %v4107
        %v4255 = vmul.f32 %v3679, %v4254
        %v4256 = vrcp.pop %v4114
        %v4257 = vmul.f32 %v3681, %v4256
        %v4258 = vrcp.pop %v4121
        %v4259 = vmul.f32 %v3683, %v4258
        %v4260 = vrcp.pop %v4128
        %v4261 = vmul.f32 %v3685, %v4260
        %v4262 = vrcp.pop %v4135
        %v4263 = vmul.f32 %v3687, %v4262
        %v4264 = vmul.f32 %v4137, 0.25
        %v4265 = vmul.f32 %v4139, 0.25
        %v4266 = vmul.f32 %v4141, 0.25
        %v4267 = vmul.f32 %v4143, 0.25
        %v4268 = vmul.f32 %v4145, 0.25
        %v4269 = vmul.f32 %v4147, 0.25
        %v4270 = vmul.f32 %v4149, 0.25
        %v4271 = vmul.f32 %v4151, 0.25
        %v4272 = vmul.f32 %v4153, 0.25
        %v4273 = vmul.f32 %v4155, 0.25
        %v4274 = vmul.f32 %v4157, 0.25
        %v4275 = vmul.f32 %v4159, 0.25
        %v4276 = vmul.f32 %v4161, 0.25
        %v4277 = vmul.f32 %v4163, 0.25
        %v4278 = vmul.f32 %v4165, 0.25
        %v4279 = vmul.f32 %v4167, 0.25
        %v4280 = vmul.f32 %v4169, 0.25
        %v4281 = vmul.f32 %v4171, 0.25
        %v4282 = vmul.f32 %v4173, 0.25
        %v4283 = vmul.f32 %v4175, 0.25
        %v4284 = vmul.f32 %v4177, 0.25
        %v4285 = vmul.f32 %v4179, 0.25
        %v4286 = vmul.f32 %v4181, 0.25
        %v4287 = vmul.f32 %v4183, 0.25
        %v4288 = vmul.f32 %v4185, 0.25
        %v4289 = vmul.f32 %v4187, 0.25
        %v4290 = vmul.f32 %v4189, 0.25
        %v4291 = vmul.f32 %v4191, 0.25
        %v4292 = vmul.f32 %v4193, 0.25
        %v4293 = vmul.f32 %v4195, 0.25
        %v4294 = vmul.f32 %v4197, 0.25
        %v4295 = vmul.f32 %v4199, 0.25
        %v4296 = vmul.f32 %v4201, 0.25
        %v4297 = vmul.f32 %v4203, 0.25
        %v4298 = vmul.f32 %v4205, 0.25
        %v4299 = vmul.f32 %v4207, 0.25
        %v4300 = vmul.f32 %v4209, 0.25
        %v4301 = vmul.f32 %v4211, 0.25
        %v4302 = vmul.f32 %v4213, 0.25
        %v4303 = vmul.f32 %v4215, 0.25
        %v4304 = vmul.f32 %v4217, 0.25
        %v4305 = vmul.f32 %v4219, 0.25
        %v4306 = vmul.f32 %v4221, 0.25
        %v4307 = vmul.f32 %v4223, 0.25
        %v4308 = vmul.f32 %v4225, 0.25
        %v4309 = vmul.f32 %v4227, 0.25
        %v4310 = vmul.f32 %v4229, 0.25
        %v4311 = vmul.f32 %v4231, 0.25
        %v4312 = vmul.f32 %v4233, 0.25
        %v4313 = vmul.f32 %v4235, 0.25
        %v4314 = vmul.f32 %v4237, 0.25
        %v4315 = vmul.f32 %v4239, 0.25
        %v4316 = vmul.f32 %v4241, 0.25
        %v4317 = vmul.f32 %v4243, 0.25
        %v4318 = vmul.f32 %v4245, 0.25
        %v4319 = vmul.f32 %v4247, 0.25
        %v4320 = vmul.f32 %v4249, 0.25
        %v4321 = vmul.f32 %v4251, 0.25
        %v4322 = vmul.f32 %v4253, 0.25
        %v4323 = vmul.f32 %v4255, 0.25
        %v4324 = vmul.f32 %v4257, 0.25
        %v4325 = vmul.f32 %v4259, 0.25
        %v4326 = vmul.f32 %v4261, 0.25
        %v4327 = vmul.f32 %v4263, 0.25
        %v4328 = vld [vmem:[%s5] sm:$0xf]
        %v4330 = vsel %vm3047, %v4264, 0
        %v4333 = vsel %vm3047, %v4265, 0
        %v4336 = vsel %vm3047, %v4266, 0
        %v4339 = vsel %vm3047, %v4267, 0
        %v4342 = vsel %vm3047, %v4268, 0
        %v4345 = vsel %vm3047, %v4269, 0
        %v4348 = vsel %vm3047, %v4270, 0
        %v4351 = vsel %vm3047, %v4271, 0
        %v4354 = vsel %vm3047, %v4272, 0
        %v4357 = vsel %vm3047, %v4273, 0
        %v4360 = vsel %vm3047, %v4274, 0
        %v4363 = vsel %vm3047, %v4275, 0
        %v4366 = vsel %vm3047, %v4276, 0
        %v4369 = vsel %vm3047, %v4277, 0
        %v4372 = vsel %vm3047, %v4278, 0
        %v4375 = vsel %vm3047, %v4279, 0
        %v4378 = vsel %vm3047, %v4280, 0
        %v4381 = vsel %vm3047, %v4281, 0
        %v4384 = vsel %vm3047, %v4282, 0
        %v4387 = vsel %vm3047, %v4283, 0
        %v4390 = vsel %vm3047, %v4284, 0
        %v4393 = vsel %vm3047, %v4285, 0
        %v4396 = vsel %vm3047, %v4286, 0
        %v4399 = vsel %vm3047, %v4287, 0
        %v4402 = vsel %vm3047, %v4288, 0
        %v4405 = vsel %vm3047, %v4289, 0
        %v4408 = vsel %vm3047, %v4290, 0
        %v4411 = vsel %vm3047, %v4291, 0
        %v4414 = vsel %vm3047, %v4292, 0
        %v4417 = vsel %vm3047, %v4293, 0
        %v4420 = vsel %vm3047, %v4294, 0
        %v4423 = vsel %vm3047, %v4295, 0
        %v4426 = vsel %vm3047, %v4296, 0
        %v4429 = vsel %vm3047, %v4297, 0
        %v4432 = vsel %vm3047, %v4298, 0
        %v4435 = vsel %vm3047, %v4299, 0
        %v4438 = vsel %vm3047, %v4300, 0
        %v4441 = vsel %vm3047, %v4301, 0
        %v4444 = vsel %vm3047, %v4302, 0
        %v4447 = vsel %vm3047, %v4303, 0
        %v4450 = vsel %vm3047, %v4304, 0
        %v4453 = vsel %vm3047, %v4305, 0
        %v4456 = vsel %vm3047, %v4306, 0
        %v4459 = vsel %vm3047, %v4307, 0
        %v4462 = vsel %vm3047, %v4308, 0
        %v4465 = vsel %vm3047, %v4309, 0
        %v4468 = vsel %vm3047, %v4310, 0
        %v4471 = vsel %vm3047, %v4311, 0
        %v4474 = vsel %vm3047, %v4312, 0
        %v4477 = vsel %vm3047, %v4313, 0
        %v4480 = vsel %vm3047, %v4314, 0
        %v4483 = vsel %vm3047, %v4315, 0
        %v4486 = vsel %vm3047, %v4316, 0
        %v4489 = vsel %vm3047, %v4317, 0
        %v4492 = vsel %vm3047, %v4318, 0
        %v4495 = vsel %vm3047, %v4319, 0
        %v4498 = vsel %vm3047, %v4320, 0
        %v4501 = vsel %vm3047, %v4321, 0
        %v4504 = vsel %vm3047, %v4322, 0
        %v4507 = vsel %vm3047, %v4323, 0
        %v4510 = vsel %vm3047, %v4324, 0
        %v4513 = vsel %vm3047, %v4325, 0
        %v4516 = vsel %vm3047, %v4326, 0
        %v4519 = vsel %vm3047, %v4327, 0
        %vm4521 = vcmask 1043456
        %v4523 = vsel %vm4521, %v4328, 0
        %4525 = vmatprep.subr.mxu0 0.0
        %4526 = vmatpush1.msra.mxu0 %v4523
        %4527 = vmatprep.subr.mxu0 0.0
        %4528 = vmatpush1.msra.mxu0 0.0
        %4529 = vmatprep.subr.mxu0 0.0
        %4530 = vmatpush1.msra.mxu0 0.0
        %4531 = vmatprep.subr.mxu0 0.0
        %4532 = vmatpush1.msra.mxu0 0.0
        %4533 = vmatprep.subr.mxu0 0.0
        %4534 = vmatpush1.msra.mxu0 0.0
        %4535 = vmatprep.subr.mxu0 0.0
        %4536 = vmatpush1.msra.mxu0 0.0
        %4537 = vmatprep.subr.mxu0 0.0
        %4538 = vmatpush1.msra.mxu0 0.0
        %4539 = vmatprep.subr.mxu0 0.0
        %4540 = vmatpush1.msra.mxu0 0.0
        %4541 = vmatprep.subr.mxu0 0.0
        %4542 = vmatpush1.msra.mxu0 0.0
        %4543 = vmatprep.subr.mxu0 0.0
        %4544 = vmatpush1.msra.mxu0 0.0
        %4545 = vmatprep.subr.mxu0 0.0
        %4546 = vmatpush1.msra.mxu0 0.0
        %4547 = vmatprep.subr.mxu0 0.0
        %4548 = vmatpush1.msra.mxu0 0.0
        %4549 = vmatprep.subr.mxu0 0.0
        %4550 = vmatpush1.msra.mxu0 0.0
        %4551 = vmatprep.subr.mxu0 0.0
        %4552 = vmatpush1.msra.mxu0 0.0
        %4553 = vmatprep.subr.mxu0 0.0
        %4554 = vmatpush1.msra.mxu0 0.0
        %4555 = vmatprep.subr.mxu0 0.0
        %4556 = vmatpush1.msra.mxu0 0.0
        %4557 = vmatprep.subr.mxu0 0.0
        %4558 = vmatpush1.msra.mxu0 0.0
        %4559 = vmatprep.subr.mxu0 0.0
        %4560 = vmatpush1.msra.mxu0 0.0
        %4561 = vmatprep.subr.mxu0 0.0
        %4562 = vmatpush1.msra.mxu0 0.0
        %4563 = vmatprep.subr.mxu0 0.0
        %4564 = vmatpush1.msra.mxu0 0.0
        %4565 = vmatprep.subr.mxu0 0.0
        %4566 = vmatpush1.msra.mxu0 0.0
        %4567 = vmatprep.subr.mxu0 0.0
        %4568 = vmatpush1.msra.mxu0 0.0
        %4569 = vmatprep.subr.mxu0 0.0
        %4570 = vmatpush1.msra.mxu0 0.0
        %4571 = vmatprep.subr.mxu0 0.0
        %4572 = vmatpush1.msra.mxu0 0.0
        %4573 = vmatprep.subr.mxu0 0.0
        %4574 = vmatpush1.msra.mxu0 0.0
        %4575 = vmatprep.subr.mxu0 0.0
        %4576 = vmatpush1.msra.mxu0 0.0
        %4577 = vmatprep.subr.mxu0 0.0
        %4578 = vmatpush1.msra.mxu0 0.0
        %4579 = vmatprep.subr.mxu0 0.0
        %4580 = vmatpush1.msra.mxu0 0.0
        %4581 = vmatprep.subr.mxu0 0.0
        %4582 = vmatpush1.msra.mxu0 0.0
        %4583 = vmatprep.subr.mxu0 0.0
        %4584 = vmatpush1.msra.mxu0 0.0
        %4585 = vmatprep.subr.mxu0 0.0
        %4586 = vmatpush1.msra.mxu0 0.0
        %4587 = vmatprep.subr.mxu0 0.0
        %4588 = vmatpush1.msra.mxu0 0.0
        %4589 = vmatprep.mubr.f32.mxu0 0.0
        %4590 = vmatmul.mubr.f32.gmra.mrb[0].mxu0 %v4330
        %v4591 = vpop.f32.mrb[0].mxu0
        %v4592 = vadd.f32 0.0, %v4591
        %v4593 = vpop.f32.mrb[0].mxu0
        %4594 = vmatprep.mubr.f32.mxu0 0.0
        %4595 = vmatmul.mubr.f32.gmra.mrb[0].mxu0 %v4333
        %v4596 = vpop.f32.mrb[0].mxu0
        %v4597 = vadd.f32 0.0, %v4596
        %v4598 = vpop.f32.mrb[0].mxu0
        %4599 = vmatprep.mubr.f32.mxu0 0.0
        %4600 = vmatmul.mubr.f32.gmra.mrb[0].mxu0 %v4336
        %v4601 = vpop.f32.mrb[0].mxu0
        %v4602 = vadd.f32 0.0, %v4601
        %v4603 = vpop.f32.mrb[0].mxu0
        %4604 = vmatprep.mubr.f32.mxu0 0.0
        %4605 = vmatmul.mubr.f32.gmra.mrb[0].mxu0 %v4339
        %v4606 = vpop.f32.mrb[0].mxu0
        %v4607 = vadd.f32 0.0, %v4606
        %v4608 = vpop.f32.mrb[0].mxu0
        %4609 = vmatprep.mubr.f32.mxu0 0.0
        %4610 = vmatmul.mubr.f32.gmra.mrb[0].mxu0 %v4342
        %v4611 = vpop.f32.mrb[0].mxu0
        %v4612 = vadd.f32 0.0, %v4611
        %v4613 = vpop.f32.mrb[0].mxu0
        %4614 = vmatprep.mubr.f32.mxu0 0.0
        %4615 = vmatmul.mubr.f32.gmra.mrb[0].mxu0 %v4345
        %v4616 = vpop.f32.mrb[0].mxu0
        %v4617 = vadd.f32 0.0, %v4616
        %v4618 = vpop.f32.mrb[0].mxu0
        %4619 = vmatprep.mubr.f32.mxu0 0.0
        %4620 = vmatmul.mubr.f32.gmra.mrb[0].mxu0 %v4348
        %v4621 = vpop.f32.mrb[0].mxu0
        %v4622 = vadd.f32 0.0, %v4621
        %v4623 = vpop.f32.mrb[0].mxu0
        %4624 = vmatprep.mubr.f32.mxu0 0.0
        %4625 = vmatmul.mubr.f32.gmra.mrb[0].mxu0 %v4351
        %v4626 = vpop.f32.mrb[0].mxu0
        %v4627 = vadd.f32 0.0, %v4626
        %v4628 = vpop.f32.mrb[0].mxu0
        %4629 = vmatprep.mubr.f32.mxu0 0.0
        %4630 = vmatmul.mubr.f32.gmra.mrb[0].mxu0 %v4354
        %v4631 = vpop.f32.mrb[0].mxu0
        %v4632 = vadd.f32 0.0, %v4631
        %v4633 = vpop.f32.mrb[0].mxu0
        %4634 = vmatprep.mubr.f32.mxu0 0.0
        %4635 = vmatmul.mubr.f32.gmra.mrb[0].mxu0 %v4357
        %v4636 = vpop.f32.mrb[0].mxu0
        %v4637 = vadd.f32 0.0, %v4636
        %v4638 = vpop.f32.mrb[0].mxu0
        %4639 = vmatprep.mubr.f32.mxu0 0.0
        %4640 = vmatmul.mubr.f32.gmra.mrb[0].mxu0 %v4360
        %v4641 = vpop.f32.mrb[0].mxu0
        %v4642 = vadd.f32 0.0, %v4641
        %v4643 = vpop.f32.mrb[0].mxu0
        %4644 = vmatprep.mubr.f32.mxu0 0.0
        %4645 = vmatmul.mubr.f32.gmra.mrb[0].mxu0 %v4363
        %v4646 = vpop.f32.mrb[0].mxu0
        %v4647 = vadd.f32 0.0, %v4646
        %v4648 = vpop.f32.mrb[0].mxu0
        %4649 = vmatprep.mubr.f32.mxu0 0.0
        %4650 = vmatmul.mubr.f32.gmra.mrb[0].mxu0 %v4366
        %v4651 = vpop.f32.mrb[0].mxu0
        %v4652 = vadd.f32 0.0, %v4651
        %v4653 = vpop.f32.mrb[0].mxu0
        %4654 = vmatprep.mubr.f32.mxu0 0.0
        %4655 = vmatmul.mubr.f32.gmra.mrb[0].mxu0 %v4369
        %v4656 = vpop.f32.mrb[0].mxu0
        %v4657 = vadd.f32 0.0, %v4656
        %v4658 = vpop.f32.mrb[0].mxu0
        %4659 = vmatprep.mubr.f32.mxu0 0.0
        %4660 = vmatmul.mubr.f32.gmra.mrb[0].mxu0 %v4372
        %v4661 = vpop.f32.mrb[0].mxu0
        %v4662 = vadd.f32 0.0, %v4661
        %v4663 = vpop.f32.mrb[0].mxu0
        %4664 = vmatprep.mubr.f32.mxu0 0.0
        %4665 = vmatmul.mubr.f32.gmra.mrb[0].mxu0 %v4375
        %v4666 = vpop.f32.mrb[0].mxu0
        %v4667 = vadd.f32 0.0, %v4666
        %v4668 = vpop.f32.mrb[0].mxu0
        %4669 = vmatprep.mubr.f32.mxu0 0.0
        %4670 = vmatmul.mubr.f32.gmra.mrb[0].mxu0 %v4378
        %v4671 = vpop.f32.mrb[0].mxu0
        %v4672 = vadd.f32 0.0, %v4671
        %v4673 = vpop.f32.mrb[0].mxu0
        %4674 = vmatprep.mubr.f32.mxu0 0.0
        %4675 = vmatmul.mubr.f32.gmra.mrb[0].mxu0 %v4381
        %v4676 = vpop.f32.mrb[0].mxu0
        %v4677 = vadd.f32 0.0, %v4676
        %v4678 = vpop.f32.mrb[0].mxu0
        %4679 = vmatprep.mubr.f32.mxu0 0.0
        %4680 = vmatmul.mubr.f32.gmra.mrb[0].mxu0 %v4384
        %v4681 = vpop.f32.mrb[0].mxu0
        %v4682 = vadd.f32 0.0, %v4681
        %v4683 = vpop.f32.mrb[0].mxu0
        %4684 = vmatprep.mubr.f32.mxu0 0.0
        %4685 = vmatmul.mubr.f32.gmra.mrb[0].mxu0 %v4387
        %v4686 = vpop.f32.mrb[0].mxu0
        %v4687 = vadd.f32 0.0, %v4686
        %v4688 = vpop.f32.mrb[0].mxu0
        %4689 = vmatprep.mubr.f32.mxu0 0.0
        %4690 = vmatmul.mubr.f32.gmra.mrb[0].mxu0 %v4390
        %v4691 = vpop.f32.mrb[0].mxu0
        %v4692 = vadd.f32 0.0, %v4691
        %v4693 = vpop.f32.mrb[0].mxu0
        %4694 = vmatprep.mubr.f32.mxu0 0.0
        %4695 = vmatmul.mubr.f32.gmra.mrb[0].mxu0 %v4393
        %v4696 = vpop.f32.mrb[0].mxu0
        %v4697 = vadd.f32 0.0, %v4696
        %v4698 = vpop.f32.mrb[0].mxu0
        %4699 = vmatprep.mubr.f32.mxu0 0.0
        %4700 = vmatmul.mubr.f32.gmra.mrb[0].mxu0 %v4396
        %v4701 = vpop.f32.mrb[0].mxu0
        %v4702 = vadd.f32 0.0, %v4701
        %v4703 = vpop.f32.mrb[0].mxu0
        %4704 = vmatprep.mubr.f32.mxu0 0.0
        %4705 = vmatmul.mubr.f32.gmra.mrb[0].mxu0 %v4399
        %v4706 = vpop.f32.mrb[0].mxu0
        %v4707 = vadd.f32 0.0, %v4706
        %v4708 = vpop.f32.mrb[0].mxu0
        %4709 = vmatprep.mubr.f32.mxu0 0.0
        %4710 = vmatmul.mubr.f32.gmra.mrb[0].mxu0 %v4402
        %v4711 = vpop.f32.mrb[0].mxu0
        %v4712 = vadd.f32 0.0, %v4711
        %v4713 = vpop.f32.mrb[0].mxu0
        %4714 = vmatprep.mubr.f32.mxu0 0.0
        %4715 = vmatmul.mubr.f32.gmra.mrb[0].mxu0 %v4405
        %v4716 = vpop.f32.mrb[0].mxu0
        %v4717 = vadd.f32 0.0, %v4716
        %v4718 = vpop.f32.mrb[0].mxu0
        %4719 = vmatprep.mubr.f32.mxu0 0.0
        %4720 = vmatmul.mubr.f32.gmra.mrb[0].mxu0 %v4408
        %v4721 = vpop.f32.mrb[0].mxu0
        %v4722 = vadd.f32 0.0, %v4721
        %v4723 = vpop.f32.mrb[0].mxu0
        %4724 = vmatprep.mubr.f32.mxu0 0.0
        %4725 = vmatmul.mubr.f32.gmra.mrb[0].mxu0 %v4411
        %v4726 = vpop.f32.mrb[0].mxu0
        %v4727 = vadd.f32 0.0, %v4726
        %v4728 = vpop.f32.mrb[0].mxu0
        %4729 = vmatprep.mubr.f32.mxu0 0.0
        %4730 = vmatmul.mubr.f32.gmra.mrb[0].mxu0 %v4414
        %v4731 = vpop.f32.mrb[0].mxu0
        %v4732 = vadd.f32 0.0, %v4731
        %v4733 = vpop.f32.mrb[0].mxu0
        %4734 = vmatprep.mubr.f32.mxu0 0.0
        %4735 = vmatmul.mubr.f32.gmra.mrb[0].mxu0 %v4417
        %v4736 = vpop.f32.mrb[0].mxu0
        %v4737 = vadd.f32 0.0, %v4736
        %v4738 = vpop.f32.mrb[0].mxu0
        %4739 = vmatprep.mubr.f32.mxu0 0.0
        %4740 = vmatmul.mubr.f32.gmra.mrb[0].mxu0 %v4420
        %v4741 = vpop.f32.mrb[0].mxu0
        %v4742 = vadd.f32 0.0, %v4741
        %v4743 = vpop.f32.mrb[0].mxu0
        %4744 = vmatprep.mubr.f32.mxu0 0.0
        %4745 = vmatmul.mubr.f32.gmra.mrb[0].mxu0 %v4423
        %v4746 = vpop.f32.mrb[0].mxu0
        %v4747 = vadd.f32 0.0, %v4746
        %v4748 = vpop.f32.mrb[0].mxu0
        %4749 = vmatprep.mubr.f32.mxu0 0.0
        %4750 = vmatmul.mubr.f32.gmra.mrb[0].mxu0 %v4426
        %v4751 = vpop.f32.mrb[0].mxu0
        %v4752 = vadd.f32 0.0, %v4751
        %v4753 = vpop.f32.mrb[0].mxu0
        %4754 = vmatprep.mubr.f32.mxu0 0.0
        %4755 = vmatmul.mubr.f32.gmra.mrb[0].mxu0 %v4429
        %v4756 = vpop.f32.mrb[0].mxu0
        %v4757 = vadd.f32 0.0, %v4756
        %v4758 = vpop.f32.mrb[0].mxu0
        %4759 = vmatprep.mubr.f32.mxu0 0.0
        %4760 = vmatmul.mubr.f32.gmra.mrb[0].mxu0 %v4432
        %v4761 = vpop.f32.mrb[0].mxu0
        %v4762 = vadd.f32 0.0, %v4761
        %v4763 = vpop.f32.mrb[0].mxu0
        %4764 = vmatprep.mubr.f32.mxu0 0.0
        %4765 = vmatmul.mubr.f32.gmra.mrb[0].mxu0 %v4435
        %v4766 = vpop.f32.mrb[0].mxu0
        %v4767 = vadd.f32 0.0, %v4766
        %v4768 = vpop.f32.mrb[0].mxu0
        %4769 = vmatprep.mubr.f32.mxu0 0.0
        %4770 = vmatmul.mubr.f32.gmra.mrb[0].mxu0 %v4438
        %v4771 = vpop.f32.mrb[0].mxu0
        %v4772 = vadd.f32 0.0, %v4771
        %v4773 = vpop.f32.mrb[0].mxu0
        %4774 = vmatprep.mubr.f32.mxu0 0.0
        %4775 = vmatmul.mubr.f32.gmra.mrb[0].mxu0 %v4441
        %v4776 = vpop.f32.mrb[0].mxu0
        %v4777 = vadd.f32 0.0, %v4776
        %v4778 = vpop.f32.mrb[0].mxu0
        %4779 = vmatprep.mubr.f32.mxu0 0.0
        %4780 = vmatmul.mubr.f32.gmra.mrb[0].mxu0 %v4444
        %v4781 = vpop.f32.mrb[0].mxu0
        %v4782 = vadd.f32 0.0, %v4781
        %v4783 = vpop.f32.mrb[0].mxu0
        %4784 = vmatprep.mubr.f32.mxu0 0.0
        %4785 = vmatmul.mubr.f32.gmra.mrb[0].mxu0 %v4447
        %v4786 = vpop.f32.mrb[0].mxu0
        %v4787 = vadd.f32 0.0, %v4786
        %v4788 = vpop.f32.mrb[0].mxu0
        %4789 = vmatprep.mubr.f32.mxu0 0.0
        %4790 = vmatmul.mubr.f32.gmra.mrb[0].mxu0 %v4450
        %v4791 = vpop.f32.mrb[0].mxu0
        %v4792 = vadd.f32 0.0, %v4791
        %v4793 = vpop.f32.mrb[0].mxu0
        %4794 = vmatprep.mubr.f32.mxu0 0.0
        %4795 = vmatmul.mubr.f32.gmra.mrb[0].mxu0 %v4453
        %v4796 = vpop.f32.mrb[0].mxu0
        %v4797 = vadd.f32 0.0, %v4796
        %v4798 = vpop.f32.mrb[0].mxu0
        %4799 = vmatprep.mubr.f32.mxu0 0.0
        %4800 = vmatmul.mubr.f32.gmra.mrb[0].mxu0 %v4456
        %v4801 = vpop.f32.mrb[0].mxu0
        %v4802 = vadd.f32 0.0, %v4801
        %v4803 = vpop.f32.mrb[0].mxu0
        %4804 = vmatprep.mubr.f32.mxu0 0.0
        %4805 = vmatmul.mubr.f32.gmra.mrb[0].mxu0 %v4459
        %v4806 = vpop.f32.mrb[0].mxu0
        %v4807 = vadd.f32 0.0, %v4806
        %v4808 = vpop.f32.mrb[0].mxu0
        %4809 = vmatprep.mubr.f32.mxu0 0.0
        %4810 = vmatmul.mubr.f32.gmra.mrb[0].mxu0 %v4462
        %v4811 = vpop.f32.mrb[0].mxu0
        %v4812 = vadd.f32 0.0, %v4811
        %v4813 = vpop.f32.mrb[0].mxu0
        %4814 = vmatprep.mubr.f32.mxu0 0.0
        %4815 = vmatmul.mubr.f32.gmra.mrb[0].mxu0 %v4465
        %v4816 = vpop.f32.mrb[0].mxu0
        %v4817 = vadd.f32 0.0, %v4816
        %v4818 = vpop.f32.mrb[0].mxu0
        %4819 = vmatprep.mubr.f32.mxu0 0.0
        %4820 = vmatmul.mubr.f32.gmra.mrb[0].mxu0 %v4468
        %v4821 = vpop.f32.mrb[0].mxu0
        %v4822 = vadd.f32 0.0, %v4821
        %v4823 = vpop.f32.mrb[0].mxu0
        %4824 = vmatprep.mubr.f32.mxu0 0.0
        %4825 = vmatmul.mubr.f32.gmra.mrb[0].mxu0 %v4471
        %v4826 = vpop.f32.mrb[0].mxu0
        %v4827 = vadd.f32 0.0, %v4826
        %v4828 = vpop.f32.mrb[0].mxu0
        %4829 = vmatprep.mubr.f32.mxu0 0.0
        %4830 = vmatmul.mubr.f32.gmra.mrb[0].mxu0 %v4474
        %v4831 = vpop.f32.mrb[0].mxu0
        %v4832 = vadd.f32 0.0, %v4831
        %v4833 = vpop.f32.mrb[0].mxu0
        %4834 = vmatprep.mubr.f32.mxu0 0.0
        %4835 = vmatmul.mubr.f32.gmra.mrb[0].mxu0 %v4477
        %v4836 = vpop.f32.mrb[0].mxu0
        %v4837 = vadd.f32 0.0, %v4836
        %v4838 = vpop.f32.mrb[0].mxu0
        %4839 = vmatprep.mubr.f32.mxu0 0.0
        %4840 = vmatmul.mubr.f32.gmra.mrb[0].mxu0 %v4480
        %v4841 = vpop.f32.mrb[0].mxu0
        %v4842 = vadd.f32 0.0, %v4841
        %v4843 = vpop.f32.mrb[0].mxu0
        %4844 = vmatprep.mubr.f32.mxu0 0.0
        %4845 = vmatmul.mubr.f32.gmra.mrb[0].mxu0 %v4483
        %v4846 = vpop.f32.mrb[0].mxu0
        %v4847 = vadd.f32 0.0, %v4846
        %v4848 = vpop.f32.mrb[0].mxu0
        %4849 = vmatprep.mubr.f32.mxu0 0.0
        %4850 = vmatmul.mubr.f32.gmra.mrb[0].mxu0 %v4486
        %v4851 = vpop.f32.mrb[0].mxu0
        %v4852 = vadd.f32 0.0, %v4851
        %v4853 = vpop.f32.mrb[0].mxu0
        %4854 = vmatprep.mubr.f32.mxu0 0.0
        %4855 = vmatmul.mubr.f32.gmra.mrb[0].mxu0 %v4489
        %v4856 = vpop.f32.mrb[0].mxu0
        %v4857 = vadd.f32 0.0, %v4856
        %v4858 = vpop.f32.mrb[0].mxu0
        %4859 = vmatprep.mubr.f32.mxu0 0.0
        %4860 = vmatmul.mubr.f32.gmra.mrb[0].mxu0 %v4492
        %v4861 = vpop.f32.mrb[0].mxu0
        %v4862 = vadd.f32 0.0, %v4861
        %v4863 = vpop.f32.mrb[0].mxu0
        %4864 = vmatprep.mubr.f32.mxu0 0.0
        %4865 = vmatmul.mubr.f32.gmra.mrb[0].mxu0 %v4495
        %v4866 = vpop.f32.mrb[0].mxu0
        %v4867 = vadd.f32 0.0, %v4866
        %v4868 = vpop.f32.mrb[0].mxu0
        %4869 = vmatprep.mubr.f32.mxu0 0.0
        %4870 = vmatmul.mubr.f32.gmra.mrb[0].mxu0 %v4498
        %v4871 = vpop.f32.mrb[0].mxu0
        %v4872 = vadd.f32 0.0, %v4871
        %v4873 = vpop.f32.mrb[0].mxu0
        %4874 = vmatprep.mubr.f32.mxu0 0.0
        %4875 = vmatmul.mubr.f32.gmra.mrb[0].mxu0 %v4501
        %v4876 = vpop.f32.mrb[0].mxu0
        %v4877 = vadd.f32 0.0, %v4876
        %v4878 = vpop.f32.mrb[0].mxu0
        %4879 = vmatprep.mubr.f32.mxu0 0.0
        %4880 = vmatmul.mubr.f32.gmra.mrb[0].mxu0 %v4504
        %v4881 = vpop.f32.mrb[0].mxu0
        %v4882 = vadd.f32 0.0, %v4881
        %v4883 = vpop.f32.mrb[0].mxu0
        %4884 = vmatprep.mubr.f32.mxu0 0.0
        %4885 = vmatmul.mubr.f32.gmra.mrb[0].mxu0 %v4507
        %v4886 = vpop.f32.mrb[0].mxu0
        %v4887 = vadd.f32 0.0, %v4886
        %v4888 = vpop.f32.mrb[0].mxu0
        %4889 = vmatprep.mubr.f32.mxu0 0.0
        %4890 = vmatmul.mubr.f32.gmra.mrb[0].mxu0 %v4510
        %v4891 = vpop.f32.mrb[0].mxu0
        %v4892 = vadd.f32 0.0, %v4891
        %v4893 = vpop.f32.mrb[0].mxu0
        %4894 = vmatprep.mubr.f32.mxu0 0.0
        %4895 = vmatmul.mubr.f32.gmra.mrb[0].mxu0 %v4513
        %v4896 = vpop.f32.mrb[0].mxu0
        %v4897 = vadd.f32 0.0, %v4896
        %v4898 = vpop.f32.mrb[0].mxu0
        %4899 = vmatprep.mubr.f32.mxu0 0.0
        %4900 = vmatmul.mubr.f32.gmra.mrb[0].mxu0 %v4516
        %v4901 = vpop.f32.mrb[0].mxu0
        %v4902 = vadd.f32 0.0, %v4901
        %v4903 = vpop.f32.mrb[0].mxu0
        %4904 = vmatprep.mubr.f32.mxu0 0.0
        %4905 = vmatmul.mubr.f32.gmra.mrb[0].mxu0 %v4519
        %v4906 = vpop.f32.mrb[0].mxu0
        %v4907 = vadd.f32 0.0, %v4906
        %v4908 = vpop.f32.mrb[0].mxu0
        %4909 = vdwg.mxu0
        %v4910 = vmul.f32 %v4592, %v1354
        %v4911 = vmul.f32 %v4597, %v1354
        %v4912 = vmul.f32 %v4602, %v1354
        %v4913 = vmul.f32 %v4607, %v1354
        %v4914 = vmul.f32 %v4612, %v1354
        %v4915 = vmul.f32 %v4617, %v1354
        %v4916 = vmul.f32 %v4622, %v1354
        %v4917 = vmul.f32 %v4627, %v1354
        %v4918 = vmul.f32 %v4632, %v1360
        %v4919 = vmul.f32 %v4637, %v1360
        %v4920 = vmul.f32 %v4642, %v1360
        %v4921 = vmul.f32 %v4647, %v1360
        %v4922 = vmul.f32 %v4652, %v1360
        %v4923 = vmul.f32 %v4657, %v1360
        %v4924 = vmul.f32 %v4662, %v1360
        %v4925 = vmul.f32 %v4667, %v1360
        %v4926 = vmul.f32 %v4672, %v1366
        %v4927 = vmul.f32 %v4677, %v1366
        %v4928 = vmul.f32 %v4682, %v1366
        %v4929 = vmul.f32 %v4687, %v1366
        %v4930 = vmul.f32 %v4692, %v1366
        %v4931 = vmul.f32 %v4697, %v1366
        %v4932 = vmul.f32 %v4702, %v1366
        %v4933 = vmul.f32 %v4707, %v1366
        %v4934 = vmul.f32 %v4712, %v1372
        %v4935 = vmul.f32 %v4717, %v1372
        %v4936 = vmul.f32 %v4722, %v1372
        %v4937 = vmul.f32 %v4727, %v1372
        %v4938 = vmul.f32 %v4732, %v1372
        %v4939 = vmul.f32 %v4737, %v1372
        %v4940 = vmul.f32 %v4742, %v1372
        %v4941 = vmul.f32 %v4747, %v1372
        %v4942 = vmul.f32 %v4752, %v1378
        %v4943 = vmul.f32 %v4757, %v1378
        %v4944 = vmul.f32 %v4762, %v1378
        %v4945 = vmul.f32 %v4767, %v1378
        %v4946 = vmul.f32 %v4772, %v1378
        %v4947 = vmul.f32 %v4777, %v1378
        %v4948 = vmul.f32 %v4782, %v1378
        %v4949 = vmul.f32 %v4787, %v1378
        %v4950 = vmul.f32 %v4792, %v1384
        %v4951 = vmul.f32 %v4797, %v1384
        %v4952 = vmul.f32 %v4802, %v1384
        %v4953 = vmul.f32 %v4807, %v1384
        %v4954 = vmul.f32 %v4812, %v1384
        %v4955 = vmul.f32 %v4817, %v1384
        %v4956 = vmul.f32 %v4822, %v1384
        %v4957 = vmul.f32 %v4827, %v1384
        %v4958 = vmul.f32 %v4832, %v1390
        %v4959 = vmul.f32 %v4837, %v1390
        %v4960 = vmul.f32 %v4842, %v1390
        %v4961 = vmul.f32 %v4847, %v1390
        %v4962 = vmul.f32 %v4852, %v1390
        %v4963 = vmul.f32 %v4857, %v1390
        %v4964 = vmul.f32 %v4862, %v1390
        %v4965 = vmul.f32 %v4867, %v1390
        %v4966 = vmul.f32 %v4872, %v1396
        %v4967 = vmul.f32 %v4877, %v1396
        %v4968 = vmul.f32 %v4882, %v1396
        %v4969 = vmul.f32 %v4887, %v1396
        %v4970 = vmul.f32 %v4892, %v1396
        %v4971 = vmul.f32 %v4897, %v1396
        %v4972 = vmul.f32 %v4902, %v1396
        %v4973 = vmul.f32 %v4907, %v1396
        %v4974 = vsel %vm744, %v4910, 0.0
        %v4975 = vrot.slane %v4974, 4
        %v4976 = vadd.f32 %v4974, %v4975
        %v4977 = vrot.slane %v4976, 2
        %v4978 = vadd.f32 %v4976, %v4977
        %v4979 = vrot.slane %v4978, 1
        %v4980 = vadd.f32 %v4978, %v4979
        %v4981 = vsel %vm744, %v4911, 0.0
        %v4982 = vrot.slane %v4981, 4
        %v4983 = vadd.f32 %v4981, %v4982
        %v4984 = vrot.slane %v4983, 2
        %v4985 = vadd.f32 %v4983, %v4984
        %v4986 = vrot.slane %v4985, 1
        %v4987 = vadd.f32 %v4985, %v4986
        %v4988 = vsel %vm744, %v4912, 0.0
        %v4989 = vrot.slane %v4988, 4
        %v4990 = vadd.f32 %v4988, %v4989
        %v4991 = vrot.slane %v4990, 2
        %v4992 = vadd.f32 %v4990, %v4991
        %v4993 = vrot.slane %v4992, 1
        %v4994 = vadd.f32 %v4992, %v4993
        %v4995 = vsel %vm744, %v4913, 0.0
        %v4996 = vrot.slane %v4995, 4
        %v4997 = vadd.f32 %v4995, %v4996
        %v4998 = vrot.slane %v4997, 2
        %v4999 = vadd.f32 %v4997, %v4998
        %v5000 = vrot.slane %v4999, 1
        %v5001 = vadd.f32 %v4999, %v5000
        %v5002 = vsel %vm744, %v4914, 0.0
        %v5003 = vrot.slane %v5002, 4
        %v5004 = vadd.f32 %v5002, %v5003
        %v5005 = vrot.slane %v5004, 2
        %v5006 = vadd.f32 %v5004, %v5005
        %v5007 = vrot.slane %v5006, 1
        %v5008 = vadd.f32 %v5006, %v5007
        %v5009 = vsel %vm744, %v4915, 0.0
        %v5010 = vrot.slane %v5009, 4
        %v5011 = vadd.f32 %v5009, %v5010
        %v5012 = vrot.slane %v5011, 2
        %v5013 = vadd.f32 %v5011, %v5012
        %v5014 = vrot.slane %v5013, 1
        %v5015 = vadd.f32 %v5013, %v5014
        %v5016 = vsel %vm744, %v4916, 0.0
        %v5017 = vrot.slane %v5016, 4
        %v5018 = vadd.f32 %v5016, %v5017
        %v5019 = vrot.slane %v5018, 2
        %v5020 = vadd.f32 %v5018, %v5019
        %v5021 = vrot.slane %v5020, 1
        %v5022 = vadd.f32 %v5020, %v5021
        %v5023 = vsel %vm744, %v4917, 0.0
        %v5024 = vrot.slane %v5023, 4
        %v5025 = vadd.f32 %v5023, %v5024
        %v5026 = vrot.slane %v5025, 2
        %v5027 = vadd.f32 %v5025, %v5026
        %v5028 = vrot.slane %v5027, 1
        %v5029 = vadd.f32 %v5027, %v5028
        %v5030 = vsel %vm744, %v4918, 0.0
        %v5031 = vrot.slane %v5030, 4
        %v5032 = vadd.f32 %v5030, %v5031
        %v5033 = vrot.slane %v5032, 2
        %v5034 = vadd.f32 %v5032, %v5033
        %v5035 = vrot.slane %v5034, 1
        %v5036 = vadd.f32 %v5034, %v5035
        %v5037 = vsel %vm744, %v4919, 0.0
        %v5038 = vrot.slane %v5037, 4
        %v5039 = vadd.f32 %v5037, %v5038
        %v5040 = vrot.slane %v5039, 2
        %v5041 = vadd.f32 %v5039, %v5040
        %v5042 = vrot.slane %v5041, 1
        %v5043 = vadd.f32 %v5041, %v5042
        %v5044 = vsel %vm744, %v4920, 0.0
        %v5045 = vrot.slane %v5044, 4
        %v5046 = vadd.f32 %v5044, %v5045
        %v5047 = vrot.slane %v5046, 2
        %v5048 = vadd.f32 %v5046, %v5047
        %v5049 = vrot.slane %v5048, 1
        %v5050 = vadd.f32 %v5048, %v5049
        %v5051 = vsel %vm744, %v4921, 0.0
        %v5052 = vrot.slane %v5051, 4
        %v5053 = vadd.f32 %v5051, %v5052
        %v5054 = vrot.slane %v5053, 2
        %v5055 = vadd.f32 %v5053, %v5054
        %v5056 = vrot.slane %v5055, 1
        %v5057 = vadd.f32 %v5055, %v5056
        %v5058 = vsel %vm744, %v4922, 0.0
        %v5059 = vrot.slane %v5058, 4
        %v5060 = vadd.f32 %v5058, %v5059
        %v5061 = vrot.slane %v5060, 2
        %v5062 = vadd.f32 %v5060, %v5061
        %v5063 = vrot.slane %v5062, 1
        %v5064 = vadd.f32 %v5062, %v5063
        %v5065 = vsel %vm744, %v4923, 0.0
        %v5066 = vrot.slane %v5065, 4
        %v5067 = vadd.f32 %v5065, %v5066
        %v5068 = vrot.slane %v5067, 2
        %v5069 = vadd.f32 %v5067, %v5068
        %v5070 = vrot.slane %v5069, 1
        %v5071 = vadd.f32 %v5069, %v5070
        %v5072 = vsel %vm744, %v4924, 0.0
        %v5073 = vrot.slane %v5072, 4
        %v5074 = vadd.f32 %v5072, %v5073
        %v5075 = vrot.slane %v5074, 2
        %v5076 = vadd.f32 %v5074, %v5075
        %v5077 = vrot.slane %v5076, 1
        %v5078 = vadd.f32 %v5076, %v5077
        %v5079 = vsel %vm744, %v4925, 0.0
        %v5080 = vrot.slane %v5079, 4
        %v5081 = vadd.f32 %v5079, %v5080
        %v5082 = vrot.slane %v5081, 2
        %v5083 = vadd.f32 %v5081, %v5082
        %v5084 = vrot.slane %v5083, 1
        %v5085 = vadd.f32 %v5083, %v5084
        %v5086 = vsel %vm744, %v4926, 0.0
        %v5087 = vrot.slane %v5086, 4
        %v5088 = vadd.f32 %v5086, %v5087
        %v5089 = vrot.slane %v5088, 2
        %v5090 = vadd.f32 %v5088, %v5089
        %v5091 = vrot.slane %v5090, 1
        %v5092 = vadd.f32 %v5090, %v5091
        %v5093 = vsel %vm744, %v4927, 0.0
        %v5094 = vrot.slane %v5093, 4
        %v5095 = vadd.f32 %v5093, %v5094
        %v5096 = vrot.slane %v5095, 2
        %v5097 = vadd.f32 %v5095, %v5096
        %v5098 = vrot.slane %v5097, 1
        %v5099 = vadd.f32 %v5097, %v5098
        %v5100 = vsel %vm744, %v4928, 0.0
        %v5101 = vrot.slane %v5100, 4
        %v5102 = vadd.f32 %v5100, %v5101
        %v5103 = vrot.slane %v5102, 2
        %v5104 = vadd.f32 %v5102, %v5103
        %v5105 = vrot.slane %v5104, 1
        %v5106 = vadd.f32 %v5104, %v5105
        %v5107 = vsel %vm744, %v4929, 0.0
        %v5108 = vrot.slane %v5107, 4
        %v5109 = vadd.f32 %v5107, %v5108
        %v5110 = vrot.slane %v5109, 2
        %v5111 = vadd.f32 %v5109, %v5110
        %v5112 = vrot.slane %v5111, 1
        %v5113 = vadd.f32 %v5111, %v5112
        %v5114 = vsel %vm744, %v4930, 0.0
        %v5115 = vrot.slane %v5114, 4
        %v5116 = vadd.f32 %v5114, %v5115
        %v5117 = vrot.slane %v5116, 2
        %v5118 = vadd.f32 %v5116, %v5117
        %v5119 = vrot.slane %v5118, 1
        %v5120 = vadd.f32 %v5118, %v5119
        %v5121 = vsel %vm744, %v4931, 0.0
        %v5122 = vrot.slane %v5121, 4
        %v5123 = vadd.f32 %v5121, %v5122
        %v5124 = vrot.slane %v5123, 2
        %v5125 = vadd.f32 %v5123, %v5124
        %v5126 = vrot.slane %v5125, 1
        %v5127 = vadd.f32 %v5125, %v5126
        %v5128 = vsel %vm744, %v4932, 0.0
        %v5129 = vrot.slane %v5128, 4
        %v5130 = vadd.f32 %v5128, %v5129
        %v5131 = vrot.slane %v5130, 2
        %v5132 = vadd.f32 %v5130, %v5131
        %v5133 = vrot.slane %v5132, 1
        %v5134 = vadd.f32 %v5132, %v5133
        %v5135 = vsel %vm744, %v4933, 0.0
        %v5136 = vrot.slane %v5135, 4
        %v5137 = vadd.f32 %v5135, %v5136
        %v5138 = vrot.slane %v5137, 2
        %v5139 = vadd.f32 %v5137, %v5138
        %v5140 = vrot.slane %v5139, 1
        %v5141 = vadd.f32 %v5139, %v5140
        %v5142 = vsel %vm744, %v4934, 0.0
        %v5143 = vrot.slane %v5142, 4
        %v5144 = vadd.f32 %v5142, %v5143
        %v5145 = vrot.slane %v5144, 2
        %v5146 = vadd.f32 %v5144, %v5145
        %v5147 = vrot.slane %v5146, 1
        %v5148 = vadd.f32 %v5146, %v5147
        %v5149 = vsel %vm744, %v4935, 0.0
        %v5150 = vrot.slane %v5149, 4
        %v5151 = vadd.f32 %v5149, %v5150
        %v5152 = vrot.slane %v5151, 2
        %v5153 = vadd.f32 %v5151, %v5152
        %v5154 = vrot.slane %v5153, 1
        %v5155 = vadd.f32 %v5153, %v5154
        %v5156 = vsel %vm744, %v4936, 0.0
        %v5157 = vrot.slane %v5156, 4
        %v5158 = vadd.f32 %v5156, %v5157
        %v5159 = vrot.slane %v5158, 2
        %v5160 = vadd.f32 %v5158, %v5159
        %v5161 = vrot.slane %v5160, 1
        %v5162 = vadd.f32 %v5160, %v5161
        %v5163 = vsel %vm744, %v4937, 0.0
        %v5164 = vrot.slane %v5163, 4
        %v5165 = vadd.f32 %v5163, %v5164
        %v5166 = vrot.slane %v5165, 2
        %v5167 = vadd.f32 %v5165, %v5166
        %v5168 = vrot.slane %v5167, 1
        %v5169 = vadd.f32 %v5167, %v5168
        %v5170 = vsel %vm744, %v4938, 0.0
        %v5171 = vrot.slane %v5170, 4
        %v5172 = vadd.f32 %v5170, %v5171
        %v5173 = vrot.slane %v5172, 2
        %v5174 = vadd.f32 %v5172, %v5173
        %v5175 = vrot.slane %v5174, 1
        %v5176 = vadd.f32 %v5174, %v5175
        %v5177 = vsel %vm744, %v4939, 0.0
        %v5178 = vrot.slane %v5177, 4
        %v5179 = vadd.f32 %v5177, %v5178
        %v5180 = vrot.slane %v5179, 2
        %v5181 = vadd.f32 %v5179, %v5180
        %v5182 = vrot.slane %v5181, 1
        %v5183 = vadd.f32 %v5181, %v5182
        %v5184 = vsel %vm744, %v4940, 0.0
        %v5185 = vrot.slane %v5184, 4
        %v5186 = vadd.f32 %v5184, %v5185
        %v5187 = vrot.slane %v5186, 2
        %v5188 = vadd.f32 %v5186, %v5187
        %v5189 = vrot.slane %v5188, 1
        %v5190 = vadd.f32 %v5188, %v5189
        %v5191 = vsel %vm744, %v4941, 0.0
        %v5192 = vrot.slane %v5191, 4
        %v5193 = vadd.f32 %v5191, %v5192
        %v5194 = vrot.slane %v5193, 2
        %v5195 = vadd.f32 %v5193, %v5194
        %v5196 = vrot.slane %v5195, 1
        %v5197 = vadd.f32 %v5195, %v5196
        %v5198 = vsel %vm744, %v4942, 0.0
        %v5199 = vrot.slane %v5198, 4
        %v5200 = vadd.f32 %v5198, %v5199
        %v5201 = vrot.slane %v5200, 2
        %v5202 = vadd.f32 %v5200, %v5201
        %v5203 = vrot.slane %v5202, 1
        %v5204 = vadd.f32 %v5202, %v5203
        %v5205 = vsel %vm744, %v4943, 0.0
        %v5206 = vrot.slane %v5205, 4
        %v5207 = vadd.f32 %v5205, %v5206
        %v5208 = vrot.slane %v5207, 2
        %v5209 = vadd.f32 %v5207, %v5208
        %v5210 = vrot.slane %v5209, 1
        %v5211 = vadd.f32 %v5209, %v5210
        %v5212 = vsel %vm744, %v4944, 0.0
        %v5213 = vrot.slane %v5212, 4
        %v5214 = vadd.f32 %v5212, %v5213
        %v5215 = vrot.slane %v5214, 2
        %v5216 = vadd.f32 %v5214, %v5215
        %v5217 = vrot.slane %v5216, 1
        %v5218 = vadd.f32 %v5216, %v5217
        %v5219 = vsel %vm744, %v4945, 0.0
        %v5220 = vrot.slane %v5219, 4
        %v5221 = vadd.f32 %v5219, %v5220
        %v5222 = vrot.slane %v5221, 2
        %v5223 = vadd.f32 %v5221, %v5222
        %v5224 = vrot.slane %v5223, 1
        %v5225 = vadd.f32 %v5223, %v5224
        %v5226 = vsel %vm744, %v4946, 0.0
        %v5227 = vrot.slane %v5226, 4
        %v5228 = vadd.f32 %v5226, %v5227
        %v5229 = vrot.slane %v5228, 2
        %v5230 = vadd.f32 %v5228, %v5229
        %v5231 = vrot.slane %v5230, 1
        %v5232 = vadd.f32 %v5230, %v5231
        %v5233 = vsel %vm744, %v4947, 0.0
        %v5234 = vrot.slane %v5233, 4
        %v5235 = vadd.f32 %v5233, %v5234
        %v5236 = vrot.slane %v5235, 2
        %v5237 = vadd.f32 %v5235, %v5236
        %v5238 = vrot.slane %v5237, 1
        %v5239 = vadd.f32 %v5237, %v5238
        %v5240 = vsel %vm744, %v4948, 0.0
        %v5241 = vrot.slane %v5240, 4
        %v5242 = vadd.f32 %v5240, %v5241
        %v5243 = vrot.slane %v5242, 2
        %v5244 = vadd.f32 %v5242, %v5243
        %v5245 = vrot.slane %v5244, 1
        %v5246 = vadd.f32 %v5244, %v5245
        %v5247 = vsel %vm744, %v4949, 0.0
        %v5248 = vrot.slane %v5247, 4
        %v5249 = vadd.f32 %v5247, %v5248
        %v5250 = vrot.slane %v5249, 2
        %v5251 = vadd.f32 %v5249, %v5250
        %v5252 = vrot.slane %v5251, 1
        %v5253 = vadd.f32 %v5251, %v5252
        %v5254 = vsel %vm744, %v4950, 0.0
        %v5255 = vrot.slane %v5254, 4
        %v5256 = vadd.f32 %v5254, %v5255
        %v5257 = vrot.slane %v5256, 2
        %v5258 = vadd.f32 %v5256, %v5257
        %v5259 = vrot.slane %v5258, 1
        %v5260 = vadd.f32 %v5258, %v5259
        %v5261 = vsel %vm744, %v4951, 0.0
        %v5262 = vrot.slane %v5261, 4
        %v5263 = vadd.f32 %v5261, %v5262
        %v5264 = vrot.slane %v5263, 2
        %v5265 = vadd.f32 %v5263, %v5264
        %v5266 = vrot.slane %v5265, 1
        %v5267 = vadd.f32 %v5265, %v5266
        %v5268 = vsel %vm744, %v4952, 0.0
        %v5269 = vrot.slane %v5268, 4
        %v5270 = vadd.f32 %v5268, %v5269
        %v5271 = vrot.slane %v5270, 2
        %v5272 = vadd.f32 %v5270, %v5271
        %v5273 = vrot.slane %v5272, 1
        %v5274 = vadd.f32 %v5272, %v5273
        %v5275 = vsel %vm744, %v4953, 0.0
        %v5276 = vrot.slane %v5275, 4
        %v5277 = vadd.f32 %v5275, %v5276
        %v5278 = vrot.slane %v5277, 2
        %v5279 = vadd.f32 %v5277, %v5278
        %v5280 = vrot.slane %v5279, 1
        %v5281 = vadd.f32 %v5279, %v5280
        %v5282 = vsel %vm744, %v4954, 0.0
        %v5283 = vrot.slane %v5282, 4
        %v5284 = vadd.f32 %v5282, %v5283
        %v5285 = vrot.slane %v5284, 2
        %v5286 = vadd.f32 %v5284, %v5285
        %v5287 = vrot.slane %v5286, 1
        %v5288 = vadd.f32 %v5286, %v5287
        %v5289 = vsel %vm744, %v4955, 0.0
        %v5290 = vrot.slane %v5289, 4
        %v5291 = vadd.f32 %v5289, %v5290
        %v5292 = vrot.slane %v5291, 2
        %v5293 = vadd.f32 %v5291, %v5292
        %v5294 = vrot.slane %v5293, 1
        %v5295 = vadd.f32 %v5293, %v5294
        %v5296 = vsel %vm744, %v4956, 0.0
        %v5297 = vrot.slane %v5296, 4
        %v5298 = vadd.f32 %v5296, %v5297
        %v5299 = vrot.slane %v5298, 2
        %v5300 = vadd.f32 %v5298, %v5299
        %v5301 = vrot.slane %v5300, 1
        %v5302 = vadd.f32 %v5300, %v5301
        %v5303 = vsel %vm744, %v4957, 0.0
        %v5304 = vrot.slane %v5303, 4
        %v5305 = vadd.f32 %v5303, %v5304
        %v5306 = vrot.slane %v5305, 2
        %v5307 = vadd.f32 %v5305, %v5306
        %v5308 = vrot.slane %v5307, 1
        %v5309 = vadd.f32 %v5307, %v5308
        %v5310 = vsel %vm744, %v4958, 0.0
        %v5311 = vrot.slane %v5310, 4
        %v5312 = vadd.f32 %v5310, %v5311
        %v5313 = vrot.slane %v5312, 2
        %v5314 = vadd.f32 %v5312, %v5313
        %v5315 = vrot.slane %v5314, 1
        %v5316 = vadd.f32 %v5314, %v5315
        %v5317 = vsel %vm744, %v4959, 0.0
        %v5318 = vrot.slane %v5317, 4
        %v5319 = vadd.f32 %v5317, %v5318
        %v5320 = vrot.slane %v5319, 2
        %v5321 = vadd.f32 %v5319, %v5320
        %v5322 = vrot.slane %v5321, 1
        %v5323 = vadd.f32 %v5321, %v5322
        %v5324 = vsel %vm744, %v4960, 0.0
        %v5325 = vrot.slane %v5324, 4
        %v5326 = vadd.f32 %v5324, %v5325
        %v5327 = vrot.slane %v5326, 2
        %v5328 = vadd.f32 %v5326, %v5327
        %v5329 = vrot.slane %v5328, 1
        %v5330 = vadd.f32 %v5328, %v5329
        %v5331 = vsel %vm744, %v4961, 0.0
        %v5332 = vrot.slane %v5331, 4
        %v5333 = vadd.f32 %v5331, %v5332
        %v5334 = vrot.slane %v5333, 2
        %v5335 = vadd.f32 %v5333, %v5334
        %v5336 = vrot.slane %v5335, 1
        %v5337 = vadd.f32 %v5335, %v5336
        %v5338 = vsel %vm744, %v4962, 0.0
        %v5339 = vrot.slane %v5338, 4
        %v5340 = vadd.f32 %v5338, %v5339
        %v5341 = vrot.slane %v5340, 2
        %v5342 = vadd.f32 %v5340, %v5341
        %v5343 = vrot.slane %v5342, 1
        %v5344 = vadd.f32 %v5342, %v5343
        %v5345 = vsel %vm744, %v4963, 0.0
        %v5346 = vrot.slane %v5345, 4
        %v5347 = vadd.f32 %v5345, %v5346
        %v5348 = vrot.slane %v5347, 2
        %v5349 = vadd.f32 %v5347, %v5348
        %v5350 = vrot.slane %v5349, 1
        %v5351 = vadd.f32 %v5349, %v5350
        %v5352 = vsel %vm744, %v4964, 0.0
        %v5353 = vrot.slane %v5352, 4
        %v5354 = vadd.f32 %v5352, %v5353
        %v5355 = vrot.slane %v5354, 2
        %v5356 = vadd.f32 %v5354, %v5355
        %v5357 = vrot.slane %v5356, 1
        %v5358 = vadd.f32 %v5356, %v5357
        %v5359 = vsel %vm744, %v4965, 0.0
        %v5360 = vrot.slane %v5359, 4
        %v5361 = vadd.f32 %v5359, %v5360
        %v5362 = vrot.slane %v5361, 2
        %v5363 = vadd.f32 %v5361, %v5362
        %v5364 = vrot.slane %v5363, 1
        %v5365 = vadd.f32 %v5363, %v5364
        %v5366 = vsel %vm744, %v4966, 0.0
        %v5367 = vrot.slane %v5366, 4
        %v5368 = vadd.f32 %v5366, %v5367
        %v5369 = vrot.slane %v5368, 2
        %v5370 = vadd.f32 %v5368, %v5369
        %v5371 = vrot.slane %v5370, 1
        %v5372 = vadd.f32 %v5370, %v5371
        %v5373 = vsel %vm744, %v4967, 0.0
        %v5374 = vrot.slane %v5373, 4
        %v5375 = vadd.f32 %v5373, %v5374
        %v5376 = vrot.slane %v5375, 2
        %v5377 = vadd.f32 %v5375, %v5376
        %v5378 = vrot.slane %v5377, 1
        %v5379 = vadd.f32 %v5377, %v5378
        %v5380 = vsel %vm744, %v4968, 0.0
        %v5381 = vrot.slane %v5380, 4
        %v5382 = vadd.f32 %v5380, %v5381
        %v5383 = vrot.slane %v5382, 2
        %v5384 = vadd.f32 %v5382, %v5383
        %v5385 = vrot.slane %v5384, 1
        %v5386 = vadd.f32 %v5384, %v5385
        %v5387 = vsel %vm744, %v4969, 0.0
        %v5388 = vrot.slane %v5387, 4
        %v5389 = vadd.f32 %v5387, %v5388
        %v5390 = vrot.slane %v5389, 2
        %v5391 = vadd.f32 %v5389, %v5390
        %v5392 = vrot.slane %v5391, 1
        %v5393 = vadd.f32 %v5391, %v5392
        %v5394 = vsel %vm744, %v4970, 0.0
        %v5395 = vrot.slane %v5394, 4
        %v5396 = vadd.f32 %v5394, %v5395
        %v5397 = vrot.slane %v5396, 2
        %v5398 = vadd.f32 %v5396, %v5397
        %v5399 = vrot.slane %v5398, 1
        %v5400 = vadd.f32 %v5398, %v5399
        %v5401 = vsel %vm744, %v4971, 0.0
        %v5402 = vrot.slane %v5401, 4
        %v5403 = vadd.f32 %v5401, %v5402
        %v5404 = vrot.slane %v5403, 2
        %v5405 = vadd.f32 %v5403, %v5404
        %v5406 = vrot.slane %v5405, 1
        %v5407 = vadd.f32 %v5405, %v5406
        %v5408 = vsel %vm744, %v4972, 0.0
        %v5409 = vrot.slane %v5408, 4
        %v5410 = vadd.f32 %v5408, %v5409
        %v5411 = vrot.slane %v5410, 2
        %v5412 = vadd.f32 %v5410, %v5411
        %v5413 = vrot.slane %v5412, 1
        %v5414 = vadd.f32 %v5412, %v5413
        %v5415 = vsel %vm744, %v4973, 0.0
        %v5416 = vrot.slane %v5415, 4
        %v5417 = vadd.f32 %v5415, %v5416
        %v5418 = vrot.slane %v5417, 2
        %v5419 = vadd.f32 %v5417, %v5418
        %v5420 = vrot.slane %v5419, 1
        %v5421 = vadd.f32 %v5419, %v5420
        %v5422 = vld [vmem:[#allocation6] sm:$0xff]
        %v5423 = vld [vmem:[#allocation6 + $0x8] sm:$0xff]
        %v5424 = vld [vmem:[#allocation6 + $0x10] sm:$0xff]
        %v5425 = vld [vmem:[#allocation6 + $0x18] sm:$0xff]
        %v5426 = vld [vmem:[#allocation6 + $0x20] sm:$0xff]
        %v5427 = vld [vmem:[#allocation6 + $0x28] sm:$0xff]
        %v5428 = vld [vmem:[#allocation6 + $0x30] sm:$0xff]
        %v5429 = vld [vmem:[#allocation6 + $0x38] sm:$0xff]
        %vm5494 = vcmask 1041409
        %v5495 = vsel %vm5494, %v4987, %v4980
        %vm5496 = vcmask 1042434
        %v5497 = vsel %vm5496, %v4994, %v5495
        %vm5498 = vcmask 1043459
        %v5499 = vsel %vm5498, %v5001, %v5497
        %vm5500 = vcmask 1044484
        %v5501 = vsel %vm5500, %v5008, %v5499
        %vm5502 = vcmask 1045509
        %v5503 = vsel %vm5502, %v5015, %v5501
        %vm5504 = vcmask 1046534
        %v5505 = vsel %vm5504, %v5022, %v5503
        %vm5506 = vcmask 1047559
        %v5507 = vsel %vm5506, %v5029, %v5505
        %v5508 = vsel %vm5494, %v5043, %v5036
        %v5509 = vsel %vm5496, %v5050, %v5508
        %v5510 = vsel %vm5498, %v5057, %v5509
        %v5511 = vsel %vm5500, %v5064, %v5510
        %v5512 = vsel %vm5502, %v5071, %v5511
        %v5513 = vsel %vm5504, %v5078, %v5512
        %v5514 = vsel %vm5506, %v5085, %v5513
        %v5515 = vsel %vm5494, %v5099, %v5092
        %v5516 = vsel %vm5496, %v5106, %v5515
        %v5517 = vsel %vm5498, %v5113, %v5516
        %v5518 = vsel %vm5500, %v5120, %v5517
        %v5519 = vsel %vm5502, %v5127, %v5518
        %v5520 = vsel %vm5504, %v5134, %v5519
        %v5521 = vsel %vm5506, %v5141, %v5520
        %v5522 = vsel %vm5494, %v5155, %v5148
        %v5523 = vsel %vm5496, %v5162, %v5522
        %v5524 = vsel %vm5498, %v5169, %v5523
        %v5525 = vsel %vm5500, %v5176, %v5524
        %v5526 = vsel %vm5502, %v5183, %v5525
        %v5527 = vsel %vm5504, %v5190, %v5526
        %v5528 = vsel %vm5506, %v5197, %v5527
        %v5529 = vsel %vm5494, %v5211, %v5204
        %v5530 = vsel %vm5496, %v5218, %v5529
        %v5531 = vsel %vm5498, %v5225, %v5530
        %v5532 = vsel %vm5500, %v5232, %v5531
        %v5533 = vsel %vm5502, %v5239, %v5532
        %v5534 = vsel %vm5504, %v5246, %v5533
        %v5535 = vsel %vm5506, %v5253, %v5534
        %v5536 = vsel %vm5494, %v5267, %v5260
        %v5537 = vsel %vm5496, %v5274, %v5536
        %v5538 = vsel %vm5498, %v5281, %v5537
        %v5539 = vsel %vm5500, %v5288, %v5538
        %v5540 = vsel %vm5502, %v5295, %v5539
        %v5541 = vsel %vm5504, %v5302, %v5540
        %v5542 = vsel %vm5506, %v5309, %v5541
        %v5543 = vsel %vm5494, %v5323, %v5316
        %v5544 = vsel %vm5496, %v5330, %v5543
        %v5545 = vsel %vm5498, %v5337, %v5544
        %v5546 = vsel %vm5500, %v5344, %v5545
        %v5547 = vsel %vm5502, %v5351, %v5546
        %v5548 = vsel %vm5504, %v5358, %v5547
        %v5549 = vsel %vm5506, %v5365, %v5548
        %v5550 = vsel %vm5494, %v5379, %v5372
        %v5551 = vsel %vm5496, %v5386, %v5550
        %v5552 = vsel %vm5498, %v5393, %v5551
        %v5553 = vsel %vm5500, %v5400, %v5552
        %v5554 = vsel %vm5502, %v5407, %v5553
        %v5555 = vsel %vm5504, %v5414, %v5554
        %v5556 = vsel %vm5506, %v5421, %v5555
        %v5566 = vsel %vm744, %v5422, 0
        %v5569 = vsel %vm744, %v5423, 0
        %v5572 = vsel %vm744, %v5424, 0
        %v5575 = vsel %vm744, %v5425, 0
        %v5578 = vsel %vm744, %v5426, 0
        %v5581 = vsel %vm744, %v5427, 0
        %v5584 = vsel %vm744, %v5428, 0
        %v5587 = vsel %vm744, %v5429, 0
        %5589 = vmatprep.subr.mxu0 0.0
        %5590 = vmatpush1.msra.mxu0 %v5507
        %5591 = vmatprep.subr.mxu0 0.0
        %5592 = vmatpush1.msra.mxu0 %v5514
        %5593 = vmatprep.subr.mxu0 0.0
        %5594 = vmatpush1.msra.mxu0 %v5521
        %5595 = vmatprep.subr.mxu0 0.0
        %5596 = vmatpush1.msra.mxu0 %v5528
        %5597 = vmatprep.subr.mxu0 0.0
        %5598 = vmatpush1.msra.mxu0 %v5535
        %5599 = vmatprep.subr.mxu0 0.0
        %5600 = vmatpush1.msra.mxu0 %v5542
        %5601 = vmatprep.subr.mxu0 0.0
        %5602 = vmatpush1.msra.mxu0 %v5549
        %5603 = vmatprep.subr.mxu0 0.0
        %5604 = vmatpush1.msra.mxu0 %v5556
        %5605 = vmatprep.subr.mxu0 0.0
        %5606 = vmatpush1.msra.mxu0 0.0
        %5607 = vmatprep.subr.mxu0 0.0
        %5608 = vmatpush1.msra.mxu0 0.0
        %5609 = vmatprep.subr.mxu0 0.0
        %5610 = vmatpush1.msra.mxu0 0.0
        %5611 = vmatprep.subr.mxu0 0.0
        %5612 = vmatpush1.msra.mxu0 0.0
        %5613 = vmatprep.subr.mxu0 0.0
        %5614 = vmatpush1.msra.mxu0 0.0
        %5615 = vmatprep.subr.mxu0 0.0
        %5616 = vmatpush1.msra.mxu0 0.0
        %5617 = vmatprep.subr.mxu0 0.0
        %5618 = vmatpush1.msra.mxu0 0.0
        %5619 = vmatprep.subr.mxu0 0.0
        %5620 = vmatpush1.msra.mxu0 0.0
        %5621 = vmatprep.subr.mxu0 0.0
        %5622 = vmatpush1.msra.mxu0 0.0
        %5623 = vmatprep.subr.mxu0 0.0
        %5624 = vmatpush1.msra.mxu0 0.0
        %5625 = vmatprep.subr.mxu0 0.0
        %5626 = vmatpush1.msra.mxu0 0.0
        %5627 = vmatprep.subr.mxu0 0.0
        %5628 = vmatpush1.msra.mxu0 0.0
        %5629 = vmatprep.subr.mxu0 0.0
        %5630 = vmatpush1.msra.mxu0 0.0
        %5631 = vmatprep.subr.mxu0 0.0
        %5632 = vmatpush1.msra.mxu0 0.0
        %5633 = vmatprep.subr.mxu0 0.0
        %5634 = vmatpush1.msra.mxu0 0.0
        %5635 = vmatprep.subr.mxu0 0.0
        %5636 = vmatpush1.msra.mxu0 0.0
        %5637 = vmatprep.subr.mxu0 0.0
        %5638 = vmatpush1.msra.mxu0 0.0
        %5639 = vmatprep.subr.mxu0 0.0
        %5640 = vmatpush1.msra.mxu0 0.0
        %5641 = vmatprep.subr.mxu0 0.0
        %5642 = vmatpush1.msra.mxu0 0.0
        %5643 = vmatprep.subr.mxu0 0.0
        %5644 = vmatpush1.msra.mxu0 0.0
        %5645 = vmatprep.subr.mxu0 0.0
        %5646 = vmatpush1.msra.mxu0 0.0
        %5647 = vmatprep.subr.mxu0 0.0
        %5648 = vmatpush1.msra.mxu0 0.0
        %5649 = vmatprep.subr.mxu0 0.0
        %5650 = vmatpush1.msra.mxu0 0.0
        %5651 = vmatprep.subr.mxu0 0.0
        %5652 = vmatpush1.msra.mxu0 0.0
        %5653 = vmatprep.mubr.f32.mxu0 0.0
        %5654 = vmatmul.mubr.f32.gmra.mrb[0].mxu0 %v5566
        %v5655 = vpop.f32.mrb[0].mxu0
        %v5656 = vadd.f32 0.0, %v5655
        %v5657 = vpop.f32.mrb[0].mxu0
        %5658 = vmatprep.mubr.f32.mxu0 0.0
        %5659 = vmatmul.mubr.f32.gmra.mrb[0].mxu0 %v5569
        %v5660 = vpop.f32.mrb[0].mxu0
        %v5661 = vadd.f32 0.0, %v5660
        %v5662 = vpop.f32.mrb[0].mxu0
        %5663 = vmatprep.mubr.f32.mxu0 0.0
        %5664 = vmatmul.mubr.f32.gmra.mrb[0].mxu0 %v5572
        %v5665 = vpop.f32.mrb[0].mxu0
        %v5666 = vadd.f32 0.0, %v5665
        %v5667 = vpop.f32.mrb[0].mxu0
        %5668 = vmatprep.mubr.f32.mxu0 0.0
        %5669 = vmatmul.mubr.f32.gmra.mrb[0].mxu0 %v5575
        %v5670 = vpop.f32.mrb[0].mxu0
        %v5671 = vadd.f32 0.0, %v5670
        %v5672 = vpop.f32.mrb[0].mxu0
        %5673 = vmatprep.mubr.f32.mxu0 0.0
        %5674 = vmatmul.mubr.f32.gmra.mrb[0].mxu0 %v5578
        %v5675 = vpop.f32.mrb[0].mxu0
        %v5676 = vadd.f32 0.0, %v5675
        %v5677 = vpop.f32.mrb[0].mxu0
        %5678 = vmatprep.mubr.f32.mxu0 0.0
        %5679 = vmatmul.mubr.f32.gmra.mrb[0].mxu0 %v5581
        %v5680 = vpop.f32.mrb[0].mxu0
        %v5681 = vadd.f32 0.0, %v5680
        %v5682 = vpop.f32.mrb[0].mxu0
        %5683 = vmatprep.mubr.f32.mxu0 0.0
        %5684 = vmatmul.mubr.f32.gmra.mrb[0].mxu0 %v5584
        %v5685 = vpop.f32.mrb[0].mxu0
        %v5686 = vadd.f32 0.0, %v5685
        %v5687 = vpop.f32.mrb[0].mxu0
        %5688 = vmatprep.mubr.f32.mxu0 0.0
        %5689 = vmatmul.mubr.f32.gmra.mrb[0].mxu0 %v5587
        %v5690 = vpop.f32.mrb[0].mxu0
        %v5691 = vadd.f32 0.0, %v5690
        %v5692 = vpop.f32.mrb[0].mxu0
        %5693 = vdwg.mxu0
        %v5694 = vld [vmem:[%s11] sm:$0xff]
        %v5695 = vld [vmem:[%s11 + $0x8] sm:$0xff]
        %v5696 = vld [vmem:[%s11 + $0x10] sm:$0xff]
        %v5697 = vld [vmem:[%s11 + $0x18] sm:$0xff]
        %v5698 = vld [vmem:[%s11 + $0x20] sm:$0xff]
        %v5699 = vld [vmem:[%s11 + $0x28] sm:$0xff]
        %v5700 = vld [vmem:[%s11 + $0x30] sm:$0xff]
        %v5701 = vld [vmem:[%s11 + $0x38] sm:$0xff]
        %v5702 = vld [vmem:[%s12] sm:$0xff]
        %v5703 = vld [vmem:[%s12 + $0x8] sm:$0xff]
        %v5704 = vld [vmem:[%s12 + $0x10] sm:$0xff]
        %v5705 = vld [vmem:[%s12 + $0x18] sm:$0xff]
        %v5706 = vld [vmem:[%s12 + $0x20] sm:$0xff]
        %v5707 = vld [vmem:[%s12 + $0x28] sm:$0xff]
        %v5708 = vld [vmem:[%s12 + $0x30] sm:$0xff]
        %v5709 = vld [vmem:[%s12 + $0x38] sm:$0xff]
        %v5711 = vsel %vm744, %v5656, 0
        %v5714 = vsel %vm744, %v5661, 0
        %v5717 = vsel %vm744, %v5666, 0
        %v5720 = vsel %vm744, %v5671, 0
        %v5723 = vsel %vm744, %v5676, 0
        %v5726 = vsel %vm744, %v5681, 0
        %v5729 = vsel %vm744, %v5686, 0
        %v5732 = vsel %vm744, %v5691, 0
        %5734 = vmatprep.subr.mxu0 0.0
        %5735 = vmatpush1.msra.mxu0 %v5702
        %5736 = vmatprep.subr.mxu0 0.0
        %5737 = vmatpush1.msra.mxu0 %v5703
        %5738 = vmatprep.subr.mxu0 0.0
        %5739 = vmatpush1.msra.mxu0 %v5704
        %5740 = vmatprep.subr.mxu0 0.0
        %5741 = vmatpush1.msra.mxu0 %v5705
        %5742 = vmatprep.subr.mxu0 0.0
        %5743 = vmatpush1.msra.mxu0 %v5706
        %5744 = vmatprep.subr.mxu0 0.0
        %5745 = vmatpush1.msra.mxu0 %v5707
        %5746 = vmatprep.subr.mxu0 0.0
        %5747 = vmatpush1.msra.mxu0 %v5708
        %5748 = vmatprep.subr.mxu0 0.0
        %5749 = vmatpush1.msra.mxu0 %v5709
        %5750 = vmatprep.subr.mxu0 0.0
        %5751 = vmatpush1.msra.mxu0 0.0
        %5752 = vmatprep.subr.mxu0 0.0
        %5753 = vmatpush1.msra.mxu0 0.0
        %5754 = vmatprep.subr.mxu0 0.0
        %5755 = vmatpush1.msra.mxu0 0.0
        %5756 = vmatprep.subr.mxu0 0.0
        %5757 = vmatpush1.msra.mxu0 0.0
        %5758 = vmatprep.subr.mxu0 0.0
        %5759 = vmatpush1.msra.mxu0 0.0
        %5760 = vmatprep.subr.mxu0 0.0
        %5761 = vmatpush1.msra.mxu0 0.0
        %5762 = vmatprep.subr.mxu0 0.0
        %5763 = vmatpush1.msra.mxu0 0.0
        %5764 = vmatprep.subr.mxu0 0.0
        %5765 = vmatpush1.msra.mxu0 0.0
        %5766 = vmatprep.subr.mxu0 0.0
        %5767 = vmatpush1.msra.mxu0 0.0
        %5768 = vmatprep.subr.mxu0 0.0
        %5769 = vmatpush1.msra.mxu0 0.0
        %5770 = vmatprep.subr.mxu0 0.0
        %5771 = vmatpush1.msra.mxu0 0.0
        %5772 = vmatprep.subr.mxu0 0.0
        %5773 = vmatpush1.msra.mxu0 0.0
        %5774 = vmatprep.subr.mxu0 0.0
        %5775 = vmatpush1.msra.mxu0 0.0
        %5776 = vmatprep.subr.mxu0 0.0
        %5777 = vmatpush1.msra.mxu0 0.0
        %5778 = vmatprep.subr.mxu0 0.0
        %5779 = vmatpush1.msra.mxu0 0.0
        %5780 = vmatprep.subr.mxu0 0.0
        %5781 = vmatpush1.msra.mxu0 0.0
        %5782 = vmatprep.subr.mxu0 0.0
        %5783 = vmatpush1.msra.mxu0 0.0
        %5784 = vmatprep.subr.mxu0 0.0
        %5785 = vmatpush1.msra.mxu0 0.0
        %5786 = vmatprep.subr.mxu0 0.0
        %5787 = vmatpush1.msra.mxu0 0.0
        %5788 = vmatprep.subr.mxu0 0.0
        %5789 = vmatpush1.msra.mxu0 0.0
        %5790 = vmatprep.subr.mxu0 0.0
        %5791 = vmatpush1.msra.mxu0 0.0
        %5792 = vmatprep.subr.mxu0 0.0
        %5793 = vmatpush1.msra.mxu0 0.0
        %5794 = vmatprep.subr.mxu0 0.0
        %5795 = vmatpush1.msra.mxu0 0.0
        %5796 = vmatprep.subr.mxu0 0.0
        %5797 = vmatpush1.msra.mxu0 0.0
        %5798 = vmatprep.mubr.f32.mxu0 0.0
        %5799 = vmatmul.mubr.f32.gmra.mrb[0].mxu0 %v5711
        %v5800 = vpop.f32.mrb[0].mxu0
        %v5801 = vadd.f32 0.0, %v5800
        %v5802 = vpop.f32.mrb[0].mxu0
        %5803 = vmatprep.mubr.f32.mxu0 0.0
        %5804 = vmatmul.mubr.f32.gmra.mrb[0].mxu0 %v5714
        %v5805 = vpop.f32.mrb[0].mxu0
        %v5806 = vadd.f32 0.0, %v5805
        %v5807 = vpop.f32.mrb[0].mxu0
        %5808 = vmatprep.mubr.f32.mxu0 0.0
        %5809 = vmatmul.mubr.f32.gmra.mrb[0].mxu0 %v5717
        %v5810 = vpop.f32.mrb[0].mxu0
        %v5811 = vadd.f32 0.0, %v5810
        %v5812 = vpop.f32.mrb[0].mxu0
        %5813 = vmatprep.mubr.f32.mxu0 0.0
        %5814 = vmatmul.mubr.f32.gmra.mrb[0].mxu0 %v5720
        %v5815 = vpop.f32.mrb[0].mxu0
        %v5816 = vadd.f32 0.0, %v5815
        %v5817 = vpop.f32.mrb[0].mxu0
        %5818 = vmatprep.mubr.f32.mxu0 0.0
        %5819 = vmatmul.mubr.f32.gmra.mrb[0].mxu0 %v5723
        %v5820 = vpop.f32.mrb[0].mxu0
        %v5821 = vadd.f32 0.0, %v5820
        %v5822 = vpop.f32.mrb[0].mxu0
        %5823 = vmatprep.mubr.f32.mxu0 0.0
        %5824 = vmatmul.mubr.f32.gmra.mrb[0].mxu0 %v5726
        %v5825 = vpop.f32.mrb[0].mxu0
        %v5826 = vadd.f32 0.0, %v5825
        %v5827 = vpop.f32.mrb[0].mxu0
        %5828 = vmatprep.mubr.f32.mxu0 0.0
        %5829 = vmatmul.mubr.f32.gmra.mrb[0].mxu0 %v5729
        %v5830 = vpop.f32.mrb[0].mxu0
        %v5831 = vadd.f32 0.0, %v5830
        %v5832 = vpop.f32.mrb[0].mxu0
        %5833 = vmatprep.mubr.f32.mxu0 0.0
        %5834 = vmatmul.mubr.f32.gmra.mrb[0].mxu0 %v5732
        %v5835 = vpop.f32.mrb[0].mxu0
        %v5836 = vadd.f32 0.0, %v5835
        %v5837 = vpop.f32.mrb[0].mxu0
        %5838 = vdwg.mxu0
        %v5839 = vsel %vm744, %v5507, 0
        %v5841 = vsel %vm744, %v5514, 0
        %v5843 = vsel %vm744, %v5521, 0
        %v5845 = vsel %vm744, %v5528, 0
        %v5847 = vsel %vm744, %v5535, 0
        %v5849 = vsel %vm744, %v5542, 0
        %v5851 = vsel %vm744, %v5549, 0
        %v5853 = vsel %vm744, %v5556, 0
        %5855 = vmatprep.subr.mxu0 0.0
        %5856 = vmatpush1.msra.mxu0 %v5694
        %5857 = vmatprep.subr.mxu0 0.0
        %5858 = vmatpush1.msra.mxu0 %v5695
        %5859 = vmatprep.subr.mxu0 0.0
        %5860 = vmatpush1.msra.mxu0 %v5696
        %5861 = vmatprep.subr.mxu0 0.0
        %5862 = vmatpush1.msra.mxu0 %v5697
        %5863 = vmatprep.subr.mxu0 0.0
        %5864 = vmatpush1.msra.mxu0 %v5698
        %5865 = vmatprep.subr.mxu0 0.0
        %5866 = vmatpush1.msra.mxu0 %v5699
        %5867 = vmatprep.subr.mxu0 0.0
        %5868 = vmatpush1.msra.mxu0 %v5700
        %5869 = vmatprep.subr.mxu0 0.0
        %5870 = vmatpush1.msra.mxu0 %v5701
        %5871 = vmatprep.subr.mxu0 0.0
        %5872 = vmatpush1.msra.mxu0 0.0
        %5873 = vmatprep.subr.mxu0 0.0
        %5874 = vmatpush1.msra.mxu0 0.0
        %5875 = vmatprep.subr.mxu0 0.0
        %5876 = vmatpush1.msra.mxu0 0.0
        %5877 = vmatprep.subr.mxu0 0.0
        %5878 = vmatpush1.msra.mxu0 0.0
        %5879 = vmatprep.subr.mxu0 0.0
        %5880 = vmatpush1.msra.mxu0 0.0
        %5881 = vmatprep.subr.mxu0 0.0
        %5882 = vmatpush1.msra.mxu0 0.0
        %5883 = vmatprep.subr.mxu0 0.0
        %5884 = vmatpush1.msra.mxu0 0.0
        %5885 = vmatprep.subr.mxu0 0.0
        %5886 = vmatpush1.msra.mxu0 0.0
        %5887 = vmatprep.subr.mxu0 0.0
        %5888 = vmatpush1.msra.mxu0 0.0
        %5889 = vmatprep.subr.mxu0 0.0
        %5890 = vmatpush1.msra.mxu0 0.0
        %5891 = vmatprep.subr.mxu0 0.0
        %5892 = vmatpush1.msra.mxu0 0.0
        %5893 = vmatprep.subr.mxu0 0.0
        %5894 = vmatpush1.msra.mxu0 0.0
        %5895 = vmatprep.subr.mxu0 0.0
        %5896 = vmatpush1.msra.mxu0 0.0
        %5897 = vmatprep.subr.mxu0 0.0
        %5898 = vmatpush1.msra.mxu0 0.0
        %5899 = vmatprep.subr.mxu0 0.0
        %5900 = vmatpush1.msra.mxu0 0.0
        %5901 = vmatprep.subr.mxu0 0.0
        %5902 = vmatpush1.msra.mxu0 0.0
        %5903 = vmatprep.subr.mxu0 0.0
        %5904 = vmatpush1.msra.mxu0 0.0
        %5905 = vmatprep.subr.mxu0 0.0
        %5906 = vmatpush1.msra.mxu0 0.0
        %5907 = vmatprep.subr.mxu0 0.0
        %5908 = vmatpush1.msra.mxu0 0.0
        %5909 = vmatprep.subr.mxu0 0.0
        %5910 = vmatpush1.msra.mxu0 0.0
        %5911 = vmatprep.subr.mxu0 0.0
        %5912 = vmatpush1.msra.mxu0 0.0
        %5913 = vmatprep.subr.mxu0 0.0
        %5914 = vmatpush1.msra.mxu0 0.0
        %5915 = vmatprep.subr.mxu0 0.0
        %5916 = vmatpush1.msra.mxu0 0.0
        %5917 = vmatprep.subr.mxu0 0.0
        %5918 = vmatpush1.msra.mxu0 0.0
        %5919 = vmatprep.mubr.f32.mxu0 0.0
        %5920 = vmatmul.mubr.f32.gmra.mrb[0].mxu0 %v5839
        %v5921 = vpop.f32.mrb[0].mxu0
        %v5922 = vadd.f32 %v5801, %v5921
        %v5923 = vpop.f32.mrb[0].mxu0
        %5924 = vmatprep.mubr.f32.mxu0 0.0
        %5925 = vmatmul.mubr.f32.gmra.mrb[0].mxu0 %v5841
        %v5926 = vpop.f32.mrb[0].mxu0
        %v5927 = vadd.f32 %v5806, %v5926
        %v5928 = vpop.f32.mrb[0].mxu0
        %5929 = vmatprep.mubr.f32.mxu0 0.0
        %5930 = vmatmul.mubr.f32.gmra.mrb[0].mxu0 %v5843
        %v5931 = vpop.f32.mrb[0].mxu0
        %v5932 = vadd.f32 %v5811, %v5931
        %v5933 = vpop.f32.mrb[0].mxu0
        %5934 = vmatprep.mubr.f32.mxu0 0.0
        %5935 = vmatmul.mubr.f32.gmra.mrb[0].mxu0 %v5845
        %v5936 = vpop.f32.mrb[0].mxu0
        %v5937 = vadd.f32 %v5816, %v5936
        %v5938 = vpop.f32.mrb[0].mxu0
        %5939 = vmatprep.mubr.f32.mxu0 0.0
        %5940 = vmatmul.mubr.f32.gmra.mrb[0].mxu0 %v5847
        %v5941 = vpop.f32.mrb[0].mxu0
        %v5942 = vadd.f32 %v5821, %v5941
        %v5943 = vpop.f32.mrb[0].mxu0
        %5944 = vmatprep.mubr.f32.mxu0 0.0
        %5945 = vmatmul.mubr.f32.gmra.mrb[0].mxu0 %v5849
        %v5946 = vpop.f32.mrb[0].mxu0
        %v5947 = vadd.f32 %v5826, %v5946
        %v5948 = vpop.f32.mrb[0].mxu0
        %5949 = vmatprep.mubr.f32.mxu0 0.0
        %5950 = vmatmul.mubr.f32.gmra.mrb[0].mxu0 %v5851
        %v5951 = vpop.f32.mrb[0].mxu0
        %v5952 = vadd.f32 %v5831, %v5951
        %v5953 = vpop.f32.mrb[0].mxu0
        %5954 = vmatprep.mubr.f32.mxu0 0.0
        %5955 = vmatmul.mubr.f32.gmra.mrb[0].mxu0 %v5853
        %v5956 = vpop.f32.mrb[0].mxu0
        %v5957 = vadd.f32 %v5836, %v5956
        %v5958 = vpop.f32.mrb[0].mxu0
        %5959 = vdwg.mxu0
        %v5960 = vld [vmem:[#allocation2] sm:$0x1]
        %v5962 = vlaneseq
        %v5963 = vshrl.u32 %v5962, 7
        %v5964 = vsub.s32 0, %v5963
        %v5965 = vrot.slane %v5960, %v5964
        %v5967 = vadd.f32 %v5922, %v5965
        %v5968 = vadd.f32 %v5927, %v5965
        %v5969 = vadd.f32 %v5932, %v5965
        %v5970 = vadd.f32 %v5937, %v5965
        %v5971 = vadd.f32 %v5942, %v5965
        %v5972 = vadd.f32 %v5947, %v5965
        %v5973 = vadd.f32 %v5952, %v5965
        %v5974 = vadd.f32 %v5957, %v5965
        %v5975 = vxor.u32 %v5967, 2147483648
        %v5976 = vxor.u32 %v5968, 2147483648
        %v5977 = vxor.u32 %v5969, 2147483648
        %v5978 = vxor.u32 %v5970, 2147483648
        %v5979 = vxor.u32 %v5971, 2147483648
        %v5980 = vxor.u32 %v5972, 2147483648
        %v5981 = vxor.u32 %v5973, 2147483648
        %v5982 = vxor.u32 %v5974, 2147483648
        %v5983 = vmul.f32 %v5975, 1.442695
        %v5984 = vpow.pop %v5983
        %v5985 = vmul.f32 %v5976, 1.442695
        %v5986 = vpow.pop %v5985
        %v5987 = vmul.f32 %v5977, 1.442695
        %v5988 = vpow.pop %v5987
        %v5989 = vmul.f32 %v5978, 1.442695
        %v5990 = vpow.pop %v5989
        %v5991 = vmul.f32 %v5979, 1.442695
        %v5992 = vpow.pop %v5991
        %v5993 = vmul.f32 %v5980, 1.442695
        %v5994 = vpow.pop %v5993
        %v5995 = vmul.f32 %v5981, 1.442695
        %v5996 = vpow.pop %v5995
        %v5997 = vmul.f32 %v5982, 1.442695
        %v5998 = vpow.pop %v5997
        %v5999 = vadd.f32 %v5984, 1.0
        %v6000 = vadd.f32 %v5986, 1.0
        %v6001 = vadd.f32 %v5988, 1.0
        %v6002 = vadd.f32 %v5990, 1.0
        %v6003 = vadd.f32 %v5992, 1.0
        %v6004 = vadd.f32 %v5994, 1.0
        %v6005 = vadd.f32 %v5996, 1.0
        %v6006 = vadd.f32 %v5998, 1.0
        %v6007 = vrcp.pop %v5999
        %v6008 = vmul.f32 1.0, %v6007
        %v6009 = vrcp.pop %v6000
        %v6010 = vmul.f32 1.0, %v6009
        %v6011 = vrcp.pop %v6001
        %v6012 = vmul.f32 1.0, %v6011
        %v6013 = vrcp.pop %v6002
        %v6014 = vmul.f32 1.0, %v6013
        %v6015 = vrcp.pop %v6003
        %v6016 = vmul.f32 1.0, %v6015
        %v6017 = vrcp.pop %v6004
        %v6018 = vmul.f32 1.0, %v6017
        %v6019 = vrcp.pop %v6005
        %v6020 = vmul.f32 1.0, %v6019
        %v6021 = vrcp.pop %v6006
        %v6022 = vmul.f32 1.0, %v6021
        %v6023 = vsub.f32 1.0, %v6008
        %v6024 = vsub.f32 1.0, %v6010
        %v6025 = vsub.f32 1.0, %v6012
        %v6026 = vsub.f32 1.0, %v6014
        %v6027 = vsub.f32 1.0, %v6016
        %v6028 = vsub.f32 1.0, %v6018
        %v6029 = vsub.f32 1.0, %v6020
        %v6030 = vsub.f32 1.0, %v6022
        %6032 = vset.pattern.permute.xlu0 0
        %6033 = vperm.xlu0 %6032, %v6023
        %v6034 = vpop.permute.xlu0 %6033
        %6037 = vset.pattern.permute.xlu0 0
        %6038 = vperm.xlu0 %6037, %v6024
        %v6039 = vpop.permute.xlu0 %6038
        %6042 = vset.pattern.permute.xlu0 0
        %6043 = vperm.xlu0 %6042, %v6025
        %v6044 = vpop.permute.xlu0 %6043
        %6047 = vset.pattern.permute.xlu0 0
        %6048 = vperm.xlu0 %6047, %v6026
        %v6049 = vpop.permute.xlu0 %6048
        %6052 = vset.pattern.permute.xlu0 0
        %6053 = vperm.xlu0 %6052, %v6027
        %v6054 = vpop.permute.xlu0 %6053
        %6057 = vset.pattern.permute.xlu0 0
        %6058 = vperm.xlu0 %6057, %v6028
        %v6059 = vpop.permute.xlu0 %6058
        %6062 = vset.pattern.permute.xlu0 0
        %6063 = vperm.xlu0 %6062, %v6029
        %v6064 = vpop.permute.xlu0 %6063
        %6067 = vset.pattern.permute.xlu0 0
        %6068 = vperm.xlu0 %6067, %v6030
        %v6069 = vpop.permute.xlu0 %6068
        %v6071 = vmul.f32 %v6034, %v5507
        %v6072 = vmul.f32 %v6039, %v5514
        %v6073 = vmul.f32 %v6044, %v5521
        %v6074 = vmul.f32 %v6049, %v5528
        %v6075 = vmul.f32 %v6054, %v5535
        %v6076 = vmul.f32 %v6059, %v5542
        %v6077 = vmul.f32 %v6064, %v5549
        %v6078 = vmul.f32 %v6069, %v5556
        %6080 = vset.pattern.permute.xlu0 0
        %6081 = vperm.xlu0 %6080, %v6008
        %v6082 = vpop.permute.xlu0 %6081
        %6085 = vset.pattern.permute.xlu0 0
        %6086 = vperm.xlu0 %6085, %v6010
        %v6087 = vpop.permute.xlu0 %6086
        %6090 = vset.pattern.permute.xlu0 0
        %6091 = vperm.xlu0 %6090, %v6012
        %v6092 = vpop.permute.xlu0 %6091
        %6095 = vset.pattern.permute.xlu0 0
        %6096 = vperm.xlu0 %6095, %v6014
        %v6097 = vpop.permute.xlu0 %6096
        %6100 = vset.pattern.permute.xlu0 0
        %6101 = vperm.xlu0 %6100, %v6016
        %v6102 = vpop.permute.xlu0 %6101
        %6105 = vset.pattern.permute.xlu0 0
        %6106 = vperm.xlu0 %6105, %v6018
        %v6107 = vpop.permute.xlu0 %6106
        %6110 = vset.pattern.permute.xlu0 0
        %6111 = vperm.xlu0 %6110, %v6020
        %v6112 = vpop.permute.xlu0 %6111
        %6115 = vset.pattern.permute.xlu0 0
        %6116 = vperm.xlu0 %6115, %v6022
        %v6117 = vpop.permute.xlu0 %6116
        %v6119 = vmul.f32 %v6082, %v5656
        %v6120 = vmul.f32 %v6087, %v5661
        %v6121 = vmul.f32 %v6092, %v5666
        %v6122 = vmul.f32 %v6097, %v5671
        %v6123 = vmul.f32 %v6102, %v5676
        %v6124 = vmul.f32 %v6107, %v5681
        %v6125 = vmul.f32 %v6112, %v5686
        %v6126 = vmul.f32 %v6117, %v5691
        %v6127 = vadd.f32 %v6071, %v6119
        %v6128 = vadd.f32 %v6072, %v6120
        %v6129 = vadd.f32 %v6073, %v6121
        %v6130 = vadd.f32 %v6074, %v6122
        %v6131 = vadd.f32 %v6075, %v6123
        %v6132 = vadd.f32 %v6076, %v6124
        %v6133 = vadd.f32 %v6077, %v6125
        %v6134 = vadd.f32 %v6078, %v6126
        %v6135 = vld [vmem:[%s6] sm:$0xff]
        %v6136 = vld [vmem:[%s6 + $0x8] sm:$0xff]
        %v6137 = vld [vmem:[%s6 + $0x10] sm:$0xff]
        %v6138 = vld [vmem:[%s6 + $0x18] sm:$0xff]
        %v6139 = vld [vmem:[%s6 + $0x20] sm:$0xff]
        %v6140 = vld [vmem:[%s6 + $0x28] sm:$0xff]
        %v6141 = vld [vmem:[%s6 + $0x30] sm:$0xff]
        %v6142 = vld [vmem:[%s6 + $0x38] sm:$0xff]
        %v6143 = vld [vmem:[%s7] sm:$0xf]
        %v6144 = vld [vmem:[%s14] sm:$0xff]
        %v6145 = vld [vmem:[%s14 + $0x8] sm:$0xff]
        %v6146 = vld [vmem:[%s14 + $0x10] sm:$0xff]
        %v6147 = vld [vmem:[%s14 + $0x18] sm:$0xff]
        %v6148 = vld [vmem:[%s14 + $0x20] sm:$0xff]
        %v6149 = vld [vmem:[%s14 + $0x28] sm:$0xff]
        %v6150 = vld [vmem:[%s14 + $0x30] sm:$0xff]
        %v6151 = vld [vmem:[%s14 + $0x38] sm:$0xff]
        %v6152 = vld [vmem:[%s14 + $0x40] sm:$0xff]
        %v6153 = vld [vmem:[%s14 + $0x48] sm:$0xff]
        %v6154 = vld [vmem:[%s14 + $0x50] sm:$0xff]
        %v6155 = vld [vmem:[%s14 + $0x58] sm:$0xff]
        %v6156 = vld [vmem:[%s14 + $0x60] sm:$0xff]
        %v6157 = vld [vmem:[%s14 + $0x68] sm:$0xff]
        %v6158 = vld [vmem:[%s14 + $0x70] sm:$0xff]
        %v6159 = vld [vmem:[%s14 + $0x78] sm:$0xff]
        %v6160 = vld [vmem:[%s15] sm:$0x3]
        %v6162 = vlaneseq
        %v6163 = vshrl.u32 %v6162, 7
        %v6164 = vsub.s32 0, %v6163
        %v6165 = vrot.slane %v6160, %v6164
        %v6166 = vlaneseq
        %v6167 = vshrl.u32 %v6166, 7
        %v6168 = vsub.s32 1, %v6167
        %v6169 = vrot.slane %v6160, %v6168
        %v6173 = vsel %vm744, %v911, 0
        %6175 = vmatprep.subr.mxu0 %v6145
        %6176 = vmatpush1.msra.mxu0 %v6144
        %6177 = vmatprep.subr.mxu0 %v6147
        %6178 = vmatpush1.msra.mxu0 %v6146
        %6179 = vmatprep.subr.mxu0 %v6149
        %6180 = vmatpush1.msra.mxu0 %v6148
        %6181 = vmatprep.subr.mxu0 %v6151
        %6182 = vmatpush1.msra.mxu0 %v6150
        %6183 = vmatprep.subr.mxu0 %v6153
        %6184 = vmatpush1.msra.mxu0 %v6152
        %6185 = vmatprep.subr.mxu0 %v6155
        %6186 = vmatpush1.msra.mxu0 %v6154
        %6187 = vmatprep.subr.mxu0 %v6157
        %6188 = vmatpush1.msra.mxu0 %v6156
        %6189 = vmatprep.subr.mxu0 %v6159
        %6190 = vmatpush1.msra.mxu0 %v6158
        %6191 = vmatprep.subr.mxu0 0.0
        %6192 = vmatpush1.msra.mxu0 0.0
        %6193 = vmatprep.subr.mxu0 0.0
        %6194 = vmatpush1.msra.mxu0 0.0
        %6195 = vmatprep.subr.mxu0 0.0
        %6196 = vmatpush1.msra.mxu0 0.0
        %6197 = vmatprep.subr.mxu0 0.0
        %6198 = vmatpush1.msra.mxu0 0.0
        %6199 = vmatprep.subr.mxu0 0.0
        %6200 = vmatpush1.msra.mxu0 0.0
        %6201 = vmatprep.subr.mxu0 0.0
        %6202 = vmatpush1.msra.mxu0 0.0
        %6203 = vmatprep.subr.mxu0 0.0
        %6204 = vmatpush1.msra.mxu0 0.0
        %6205 = vmatprep.subr.mxu0 0.0
        %6206 = vmatpush1.msra.mxu0 0.0
        %6207 = vmatprep.subr.mxu0 0.0
        %6208 = vmatpush1.msra.mxu0 0.0
        %6209 = vmatprep.subr.mxu0 0.0
        %6210 = vmatpush1.msra.mxu0 0.0
        %6211 = vmatprep.subr.mxu0 0.0
        %6212 = vmatpush1.msra.mxu0 0.0
        %6213 = vmatprep.subr.mxu0 0.0
        %6214 = vmatpush1.msra.mxu0 0.0
        %6215 = vmatprep.subr.mxu0 0.0
        %6216 = vmatpush1.msra.mxu0 0.0
        %6217 = vmatprep.subr.mxu0 0.0
        %6218 = vmatpush1.msra.mxu0 0.0
        %6219 = vmatprep.subr.mxu0 0.0
        %6220 = vmatpush1.msra.mxu0 0.0
        %6221 = vmatprep.subr.mxu0 0.0
        %6222 = vmatpush1.msra.mxu0 0.0
        %6223 = vmatprep.subr.mxu0 0.0
        %6224 = vmatpush1.msra.mxu0 0.0
        %6225 = vmatprep.subr.mxu0 0.0
        %6226 = vmatpush1.msra.mxu0 0.0
        %6227 = vmatprep.subr.mxu0 0.0
        %6228 = vmatpush1.msra.mxu0 0.0
        %6229 = vmatprep.subr.mxu0 0.0
        %6230 = vmatpush1.msra.mxu0 0.0
        %6231 = vmatprep.subr.mxu0 0.0
        %6232 = vmatpush1.msra.mxu0 0.0
        %6233 = vmatprep.subr.mxu0 0.0
        %6234 = vmatpush1.msra.mxu0 0.0
        %6235 = vmatprep.subr.mxu0 0.0
        %6236 = vmatpush1.msra.mxu0 0.0
        %6237 = vmatprep.subr.mxu0 0.0
        %6238 = vmatpush1.msra.mxu0 0.0
        %6239 = vmatprep.mubr.f32.mxu0 0.0
        %6240 = vmatmul.mubr.f32.gmra.mrb[0].mxu0 %v6173
        %v6241 = vpop.f32.mrb[0].mxu0
        %v6242 = vadd.f32 %v6165, %v6241
        %v6243 = vpop.f32.mrb[0].mxu0
        %v6244 = vadd.f32 %v6169, %v6243
        %6245 = vdwg.mxu0
        %v6246 = vld [vmem:[#allocation9] sm:$0xff]
        %v6247 = vld [vmem:[#allocation9 + $0x8] sm:$0xff]
        %v6248 = vld [vmem:[#allocation9 + $0x10] sm:$0xff]
        %v6249 = vld [vmem:[#allocation9 + $0x18] sm:$0xff]
        %v6250 = vld [vmem:[#allocation9 + $0x20] sm:$0xff]
        %v6251 = vld [vmem:[#allocation9 + $0x28] sm:$0xff]
        %v6252 = vld [vmem:[#allocation9 + $0x30] sm:$0xff]
        %v6253 = vld [vmem:[#allocation9 + $0x38] sm:$0xff]
        %v6254 = vld [vmem:[%s17] sm:$0x1]
        %v6256 = vlaneseq
        %v6257 = vshrl.u32 %v6256, 7
        %v6258 = vsub.s32 0, %v6257
        %v6259 = vrot.slane %v6254, %v6258
        %v6262 = vsel %vm744, %v6127, 0
        %v6265 = vsel %vm744, %v6128, 0
        %v6268 = vsel %vm744, %v6129, 0
        %v6271 = vsel %vm744, %v6130, 0
        %v6274 = vsel %vm744, %v6131, 0
        %v6277 = vsel %vm744, %v6132, 0
        %v6280 = vsel %vm744, %v6133, 0
        %v6283 = vsel %vm744, %v6134, 0
        %6285 = vmatprep.subr.mxu0 0.0
        %6286 = vmatpush1.msra.mxu0 %v6246
        %6287 = vmatprep.subr.mxu0 0.0
        %6288 = vmatpush1.msra.mxu0 %v6247
        %6289 = vmatprep.subr.mxu0 0.0
        %6290 = vmatpush1.msra.mxu0 %v6248
        %6291 = vmatprep.subr.mxu0 0.0
        %6292 = vmatpush1.msra.mxu0 %v6249
        %6293 = vmatprep.subr.mxu0 0.0
        %6294 = vmatpush1.msra.mxu0 %v6250
        %6295 = vmatprep.subr.mxu0 0.0
        %6296 = vmatpush1.msra.mxu0 %v6251
        %6297 = vmatprep.subr.mxu0 0.0
        %6298 = vmatpush1.msra.mxu0 %v6252
        %6299 = vmatprep.subr.mxu0 0.0
        %6300 = vmatpush1.msra.mxu0 %v6253
        %6301 = vmatprep.subr.mxu0 0.0
        %6302 = vmatpush1.msra.mxu0 0.0
        %6303 = vmatprep.subr.mxu0 0.0
        %6304 = vmatpush1.msra.mxu0 0.0
        %6305 = vmatprep.subr.mxu0 0.0
        %6306 = vmatpush1.msra.mxu0 0.0
        %6307 = vmatprep.subr.mxu0 0.0
        %6308 = vmatpush1.msra.mxu0 0.0
        %6309 = vmatprep.subr.mxu0 0.0
        %6310 = vmatpush1.msra.mxu0 0.0
        %6311 = vmatprep.subr.mxu0 0.0
        %6312 = vmatpush1.msra.mxu0 0.0
        %6313 = vmatprep.subr.mxu0 0.0
        %6314 = vmatpush1.msra.mxu0 0.0
        %6315 = vmatprep.subr.mxu0 0.0
        %6316 = vmatpush1.msra.mxu0 0.0
        %6317 = vmatprep.subr.mxu0 0.0
        %6318 = vmatpush1.msra.mxu0 0.0
        %6319 = vmatprep.subr.mxu0 0.0
        %6320 = vmatpush1.msra.mxu0 0.0
        %6321 = vmatprep.subr.mxu0 0.0
        %6322 = vmatpush1.msra.mxu0 0.0
        %6323 = vmatprep.subr.mxu0 0.0
        %6324 = vmatpush1.msra.mxu0 0.0
        %6325 = vmatprep.subr.mxu0 0.0
        %6326 = vmatpush1.msra.mxu0 0.0
        %6327 = vmatprep.subr.mxu0 0.0
        %6328 = vmatpush1.msra.mxu0 0.0
        %6329 = vmatprep.subr.mxu0 0.0
        %6330 = vmatpush1.msra.mxu0 0.0
        %6331 = vmatprep.subr.mxu0 0.0
        %6332 = vmatpush1.msra.mxu0 0.0
        %6333 = vmatprep.subr.mxu0 0.0
        %6334 = vmatpush1.msra.mxu0 0.0
        %6335 = vmatprep.subr.mxu0 0.0
        %6336 = vmatpush1.msra.mxu0 0.0
        %6337 = vmatprep.subr.mxu0 0.0
        %6338 = vmatpush1.msra.mxu0 0.0
        %6339 = vmatprep.subr.mxu0 0.0
        %6340 = vmatpush1.msra.mxu0 0.0
        %6341 = vmatprep.subr.mxu0 0.0
        %6342 = vmatpush1.msra.mxu0 0.0
        %6343 = vmatprep.subr.mxu0 0.0
        %6344 = vmatpush1.msra.mxu0 0.0
        %6345 = vmatprep.subr.mxu0 0.0
        %6346 = vmatpush1.msra.mxu0 0.0
        %6347 = vmatprep.subr.mxu0 0.0
        %6348 = vmatpush1.msra.mxu0 0.0
        %6349 = vmatprep.mubr.f32.mxu0 0.0
        %6350 = vmatmul.mubr.f32.gmra.mrb[0].mxu0 %v6262
        %v6351 = vpop.f32.mrb[0].mxu0
        %v6352 = vadd.f32 %v6259, %v6351
        %v6353 = vpop.f32.mrb[0].mxu0
        %6354 = vmatprep.mubr.f32.mxu0 0.0
        %6355 = vmatmul.mubr.f32.gmra.mrb[0].mxu0 %v6265
        %v6356 = vpop.f32.mrb[0].mxu0
        %v6357 = vadd.f32 %v6259, %v6356
        %v6358 = vpop.f32.mrb[0].mxu0
        %6359 = vmatprep.mubr.f32.mxu0 0.0
        %6360 = vmatmul.mubr.f32.gmra.mrb[0].mxu0 %v6268
        %v6361 = vpop.f32.mrb[0].mxu0
        %v6362 = vadd.f32 %v6259, %v6361
        %v6363 = vpop.f32.mrb[0].mxu0
        %6364 = vmatprep.mubr.f32.mxu0 0.0
        %6365 = vmatmul.mubr.f32.gmra.mrb[0].mxu0 %v6271
        %v6366 = vpop.f32.mrb[0].mxu0
        %v6367 = vadd.f32 %v6259, %v6366
        %v6368 = vpop.f32.mrb[0].mxu0
        %6369 = vmatprep.mubr.f32.mxu0 0.0
        %6370 = vmatmul.mubr.f32.gmra.mrb[0].mxu0 %v6274
        %v6371 = vpop.f32.mrb[0].mxu0
        %v6372 = vadd.f32 %v6259, %v6371
        %v6373 = vpop.f32.mrb[0].mxu0
        %6374 = vmatprep.mubr.f32.mxu0 0.0
        %6375 = vmatmul.mubr.f32.gmra.mrb[0].mxu0 %v6277
        %v6376 = vpop.f32.mrb[0].mxu0
        %v6377 = vadd.f32 %v6259, %v6376
        %v6378 = vpop.f32.mrb[0].mxu0
        %6379 = vmatprep.mubr.f32.mxu0 0.0
        %6380 = vmatmul.mubr.f32.gmra.mrb[0].mxu0 %v6280
        %v6381 = vpop.f32.mrb[0].mxu0
        %v6382 = vadd.f32 %v6259, %v6381
        %v6383 = vpop.f32.mrb[0].mxu0
        %6384 = vmatprep.mubr.f32.mxu0 0.0
        %6385 = vmatmul.mubr.f32.gmra.mrb[0].mxu0 %v6283
        %v6386 = vpop.f32.mrb[0].mxu0
        %v6387 = vadd.f32 %v6259, %v6386
        %v6388 = vpop.f32.mrb[0].mxu0
        %6389 = vdwg.mxu0
        %v6390 = vmul.f32 %v6352, 0.5
        %v6391 = vmul.f32 %v6357, 0.5
        %v6392 = vmul.f32 %v6362, 0.5
        %v6393 = vmul.f32 %v6367, 0.5
        %v6394 = vmul.f32 %v6372, 0.5
        %v6395 = vmul.f32 %v6377, 0.5
        %v6396 = vmul.f32 %v6382, 0.5
        %v6397 = vmul.f32 %v6387, 0.5
        %6406 = vrot.lane.b32.xlu0 %v6390, 64
        %v6407 = vpop.permute.xlu0 %6406
        %6408 = vrot.lane.b32.xlu0 %v6391, 64
        %v6409 = vpop.permute.xlu0 %6408
        %6410 = vrot.lane.b32.xlu0 %v6392, 64
        %v6411 = vpop.permute.xlu0 %6410
        %6412 = vrot.lane.b32.xlu0 %v6393, 64
        %v6413 = vpop.permute.xlu0 %6412
        %6414 = vrot.lane.b32.xlu0 %v6394, 64
        %v6415 = vpop.permute.xlu0 %6414
        %6416 = vrot.lane.b32.xlu0 %v6395, 64
        %v6417 = vpop.permute.xlu0 %6416
        %6418 = vrot.lane.b32.xlu0 %v6396, 64
        %v6419 = vpop.permute.xlu0 %6418
        %6420 = vrot.lane.b32.xlu0 %v6397, 64
        %v6421 = vpop.permute.xlu0 %6420
        %v6430 = vadd.f32 %v6242, %v6407
        %v6431 = vadd.f32 %v6242, %v6409
        %v6432 = vadd.f32 %v6242, %v6411
        %v6433 = vadd.f32 %v6242, %v6413
        %v6434 = vadd.f32 %v6242, %v6415
        %v6435 = vadd.f32 %v6242, %v6417
        %v6436 = vadd.f32 %v6242, %v6419
        %v6437 = vadd.f32 %v6242, %v6421
        %v6438 = vadd.f32 %v6244, %v6407
        %v6439 = vadd.f32 %v6244, %v6409
        %v6440 = vadd.f32 %v6244, %v6411
        %v6441 = vadd.f32 %v6244, %v6413
        %v6442 = vadd.f32 %v6244, %v6415
        %v6443 = vadd.f32 %v6244, %v6417
        %v6444 = vadd.f32 %v6244, %v6419
        %v6445 = vadd.f32 %v6244, %v6421
        %v6447 = vcombine.high %v6242, %v6242
        %v6449 = vunpack.c.l.s4 1966171168
        %v6450 = vunpack.c.0.s8 %v6449
        %v6451 = vlaneseq
        %v6452 = vshrl.u32 %v6451, 7
        %v6453 = vsub.s32 %v6450, %v6452
        %v6454 = vrot.slane %v6242, %v6453
        %v6456 = vunpack.c.l.s4 1966171168
        %v6457 = vunpack.c.0.s8 %v6456
        %v6458 = vlaneseq
        %v6459 = vshrl.u32 %v6458, 7
        %v6460 = vsub.s32 %v6457, %v6459
        %v6461 = vrot.slane %v6447, %v6460
        %v6462 = vcombine.high %v6454, %v6454
        %v6463 = vcombine.high %v6461, %v6461
        %v6465 = vunpack.c.l.s4 1966171168
        %v6466 = vunpack.c.0.s8 %v6465
        %v6467 = vlaneseq
        %v6468 = vshrl.u32 %v6467, 7
        %v6469 = vsub.s32 %v6466, %v6468
        %v6470 = vrot.slane %v6454, %v6469
        %v6472 = vunpack.c.l.s4 1966171168
        %v6473 = vunpack.c.0.s8 %v6472
        %v6474 = vlaneseq
        %v6475 = vshrl.u32 %v6474, 7
        %v6476 = vsub.s32 %v6473, %v6475
        %v6477 = vrot.slane %v6461, %v6476
        %v6479 = vunpack.c.l.s4 1966171168
        %v6480 = vunpack.c.0.s8 %v6479
        %v6481 = vlaneseq
        %v6482 = vshrl.u32 %v6481, 7
        %v6483 = vsub.s32 %v6480, %v6482
        %v6484 = vrot.slane %v6462, %v6483
        %v6486 = vunpack.c.l.s4 1966171168
        %v6487 = vunpack.c.0.s8 %v6486
        %v6488 = vlaneseq
        %v6489 = vshrl.u32 %v6488, 7
        %v6490 = vsub.s32 %v6487, %v6489
        %v6491 = vrot.slane %v6463, %v6490
        %v6492 = vcombine.high %v6470, %v6470
        %v6493 = vcombine.high %v6477, %v6477
        %v6494 = vcombine.high %v6484, %v6484
        %v6495 = vcombine.high %v6491, %v6491
        %v6496 = vlaneseq
        %v6497 = vshrl.u32 %v6496, 7
        %v6498 = vsub.s32 0, %v6497
        %v6499 = vrot.slane %v6470, %v6498
        %v6500 = vlaneseq
        %v6501 = vshrl.u32 %v6500, 7
        %v6502 = vsub.s32 0, %v6501
        %v6503 = vrot.slane %v6484, %v6502
        %v6504 = vlaneseq
        %v6505 = vshrl.u32 %v6504, 7
        %v6506 = vsub.s32 0, %v6505
        %v6507 = vrot.slane %v6492, %v6506
        %v6508 = vlaneseq
        %v6509 = vshrl.u32 %v6508, 7
        %v6510 = vsub.s32 0, %v6509
        %v6511 = vrot.slane %v6494, %v6510
        %v6512 = vlaneseq
        %v6513 = vshrl.u32 %v6512, 7
        %v6514 = vsub.s32 0, %v6513
        %v6515 = vrot.slane %v6477, %v6514
        %v6516 = vlaneseq
        %v6517 = vshrl.u32 %v6516, 7
        %v6518 = vsub.s32 0, %v6517
        %v6519 = vrot.slane %v6491, %v6518
        %v6520 = vlaneseq
        %v6521 = vshrl.u32 %v6520, 7
        %v6522 = vsub.s32 0, %v6521
        %v6523 = vrot.slane %v6493, %v6522
        %v6524 = vlaneseq
        %v6525 = vshrl.u32 %v6524, 7
        %v6526 = vsub.s32 0, %v6525
        %v6527 = vrot.slane %v6495, %v6526
        %6544 = vrot.lane.b32.xlu0 %v6430, 64
        %v6545 = vpop.permute.xlu0 %6544
        %6546 = vrot.lane.b32.xlu0 %v6431, 64
        %v6547 = vpop.permute.xlu0 %6546
        %6548 = vrot.lane.b32.xlu0 %v6432, 64
        %v6549 = vpop.permute.xlu0 %6548
        %6550 = vrot.lane.b32.xlu0 %v6433, 64
        %v6551 = vpop.permute.xlu0 %6550
        %6552 = vrot.lane.b32.xlu0 %v6434, 64
        %v6553 = vpop.permute.xlu0 %6552
        %6554 = vrot.lane.b32.xlu0 %v6435, 64
        %v6555 = vpop.permute.xlu0 %6554
        %6556 = vrot.lane.b32.xlu0 %v6436, 64
        %v6557 = vpop.permute.xlu0 %6556
        %6558 = vrot.lane.b32.xlu0 %v6437, 64
        %v6559 = vpop.permute.xlu0 %6558
        %v6568 = vmul.f32 %v6499, %v6545
        %v6569 = vmul.f32 %v6503, %v6547
        %v6570 = vmul.f32 %v6507, %v6549
        %v6571 = vmul.f32 %v6511, %v6551
        %v6572 = vmul.f32 %v6515, %v6553
        %v6573 = vmul.f32 %v6519, %v6555
        %v6574 = vmul.f32 %v6523, %v6557
        %v6575 = vmul.f32 %v6527, %v6559
        %v6577 = vsel %vm744, %v6568, 0
        %v6580 = vsel %vm744, %v6569, 0
        %v6583 = vsel %vm744, %v6570, 0
        %v6586 = vsel %vm744, %v6571, 0
        %v6589 = vsel %vm744, %v6572, 0
        %v6592 = vsel %vm744, %v6573, 0
        %v6595 = vsel %vm744, %v6574, 0
        %v6598 = vsel %vm744, %v6575, 0
        %6600 = vmatprep.subr.mxu0 0.0
        %6601 = vmatpush1.msra.mxu0 %v6135
        %6602 = vmatprep.subr.mxu0 0.0
        %6603 = vmatpush1.msra.mxu0 %v6136
        %6604 = vmatprep.subr.mxu0 0.0
        %6605 = vmatpush1.msra.mxu0 %v6137
        %6606 = vmatprep.subr.mxu0 0.0
        %6607 = vmatpush1.msra.mxu0 %v6138
        %6608 = vmatprep.subr.mxu0 0.0
        %6609 = vmatpush1.msra.mxu0 %v6139
        %6610 = vmatprep.subr.mxu0 0.0
        %6611 = vmatpush1.msra.mxu0 %v6140
        %6612 = vmatprep.subr.mxu0 0.0
        %6613 = vmatpush1.msra.mxu0 %v6141
        %6614 = vmatprep.subr.mxu0 0.0
        %6615 = vmatpush1.msra.mxu0 %v6142
        %6616 = vmatprep.subr.mxu0 0.0
        %6617 = vmatpush1.msra.mxu0 0.0
        %6618 = vmatprep.subr.mxu0 0.0
        %6619 = vmatpush1.msra.mxu0 0.0
        %6620 = vmatprep.subr.mxu0 0.0
        %6621 = vmatpush1.msra.mxu0 0.0
        %6622 = vmatprep.subr.mxu0 0.0
        %6623 = vmatpush1.msra.mxu0 0.0
        %6624 = vmatprep.subr.mxu0 0.0
        %6625 = vmatpush1.msra.mxu0 0.0
        %6626 = vmatprep.subr.mxu0 0.0
        %6627 = vmatpush1.msra.mxu0 0.0
        %6628 = vmatprep.subr.mxu0 0.0
        %6629 = vmatpush1.msra.mxu0 0.0
        %6630 = vmatprep.subr.mxu0 0.0
        %6631 = vmatpush1.msra.mxu0 0.0
        %6632 = vmatprep.subr.mxu0 0.0
        %6633 = vmatpush1.msra.mxu0 0.0
        %6634 = vmatprep.subr.mxu0 0.0
        %6635 = vmatpush1.msra.mxu0 0.0
        %6636 = vmatprep.subr.mxu0 0.0
        %6637 = vmatpush1.msra.mxu0 0.0
        %6638 = vmatprep.subr.mxu0 0.0
        %6639 = vmatpush1.msra.mxu0 0.0
        %6640 = vmatprep.subr.mxu0 0.0
        %6641 = vmatpush1.msra.mxu0 0.0
        %6642 = vmatprep.subr.mxu0 0.0
        %6643 = vmatpush1.msra.mxu0 0.0
        %6644 = vmatprep.subr.mxu0 0.0
        %6645 = vmatpush1.msra.mxu0 0.0
        %6646 = vmatprep.subr.mxu0 0.0
        %6647 = vmatpush1.msra.mxu0 0.0
        %6648 = vmatprep.subr.mxu0 0.0
        %6649 = vmatpush1.msra.mxu0 0.0
        %6650 = vmatprep.subr.mxu0 0.0
        %6651 = vmatpush1.msra.mxu0 0.0
        %6652 = vmatprep.subr.mxu0 0.0
        %6653 = vmatpush1.msra.mxu0 0.0
        %6654 = vmatprep.subr.mxu0 0.0
        %6655 = vmatpush1.msra.mxu0 0.0
        %6656 = vmatprep.subr.mxu0 0.0
        %6657 = vmatpush1.msra.mxu0 0.0
        %6658 = vmatprep.subr.mxu0 0.0
        %6659 = vmatpush1.msra.mxu0 0.0
        %6660 = vmatprep.subr.mxu0 0.0
        %6661 = vmatpush1.msra.mxu0 0.0
        %6662 = vmatprep.subr.mxu0 0.0
        %6663 = vmatpush1.msra.mxu0 0.0
        %6664 = vmatprep.mubr.f32.mxu0 0.0
        %6665 = vmatmul.mubr.f32.gmra.mrb[0].mxu0 %v6577
        %v6666 = vpop.f32.mrb[0].mxu0
        %v6667 = vadd.f32 0.0, %v6666
        %v6668 = vpop.f32.mrb[0].mxu0
        %6669 = vmatprep.mubr.f32.mxu0 0.0
        %6670 = vmatmul.mubr.f32.gmra.mrb[0].mxu0 %v6580
        %v6671 = vpop.f32.mrb[0].mxu0
        %v6672 = vadd.f32 0.0, %v6671
        %v6673 = vpop.f32.mrb[0].mxu0
        %6674 = vmatprep.mubr.f32.mxu0 0.0
        %6675 = vmatmul.mubr.f32.gmra.mrb[0].mxu0 %v6583
        %v6676 = vpop.f32.mrb[0].mxu0
        %v6677 = vadd.f32 0.0, %v6676
        %v6678 = vpop.f32.mrb[0].mxu0
        %6679 = vmatprep.mubr.f32.mxu0 0.0
        %6680 = vmatmul.mubr.f32.gmra.mrb[0].mxu0 %v6586
        %v6681 = vpop.f32.mrb[0].mxu0
        %v6682 = vadd.f32 0.0, %v6681
        %v6683 = vpop.f32.mrb[0].mxu0
        %6684 = vmatprep.mubr.f32.mxu0 0.0
        %6685 = vmatmul.mubr.f32.gmra.mrb[0].mxu0 %v6589
        %v6686 = vpop.f32.mrb[0].mxu0
        %v6687 = vadd.f32 0.0, %v6686
        %v6688 = vpop.f32.mrb[0].mxu0
        %6689 = vmatprep.mubr.f32.mxu0 0.0
        %6690 = vmatmul.mubr.f32.gmra.mrb[0].mxu0 %v6592
        %v6691 = vpop.f32.mrb[0].mxu0
        %v6692 = vadd.f32 0.0, %v6691
        %v6693 = vpop.f32.mrb[0].mxu0
        %6694 = vmatprep.mubr.f32.mxu0 0.0
        %6695 = vmatmul.mubr.f32.gmra.mrb[0].mxu0 %v6595
        %v6696 = vpop.f32.mrb[0].mxu0
        %v6697 = vadd.f32 0.0, %v6696
        %v6698 = vpop.f32.mrb[0].mxu0
        %6699 = vmatprep.mubr.f32.mxu0 0.0
        %6700 = vmatmul.mubr.f32.gmra.mrb[0].mxu0 %v6598
        %v6701 = vpop.f32.mrb[0].mxu0
        %v6702 = vadd.f32 0.0, %v6701
        %v6703 = vpop.f32.mrb[0].mxu0
        %6704 = vdwg.mxu0
        %v6705 = vmul.f32 %v6667, 0.25
        %v6706 = vmul.f32 %v6672, 0.25
        %v6707 = vmul.f32 %v6677, 0.25
        %v6708 = vmul.f32 %v6682, 0.25
        %v6709 = vmul.f32 %v6687, 0.25
        %v6710 = vmul.f32 %v6692, 0.25
        %v6711 = vmul.f32 %v6697, 0.25
        %v6712 = vmul.f32 %v6702, 0.25
        %vm6713 = vcmp.eq.f32.partialorder %v919, 0.0
        %vm6714 = vcmp.eq.f32.partialorder %v926, 0.0
        %vm6715 = vcmp.eq.f32.partialorder %v933, 0.0
        %vm6716 = vcmp.eq.f32.partialorder %v940, 0.0
        %vm6717 = vcmp.eq.f32.partialorder %v947, 0.0
        %vm6718 = vcmp.eq.f32.partialorder %v954, 0.0
        %vm6719 = vcmp.eq.f32.partialorder %v961, 0.0
        %vm6720 = vcmp.eq.f32.partialorder %v968, 0.0
        %v6721 = vsel %vm6713, 1, 0
        %v6722 = vsel %vm6714, 1, 0
        %v6723 = vsel %vm6715, 1, 0
        %v6724 = vsel %vm6716, 1, 0
        %v6725 = vsel %vm6717, 1, 0
        %v6726 = vsel %vm6718, 1, 0
        %v6727 = vsel %vm6719, 1, 0
        %v6728 = vsel %vm6720, 1, 0
        %vm6729 = vcmp.eq.s32.totalorder %v6721, 1
        %vm6730 = vcmp.eq.s32.totalorder %v6722, 1
        %vm6731 = vcmp.eq.s32.totalorder %v6723, 1
        %vm6732 = vcmp.eq.s32.totalorder %v6724, 1
        %vm6733 = vcmp.eq.s32.totalorder %v6725, 1
        %vm6734 = vcmp.eq.s32.totalorder %v6726, 1
        %vm6735 = vcmp.eq.s32.totalorder %v6727, 1
        %vm6736 = vcmp.eq.s32.totalorder %v6728, 1
        %v6737 = vsel %vm6729, -10000.0, %v6705
        %v6738 = vsel %vm6730, -10000.0, %v6706
        %v6739 = vsel %vm6731, -10000.0, %v6707
        %v6740 = vsel %vm6732, -10000.0, %v6708
        %v6741 = vsel %vm6733, -10000.0, %v6709
        %v6742 = vsel %vm6734, -10000.0, %v6710
        %v6743 = vsel %vm6735, -10000.0, %v6711
        %v6744 = vsel %vm6736, -10000.0, %v6712
        %v6745 = vsel %vm3047, %v6737, -inf
        %v6746 = vrot.slane %v6745, 4
        %v6747 = vmax.f32 %v6745, %v6746
        %v6748 = vrot.slane %v6747, 2
        %v6749 = vmax.f32 %v6747, %v6748
        %v6750 = vrot.slane %v6749, 1
        %v6751 = vmax.f32 %v6749, %v6750
        %v6752 = vsel %vm3047, %v6738, -inf
        %v6753 = vrot.slane %v6752, 4
        %v6754 = vmax.f32 %v6752, %v6753
        %v6755 = vrot.slane %v6754, 2
        %v6756 = vmax.f32 %v6754, %v6755
        %v6757 = vrot.slane %v6756, 1
        %v6758 = vmax.f32 %v6756, %v6757
        %v6759 = vsel %vm3047, %v6739, -inf
        %v6760 = vrot.slane %v6759, 4
        %v6761 = vmax.f32 %v6759, %v6760
        %v6762 = vrot.slane %v6761, 2
        %v6763 = vmax.f32 %v6761, %v6762
        %v6764 = vrot.slane %v6763, 1
        %v6765 = vmax.f32 %v6763, %v6764
        %v6766 = vsel %vm3047, %v6740, -inf
        %v6767 = vrot.slane %v6766, 4
        %v6768 = vmax.f32 %v6766, %v6767
        %v6769 = vrot.slane %v6768, 2
        %v6770 = vmax.f32 %v6768, %v6769
        %v6771 = vrot.slane %v6770, 1
        %v6772 = vmax.f32 %v6770, %v6771
        %v6773 = vsel %vm3047, %v6741, -inf
        %v6774 = vrot.slane %v6773, 4
        %v6775 = vmax.f32 %v6773, %v6774
        %v6776 = vrot.slane %v6775, 2
        %v6777 = vmax.f32 %v6775, %v6776
        %v6778 = vrot.slane %v6777, 1
        %v6779 = vmax.f32 %v6777, %v6778
        %v6780 = vsel %vm3047, %v6742, -inf
        %v6781 = vrot.slane %v6780, 4
        %v6782 = vmax.f32 %v6780, %v6781
        %v6783 = vrot.slane %v6782, 2
        %v6784 = vmax.f32 %v6782, %v6783
        %v6785 = vrot.slane %v6784, 1
        %v6786 = vmax.f32 %v6784, %v6785
        %v6787 = vsel %vm3047, %v6743, -inf
        %v6788 = vrot.slane %v6787, 4
        %v6789 = vmax.f32 %v6787, %v6788
        %v6790 = vrot.slane %v6789, 2
        %v6791 = vmax.f32 %v6789, %v6790
        %v6792 = vrot.slane %v6791, 1
        %v6793 = vmax.f32 %v6791, %v6792
        %v6794 = vsel %vm3047, %v6744, -inf
        %v6795 = vrot.slane %v6794, 4
        %v6796 = vmax.f32 %v6794, %v6795
        %v6797 = vrot.slane %v6796, 2
        %v6798 = vmax.f32 %v6796, %v6797
        %v6799 = vrot.slane %v6798, 1
        %v6800 = vmax.f32 %v6798, %v6799
        %v6801 = vsub.f32 %v6737, %v6751
        %v6802 = vsub.f32 %v6738, %v6758
        %v6803 = vsub.f32 %v6739, %v6765
        %v6804 = vsub.f32 %v6740, %v6772
        %v6805 = vsub.f32 %v6741, %v6779
        %v6806 = vsub.f32 %v6742, %v6786
        %v6807 = vsub.f32 %v6743, %v6793
        %v6808 = vsub.f32 %v6744, %v6800
        %v6809 = vmul.f32 %v6801, 1.442695
        %v6810 = vpow.pop %v6809
        %v6811 = vmul.f32 %v6802, 1.442695
        %v6812 = vpow.pop %v6811
        %v6813 = vmul.f32 %v6803, 1.442695
        %v6814 = vpow.pop %v6813
        %v6815 = vmul.f32 %v6804, 1.442695
        %v6816 = vpow.pop %v6815
        %v6817 = vmul.f32 %v6805, 1.442695
        %v6818 = vpow.pop %v6817
        %v6819 = vmul.f32 %v6806, 1.442695
        %v6820 = vpow.pop %v6819
        %v6821 = vmul.f32 %v6807, 1.442695
        %v6822 = vpow.pop %v6821
        %v6823 = vmul.f32 %v6808, 1.442695
        %v6824 = vpow.pop %v6823
        %v6825 = vsel %vm3047, %v6810, 0.0
        %v6826 = vrot.slane %v6825, 4
        %v6827 = vadd.f32 %v6825, %v6826
        %v6828 = vrot.slane %v6827, 2
        %v6829 = vadd.f32 %v6827, %v6828
        %v6830 = vrot.slane %v6829, 1
        %v6831 = vadd.f32 %v6829, %v6830
        %v6832 = vsel %vm3047, %v6812, 0.0
        %v6833 = vrot.slane %v6832, 4
        %v6834 = vadd.f32 %v6832, %v6833
        %v6835 = vrot.slane %v6834, 2
        %v6836 = vadd.f32 %v6834, %v6835
        %v6837 = vrot.slane %v6836, 1
        %v6838 = vadd.f32 %v6836, %v6837
        %v6839 = vsel %vm3047, %v6814, 0.0
        %v6840 = vrot.slane %v6839, 4
        %v6841 = vadd.f32 %v6839, %v6840
        %v6842 = vrot.slane %v6841, 2
        %v6843 = vadd.f32 %v6841, %v6842
        %v6844 = vrot.slane %v6843, 1
        %v6845 = vadd.f32 %v6843, %v6844
        %v6846 = vsel %vm3047, %v6816, 0.0
        %v6847 = vrot.slane %v6846, 4
        %v6848 = vadd.f32 %v6846, %v6847
        %v6849 = vrot.slane %v6848, 2
        %v6850 = vadd.f32 %v6848, %v6849
        %v6851 = vrot.slane %v6850, 1
        %v6852 = vadd.f32 %v6850, %v6851
        %v6853 = vsel %vm3047, %v6818, 0.0
        %v6854 = vrot.slane %v6853, 4
        %v6855 = vadd.f32 %v6853, %v6854
        %v6856 = vrot.slane %v6855, 2
        %v6857 = vadd.f32 %v6855, %v6856
        %v6858 = vrot.slane %v6857, 1
        %v6859 = vadd.f32 %v6857, %v6858
        %v6860 = vsel %vm3047, %v6820, 0.0
        %v6861 = vrot.slane %v6860, 4
        %v6862 = vadd.f32 %v6860, %v6861
        %v6863 = vrot.slane %v6862, 2
        %v6864 = vadd.f32 %v6862, %v6863
        %v6865 = vrot.slane %v6864, 1
        %v6866 = vadd.f32 %v6864, %v6865
        %v6867 = vsel %vm3047, %v6822, 0.0
        %v6868 = vrot.slane %v6867, 4
        %v6869 = vadd.f32 %v6867, %v6868
        %v6870 = vrot.slane %v6869, 2
        %v6871 = vadd.f32 %v6869, %v6870
        %v6872 = vrot.slane %v6871, 1
        %v6873 = vadd.f32 %v6871, %v6872
        %v6874 = vsel %vm3047, %v6824, 0.0
        %v6875 = vrot.slane %v6874, 4
        %v6876 = vadd.f32 %v6874, %v6875
        %v6877 = vrot.slane %v6876, 2
        %v6878 = vadd.f32 %v6876, %v6877
        %v6879 = vrot.slane %v6878, 1
        %v6880 = vadd.f32 %v6878, %v6879
        %v6881 = vrcp.pop %v6831
        %v6882 = vmul.f32 %v6810, %v6881
        %v6883 = vrcp.pop %v6838
        %v6884 = vmul.f32 %v6812, %v6883
        %v6885 = vrcp.pop %v6845
        %v6886 = vmul.f32 %v6814, %v6885
        %v6887 = vrcp.pop %v6852
        %v6888 = vmul.f32 %v6816, %v6887
        %v6889 = vrcp.pop %v6859
        %v6890 = vmul.f32 %v6818, %v6889
        %v6891 = vrcp.pop %v6866
        %v6892 = vmul.f32 %v6820, %v6891
        %v6893 = vrcp.pop %v6873
        %v6894 = vmul.f32 %v6822, %v6893
        %v6895 = vrcp.pop %v6880
        %v6896 = vmul.f32 %v6824, %v6895
        %v6898 = vsel %vm3047, %v6882, 0
        %v6901 = vsel %vm3047, %v6884, 0
        %v6904 = vsel %vm3047, %v6886, 0
        %v6907 = vsel %vm3047, %v6888, 0
        %v6910 = vsel %vm3047, %v6890, 0
        %v6913 = vsel %vm3047, %v6892, 0
        %v6916 = vsel %vm3047, %v6894, 0
        %v6919 = vsel %vm3047, %v6896, 0
        %v6922 = vsel %vm4521, %v6143, 0
        %6924 = vmatprep.subr.mxu0 0.0
        %6925 = vmatpush1.msra.mxu0 %v6922
        %6926 = vmatprep.subr.mxu0 0.0
        %6927 = vmatpush1.msra.mxu0 0.0
        %6928 = vmatprep.subr.mxu0 0.0
        %6929 = vmatpush1.msra.mxu0 0.0
        %6930 = vmatprep.subr.mxu0 0.0
        %6931 = vmatpush1.msra.mxu0 0.0
        %6932 = vmatprep.subr.mxu0 0.0
        %6933 = vmatpush1.msra.mxu0 0.0
        %6934 = vmatprep.subr.mxu0 0.0
        %6935 = vmatpush1.msra.mxu0 0.0
        %6936 = vmatprep.subr.mxu0 0.0
        %6937 = vmatpush1.msra.mxu0 0.0
        %6938 = vmatprep.subr.mxu0 0.0
        %6939 = vmatpush1.msra.mxu0 0.0
        %6940 = vmatprep.subr.mxu0 0.0
        %6941 = vmatpush1.msra.mxu0 0.0
        %6942 = vmatprep.subr.mxu0 0.0
        %6943 = vmatpush1.msra.mxu0 0.0
        %6944 = vmatprep.subr.mxu0 0.0
        %6945 = vmatpush1.msra.mxu0 0.0
        %6946 = vmatprep.subr.mxu0 0.0
        %6947 = vmatpush1.msra.mxu0 0.0
        %6948 = vmatprep.subr.mxu0 0.0
        %6949 = vmatpush1.msra.mxu0 0.0
        %6950 = vmatprep.subr.mxu0 0.0
        %6951 = vmatpush1.msra.mxu0 0.0
        %6952 = vmatprep.subr.mxu0 0.0
        %6953 = vmatpush1.msra.mxu0 0.0
        %6954 = vmatprep.subr.mxu0 0.0
        %6955 = vmatpush1.msra.mxu0 0.0
        %6956 = vmatprep.subr.mxu0 0.0
        %6957 = vmatpush1.msra.mxu0 0.0
        %6958 = vmatprep.subr.mxu0 0.0
        %6959 = vmatpush1.msra.mxu0 0.0
        %6960 = vmatprep.subr.mxu0 0.0
        %6961 = vmatpush1.msra.mxu0 0.0
        %6962 = vmatprep.subr.mxu0 0.0
        %6963 = vmatpush1.msra.mxu0 0.0
        %6964 = vmatprep.subr.mxu0 0.0
        %6965 = vmatpush1.msra.mxu0 0.0
        %6966 = vmatprep.subr.mxu0 0.0
        %6967 = vmatpush1.msra.mxu0 0.0
        %6968 = vmatprep.subr.mxu0 0.0
        %6969 = vmatpush1.msra.mxu0 0.0
        %6970 = vmatprep.subr.mxu0 0.0
        %6971 = vmatpush1.msra.mxu0 0.0
        %6972 = vmatprep.subr.mxu0 0.0
        %6973 = vmatpush1.msra.mxu0 0.0
        %6974 = vmatprep.subr.mxu0 0.0
        %6975 = vmatpush1.msra.mxu0 0.0
        %6976 = vmatprep.subr.mxu0 0.0
        %6977 = vmatpush1.msra.mxu0 0.0
        %6978 = vmatprep.subr.mxu0 0.0
        %6979 = vmatpush1.msra.mxu0 0.0
        %6980 = vmatprep.subr.mxu0 0.0
        %6981 = vmatpush1.msra.mxu0 0.0
        %6982 = vmatprep.subr.mxu0 0.0
        %6983 = vmatpush1.msra.mxu0 0.0
        %6984 = vmatprep.subr.mxu0 0.0
        %6985 = vmatpush1.msra.mxu0 0.0
        %6986 = vmatprep.subr.mxu0 0.0
        %6987 = vmatpush1.msra.mxu0 0.0
        %6988 = vmatprep.mubr.f32.mxu0 0.0
        %6989 = vmatmul.mubr.f32.gmra.mrb[0].mxu0 %v6898
        %v6990 = vpop.f32.mrb[0].mxu0
        %v6991 = vadd.f32 0.0, %v6990
        %v6992 = vpop.f32.mrb[0].mxu0
        %6993 = vmatprep.mubr.f32.mxu0 0.0
        %6994 = vmatmul.mubr.f32.gmra.mrb[0].mxu0 %v6901
        %v6995 = vpop.f32.mrb[0].mxu0
        %v6996 = vadd.f32 0.0, %v6995
        %v6997 = vpop.f32.mrb[0].mxu0
        %6998 = vmatprep.mubr.f32.mxu0 0.0
        %6999 = vmatmul.mubr.f32.gmra.mrb[0].mxu0 %v6904
        %v7000 = vpop.f32.mrb[0].mxu0
        %v7001 = vadd.f32 0.0, %v7000
        %v7002 = vpop.f32.mrb[0].mxu0
        %7003 = vmatprep.mubr.f32.mxu0 0.0
        %7004 = vmatmul.mubr.f32.gmra.mrb[0].mxu0 %v6907
        %v7005 = vpop.f32.mrb[0].mxu0
        %v7006 = vadd.f32 0.0, %v7005
        %v7007 = vpop.f32.mrb[0].mxu0
        %7008 = vmatprep.mubr.f32.mxu0 0.0
        %7009 = vmatmul.mubr.f32.gmra.mrb[0].mxu0 %v6910
        %v7010 = vpop.f32.mrb[0].mxu0
        %v7011 = vadd.f32 0.0, %v7010
        %v7012 = vpop.f32.mrb[0].mxu0
        %7013 = vmatprep.mubr.f32.mxu0 0.0
        %7014 = vmatmul.mubr.f32.gmra.mrb[0].mxu0 %v6913
        %v7015 = vpop.f32.mrb[0].mxu0
        %v7016 = vadd.f32 0.0, %v7015
        %v7017 = vpop.f32.mrb[0].mxu0
        %7018 = vmatprep.mubr.f32.mxu0 0.0
        %7019 = vmatmul.mubr.f32.gmra.mrb[0].mxu0 %v6916
        %v7020 = vpop.f32.mrb[0].mxu0
        %v7021 = vadd.f32 0.0, %v7020
        %v7022 = vpop.f32.mrb[0].mxu0
        %7023 = vmatprep.mubr.f32.mxu0 0.0
        %7024 = vmatmul.mubr.f32.gmra.mrb[0].mxu0 %v6919
        %v7025 = vpop.f32.mrb[0].mxu0
        %v7026 = vadd.f32 0.0, %v7025
        %v7027 = vpop.f32.mrb[0].mxu0
        %7028 = vdwg.mxu0
        %v7029 = vmul.f32 %v6991, %v6438
        %v7030 = vmul.f32 %v6996, %v6439
        %v7031 = vmul.f32 %v7001, %v6440
        %v7032 = vmul.f32 %v7006, %v6441
        %v7033 = vmul.f32 %v7011, %v6442
        %v7034 = vmul.f32 %v7016, %v6443
        %v7035 = vmul.f32 %v7021, %v6444
        %v7036 = vmul.f32 %v7026, %v6445
        %v7037 = vsel %vm744, %v7029, 0.0
        %v7038 = vrot.slane %v7037, 4
        %v7039 = vadd.f32 %v7037, %v7038
        %v7040 = vrot.slane %v7039, 2
        %v7041 = vadd.f32 %v7039, %v7040
        %v7042 = vrot.slane %v7041, 1
        %v7043 = vadd.f32 %v7041, %v7042
        %v7044 = vsel %vm744, %v7030, 0.0
        %v7045 = vrot.slane %v7044, 4
        %v7046 = vadd.f32 %v7044, %v7045
        %v7047 = vrot.slane %v7046, 2
        %v7048 = vadd.f32 %v7046, %v7047
        %v7049 = vrot.slane %v7048, 1
        %v7050 = vadd.f32 %v7048, %v7049
        %v7051 = vsel %vm744, %v7031, 0.0
        %v7052 = vrot.slane %v7051, 4
        %v7053 = vadd.f32 %v7051, %v7052
        %v7054 = vrot.slane %v7053, 2
        %v7055 = vadd.f32 %v7053, %v7054
        %v7056 = vrot.slane %v7055, 1
        %v7057 = vadd.f32 %v7055, %v7056
        %v7058 = vsel %vm744, %v7032, 0.0
        %v7059 = vrot.slane %v7058, 4
        %v7060 = vadd.f32 %v7058, %v7059
        %v7061 = vrot.slane %v7060, 2
        %v7062 = vadd.f32 %v7060, %v7061
        %v7063 = vrot.slane %v7062, 1
        %v7064 = vadd.f32 %v7062, %v7063
        %v7065 = vsel %vm744, %v7033, 0.0
        %v7066 = vrot.slane %v7065, 4
        %v7067 = vadd.f32 %v7065, %v7066
        %v7068 = vrot.slane %v7067, 2
        %v7069 = vadd.f32 %v7067, %v7068
        %v7070 = vrot.slane %v7069, 1
        %v7071 = vadd.f32 %v7069, %v7070
        %v7072 = vsel %vm744, %v7034, 0.0
        %v7073 = vrot.slane %v7072, 4
        %v7074 = vadd.f32 %v7072, %v7073
        %v7075 = vrot.slane %v7074, 2
        %v7076 = vadd.f32 %v7074, %v7075
        %v7077 = vrot.slane %v7076, 1
        %v7078 = vadd.f32 %v7076, %v7077
        %v7079 = vsel %vm744, %v7035, 0.0
        %v7080 = vrot.slane %v7079, 4
        %v7081 = vadd.f32 %v7079, %v7080
        %v7082 = vrot.slane %v7081, 2
        %v7083 = vadd.f32 %v7081, %v7082
        %v7084 = vrot.slane %v7083, 1
        %v7085 = vadd.f32 %v7083, %v7084
        %v7086 = vsel %vm744, %v7036, 0.0
        %v7087 = vrot.slane %v7086, 4
        %v7088 = vadd.f32 %v7086, %v7087
        %v7089 = vrot.slane %v7088, 2
        %v7090 = vadd.f32 %v7088, %v7089
        %v7091 = vrot.slane %v7090, 1
        %v7092 = vadd.f32 %v7090, %v7091
        %v7101 = vsel %vm5494, %v7050, %v7043
        %v7102 = vsel %vm5496, %v7057, %v7101
        %v7103 = vsel %vm5498, %v7064, %v7102
        %v7104 = vsel %vm5500, %v7071, %v7103
        %v7105 = vsel %vm5502, %v7078, %v7104
        %v7106 = vsel %vm5504, %v7085, %v7105
        %v7107 = vsel %vm5506, %v7092, %v7106
        %v7109 = vadd.f32 %v911, %v7107
        %v7110 = vsel %vm744, %v7109, 0.0
        %7111 = vadd.xlane.f32.xlu0 %v7110
        %v7112 = vpop.xlane.xlu0 %7111
        %v7113 = vrcp.pop 64.0
        %v7114 = vmul.f32 %v7112, %v7113
        %v7115 = vsub.f32 %v7109, %v7114
        %v7116 = vmul.f32 %v7115, %v7115
        %v7117 = vsel %vm744, %v7116, 0.0
        %7118 = vadd.xlane.f32.xlu0 %v7117
        %v7119 = vpop.xlane.xlu0 %7118
        %v7120 = vmul.f32 %v7119, %v7113
        %v7121 = vadd.f32 %v7120, 1e-05
        %v7122 = vrsqrt.pop %v7121
        %v7123 = vmul.f32 %v7115, %v7122
        %v7124 = vld [vmem:[%s18] sm:$0x1]
        %v7126 = vlaneseq
        %v7127 = vshrl.u32 %v7126, 7
        %v7128 = vsub.s32 0, %v7127
        %v7129 = vrot.slane %v7124, %v7128
        %v7131 = vmul.f32 %v7123, %v7129
        %v7132 = vld [vmem:[%s19] sm:$0x1]
        %v7134 = vlaneseq
        %v7135 = vshrl.u32 %v7134, 7
        %v7136 = vsub.s32 0, %v7135
        %v7137 = vrot.slane %v7132, %v7136
        %v7139 = vadd.f32 %v7131, %v7137
        %s7140 = scalar_lea.vmem %s14, 128
        %v7141 = vld [vmem:[%s7140] sm:$0xff]
        %v7142 = vld [vmem:[%s7140 + $0x8] sm:$0xff]
        %v7143 = vld [vmem:[%s7140 + $0x10] sm:$0xff]
        %v7144 = vld [vmem:[%s7140 + $0x18] sm:$0xff]
        %v7145 = vld [vmem:[%s7140 + $0x20] sm:$0xff]
        %v7146 = vld [vmem:[%s7140 + $0x28] sm:$0xff]
        %v7147 = vld [vmem:[%s7140 + $0x30] sm:$0xff]
        %v7148 = vld [vmem:[%s7140 + $0x38] sm:$0xff]
        %v7149 = vld [vmem:[%s7140 + $0x40] sm:$0xff]
        %v7150 = vld [vmem:[%s7140 + $0x48] sm:$0xff]
        %v7151 = vld [vmem:[%s7140 + $0x50] sm:$0xff]
        %v7152 = vld [vmem:[%s7140 + $0x58] sm:$0xff]
        %v7153 = vld [vmem:[%s7140 + $0x60] sm:$0xff]
        %v7154 = vld [vmem:[%s7140 + $0x68] sm:$0xff]
        %v7155 = vld [vmem:[%s7140 + $0x70] sm:$0xff]
        %v7156 = vld [vmem:[%s7140 + $0x78] sm:$0xff]
        %s7157 = scalar_lea.vmem %s15, 2
        %v7158 = vld [vmem:[%s7157] sm:$0x3]
        %v7160 = vlaneseq
        %v7161 = vshrl.u32 %v7160, 7
        %v7162 = vsub.s32 0, %v7161
        %v7163 = vrot.slane %v7158, %v7162
        %v7164 = vlaneseq
        %v7165 = vshrl.u32 %v7164, 7
        %v7166 = vsub.s32 1, %v7165
        %v7167 = vrot.slane %v7158, %v7166
        %v7171 = vsel %vm744, %v7139, 0
        %7173 = vmatprep.subr.mxu0 %v7142
        %7174 = vmatpush1.msra.mxu0 %v7141
        %7175 = vmatprep.subr.mxu0 %v7144
        %7176 = vmatpush1.msra.mxu0 %v7143
        %7177 = vmatprep.subr.mxu0 %v7146
        %7178 = vmatpush1.msra.mxu0 %v7145
        %7179 = vmatprep.subr.mxu0 %v7148
        %7180 = vmatpush1.msra.mxu0 %v7147
        %7181 = vmatprep.subr.mxu0 %v7150
        %7182 = vmatpush1.msra.mxu0 %v7149
        %7183 = vmatprep.subr.mxu0 %v7152
        %7184 = vmatpush1.msra.mxu0 %v7151
        %7185 = vmatprep.subr.mxu0 %v7154
        %7186 = vmatpush1.msra.mxu0 %v7153
        %7187 = vmatprep.subr.mxu0 %v7156
        %7188 = vmatpush1.msra.mxu0 %v7155
        %7189 = vmatprep.subr.mxu0 0.0
        %7190 = vmatpush1.msra.mxu0 0.0
        %7191 = vmatprep.subr.mxu0 0.0
        %7192 = vmatpush1.msra.mxu0 0.0
        %7193 = vmatprep.subr.mxu0 0.0
        %7194 = vmatpush1.msra.mxu0 0.0
        %7195 = vmatprep.subr.mxu0 0.0
        %7196 = vmatpush1.msra.mxu0 0.0
        %7197 = vmatprep.subr.mxu0 0.0
        %7198 = vmatpush1.msra.mxu0 0.0
        %7199 = vmatprep.subr.mxu0 0.0
        %7200 = vmatpush1.msra.mxu0 0.0
        %7201 = vmatprep.subr.mxu0 0.0
        %7202 = vmatpush1.msra.mxu0 0.0
        %7203 = vmatprep.subr.mxu0 0.0
        %7204 = vmatpush1.msra.mxu0 0.0
        %7205 = vmatprep.subr.mxu0 0.0
        %7206 = vmatpush1.msra.mxu0 0.0
        %7207 = vmatprep.subr.mxu0 0.0
        %7208 = vmatpush1.msra.mxu0 0.0
        %7209 = vmatprep.subr.mxu0 0.0
        %7210 = vmatpush1.msra.mxu0 0.0
        %7211 = vmatprep.subr.mxu0 0.0
        %7212 = vmatpush1.msra.mxu0 0.0
        %7213 = vmatprep.subr.mxu0 0.0
        %7214 = vmatpush1.msra.mxu0 0.0
        %7215 = vmatprep.subr.mxu0 0.0
        %7216 = vmatpush1.msra.mxu0 0.0
        %7217 = vmatprep.subr.mxu0 0.0
        %7218 = vmatpush1.msra.mxu0 0.0
        %7219 = vmatprep.subr.mxu0 0.0
        %7220 = vmatpush1.msra.mxu0 0.0
        %7221 = vmatprep.subr.mxu0 0.0
        %7222 = vmatpush1.msra.mxu0 0.0
        %7223 = vmatprep.subr.mxu0 0.0
        %7224 = vmatpush1.msra.mxu0 0.0
        %7225 = vmatprep.subr.mxu0 0.0
        %7226 = vmatpush1.msra.mxu0 0.0
        %7227 = vmatprep.subr.mxu0 0.0
        %7228 = vmatpush1.msra.mxu0 0.0
        %7229 = vmatprep.subr.mxu0 0.0
        %7230 = vmatpush1.msra.mxu0 0.0
        %7231 = vmatprep.subr.mxu0 0.0
        %7232 = vmatpush1.msra.mxu0 0.0
        %7233 = vmatprep.subr.mxu0 0.0
        %7234 = vmatpush1.msra.mxu0 0.0
        %7235 = vmatprep.subr.mxu0 0.0
        %7236 = vmatpush1.msra.mxu0 0.0
        %7237 = vmatprep.mubr.f32.mxu0 0.0
        %7238 = vmatmul.mubr.f32.gmra.mrb[0].mxu0 %v7171
        %v7239 = vpop.f32.mrb[0].mxu0
        %v7240 = vadd.f32 %v7163, %v7239
        %v7241 = vpop.f32.mrb[0].mxu0
        %v7242 = vadd.f32 %v7167, %v7241
        %7243 = vdwg.mxu0
        %s7244 = scalar_lea.vmem [#allocation9], 64
        %v7245 = vld [vmem:[%s7244] sm:$0xff]
        %v7246 = vld [vmem:[%s7244 + $0x8] sm:$0xff]
        %v7247 = vld [vmem:[%s7244 + $0x10] sm:$0xff]
        %v7248 = vld [vmem:[%s7244 + $0x18] sm:$0xff]
        %v7249 = vld [vmem:[%s7244 + $0x20] sm:$0xff]
        %v7250 = vld [vmem:[%s7244 + $0x28] sm:$0xff]
        %v7251 = vld [vmem:[%s7244 + $0x30] sm:$0xff]
        %v7252 = vld [vmem:[%s7244 + $0x38] sm:$0xff]
        %s7253 = scalar_lea.vmem %s17, 1
        %v7254 = vld [vmem:[%s7253] sm:$0x1]
        %v7256 = vlaneseq
        %v7257 = vshrl.u32 %v7256, 7
        %v7258 = vsub.s32 0, %v7257
        %v7259 = vrot.slane %v7254, %v7258
        %7261 = vmatprep.subr.mxu0 0.0
        %7262 = vmatpush1.msra.mxu0 %v7245
        %7263 = vmatprep.subr.mxu0 0.0
        %7264 = vmatpush1.msra.mxu0 %v7246
        %7265 = vmatprep.subr.mxu0 0.0
        %7266 = vmatpush1.msra.mxu0 %v7247
        %7267 = vmatprep.subr.mxu0 0.0
        %7268 = vmatpush1.msra.mxu0 %v7248
        %7269 = vmatprep.subr.mxu0 0.0
        %7270 = vmatpush1.msra.mxu0 %v7249
        %7271 = vmatprep.subr.mxu0 0.0
        %7272 = vmatpush1.msra.mxu0 %v7250
        %7273 = vmatprep.subr.mxu0 0.0
        %7274 = vmatpush1.msra.mxu0 %v7251
        %7275 = vmatprep.subr.mxu0 0.0
        %7276 = vmatpush1.msra.mxu0 %v7252
        %7277 = vmatprep.subr.mxu0 0.0
        %7278 = vmatpush1.msra.mxu0 0.0
        %7279 = vmatprep.subr.mxu0 0.0
        %7280 = vmatpush1.msra.mxu0 0.0
        %7281 = vmatprep.subr.mxu0 0.0
        %7282 = vmatpush1.msra.mxu0 0.0
        %7283 = vmatprep.subr.mxu0 0.0
        %7284 = vmatpush1.msra.mxu0 0.0
        %7285 = vmatprep.subr.mxu0 0.0
        %7286 = vmatpush1.msra.mxu0 0.0
        %7287 = vmatprep.subr.mxu0 0.0
        %7288 = vmatpush1.msra.mxu0 0.0
        %7289 = vmatprep.subr.mxu0 0.0
        %7290 = vmatpush1.msra.mxu0 0.0
        %7291 = vmatprep.subr.mxu0 0.0
        %7292 = vmatpush1.msra.mxu0 0.0
        %7293 = vmatprep.subr.mxu0 0.0
        %7294 = vmatpush1.msra.mxu0 0.0
        %7295 = vmatprep.subr.mxu0 0.0
        %7296 = vmatpush1.msra.mxu0 0.0
        %7297 = vmatprep.subr.mxu0 0.0
        %7298 = vmatpush1.msra.mxu0 0.0
        %7299 = vmatprep.subr.mxu0 0.0
        %7300 = vmatpush1.msra.mxu0 0.0
        %7301 = vmatprep.subr.mxu0 0.0
        %7302 = vmatpush1.msra.mxu0 0.0
        %7303 = vmatprep.subr.mxu0 0.0
        %7304 = vmatpush1.msra.mxu0 0.0
        %7305 = vmatprep.subr.mxu0 0.0
        %7306 = vmatpush1.msra.mxu0 0.0
        %7307 = vmatprep.subr.mxu0 0.0
        %7308 = vmatpush1.msra.mxu0 0.0
        %7309 = vmatprep.subr.mxu0 0.0
        %7310 = vmatpush1.msra.mxu0 0.0
        %7311 = vmatprep.subr.mxu0 0.0
        %7312 = vmatpush1.msra.mxu0 0.0
        %7313 = vmatprep.subr.mxu0 0.0
        %7314 = vmatpush1.msra.mxu0 0.0
        %7315 = vmatprep.subr.mxu0 0.0
        %7316 = vmatpush1.msra.mxu0 0.0
        %7317 = vmatprep.subr.mxu0 0.0
        %7318 = vmatpush1.msra.mxu0 0.0
        %7319 = vmatprep.subr.mxu0 0.0
        %7320 = vmatpush1.msra.mxu0 0.0
        %7321 = vmatprep.subr.mxu0 0.0
        %7322 = vmatpush1.msra.mxu0 0.0
        %7323 = vmatprep.subr.mxu0 0.0
        %7324 = vmatpush1.msra.mxu0 0.0
        %7325 = vmatprep.mubr.f32.mxu0 0.0
        %7326 = vmatmul.mubr.f32.gmra.mrb[0].mxu0 %v6262
        %v7327 = vpop.f32.mrb[0].mxu0
        %v7328 = vadd.f32 %v7259, %v7327
        %v7329 = vpop.f32.mrb[0].mxu0
        %7330 = vmatprep.mubr.f32.mxu0 0.0
        %7331 = vmatmul.mubr.f32.gmra.mrb[0].mxu0 %v6265
        %v7332 = vpop.f32.mrb[0].mxu0
        %v7333 = vadd.f32 %v7259, %v7332
        %v7334 = vpop.f32.mrb[0].mxu0
        %7335 = vmatprep.mubr.f32.mxu0 0.0
        %7336 = vmatmul.mubr.f32.gmra.mrb[0].mxu0 %v6268
        %v7337 = vpop.f32.mrb[0].mxu0
        %v7338 = vadd.f32 %v7259, %v7337
        %v7339 = vpop.f32.mrb[0].mxu0
        %7340 = vmatprep.mubr.f32.mxu0 0.0
        %7341 = vmatmul.mubr.f32.gmra.mrb[0].mxu0 %v6271
        %v7342 = vpop.f32.mrb[0].mxu0
        %v7343 = vadd.f32 %v7259, %v7342
        %v7344 = vpop.f32.mrb[0].mxu0
        %7345 = vmatprep.mubr.f32.mxu0 0.0
        %7346 = vmatmul.mubr.f32.gmra.mrb[0].mxu0 %v6274
        %v7347 = vpop.f32.mrb[0].mxu0
        %v7348 = vadd.f32 %v7259, %v7347
        %v7349 = vpop.f32.mrb[0].mxu0
        %7350 = vmatprep.mubr.f32.mxu0 0.0
        %7351 = vmatmul.mubr.f32.gmra.mrb[0].mxu0 %v6277
        %v7352 = vpop.f32.mrb[0].mxu0
        %v7353 = vadd.f32 %v7259, %v7352
        %v7354 = vpop.f32.mrb[0].mxu0
        %7355 = vmatprep.mubr.f32.mxu0 0.0
        %7356 = vmatmul.mubr.f32.gmra.mrb[0].mxu0 %v6280
        %v7357 = vpop.f32.mrb[0].mxu0
        %v7358 = vadd.f32 %v7259, %v7357
        %v7359 = vpop.f32.mrb[0].mxu0
        %7360 = vmatprep.mubr.f32.mxu0 0.0
        %7361 = vmatmul.mubr.f32.gmra.mrb[0].mxu0 %v6283
        %v7362 = vpop.f32.mrb[0].mxu0
        %v7363 = vadd.f32 %v7259, %v7362
        %v7364 = vpop.f32.mrb[0].mxu0
        %7365 = vdwg.mxu0
        %v7366 = vmul.f32 %v7328, 0.5
        %v7367 = vmul.f32 %v7333, 0.5
        %v7368 = vmul.f32 %v7338, 0.5
        %v7369 = vmul.f32 %v7343, 0.5
        %v7370 = vmul.f32 %v7348, 0.5
        %v7371 = vmul.f32 %v7353, 0.5
        %v7372 = vmul.f32 %v7358, 0.5
        %v7373 = vmul.f32 %v7363, 0.5
        %7382 = vrot.lane.b32.xlu0 %v7366, 64
        %v7383 = vpop.permute.xlu0 %7382
        %7384 = vrot.lane.b32.xlu0 %v7367, 64
        %v7385 = vpop.permute.xlu0 %7384
        %7386 = vrot.lane.b32.xlu0 %v7368, 64
        %v7387 = vpop.permute.xlu0 %7386
        %7388 = vrot.lane.b32.xlu0 %v7369, 64
        %v7389 = vpop.permute.xlu0 %7388
        %7390 = vrot.lane.b32.xlu0 %v7370, 64
        %v7391 = vpop.permute.xlu0 %7390
        %7392 = vrot.lane.b32.xlu0 %v7371, 64
        %v7393 = vpop.permute.xlu0 %7392
        %7394 = vrot.lane.b32.xlu0 %v7372, 64
        %v7395 = vpop.permute.xlu0 %7394
        %7396 = vrot.lane.b32.xlu0 %v7373, 64
        %v7397 = vpop.permute.xlu0 %7396
        %v7406 = vadd.f32 %v7240, %v7383
        %v7407 = vadd.f32 %v7240, %v7385
        %v7408 = vadd.f32 %v7240, %v7387
        %v7409 = vadd.f32 %v7240, %v7389
        %v7410 = vadd.f32 %v7240, %v7391
        %v7411 = vadd.f32 %v7240, %v7393
        %v7412 = vadd.f32 %v7240, %v7395
        %v7413 = vadd.f32 %v7240, %v7397
        %v7414 = vadd.f32 %v7242, %v7383
        %v7415 = vadd.f32 %v7242, %v7385
        %v7416 = vadd.f32 %v7242, %v7387
        %v7417 = vadd.f32 %v7242, %v7389
        %v7418 = vadd.f32 %v7242, %v7391
        %v7419 = vadd.f32 %v7242, %v7393
        %v7420 = vadd.f32 %v7242, %v7395
        %v7421 = vadd.f32 %v7242, %v7397
        %v7423 = vcombine.high %v7240, %v7240
        %v7425 = vunpack.c.l.s4 1966171168
        %v7426 = vunpack.c.0.s8 %v7425
        %v7427 = vlaneseq
        %v7428 = vshrl.u32 %v7427, 7
        %v7429 = vsub.s32 %v7426, %v7428
        %v7430 = vrot.slane %v7240, %v7429
        %v7432 = vunpack.c.l.s4 1966171168
        %v7433 = vunpack.c.0.s8 %v7432
        %v7434 = vlaneseq
        %v7435 = vshrl.u32 %v7434, 7
        %v7436 = vsub.s32 %v7433, %v7435
        %v7437 = vrot.slane %v7423, %v7436
        %v7438 = vcombine.high %v7430, %v7430
        %v7439 = vcombine.high %v7437, %v7437
        %v7441 = vunpack.c.l.s4 1966171168
        %v7442 = vunpack.c.0.s8 %v7441
        %v7443 = vlaneseq
        %v7444 = vshrl.u32 %v7443, 7
        %v7445 = vsub.s32 %v7442, %v7444
        %v7446 = vrot.slane %v7430, %v7445
        %v7448 = vunpack.c.l.s4 1966171168
        %v7449 = vunpack.c.0.s8 %v7448
        %v7450 = vlaneseq
        %v7451 = vshrl.u32 %v7450, 7
        %v7452 = vsub.s32 %v7449, %v7451
        %v7453 = vrot.slane %v7437, %v7452
        %v7455 = vunpack.c.l.s4 1966171168
        %v7456 = vunpack.c.0.s8 %v7455
        %v7457 = vlaneseq
        %v7458 = vshrl.u32 %v7457, 7
        %v7459 = vsub.s32 %v7456, %v7458
        %v7460 = vrot.slane %v7438, %v7459
        %v7462 = vunpack.c.l.s4 1966171168
        %v7463 = vunpack.c.0.s8 %v7462
        %v7464 = vlaneseq
        %v7465 = vshrl.u32 %v7464, 7
        %v7466 = vsub.s32 %v7463, %v7465
        %v7467 = vrot.slane %v7439, %v7466
        %v7468 = vcombine.high %v7446, %v7446
        %v7469 = vcombine.high %v7453, %v7453
        %v7470 = vcombine.high %v7460, %v7460
        %v7471 = vcombine.high %v7467, %v7467
        %v7472 = vlaneseq
        %v7473 = vshrl.u32 %v7472, 7
        %v7474 = vsub.s32 0, %v7473
        %v7475 = vrot.slane %v7446, %v7474
        %v7476 = vlaneseq
        %v7477 = vshrl.u32 %v7476, 7
        %v7478 = vsub.s32 0, %v7477
        %v7479 = vrot.slane %v7460, %v7478
        %v7480 = vlaneseq
        %v7481 = vshrl.u32 %v7480, 7
        %v7482 = vsub.s32 0, %v7481
        %v7483 = vrot.slane %v7468, %v7482
        %v7484 = vlaneseq
        %v7485 = vshrl.u32 %v7484, 7
        %v7486 = vsub.s32 0, %v7485
        %v7487 = vrot.slane %v7470, %v7486
        %v7488 = vlaneseq
        %v7489 = vshrl.u32 %v7488, 7
        %v7490 = vsub.s32 0, %v7489
        %v7491 = vrot.slane %v7453, %v7490
        %v7492 = vlaneseq
        %v7493 = vshrl.u32 %v7492, 7
        %v7494 = vsub.s32 0, %v7493
        %v7495 = vrot.slane %v7467, %v7494
        %v7496 = vlaneseq
        %v7497 = vshrl.u32 %v7496, 7
        %v7498 = vsub.s32 0, %v7497
        %v7499 = vrot.slane %v7469, %v7498
        %v7500 = vlaneseq
        %v7501 = vshrl.u32 %v7500, 7
        %v7502 = vsub.s32 0, %v7501
        %v7503 = vrot.slane %v7471, %v7502
        %7520 = vrot.lane.b32.xlu0 %v7406, 64
        %v7521 = vpop.permute.xlu0 %7520
        %7522 = vrot.lane.b32.xlu0 %v7407, 64
        %v7523 = vpop.permute.xlu0 %7522
        %7524 = vrot.lane.b32.xlu0 %v7408, 64
        %v7525 = vpop.permute.xlu0 %7524
        %7526 = vrot.lane.b32.xlu0 %v7409, 64
        %v7527 = vpop.permute.xlu0 %7526
        %7528 = vrot.lane.b32.xlu0 %v7410, 64
        %v7529 = vpop.permute.xlu0 %7528
        %7530 = vrot.lane.b32.xlu0 %v7411, 64
        %v7531 = vpop.permute.xlu0 %7530
        %7532 = vrot.lane.b32.xlu0 %v7412, 64
        %v7533 = vpop.permute.xlu0 %7532
        %7534 = vrot.lane.b32.xlu0 %v7413, 64
        %v7535 = vpop.permute.xlu0 %7534
        %v7544 = vmul.f32 %v7475, %v7521
        %v7545 = vmul.f32 %v7479, %v7523
        %v7546 = vmul.f32 %v7483, %v7525
        %v7547 = vmul.f32 %v7487, %v7527
        %v7548 = vmul.f32 %v7491, %v7529
        %v7549 = vmul.f32 %v7495, %v7531
        %v7550 = vmul.f32 %v7499, %v7533
        %v7551 = vmul.f32 %v7503, %v7535
        %v7553 = vsel %vm744, %v7544, 0
        %v7556 = vsel %vm744, %v7545, 0
        %v7559 = vsel %vm744, %v7546, 0
        %v7562 = vsel %vm744, %v7547, 0
        %v7565 = vsel %vm744, %v7548, 0
        %v7568 = vsel %vm744, %v7549, 0
        %v7571 = vsel %vm744, %v7550, 0
        %v7574 = vsel %vm744, %v7551, 0
        %7576 = vmatprep.subr.mxu0 0.0
        %7577 = vmatpush1.msra.mxu0 %v6135
        %7578 = vmatprep.subr.mxu0 0.0
        %7579 = vmatpush1.msra.mxu0 %v6136
        %7580 = vmatprep.subr.mxu0 0.0
        %7581 = vmatpush1.msra.mxu0 %v6137
        %7582 = vmatprep.subr.mxu0 0.0
        %7583 = vmatpush1.msra.mxu0 %v6138
        %7584 = vmatprep.subr.mxu0 0.0
        %7585 = vmatpush1.msra.mxu0 %v6139
        %7586 = vmatprep.subr.mxu0 0.0
        %7587 = vmatpush1.msra.mxu0 %v6140
        %7588 = vmatprep.subr.mxu0 0.0
        %7589 = vmatpush1.msra.mxu0 %v6141
        %7590 = vmatprep.subr.mxu0 0.0
        %7591 = vmatpush1.msra.mxu0 %v6142
        %7592 = vmatprep.subr.mxu0 0.0
        %7593 = vmatpush1.msra.mxu0 0.0
        %7594 = vmatprep.subr.mxu0 0.0
        %7595 = vmatpush1.msra.mxu0 0.0
        %7596 = vmatprep.subr.mxu0 0.0
        %7597 = vmatpush1.msra.mxu0 0.0
        %7598 = vmatprep.subr.mxu0 0.0
        %7599 = vmatpush1.msra.mxu0 0.0
        %7600 = vmatprep.subr.mxu0 0.0
        %7601 = vmatpush1.msra.mxu0 0.0
        %7602 = vmatprep.subr.mxu0 0.0
        %7603 = vmatpush1.msra.mxu0 0.0
        %7604 = vmatprep.subr.mxu0 0.0
        %7605 = vmatpush1.msra.mxu0 0.0
        %7606 = vmatprep.subr.mxu0 0.0
        %7607 = vmatpush1.msra.mxu0 0.0
        %7608 = vmatprep.subr.mxu0 0.0
        %7609 = vmatpush1.msra.mxu0 0.0
        %7610 = vmatprep.subr.mxu0 0.0
        %7611 = vmatpush1.msra.mxu0 0.0
        %7612 = vmatprep.subr.mxu0 0.0
        %7613 = vmatpush1.msra.mxu0 0.0
        %7614 = vmatprep.subr.mxu0 0.0
        %7615 = vmatpush1.msra.mxu0 0.0
        %7616 = vmatprep.subr.mxu0 0.0
        %7617 = vmatpush1.msra.mxu0 0.0
        %7618 = vmatprep.subr.mxu0 0.0
        %7619 = vmatpush1.msra.mxu0 0.0
        %7620 = vmatprep.subr.mxu0 0.0
        %7621 = vmatpush1.msra.mxu0 0.0
        %7622 = vmatprep.subr.mxu0 0.0
        %7623 = vmatpush1.msra.mxu0 0.0
        %7624 = vmatprep.subr.mxu0 0.0
        %7625 = vmatpush1.msra.mxu0 0.0
        %7626 = vmatprep.subr.mxu0 0.0
        %7627 = vmatpush1.msra.mxu0 0.0
        %7628 = vmatprep.subr.mxu0 0.0
        %7629 = vmatpush1.msra.mxu0 0.0
        %7630 = vmatprep.subr.mxu0 0.0
        %7631 = vmatpush1.msra.mxu0 0.0
        %7632 = vmatprep.subr.mxu0 0.0
        %7633 = vmatpush1.msra.mxu0 0.0
        %7634 = vmatprep.subr.mxu0 0.0
        %7635 = vmatpush1.msra.mxu0 0.0
        %7636 = vmatprep.subr.mxu0 0.0
        %7637 = vmatpush1.msra.mxu0 0.0
        %7638 = vmatprep.subr.mxu0 0.0
        %7639 = vmatpush1.msra.mxu0 0.0
        %7640 = vmatprep.mubr.f32.mxu0 0.0
        %7641 = vmatmul.mubr.f32.gmra.mrb[0].mxu0 %v7553
        %v7642 = vpop.f32.mrb[0].mxu0
        %v7643 = vadd.f32 0.0, %v7642
        %v7644 = vpop.f32.mrb[0].mxu0
        %7645 = vmatprep.mubr.f32.mxu0 0.0
        %7646 = vmatmul.mubr.f32.gmra.mrb[0].mxu0 %v7556
        %v7647 = vpop.f32.mrb[0].mxu0
        %v7648 = vadd.f32 0.0, %v7647
        %v7649 = vpop.f32.mrb[0].mxu0
        %7650 = vmatprep.mubr.f32.mxu0 0.0
        %7651 = vmatmul.mubr.f32.gmra.mrb[0].mxu0 %v7559
        %v7652 = vpop.f32.mrb[0].mxu0
        %v7653 = vadd.f32 0.0, %v7652
        %v7654 = vpop.f32.mrb[0].mxu0
        %7655 = vmatprep.mubr.f32.mxu0 0.0
        %7656 = vmatmul.mubr.f32.gmra.mrb[0].mxu0 %v7562
        %v7657 = vpop.f32.mrb[0].mxu0
        %v7658 = vadd.f32 0.0, %v7657
        %v7659 = vpop.f32.mrb[0].mxu0
        %7660 = vmatprep.mubr.f32.mxu0 0.0
        %7661 = vmatmul.mubr.f32.gmra.mrb[0].mxu0 %v7565
        %v7662 = vpop.f32.mrb[0].mxu0
        %v7663 = vadd.f32 0.0, %v7662
        %v7664 = vpop.f32.mrb[0].mxu0
        %7665 = vmatprep.mubr.f32.mxu0 0.0
        %7666 = vmatmul.mubr.f32.gmra.mrb[0].mxu0 %v7568
        %v7667 = vpop.f32.mrb[0].mxu0
        %v7668 = vadd.f32 0.0, %v7667
        %v7669 = vpop.f32.mrb[0].mxu0
        %7670 = vmatprep.mubr.f32.mxu0 0.0
        %7671 = vmatmul.mubr.f32.gmra.mrb[0].mxu0 %v7571
        %v7672 = vpop.f32.mrb[0].mxu0
        %v7673 = vadd.f32 0.0, %v7672
        %v7674 = vpop.f32.mrb[0].mxu0
        %7675 = vmatprep.mubr.f32.mxu0 0.0
        %7676 = vmatmul.mubr.f32.gmra.mrb[0].mxu0 %v7574
        %v7677 = vpop.f32.mrb[0].mxu0
        %v7678 = vadd.f32 0.0, %v7677
        %v7679 = vpop.f32.mrb[0].mxu0
        %7680 = vdwg.mxu0
        %v7681 = vmul.f32 %v7643, 0.25
        %v7682 = vmul.f32 %v7648, 0.25
        %v7683 = vmul.f32 %v7653, 0.25
        %v7684 = vmul.f32 %v7658, 0.25
        %v7685 = vmul.f32 %v7663, 0.25
        %v7686 = vmul.f32 %v7668, 0.25
        %v7687 = vmul.f32 %v7673, 0.25
        %v7688 = vmul.f32 %v7678, 0.25
        %v7689 = vsel %vm6729, -10000.0, %v7681
        %v7690 = vsel %vm6730, -10000.0, %v7682
        %v7691 = vsel %vm6731, -10000.0, %v7683
        %v7692 = vsel %vm6732, -10000.0, %v7684
        %v7693 = vsel %vm6733, -10000.0, %v7685
        %v7694 = vsel %vm6734, -10000.0, %v7686
        %v7695 = vsel %vm6735, -10000.0, %v7687
        %v7696 = vsel %vm6736, -10000.0, %v7688
        %v7697 = vsel %vm3047, %v7689, -inf
        %v7698 = vrot.slane %v7697, 4
        %v7699 = vmax.f32 %v7697, %v7698
        %v7700 = vrot.slane %v7699, 2
        %v7701 = vmax.f32 %v7699, %v7700
        %v7702 = vrot.slane %v7701, 1
        %v7703 = vmax.f32 %v7701, %v7702
        %v7704 = vsel %vm3047, %v7690, -inf
        %v7705 = vrot.slane %v7704, 4
        %v7706 = vmax.f32 %v7704, %v7705
        %v7707 = vrot.slane %v7706, 2
        %v7708 = vmax.f32 %v7706, %v7707
        %v7709 = vrot.slane %v7708, 1
        %v7710 = vmax.f32 %v7708, %v7709
        %v7711 = vsel %vm3047, %v7691, -inf
        %v7712 = vrot.slane %v7711, 4
        %v7713 = vmax.f32 %v7711, %v7712
        %v7714 = vrot.slane %v7713, 2
        %v7715 = vmax.f32 %v7713, %v7714
        %v7716 = vrot.slane %v7715, 1
        %v7717 = vmax.f32 %v7715, %v7716
        %v7718 = vsel %vm3047, %v7692, -inf
        %v7719 = vrot.slane %v7718, 4
        %v7720 = vmax.f32 %v7718, %v7719
        %v7721 = vrot.slane %v7720, 2
        %v7722 = vmax.f32 %v7720, %v7721
        %v7723 = vrot.slane %v7722, 1
        %v7724 = vmax.f32 %v7722, %v7723
        %v7725 = vsel %vm3047, %v7693, -inf
        %v7726 = vrot.slane %v7725, 4
        %v7727 = vmax.f32 %v7725, %v7726
        %v7728 = vrot.slane %v7727, 2
        %v7729 = vmax.f32 %v7727, %v7728
        %v7730 = vrot.slane %v7729, 1
        %v7731 = vmax.f32 %v7729, %v7730
        %v7732 = vsel %vm3047, %v7694, -inf
        %v7733 = vrot.slane %v7732, 4
        %v7734 = vmax.f32 %v7732, %v7733
        %v7735 = vrot.slane %v7734, 2
        %v7736 = vmax.f32 %v7734, %v7735
        %v7737 = vrot.slane %v7736, 1
        %v7738 = vmax.f32 %v7736, %v7737
        %v7739 = vsel %vm3047, %v7695, -inf
        %v7740 = vrot.slane %v7739, 4
        %v7741 = vmax.f32 %v7739, %v7740
        %v7742 = vrot.slane %v7741, 2
        %v7743 = vmax.f32 %v7741, %v7742
        %v7744 = vrot.slane %v7743, 1
        %v7745 = vmax.f32 %v7743, %v7744
        %v7746 = vsel %vm3047, %v7696, -inf
        %v7747 = vrot.slane %v7746, 4
        %v7748 = vmax.f32 %v7746, %v7747
        %v7749 = vrot.slane %v7748, 2
        %v7750 = vmax.f32 %v7748, %v7749
        %v7751 = vrot.slane %v7750, 1
        %v7752 = vmax.f32 %v7750, %v7751
        %v7753 = vsub.f32 %v7689, %v7703
        %v7754 = vsub.f32 %v7690, %v7710
        %v7755 = vsub.f32 %v7691, %v7717
        %v7756 = vsub.f32 %v7692, %v7724
        %v7757 = vsub.f32 %v7693, %v7731
        %v7758 = vsub.f32 %v7694, %v7738
        %v7759 = vsub.f32 %v7695, %v7745
        %v7760 = vsub.f32 %v7696, %v7752
        %v7761 = vmul.f32 %v7753, 1.442695
        %v7762 = vpow.pop %v7761
        %v7763 = vmul.f32 %v7754, 1.442695
        %v7764 = vpow.pop %v7763
        %v7765 = vmul.f32 %v7755, 1.442695
        %v7766 = vpow.pop %v7765
        %v7767 = vmul.f32 %v7756, 1.442695
        %v7768 = vpow.pop %v7767
        %v7769 = vmul.f32 %v7757, 1.442695
        %v7770 = vpow.pop %v7769
        %v7771 = vmul.f32 %v7758, 1.442695
        %v7772 = vpow.pop %v7771
        %v7773 = vmul.f32 %v7759, 1.442695
        %v7774 = vpow.pop %v7773
        %v7775 = vmul.f32 %v7760, 1.442695
        %v7776 = vpow.pop %v7775
        %v7777 = vsel %vm3047, %v7762, 0.0
        %v7778 = vrot.slane %v7777, 4
        %v7779 = vadd.f32 %v7777, %v7778
        %v7780 = vrot.slane %v7779, 2
        %v7781 = vadd.f32 %v7779, %v7780
        %v7782 = vrot.slane %v7781, 1
        %v7783 = vadd.f32 %v7781, %v7782
        %v7784 = vsel %vm3047, %v7764, 0.0
        %v7785 = vrot.slane %v7784, 4
        %v7786 = vadd.f32 %v7784, %v7785
        %v7787 = vrot.slane %v7786, 2
        %v7788 = vadd.f32 %v7786, %v7787
        %v7789 = vrot.slane %v7788, 1
        %v7790 = vadd.f32 %v7788, %v7789
        %v7791 = vsel %vm3047, %v7766, 0.0
        %v7792 = vrot.slane %v7791, 4
        %v7793 = vadd.f32 %v7791, %v7792
        %v7794 = vrot.slane %v7793, 2
        %v7795 = vadd.f32 %v7793, %v7794
        %v7796 = vrot.slane %v7795, 1
        %v7797 = vadd.f32 %v7795, %v7796
        %v7798 = vsel %vm3047, %v7768, 0.0
        %v7799 = vrot.slane %v7798, 4
        %v7800 = vadd.f32 %v7798, %v7799
        %v7801 = vrot.slane %v7800, 2
        %v7802 = vadd.f32 %v7800, %v7801
        %v7803 = vrot.slane %v7802, 1
        %v7804 = vadd.f32 %v7802, %v7803
        %v7805 = vsel %vm3047, %v7770, 0.0
        %v7806 = vrot.slane %v7805, 4
        %v7807 = vadd.f32 %v7805, %v7806
        %v7808 = vrot.slane %v7807, 2
        %v7809 = vadd.f32 %v7807, %v7808
        %v7810 = vrot.slane %v7809, 1
        %v7811 = vadd.f32 %v7809, %v7810
        %v7812 = vsel %vm3047, %v7772, 0.0
        %v7813 = vrot.slane %v7812, 4
        %v7814 = vadd.f32 %v7812, %v7813
        %v7815 = vrot.slane %v7814, 2
        %v7816 = vadd.f32 %v7814, %v7815
        %v7817 = vrot.slane %v7816, 1
        %v7818 = vadd.f32 %v7816, %v7817
        %v7819 = vsel %vm3047, %v7774, 0.0
        %v7820 = vrot.slane %v7819, 4
        %v7821 = vadd.f32 %v7819, %v7820
        %v7822 = vrot.slane %v7821, 2
        %v7823 = vadd.f32 %v7821, %v7822
        %v7824 = vrot.slane %v7823, 1
        %v7825 = vadd.f32 %v7823, %v7824
        %v7826 = vsel %vm3047, %v7776, 0.0
        %v7827 = vrot.slane %v7826, 4
        %v7828 = vadd.f32 %v7826, %v7827
        %v7829 = vrot.slane %v7828, 2
        %v7830 = vadd.f32 %v7828, %v7829
        %v7831 = vrot.slane %v7830, 1
        %v7832 = vadd.f32 %v7830, %v7831
        %v7833 = vrcp.pop %v7783
        %v7834 = vmul.f32 %v7762, %v7833
        %v7835 = vrcp.pop %v7790
        %v7836 = vmul.f32 %v7764, %v7835
        %v7837 = vrcp.pop %v7797
        %v7838 = vmul.f32 %v7766, %v7837
        %v7839 = vrcp.pop %v7804
        %v7840 = vmul.f32 %v7768, %v7839
        %v7841 = vrcp.pop %v7811
        %v7842 = vmul.f32 %v7770, %v7841
        %v7843 = vrcp.pop %v7818
        %v7844 = vmul.f32 %v7772, %v7843
        %v7845 = vrcp.pop %v7825
        %v7846 = vmul.f32 %v7774, %v7845
        %v7847 = vrcp.pop %v7832
        %v7848 = vmul.f32 %v7776, %v7847
        %v7850 = vsel %vm3047, %v7834, 0
        %v7853 = vsel %vm3047, %v7836, 0
        %v7856 = vsel %vm3047, %v7838, 0
        %v7859 = vsel %vm3047, %v7840, 0
        %v7862 = vsel %vm3047, %v7842, 0
        %v7865 = vsel %vm3047, %v7844, 0
        %v7868 = vsel %vm3047, %v7846, 0
        %v7871 = vsel %vm3047, %v7848, 0
        %7873 = vmatprep.subr.mxu0 0.0
        %7874 = vmatpush1.msra.mxu0 %v6922
        %7875 = vmatprep.subr.mxu0 0.0
        %7876 = vmatpush1.msra.mxu0 0.0
        %7877 = vmatprep.subr.mxu0 0.0
        %7878 = vmatpush1.msra.mxu0 0.0
        %7879 = vmatprep.subr.mxu0 0.0
        %7880 = vmatpush1.msra.mxu0 0.0
        %7881 = vmatprep.subr.mxu0 0.0
        %7882 = vmatpush1.msra.mxu0 0.0
        %7883 = vmatprep.subr.mxu0 0.0
        %7884 = vmatpush1.msra.mxu0 0.0
        %7885 = vmatprep.subr.mxu0 0.0
        %7886 = vmatpush1.msra.mxu0 0.0
        %7887 = vmatprep.subr.mxu0 0.0
        %7888 = vmatpush1.msra.mxu0 0.0
        %7889 = vmatprep.subr.mxu0 0.0
        %7890 = vmatpush1.msra.mxu0 0.0
        %7891 = vmatprep.subr.mxu0 0.0
        %7892 = vmatpush1.msra.mxu0 0.0
        %7893 = vmatprep.subr.mxu0 0.0
        %7894 = vmatpush1.msra.mxu0 0.0
        %7895 = vmatprep.subr.mxu0 0.0
        %7896 = vmatpush1.msra.mxu0 0.0
        %7897 = vmatprep.subr.mxu0 0.0
        %7898 = vmatpush1.msra.mxu0 0.0
        %7899 = vmatprep.subr.mxu0 0.0
        %7900 = vmatpush1.msra.mxu0 0.0
        %7901 = vmatprep.subr.mxu0 0.0
        %7902 = vmatpush1.msra.mxu0 0.0
        %7903 = vmatprep.subr.mxu0 0.0
        %7904 = vmatpush1.msra.mxu0 0.0
        %7905 = vmatprep.subr.mxu0 0.0
        %7906 = vmatpush1.msra.mxu0 0.0
        %7907 = vmatprep.subr.mxu0 0.0
        %7908 = vmatpush1.msra.mxu0 0.0
        %7909 = vmatprep.subr.mxu0 0.0
        %7910 = vmatpush1.msra.mxu0 0.0
        %7911 = vmatprep.subr.mxu0 0.0
        %7912 = vmatpush1.msra.mxu0 0.0
        %7913 = vmatprep.subr.mxu0 0.0
        %7914 = vmatpush1.msra.mxu0 0.0
        %7915 = vmatprep.subr.mxu0 0.0
        %7916 = vmatpush1.msra.mxu0 0.0
        %7917 = vmatprep.subr.mxu0 0.0
        %7918 = vmatpush1.msra.mxu0 0.0
        %7919 = vmatprep.subr.mxu0 0.0
        %7920 = vmatpush1.msra.mxu0 0.0
        %7921 = vmatprep.subr.mxu0 0.0
        %7922 = vmatpush1.msra.mxu0 0.0
        %7923 = vmatprep.subr.mxu0 0.0
        %7924 = vmatpush1.msra.mxu0 0.0
        %7925 = vmatprep.subr.mxu0 0.0
        %7926 = vmatpush1.msra.mxu0 0.0
        %7927 = vmatprep.subr.mxu0 0.0
        %7928 = vmatpush1.msra.mxu0 0.0
        %7929 = vmatprep.subr.mxu0 0.0
        %7930 = vmatpush1.msra.mxu0 0.0
        %7931 = vmatprep.subr.mxu0 0.0
        %7932 = vmatpush1.msra.mxu0 0.0
        %7933 = vmatprep.subr.mxu0 0.0
        %7934 = vmatpush1.msra.mxu0 0.0
        %7935 = vmatprep.subr.mxu0 0.0
        %7936 = vmatpush1.msra.mxu0 0.0
        %7937 = vmatprep.mubr.f32.mxu0 0.0
        %7938 = vmatmul.mubr.f32.gmra.mrb[0].mxu0 %v7850
        %v7939 = vpop.f32.mrb[0].mxu0
        %v7940 = vadd.f32 0.0, %v7939
        %v7941 = vpop.f32.mrb[0].mxu0
        %7942 = vmatprep.mubr.f32.mxu0 0.0
        %7943 = vmatmul.mubr.f32.gmra.mrb[0].mxu0 %v7853
        %v7944 = vpop.f32.mrb[0].mxu0
        %v7945 = vadd.f32 0.0, %v7944
        %v7946 = vpop.f32.mrb[0].mxu0
        %7947 = vmatprep.mubr.f32.mxu0 0.0
        %7948 = vmatmul.mubr.f32.gmra.mrb[0].mxu0 %v7856
        %v7949 = vpop.f32.mrb[0].mxu0
        %v7950 = vadd.f32 0.0, %v7949
        %v7951 = vpop.f32.mrb[0].mxu0
        %7952 = vmatprep.mubr.f32.mxu0 0.0
        %7953 = vmatmul.mubr.f32.gmra.mrb[0].mxu0 %v7859
        %v7954 = vpop.f32.mrb[0].mxu0
        %v7955 = vadd.f32 0.0, %v7954
        %v7956 = vpop.f32.mrb[0].mxu0
        %7957 = vmatprep.mubr.f32.mxu0 0.0
        %7958 = vmatmul.mubr.f32.gmra.mrb[0].mxu0 %v7862
        %v7959 = vpop.f32.mrb[0].mxu0
        %v7960 = vadd.f32 0.0, %v7959
        %v7961 = vpop.f32.mrb[0].mxu0
        %7962 = vmatprep.mubr.f32.mxu0 0.0
        %7963 = vmatmul.mubr.f32.gmra.mrb[0].mxu0 %v7865
        %v7964 = vpop.f32.mrb[0].mxu0
        %v7965 = vadd.f32 0.0, %v7964
        %v7966 = vpop.f32.mrb[0].mxu0
        %7967 = vmatprep.mubr.f32.mxu0 0.0
        %7968 = vmatmul.mubr.f32.gmra.mrb[0].mxu0 %v7868
        %v7969 = vpop.f32.mrb[0].mxu0
        %v7970 = vadd.f32 0.0, %v7969
        %v7971 = vpop.f32.mrb[0].mxu0
        %7972 = vmatprep.mubr.f32.mxu0 0.0
        %7973 = vmatmul.mubr.f32.gmra.mrb[0].mxu0 %v7871
        %v7974 = vpop.f32.mrb[0].mxu0
        %v7975 = vadd.f32 0.0, %v7974
        %v7976 = vpop.f32.mrb[0].mxu0
        %7977 = vdwg.mxu0
        %v7978 = vmul.f32 %v7940, %v7414
        %v7979 = vmul.f32 %v7945, %v7415
        %v7980 = vmul.f32 %v7950, %v7416
        %v7981 = vmul.f32 %v7955, %v7417
        %v7982 = vmul.f32 %v7960, %v7418
        %v7983 = vmul.f32 %v7965, %v7419
        %v7984 = vmul.f32 %v7970, %v7420
        %v7985 = vmul.f32 %v7975, %v7421
        %v7986 = vsel %vm744, %v7978, 0.0
        %v7987 = vrot.slane %v7986, 4
        %v7988 = vadd.f32 %v7986, %v7987
        %v7989 = vrot.slane %v7988, 2
        %v7990 = vadd.f32 %v7988, %v7989
        %v7991 = vrot.slane %v7990, 1
        %v7992 = vadd.f32 %v7990, %v7991
        %v7993 = vsel %vm744, %v7979, 0.0
        %v7994 = vrot.slane %v7993, 4
        %v7995 = vadd.f32 %v7993, %v7994
        %v7996 = vrot.slane %v7995, 2
        %v7997 = vadd.f32 %v7995, %v7996
        %v7998 = vrot.slane %v7997, 1
        %v7999 = vadd.f32 %v7997, %v7998
        %v8000 = vsel %vm744, %v7980, 0.0
        %v8001 = vrot.slane %v8000, 4
        %v8002 = vadd.f32 %v8000, %v8001
        %v8003 = vrot.slane %v8002, 2
        %v8004 = vadd.f32 %v8002, %v8003
        %v8005 = vrot.slane %v8004, 1
        %v8006 = vadd.f32 %v8004, %v8005
        %v8007 = vsel %vm744, %v7981, 0.0
        %v8008 = vrot.slane %v8007, 4
        %v8009 = vadd.f32 %v8007, %v8008
        %v8010 = vrot.slane %v8009, 2
        %v8011 = vadd.f32 %v8009, %v8010
        %v8012 = vrot.slane %v8011, 1
        %v8013 = vadd.f32 %v8011, %v8012
        %v8014 = vsel %vm744, %v7982, 0.0
        %v8015 = vrot.slane %v8014, 4
        %v8016 = vadd.f32 %v8014, %v8015
        %v8017 = vrot.slane %v8016, 2
        %v8018 = vadd.f32 %v8016, %v8017
        %v8019 = vrot.slane %v8018, 1
        %v8020 = vadd.f32 %v8018, %v8019
        %v8021 = vsel %vm744, %v7983, 0.0
        %v8022 = vrot.slane %v8021, 4
        %v8023 = vadd.f32 %v8021, %v8022
        %v8024 = vrot.slane %v8023, 2
        %v8025 = vadd.f32 %v8023, %v8024
        %v8026 = vrot.slane %v8025, 1
        %v8027 = vadd.f32 %v8025, %v8026
        %v8028 = vsel %vm744, %v7984, 0.0
        %v8029 = vrot.slane %v8028, 4
        %v8030 = vadd.f32 %v8028, %v8029
        %v8031 = vrot.slane %v8030, 2
        %v8032 = vadd.f32 %v8030, %v8031
        %v8033 = vrot.slane %v8032, 1
        %v8034 = vadd.f32 %v8032, %v8033
        %v8035 = vsel %vm744, %v7985, 0.0
        %v8036 = vrot.slane %v8035, 4
        %v8037 = vadd.f32 %v8035, %v8036
        %v8038 = vrot.slane %v8037, 2
        %v8039 = vadd.f32 %v8037, %v8038
        %v8040 = vrot.slane %v8039, 1
        %v8041 = vadd.f32 %v8039, %v8040
        %v8050 = vsel %vm5494, %v7999, %v7992
        %v8051 = vsel %vm5496, %v8006, %v8050
        %v8052 = vsel %vm5498, %v8013, %v8051
        %v8053 = vsel %vm5500, %v8020, %v8052
        %v8054 = vsel %vm5502, %v8027, %v8053
        %v8055 = vsel %vm5504, %v8034, %v8054
        %v8056 = vsel %vm5506, %v8041, %v8055
        %v8058 = vadd.f32 %v7139, %v8056
        %v8059 = vsel %vm744, %v8058, 0.0
        %8060 = vadd.xlane.f32.xlu0 %v8059
        %v8061 = vpop.xlane.xlu0 %8060
        %v8062 = vmul.f32 %v8061, %v7113
        %v8063 = vsub.f32 %v8058, %v8062
        %v8064 = vmul.f32 %v8063, %v8063
        %v8065 = vsel %vm744, %v8064, 0.0
        %8066 = vadd.xlane.f32.xlu0 %v8065
        %v8067 = vpop.xlane.xlu0 %8066
        %v8068 = vmul.f32 %v8067, %v7113
        %v8069 = vadd.f32 %v8068, 1e-05
        %v8070 = vrsqrt.pop %v8069
        %v8071 = vmul.f32 %v8063, %v8070
        %s8072 = scalar_lea.vmem %s18, 1
        %v8073 = vld [vmem:[%s8072] sm:$0x1]
        %v8075 = vlaneseq
        %v8076 = vshrl.u32 %v8075, 7
        %v8077 = vsub.s32 0, %v8076
        %v8078 = vrot.slane %v8073, %v8077
        %v8080 = vmul.f32 %v8071, %v8078
        %s8081 = scalar_lea.vmem %s19, 1
        %v8082 = vld [vmem:[%s8081] sm:$0x1]
        %v8084 = vlaneseq
        %v8085 = vshrl.u32 %v8084, 7
        %v8086 = vsub.s32 0, %v8085
        %v8087 = vrot.slane %v8082, %v8086
        %v8089 = vadd.f32 %v8080, %v8087
        %8090 = vst.msk [vmem:[%s730] sm:$0xff] %vm744, %v8089
        %s8091 = sand.u32 %s489, 1
        %s8092 = scalar_lea.sflag [#allocation5], %s8091
        %s8093 = sand.u32 %s489, 1
        %s8094 = smul.addr %s8093, 8
        %s8095 = scalar_lea.vmem [#allocation11], %s8094
        // Predicated region
        $region117: #{tpu_custom_call.1} parent=99 // pred_check
          %p8096 = pneg %p499
        $region118: #{tpu_custom_call.1} parent=99 // pred_check_branch
          %8098 = sbr.rel (%p8096) target = $region120
        $region119: #{tpu_custom_call.1} parent=99 // pred_region
          %s8100 = ssub.s32 128, 128
          %8101 = vsyncadd %s8092, %s8100
          %s8102 = smul.addr %s41, 128
          %s8103 = scalar_lea.hbm %s20, %s8102
          %s8105 = sshll.u32 %s8095, 4
          %s8106 = int_to_ptr.vmem [resolvable:$true] %s8105
          %8108 = dma.vmem_to_hbm [thread:$0]  %s8106, 128, %s8103, %s8092
        $region120: #{tpu_custom_call.1} parent=99 // pred_fallthru
          _
      $region100: #{tpu_custom_call.1} parent=5 // pred_fallthru
        _
      %p8109 = scmp.le.s32.totalorder 2, %s36
      // Predicated region
      $region121: #{tpu_custom_call.1} parent=5 // pred_check
        %p8110 = pneg %p8109
      $region122: #{tpu_custom_call.1} parent=5 // pred_check_branch
        %8112 = sbr.rel (%p8110) target = $region124
      $region123: #{tpu_custom_call.1} parent=5 // pred_region
        %s8113 = ssub.s32 %s36, 2
        // Predicated region
        $region125: #{tpu_custom_call.1} parent=123 // pred_check
          %p8114 = pneg %p505
        $region126: #{tpu_custom_call.1} parent=123 // pred_check_branch
          %8116 = sbr.rel (%p8114) target = $region128
        $region127: #{tpu_custom_call.1} parent=123 // pred_region
          %s8117 = sand.u32 %s490, 1
          %s8118 = scalar_lea.sflag [#allocation5], %s8117
          %s8119 = sand.u32 %s490, 1
          %s8120 = smul.addr %s8119, 8
          %s8121 = scalar_lea.vmem [#allocation11], %s8120
          %8122 = dma.done %s8118, 128
        $region128: #{tpu_custom_call.1} parent=123 // pred_fallthru
          _
      $region124: #{tpu_custom_call.1} parent=5 // pred_fallthru
        _
    $region6: #{tpu_custom_call.1} parent=1 // loop_footer
      %s40 = sadd.s32 1, %s36
    $region7: #{tpu_custom_call.1} parent=1 // loop_footer_branch
      %35 = sbr.rel target = $region3
    $region8: #{tpu_custom_call.1} parent=1 // loop_exit
      _
    %8123 = vsyncpa [#allocation4], 1
    %s8124 = scalar_lea.sflag [#allocation4], 1
    %8125 = vsyncpa %s8124, 1
    %8126 = vsyncpa [#allocation7], 1
    %8127 = vsyncpa [#allocation10], 1
    %8128 = vsyncpa [#allocation5], 1
    %s8129 = scalar_lea.sflag [#allocation5], 1
    %8130 = vsyncpa %s8129, 1

</llo_original>
